<compile_context>
chip_gen: v5e
topology: v5e:2x2
jax: 0.10.0
libtpu: 0.0.40
codegen_flags: <defaults>
</compile_context>

<pallas_src>
import functools

import jax
import jax.numpy as jnp
from jax.experimental import pallas as pl
from jax.experimental.pallas import tpu as pltpu


def ffn_kernel(x_ref, w1_ref, b1_ref, w2_ref, b2_ref, o_ref):
    # x_ref: (tm, C) bf16, w1_ref: (C, H) bf16, b1_ref: (1, H) f32,
    # w2_ref: (H, C) bf16, b2_ref: (1, C) f32, o_ref: (tm, C) f32
    h = jnp.dot(x_ref[...], w1_ref[...], preferred_element_type=jnp.float32)
    h = jnp.maximum(h + b1_ref[...], 0.0)                 # bias + ReLU in f32 (VPU)
    y = jnp.dot(h.astype(w2_ref.dtype), w2_ref[...],
                preferred_element_type=jnp.float32)
    y = y + b2_ref[...]                                   # bias in f32
    o_ref[...] = y.astype(o_ref.dtype)                    # Dropout(eval) = identity


@functools.partial(jax.jit, static_argnames=("tm",))
def feed_forward(x, w1, b1, w2, b2, *, tm=256):
    """x: (B, T, C) float32. Returns (B, T, C) float32."""
    B, T, C = x.shape
    H = w1.shape[1]
    M = B * T

    # Pad the token axis: multiple of tm, and at least 2 grid steps so the
    # "parallel" M axis can be sharded across both v7x TensorCores.
    n_steps = max(pl.cdiv(M, tm), 2)
    M_pad = n_steps * tm

    x2d = x.reshape(M, C)
    if M_pad != M:
        x2d = jnp.pad(x2d, ((0, M_pad - M), (0, 0)))

    # bf16 operands for the native MXU path; biases stay f32 (added after f32 accum).
    x_bf16 = x2d.astype(jnp.bfloat16)
    w1_bf16 = w1.astype(jnp.bfloat16)
    w2_bf16 = w2.astype(jnp.bfloat16)
    b1_2d = b1.reshape(1, H).astype(jnp.float32)
    b2_2d = b2.reshape(1, C).astype(jnp.float32)

    # Constant-index (resident) operands: no need for double-buffering.
    resident = dict(pipeline_mode=pl.Buffered(1))

    out2d = pl.pallas_call(
        ffn_kernel,
        out_shape=jax.ShapeDtypeStruct((M_pad, C), jnp.float32),
        grid_spec=pltpu.PrefetchScalarGridSpec(
            num_scalar_prefetch=0,
            grid=(n_steps,),
            in_specs=[
                pl.BlockSpec((tm, C), lambda i: (i, 0)),              # x tile
                pl.BlockSpec((C, H), lambda i: (0, 0), **resident),   # W1 (resident)
                pl.BlockSpec((1, H), lambda i: (0, 0), **resident),   # b1
                pl.BlockSpec((H, C), lambda i: (0, 0), **resident),   # W2 (resident)
                pl.BlockSpec((1, C), lambda i: (0, 0), **resident),   # b2
            ],
            out_specs=pl.BlockSpec((tm, C), lambda i: (i, 0)),
        ),
        compiler_params=pltpu.CompilerParams(
            dimension_semantics=("parallel",),
            vmem_limit_bytes=48 * 1024 * 1024,
        ),
    )(x_bf16, w1_bf16, b1_2d, w2_bf16, b2_2d)

    return out2d[:M].reshape(B, T, C)


def init_feed_forward_params(key, n_embd):
    """Deterministic init mimicking PyTorch nn.Linear defaults (uniform +-1/sqrt(fan_in))."""
    hidden = 4 * n_embd
    k1, k2, k3, k4 = jax.random.split(key, 4)
    bound1 = 1.0 / jnp.sqrt(jnp.float32(n_embd))
    bound2 = 1.0 / jnp.sqrt(jnp.float32(hidden))
    w1 = jax.random.uniform(k1, (n_embd, hidden), jnp.float32, -bound1, bound1)
    b1 = jax.random.uniform(k2, (hidden,), jnp.float32, -bound1, bound1)
    w2 = jax.random.uniform(k3, (hidden, n_embd), jnp.float32, -bound2, bound2)
    b2 = jax.random.uniform(k4, (n_embd,), jnp.float32, -bound2, bound2)
    return w1, b1, w2, b2


if __name__ == "__main__":
    n_embd = 384          # matches module's global n_embd
    B, T = 2, 8           # small batch / sequence

    key = jax.random.PRNGKey(0)
    kx, kp = jax.random.split(key)
    x = jax.random.normal(kx, (B, T, n_embd), jnp.float32)
    w1, b1, w2, b2 = init_feed_forward_params(kp, n_embd)

    out = feed_forward(x, w1, b1, w2, b2)
    out = jax.block_until_ready(out)

    # cross-check against plain-JAX f32 reference (kernel uses bf16 matmul operands,
    # f32 accumulation, so allow a modest tolerance)
    ref = jnp.maximum(x.reshape(-1, n_embd) @ w1 + b1, 0.0) @ w2 + b2
    ref = ref.reshape(B, T, n_embd)
    assert out.shape == (B, T, n_embd)
    assert jnp.allclose(out, ref, atol=5e-2, rtol=5e-2), (
        float(jnp.max(jnp.abs(out - ref))))

    print("KERNEL_OK")
</pallas_src>

<mosaic_0001>
module attributes {stable_mosaic.version = 11 : i64} {
  func.func @ffn_kernel(%arg0: i32, %arg1: memref<256x384xbf16, #tpu.memory_space<vmem>>, %arg2: memref<384x1536xbf16, #tpu.memory_space<vmem>>, %arg3: memref<1x1536xf32, #tpu.memory_space<vmem>>, %arg4: memref<1536x384xbf16, #tpu.memory_space<vmem>>, %arg5: memref<1x384xf32, #tpu.memory_space<vmem>>, %arg6: memref<256x384xf32, #tpu.memory_space<vmem>>) attributes {dimension_semantics = [#tpu.dimension_semantics<parallel>], iteration_bounds = array<i64: 2>, scalar_prefetch = 0 : i64, scratch_operands = 0 : i64, tpu.core_type = #tpu.core_type<tc>, window_params = [{transform_indices = @transform_0, window_bounds = array<i64: 256, 384>}, {pipeline_mode = #tpu.pipeline_mode<synchronous>, transform_indices = @transform_1, window_bounds = array<i64: 384, 1536>}, {pipeline_mode = #tpu.pipeline_mode<synchronous>, transform_indices = @transform_2, window_bounds = array<i64: 1, 1536>}, {pipeline_mode = #tpu.pipeline_mode<synchronous>, transform_indices = @transform_3, window_bounds = array<i64: 1536, 384>}, {pipeline_mode = #tpu.pipeline_mode<synchronous>, transform_indices = @transform_4, window_bounds = array<i64: 1, 384>}, {transform_indices = @transform_5, window_bounds = array<i64: 256, 384>}]} {
    %c0 = arith.constant 0 : index
    %c0_0 = arith.constant 0 : index
    %0 = vector.load %arg1[%c0, %c0_0] : memref<256x384xbf16, #tpu.memory_space<vmem>>, vector<256x384xbf16>
    %c0_1 = arith.constant 0 : index
    %c0_2 = arith.constant 0 : index
    %1 = vector.load %arg2[%c0_1, %c0_2] : memref<384x1536xbf16, #tpu.memory_space<vmem>>, vector<384x1536xbf16>
    %cst = arith.constant dense<0.000000e+00> : vector<256x1536xf32>
    %2 = tpu.matmul %0, %1, %cst {dimension_numbers = #tpu.dot_dimension_numbers<[1], [0], [0], [1], [0, 0, 1, 1], [], []>} : vector<256x384xbf16>, vector<384x1536xbf16>, vector<256x1536xf32> -> vector<256x1536xf32>
    %c0_3 = arith.constant 0 : index
    %c0_4 = arith.constant 0 : index
    %3 = vector.load %arg3[%c0_3, %c0_4] : memref<1x1536xf32, #tpu.memory_space<vmem>>, vector<1x1536xf32>
    %4 = vector.broadcast %3 : vector<1x1536xf32> to vector<256x1536xf32>
    %5 = arith.addf %2, %4 : vector<256x1536xf32>
    %cst_5 = arith.constant 0.000000e+00 : f32
    %6 = vector.broadcast %cst_5 : f32 to vector<256x1536xf32>
    %7 = arith.maximumf %5, %6 : vector<256x1536xf32>
    %8 = arith.truncf %7 : vector<256x1536xf32> to vector<256x1536xbf16>
    %c0_6 = arith.constant 0 : index
    %c0_7 = arith.constant 0 : index
    %9 = vector.load %arg4[%c0_6, %c0_7] : memref<1536x384xbf16, #tpu.memory_space<vmem>>, vector<1536x384xbf16>
    %cst_8 = arith.constant dense<0.000000e+00> : vector<256x384xf32>
    %10 = tpu.matmul %8, %9, %cst_8 {dimension_numbers = #tpu.dot_dimension_numbers<[1], [0], [0], [1], [0, 0, 1, 1], [], []>} : vector<256x1536xbf16>, vector<1536x384xbf16>, vector<256x384xf32> -> vector<256x384xf32>
    %c0_9 = arith.constant 0 : index
    %c0_10 = arith.constant 0 : index
    %11 = vector.load %arg5[%c0_9, %c0_10] : memref<1x384xf32, #tpu.memory_space<vmem>>, vector<1x384xf32>
    %12 = vector.broadcast %11 : vector<1x384xf32> to vector<256x384xf32>
    %13 = arith.addf %10, %12 : vector<256x384xf32>
    %c0_11 = arith.constant 0 : index
    %c0_12 = arith.constant 0 : index
    %14 = vector.load %arg6[%c0_11, %c0_12] : memref<256x384xf32, #tpu.memory_space<vmem>>, vector<256x384xf32>
    tpu.vector_store %arg6[%c0_11, %c0_12], %13 {strides = array<i32>} : memref<256x384xf32, #tpu.memory_space<vmem>>, vector<256x384xf32>,
    return
  }
  func.func @transform_0(%arg0: i32) -> (i32, i32) {
    %c0_i32 = arith.constant 0 : i32
    %c0_i32_0 = arith.constant 0 : i32
    return %arg0, %c0_i32 : i32, i32
  }
  func.func @transform_1(%arg0: i32) -> (i32, i32) {
    %c0_i32 = arith.constant 0 : i32
    %c0_i32_0 = arith.constant 0 : i32
    %c0_i32_1 = arith.constant 0 : i32
    return %c0_i32, %c0_i32_0 : i32, i32
  }
  func.func @transform_2(%arg0: i32) -> (i32, i32) {
    %c0_i32 = arith.constant 0 : i32
    %c0_i32_0 = arith.constant 0 : i32
    %c0_i32_1 = arith.constant 0 : i32
    return %c0_i32, %c0_i32_0 : i32, i32
  }
  func.func @transform_3(%arg0: i32) -> (i32, i32) {
    %c0_i32 = arith.constant 0 : i32
    %c0_i32_0 = arith.constant 0 : i32
    %c0_i32_1 = arith.constant 0 : i32
    return %c0_i32, %c0_i32_0 : i32, i32
  }
  func.func @transform_4(%arg0: i32) -> (i32, i32) {
    %c0_i32 = arith.constant 0 : i32
    %c0_i32_0 = arith.constant 0 : i32
    %c0_i32_1 = arith.constant 0 : i32
    return %c0_i32, %c0_i32_0 : i32, i32
  }
  func.func @transform_5(%arg0: i32) -> (i32, i32) {
    %c0_i32 = arith.constant 0 : i32
    %c0_i32_0 = arith.constant 0 : i32
    return %arg0, %c0_i32 : i32, i32
  }
}

</mosaic_0001>

<llo_original>
// kernel: feed_forward.1
$region0: #{feed_forward.1}
  #allocation0 [shape = 'u32[]', space=smem, size = 0x4, offset = 0x4, fixed_abs, tag = 'smem constant byte address 0x4 - core index']
  #allocation1 [shape = 'u32[72,128]{1,0:T(1,128)}', space=vmem, size = 0x9000, scoped, tag = 'internal scratch']
  %s0 = inlined_call_operand.vmem [shape: bf16[512,384], index: 0, kind: input, shape index: {}]
  %s1 = inlined_call_operand.vmem [shape: bf16[384,1536], index: 1, kind: input, shape index: {}]
  %s2 = inlined_call_operand.vmem [shape: f32[1,1536], index: 2, kind: input, shape index: {}]
  %s3 = inlined_call_operand.vmem [shape: bf16[1536,384], index: 3, kind: input, shape index: {}]
  %s4 = inlined_call_operand.vmem [shape: f32[1,384], index: 4, kind: input, shape index: {}]
  %s5 = inlined_call_operand.vmem [shape: f32[512,384], index: 5, kind: output, shape index: {}]
  %s6 = sld [smem:[#allocation0]]
  $region53: #{feed_forward.1} parent=0
    _
  %s8 = ssub.s32 1, %s6
  %s9 = scalar_select 0, %s8, %s6
  loop: start=0, step=1, limit=4
  $region2: #{feed_forward.1} parent=0 // loop_pre_header
    _
  $region3: #{feed_forward.1} parent=0 // loop_header
    %s11 = sphi 0, %s15
    %p12 = scmp.ge.s32.totalorder %s11, 4
    %s21 = sphi 0, %s23
    %s24 = sphi 0, %s21
    %s25 = sphi 0, %s24
    %s41 = sphi 0, %s25
    %s45 = sphi 0, %s45
    %s47 = sphi 0, %s45
    %s48 = sphi 0, %s47
    %s62 = sphi 0, %s48
    %s66 = sphi 0, %s66
    %s68 = sphi 0, %s66
    %s69 = sphi 0, %s68
    %s83 = sphi 0, %s69
    %s87 = sphi 0, %s87
    %s89 = sphi 0, %s87
    %s90 = sphi 0, %s89
    %s104 = sphi 0, %s90
    %s108 = sphi 0, %s108
    %s110 = sphi 0, %s108
    %s111 = sphi 0, %s110
    %s125 = sphi 0, %s111
    %s131 = sphi 0, %s133
    %s134 = sphi 0, %s131
    %s135 = sphi 0, %s134
    %s151 = sphi 0, %s135
  $region4: #{feed_forward.1} parent=0 // loop_header_branch
    %14 = sbr.rel (%p12) target = $region8
  $region5: #{feed_forward.1} parent=0 // loop_body
    %s16 = ssub.s32 %s11, 1
    %s17 = ssub.s32 %s11, 2
    %s18 = sadd.s32 %s11, 1
    %s19 = ssub.s32 %s11, %s18
    %p20 = scmp.eq.s32.totalorder %s19, 0
    %s22 = sadd.s32 %s21, 1
    %s23 = scalar_select %p20, %s21, %s22
    %p26 = pneg %p20
    %p27 = scmp.eq.s32.totalorder %s11, 1
    %p28 = por %p26, %p27
    %p29 = scmp.ne.s32.totalorder %s21, %s24
    %p30 = scmp.eq.s32.totalorder %s11, 0
    %p31 = por %p29, %p30
    %p32 = scmp.ne.s32.totalorder %s21, %s24
    %p33 = scmp.eq.s32.totalorder %s16, 1
    %p34 = por %p32, %p33
    %p35 = scmp.ne.s32.totalorder %s24, %s25
    %p36 = scmp.eq.s32.totalorder %s16, 0
    %p37 = por %p35, %p36
    %p38 = scmp.ne.s32.totalorder %s24, %s25
    %p39 = scmp.eq.s32.totalorder %s17, 1
    %p40 = por %p38, %p39
    %p42 = scmp.ne.s32.totalorder %s25, %s41
    %p43 = scmp.eq.s32.totalorder %s17, 0
    %p44 = por %p42, %p43
    %s46 = sadd.s32 %s45, 1
    %p49 = scmp.eq.s32.totalorder %s11, 1
    %p50 = scmp.ne.s32.totalorder %s45, %s47
    %p51 = scmp.eq.s32.totalorder %s11, 0
    %p52 = por %p50, %p51
    %p53 = scmp.ne.s32.totalorder %s45, %s47
    %p54 = scmp.eq.s32.totalorder %s16, 1
    %p55 = por %p53, %p54
    %p56 = scmp.ne.s32.totalorder %s47, %s48
    %p57 = scmp.eq.s32.totalorder %s16, 0
    %p58 = por %p56, %p57
    %p59 = scmp.ne.s32.totalorder %s47, %s48
    %p60 = scmp.eq.s32.totalorder %s17, 1
    %p61 = por %p59, %p60
    %p63 = scmp.ne.s32.totalorder %s48, %s62
    %p64 = scmp.eq.s32.totalorder %s17, 0
    %p65 = por %p63, %p64
    %s67 = sadd.s32 %s66, 1
    %p70 = scmp.eq.s32.totalorder %s11, 1
    %p71 = scmp.ne.s32.totalorder %s66, %s68
    %p72 = scmp.eq.s32.totalorder %s11, 0
    %p73 = por %p71, %p72
    %p74 = scmp.ne.s32.totalorder %s66, %s68
    %p75 = scmp.eq.s32.totalorder %s16, 1
    %p76 = por %p74, %p75
    %p77 = scmp.ne.s32.totalorder %s68, %s69
    %p78 = scmp.eq.s32.totalorder %s16, 0
    %p79 = por %p77, %p78
    %p80 = scmp.ne.s32.totalorder %s68, %s69
    %p81 = scmp.eq.s32.totalorder %s17, 1
    %p82 = por %p80, %p81
    %p84 = scmp.ne.s32.totalorder %s69, %s83
    %p85 = scmp.eq.s32.totalorder %s17, 0
    %p86 = por %p84, %p85
    %s88 = sadd.s32 %s87, 1
    %p91 = scmp.eq.s32.totalorder %s11, 1
    %p92 = scmp.ne.s32.totalorder %s87, %s89
    %p93 = scmp.eq.s32.totalorder %s11, 0
    %p94 = por %p92, %p93
    %p95 = scmp.ne.s32.totalorder %s87, %s89
    %p96 = scmp.eq.s32.totalorder %s16, 1
    %p97 = por %p95, %p96
    %p98 = scmp.ne.s32.totalorder %s89, %s90
    %p99 = scmp.eq.s32.totalorder %s16, 0
    %p100 = por %p98, %p99
    %p101 = scmp.ne.s32.totalorder %s89, %s90
    %p102 = scmp.eq.s32.totalorder %s17, 1
    %p103 = por %p101, %p102
    %p105 = scmp.ne.s32.totalorder %s90, %s104
    %p106 = scmp.eq.s32.totalorder %s17, 0
    %p107 = por %p105, %p106
    %s109 = sadd.s32 %s108, 1
    %p112 = scmp.eq.s32.totalorder %s11, 1
    %p113 = scmp.ne.s32.totalorder %s108, %s110
    %p114 = scmp.eq.s32.totalorder %s11, 0
    %p115 = por %p113, %p114
    %p116 = scmp.ne.s32.totalorder %s108, %s110
    %p117 = scmp.eq.s32.totalorder %s16, 1
    %p118 = por %p116, %p117
    %p119 = scmp.ne.s32.totalorder %s110, %s111
    %p120 = scmp.eq.s32.totalorder %s16, 0
    %p121 = por %p119, %p120
    %p122 = scmp.ne.s32.totalorder %s110, %s111
    %p123 = scmp.eq.s32.totalorder %s17, 1
    %p124 = por %p122, %p123
    %p126 = scmp.ne.s32.totalorder %s111, %s125
    %p127 = scmp.eq.s32.totalorder %s17, 0
    %p128 = por %p126, %p127
    %s129 = ssub.s32 %s11, %s18
    %p130 = scmp.eq.s32.totalorder %s129, 0
    %s132 = sadd.s32 %s131, 1
    %s133 = scalar_select %p130, %s131, %s132
    %p136 = pneg %p130
    %p137 = scmp.eq.s32.totalorder %s11, 1
    %p138 = por %p136, %p137
    %p139 = scmp.ne.s32.totalorder %s131, %s134
    %p140 = scmp.eq.s32.totalorder %s11, 0
    %p141 = por %p139, %p140
    %p142 = scmp.ne.s32.totalorder %s131, %s134
    %p143 = scmp.eq.s32.totalorder %s16, 1
    %p144 = por %p142, %p143
    %p145 = scmp.ne.s32.totalorder %s134, %s135
    %p146 = scmp.eq.s32.totalorder %s16, 0
    %p147 = por %p145, %p146
    %p148 = scmp.ne.s32.totalorder %s134, %s135
    %p149 = scmp.eq.s32.totalorder %s17, 1
    %p150 = por %p148, %p149
    %p152 = scmp.ne.s32.totalorder %s135, %s151
    %p153 = scmp.eq.s32.totalorder %s17, 0
    %p154 = por %p152, %p153
    %p155 = scmp.le.s32.totalorder 1, %s11
    %p156 = scmp.lt.s32.totalorder %s11, 3
    %p157 = pnand %p155, %p156
    %p158 = pneg %p157
    // Predicated region
    $region9: #{feed_forward.1} parent=5 // pred_check
      _
    $region10: #{feed_forward.1} parent=5 // pred_check_branch
      %160 = sbr.rel (%p157) target = $region12
    $region11: #{feed_forward.1} parent=5 // pred_region
      %s161 = ssub.s32 %s11, 1
      // Predicated region
      $region13: #{feed_forward.1} parent=11 // pred_check
        %p162 = pneg %p58
      $region14: #{feed_forward.1} parent=11 // pred_check_branch
        %164 = sbr.rel (%p162) target = $region16
      $region15: #{feed_forward.1} parent=11 // pred_region
        _
      $region16: #{feed_forward.1} parent=11 // pred_fallthru
        _
      // Predicated region
      $region17: #{feed_forward.1} parent=11 // pred_check
        %p165 = pneg %p79
      $region18: #{feed_forward.1} parent=11 // pred_check_branch
        %167 = sbr.rel (%p165) target = $region20
      $region19: #{feed_forward.1} parent=11 // pred_region
        _
      $region20: #{feed_forward.1} parent=11 // pred_fallthru
        _
      // Predicated region
      $region21: #{feed_forward.1} parent=11 // pred_check
        %p168 = pneg %p100
      $region22: #{feed_forward.1} parent=11 // pred_check_branch
        %170 = sbr.rel (%p168) target = $region24
      $region23: #{feed_forward.1} parent=11 // pred_region
        _
      $region24: #{feed_forward.1} parent=11 // pred_fallthru
        _
      // Predicated region
      $region25: #{feed_forward.1} parent=11 // pred_check
        %p171 = pneg %p121
      $region26: #{feed_forward.1} parent=11 // pred_check_branch
        %173 = sbr.rel (%p171) target = $region28
      $region27: #{feed_forward.1} parent=11 // pred_region
        _
      $region28: #{feed_forward.1} parent=11 // pred_fallthru
        _
    $region12: #{feed_forward.1} parent=5 // pred_fallthru
      _
    %p174 = scmp.lt.s32.totalorder %s11, 2
    // Predicated region
    $region29: #{feed_forward.1} parent=5 // pred_check
      %p175 = pneg %p174
    $region30: #{feed_forward.1} parent=5 // pred_check_branch
      %177 = sbr.rel (%p175) target = $region32
    $region31: #{feed_forward.1} parent=5 // pred_region
      // Predicated region
      $region33: #{feed_forward.1} parent=31 // pred_check
        %p178 = pneg %p31
      $region34: #{feed_forward.1} parent=31 // pred_check_branch
        %180 = sbr.rel (%p178) target = $region36
      $region35: #{feed_forward.1} parent=31 // pred_region
        %s181 = smul.u32 32, %s11
        %p182 = scmp.lt.s32.totalorder %s181, 63
        %s183 = scalar_select %p182, %s181, 63
        %s184 = smul.addr %s183, 3
        %s185 = smul.addr %s184, 4
        %s186 = scalar_lea.vmem %s0, %s185
        %s187 = smul.u32 32, %s11
      $region36: #{feed_forward.1} parent=31 // pred_fallthru
        _
    $region32: #{feed_forward.1} parent=5 // pred_fallthru
      _
    %p188 = scmp.le.s32.totalorder 1, %s11
    %p189 = scmp.lt.s32.totalorder %s11, 3
    %p190 = pnand %p188, %p189
    %p191 = pneg %p190
    // Predicated region
    $region37: #{feed_forward.1} parent=5 // pred_check
      _
    $region38: #{feed_forward.1} parent=5 // pred_check_branch
      %193 = sbr.rel (%p190) target = $region40
    $region39: #{feed_forward.1} parent=5 // pred_region
      %s194 = ssub.s32 %s11, 1
      %s195 = smul.u32 32, %s16
      %p196 = scmp.lt.s32.totalorder %s195, 63
      %s197 = scalar_select %p196, %s195, 63
      %s198 = smul.addr %s197, 3
      %s199 = smul.addr %s198, 4
      %s200 = scalar_lea.vmem %s0, %s199
      %p201 = pneg %p37
      %p202 = pneg %p34
      %p203 = pneg %p58
      %p204 = pneg %p55
      %p205 = pneg %p79
      %p206 = pneg %p76
      %p207 = pneg %p100
      %p208 = pneg %p97
      %p209 = pneg %p121
      %p210 = pneg %p118
      %p211 = pneg %p147
      %p212 = pneg %p144
      %s213 = smul.u32 32, %s16
      %p214 = scmp.lt.s32.totalorder %s213, 63
      %s215 = scalar_select %p214, %s213, 63
      %s216 = smul.addr %s215, 3
      %s217 = smul.addr %s216, 8
      %s218 = scalar_lea.vmem %s5, %s217
      %s219 = smul.u32 32, %s16
      %p220 = scmp.lt.s32.totalorder %s219, 63
      %s221 = scalar_select %p220, %s219, 63
      %s222 = smul.addr %s221, 3
      %s223 = smul.addr %s222, 4
      %s224 = scalar_lea.vmem %s0, %s223
      %s225 = smul.u32 32, %s16
      %s226 = smul.u32 32, %s16
      %p227 = scmp.lt.s32.totalorder %s226, 63
      %s228 = scalar_select %p227, %s226, 63
      %s229 = smul.addr %s228, 3
      %s230 = smul.addr %s229, 8
      %s231 = scalar_lea.vmem %s5, %s230
      %s232 = smul.u32 32, %s16
      %v233 = vld [vmem:[%s224] sm:$0xff]
      %v234 = vld [vmem:[%s224 + $0x8] sm:$0xf]
      %v235 = vld [vmem:[%s224 + $0xc] sm:$0xff]
      %v236 = vld [vmem:[%s224 + $0x14] sm:$0xf]
      %v237 = vld [vmem:[%s224 + $0x18] sm:$0xff]
      %v238 = vld [vmem:[%s224 + $0x20] sm:$0xf]
      %v239 = vld [vmem:[%s224 + $0x24] sm:$0xff]
      %v240 = vld [vmem:[%s224 + $0x2c] sm:$0xf]
      %v241 = vld [vmem:[%s224 + $0x30] sm:$0xff]
      %v242 = vld [vmem:[%s224 + $0x38] sm:$0xf]
      %v243 = vld [vmem:[%s224 + $0x3c] sm:$0xff]
      %v244 = vld [vmem:[%s224 + $0x44] sm:$0xf]
      %v245 = vld [vmem:[%s224 + $0x48] sm:$0xff]
      %v246 = vld [vmem:[%s224 + $0x50] sm:$0xf]
      %v247 = vld [vmem:[%s224 + $0x54] sm:$0xff]
      %v248 = vld [vmem:[%s224 + $0x5c] sm:$0xf]
      %v249 = vld [vmem:[%s224 + $0x60] sm:$0xff]
      %v250 = vld [vmem:[%s224 + $0x68] sm:$0xf]
      %v251 = vld [vmem:[%s224 + $0x6c] sm:$0xff]
      %v252 = vld [vmem:[%s224 + $0x74] sm:$0xf]
      %v253 = vld [vmem:[%s224 + $0x78] sm:$0xff]
      %v254 = vld [vmem:[%s224 + $0x80] sm:$0xf]
      %v255 = vld [vmem:[%s224 + $0x84] sm:$0xff]
      %v256 = vld [vmem:[%s224 + $0x8c] sm:$0xf]
      %v257 = vld [vmem:[%s224 + $0x90] sm:$0xff]
      %v258 = vld [vmem:[%s224 + $0x98] sm:$0xf]
      %v259 = vld [vmem:[%s224 + $0x9c] sm:$0xff]
      %v260 = vld [vmem:[%s224 + $0xa4] sm:$0xf]
      %v261 = vld [vmem:[%s224 + $0xa8] sm:$0xff]
      %v262 = vld [vmem:[%s224 + $0xb0] sm:$0xf]
      %v263 = vld [vmem:[%s224 + $0xb4] sm:$0xff]
      %v264 = vld [vmem:[%s224 + $0xbc] sm:$0xf]
      %v265 = vld [vmem:[%s224 + $0xc0] sm:$0xff]
      %v266 = vld [vmem:[%s224 + $0xc8] sm:$0xf]
      %v267 = vld [vmem:[%s224 + $0xcc] sm:$0xff]
      %v268 = vld [vmem:[%s224 + $0xd4] sm:$0xf]
      %v269 = vld [vmem:[%s224 + $0xd8] sm:$0xff]
      %v270 = vld [vmem:[%s224 + $0xe0] sm:$0xf]
      %v271 = vld [vmem:[%s224 + $0xe4] sm:$0xff]
      %v272 = vld [vmem:[%s224 + $0xec] sm:$0xf]
      %v273 = vld [vmem:[%s224 + $0xf0] sm:$0xff]
      %v274 = vld [vmem:[%s224 + $0xf8] sm:$0xf]
      %v275 = vld [vmem:[%s224 + $0xfc] sm:$0xff]
      %v276 = vld [vmem:[%s224 + $0x104] sm:$0xf]
      %v277 = vld [vmem:[%s224 + $0x108] sm:$0xff]
      %v278 = vld [vmem:[%s224 + $0x110] sm:$0xf]
      %v279 = vld [vmem:[%s224 + $0x114] sm:$0xff]
      %v280 = vld [vmem:[%s224 + $0x11c] sm:$0xf]
      %v281 = vld [vmem:[%s224 + $0x120] sm:$0xff]
      %v282 = vld [vmem:[%s224 + $0x128] sm:$0xf]
      %v283 = vld [vmem:[%s224 + $0x12c] sm:$0xff]
      %v284 = vld [vmem:[%s224 + $0x134] sm:$0xf]
      %v285 = vld [vmem:[%s224 + $0x138] sm:$0xff]
      %v286 = vld [vmem:[%s224 + $0x140] sm:$0xf]
      %v287 = vld [vmem:[%s224 + $0x144] sm:$0xff]
      %v288 = vld [vmem:[%s224 + $0x14c] sm:$0xf]
      %v289 = vld [vmem:[%s224 + $0x150] sm:$0xff]
      %v290 = vld [vmem:[%s224 + $0x158] sm:$0xf]
      %v291 = vld [vmem:[%s224 + $0x15c] sm:$0xff]
      %v292 = vld [vmem:[%s224 + $0x164] sm:$0xf]
      %v293 = vld [vmem:[%s224 + $0x168] sm:$0xff]
      %v294 = vld [vmem:[%s224 + $0x170] sm:$0xf]
      %v295 = vld [vmem:[%s224 + $0x174] sm:$0xff]
      %v296 = vld [vmem:[%s224 + $0x17c] sm:$0xf]
      %v297 = vld [vmem:[%s1] sm:$0xff]
      %v298 = vld [vmem:[%s1 + $0x8] sm:$0xff]
      %v299 = vld [vmem:[%s1 + $0x10] sm:$0xff]
      %v300 = vld [vmem:[%s1 + $0x18] sm:$0xff]
      %v301 = vld [vmem:[%s1 + $0x20] sm:$0xff]
      %v302 = vld [vmem:[%s1 + $0x28] sm:$0xff]
      %v303 = vld [vmem:[%s1 + $0x30] sm:$0xff]
      %v304 = vld [vmem:[%s1 + $0x38] sm:$0xff]
      %v305 = vld [vmem:[%s1 + $0x40] sm:$0xff]
      %v306 = vld [vmem:[%s1 + $0x48] sm:$0xff]
      %v307 = vld [vmem:[%s1 + $0x50] sm:$0xff]
      %v308 = vld [vmem:[%s1 + $0x58] sm:$0xff]
      %v309 = vld [vmem:[%s1 + $0x60] sm:$0xff]
      %v310 = vld [vmem:[%s1 + $0x68] sm:$0xff]
      %v311 = vld [vmem:[%s1 + $0x70] sm:$0xff]
      %v312 = vld [vmem:[%s1 + $0x78] sm:$0xff]
      %v313 = vld [vmem:[%s1 + $0x80] sm:$0xff]
      %v314 = vld [vmem:[%s1 + $0x88] sm:$0xff]
      %v315 = vld [vmem:[%s1 + $0x90] sm:$0xff]
      %v316 = vld [vmem:[%s1 + $0x98] sm:$0xff]
      %v317 = vld [vmem:[%s1 + $0xa0] sm:$0xff]
      %v318 = vld [vmem:[%s1 + $0xa8] sm:$0xff]
      %v319 = vld [vmem:[%s1 + $0xb0] sm:$0xff]
      %v320 = vld [vmem:[%s1 + $0xb8] sm:$0xff]
      %v321 = vld [vmem:[%s1 + $0xc0] sm:$0xff]
      %v322 = vld [vmem:[%s1 + $0xc8] sm:$0xff]
      %v323 = vld [vmem:[%s1 + $0xd0] sm:$0xff]
      %v324 = vld [vmem:[%s1 + $0xd8] sm:$0xff]
      %v325 = vld [vmem:[%s1 + $0xe0] sm:$0xff]
      %v326 = vld [vmem:[%s1 + $0xe8] sm:$0xff]
      %v327 = vld [vmem:[%s1 + $0xf0] sm:$0xff]
      %v328 = vld [vmem:[%s1 + $0xf8] sm:$0xff]
      %v329 = vld [vmem:[%s1 + $0x100] sm:$0xff]
      %v330 = vld [vmem:[%s1 + $0x108] sm:$0xff]
      %v331 = vld [vmem:[%s1 + $0x110] sm:$0xff]
      %v332 = vld [vmem:[%s1 + $0x118] sm:$0xff]
      %v333 = vld [vmem:[%s1 + $0x120] sm:$0xff]
      %v334 = vld [vmem:[%s1 + $0x128] sm:$0xff]
      %v335 = vld [vmem:[%s1 + $0x130] sm:$0xff]
      %v336 = vld [vmem:[%s1 + $0x138] sm:$0xff]
      %v337 = vld [vmem:[%s1 + $0x140] sm:$0xff]
      %v338 = vld [vmem:[%s1 + $0x148] sm:$0xff]
      %v339 = vld [vmem:[%s1 + $0x150] sm:$0xff]
      %v340 = vld [vmem:[%s1 + $0x158] sm:$0xff]
      %v341 = vld [vmem:[%s1 + $0x160] sm:$0xff]
      %v342 = vld [vmem:[%s1 + $0x168] sm:$0xff]
      %v343 = vld [vmem:[%s1 + $0x170] sm:$0xff]
      %v344 = vld [vmem:[%s1 + $0x178] sm:$0xff]
      %v345 = vld [vmem:[%s1 + $0x180] sm:$0xff]
      %v346 = vld [vmem:[%s1 + $0x188] sm:$0xff]
      %v347 = vld [vmem:[%s1 + $0x190] sm:$0xff]
      %v348 = vld [vmem:[%s1 + $0x198] sm:$0xff]
      %v349 = vld [vmem:[%s1 + $0x1a0] sm:$0xff]
      %v350 = vld [vmem:[%s1 + $0x1a8] sm:$0xff]
      %v351 = vld [vmem:[%s1 + $0x1b0] sm:$0xff]
      %v352 = vld [vmem:[%s1 + $0x1b8] sm:$0xff]
      %v353 = vld [vmem:[%s1 + $0x1c0] sm:$0xff]
      %v354 = vld [vmem:[%s1 + $0x1c8] sm:$0xff]
      %v355 = vld [vmem:[%s1 + $0x1d0] sm:$0xff]
      %v356 = vld [vmem:[%s1 + $0x1d8] sm:$0xff]
      %v357 = vld [vmem:[%s1 + $0x1e0] sm:$0xff]
      %v358 = vld [vmem:[%s1 + $0x1e8] sm:$0xff]
      %v359 = vld [vmem:[%s1 + $0x1f0] sm:$0xff]
      %v360 = vld [vmem:[%s1 + $0x1f8] sm:$0xff]
      %v361 = vld [vmem:[%s1 + $0x200] sm:$0xff]
      %v362 = vld [vmem:[%s1 + $0x208] sm:$0xff]
      %v363 = vld [vmem:[%s1 + $0x210] sm:$0xff]
      %v364 = vld [vmem:[%s1 + $0x218] sm:$0xff]
      %v365 = vld [vmem:[%s1 + $0x220] sm:$0xff]
      %v366 = vld [vmem:[%s1 + $0x228] sm:$0xff]
      %v367 = vld [vmem:[%s1 + $0x230] sm:$0xff]
      %v368 = vld [vmem:[%s1 + $0x238] sm:$0xff]
      %v369 = vld [vmem:[%s1 + $0x240] sm:$0xff]
      %v370 = vld [vmem:[%s1 + $0x248] sm:$0xff]
      %v371 = vld [vmem:[%s1 + $0x250] sm:$0xff]
      %v372 = vld [vmem:[%s1 + $0x258] sm:$0xff]
      %v373 = vld [vmem:[%s1 + $0x260] sm:$0xff]
      %v374 = vld [vmem:[%s1 + $0x268] sm:$0xff]
      %v375 = vld [vmem:[%s1 + $0x270] sm:$0xff]
      %v376 = vld [vmem:[%s1 + $0x278] sm:$0xff]
      %v377 = vld [vmem:[%s1 + $0x280] sm:$0xff]
      %v378 = vld [vmem:[%s1 + $0x288] sm:$0xff]
      %v379 = vld [vmem:[%s1 + $0x290] sm:$0xff]
      %v380 = vld [vmem:[%s1 + $0x298] sm:$0xff]
      %v381 = vld [vmem:[%s1 + $0x2a0] sm:$0xff]
      %v382 = vld [vmem:[%s1 + $0x2a8] sm:$0xff]
      %v383 = vld [vmem:[%s1 + $0x2b0] sm:$0xff]
      %v384 = vld [vmem:[%s1 + $0x2b8] sm:$0xff]
      %v385 = vld [vmem:[%s1 + $0x2c0] sm:$0xff]
      %v386 = vld [vmem:[%s1 + $0x2c8] sm:$0xff]
      %v387 = vld [vmem:[%s1 + $0x2d0] sm:$0xff]
      %v388 = vld [vmem:[%s1 + $0x2d8] sm:$0xff]
      %v389 = vld [vmem:[%s1 + $0x2e0] sm:$0xff]
      %v390 = vld [vmem:[%s1 + $0x2e8] sm:$0xff]
      %v391 = vld [vmem:[%s1 + $0x2f0] sm:$0xff]
      %v392 = vld [vmem:[%s1 + $0x2f8] sm:$0xff]
      %v393 = vld [vmem:[%s1 + $0x300] sm:$0xff]
      %v394 = vld [vmem:[%s1 + $0x308] sm:$0xff]
      %v395 = vld [vmem:[%s1 + $0x310] sm:$0xff]
      %v396 = vld [vmem:[%s1 + $0x318] sm:$0xff]
      %v397 = vld [vmem:[%s1 + $0x320] sm:$0xff]
      %v398 = vld [vmem:[%s1 + $0x328] sm:$0xff]
      %v399 = vld [vmem:[%s1 + $0x330] sm:$0xff]
      %v400 = vld [vmem:[%s1 + $0x338] sm:$0xff]
      %v401 = vld [vmem:[%s1 + $0x340] sm:$0xff]
      %v402 = vld [vmem:[%s1 + $0x348] sm:$0xff]
      %v403 = vld [vmem:[%s1 + $0x350] sm:$0xff]
      %v404 = vld [vmem:[%s1 + $0x358] sm:$0xff]
      %v405 = vld [vmem:[%s1 + $0x360] sm:$0xff]
      %v406 = vld [vmem:[%s1 + $0x368] sm:$0xff]
      %v407 = vld [vmem:[%s1 + $0x370] sm:$0xff]
      %v408 = vld [vmem:[%s1 + $0x378] sm:$0xff]
      %v409 = vld [vmem:[%s1 + $0x380] sm:$0xff]
      %v410 = vld [vmem:[%s1 + $0x388] sm:$0xff]
      %v411 = vld [vmem:[%s1 + $0x390] sm:$0xff]
      %v412 = vld [vmem:[%s1 + $0x398] sm:$0xff]
      %v413 = vld [vmem:[%s1 + $0x3a0] sm:$0xff]
      %v414 = vld [vmem:[%s1 + $0x3a8] sm:$0xff]
      %v415 = vld [vmem:[%s1 + $0x3b0] sm:$0xff]
      %v416 = vld [vmem:[%s1 + $0x3b8] sm:$0xff]
      %v417 = vld [vmem:[%s1 + $0x3c0] sm:$0xff]
      %v418 = vld [vmem:[%s1 + $0x3c8] sm:$0xff]
      %v419 = vld [vmem:[%s1 + $0x3d0] sm:$0xff]
      %v420 = vld [vmem:[%s1 + $0x3d8] sm:$0xff]
      %v421 = vld [vmem:[%s1 + $0x3e0] sm:$0xff]
      %v422 = vld [vmem:[%s1 + $0x3e8] sm:$0xff]
      %v423 = vld [vmem:[%s1 + $0x3f0] sm:$0xff]
      %v424 = vld [vmem:[%s1 + $0x3f8] sm:$0xff]
      %v425 = vld [vmem:[%s1 + $0x400] sm:$0xff]
      %v426 = vld [vmem:[%s1 + $0x408] sm:$0xff]
      %v427 = vld [vmem:[%s1 + $0x410] sm:$0xff]
      %v428 = vld [vmem:[%s1 + $0x418] sm:$0xff]
      %v429 = vld [vmem:[%s1 + $0x420] sm:$0xff]
      %v430 = vld [vmem:[%s1 + $0x428] sm:$0xff]
      %v431 = vld [vmem:[%s1 + $0x430] sm:$0xff]
      %v432 = vld [vmem:[%s1 + $0x438] sm:$0xff]
      %v433 = vld [vmem:[%s1 + $0x440] sm:$0xff]
      %v434 = vld [vmem:[%s1 + $0x448] sm:$0xff]
      %v435 = vld [vmem:[%s1 + $0x450] sm:$0xff]
      %v436 = vld [vmem:[%s1 + $0x458] sm:$0xff]
      %v437 = vld [vmem:[%s1 + $0x460] sm:$0xff]
      %v438 = vld [vmem:[%s1 + $0x468] sm:$0xff]
      %v439 = vld [vmem:[%s1 + $0x470] sm:$0xff]
      %v440 = vld [vmem:[%s1 + $0x478] sm:$0xff]
      %v441 = vld [vmem:[%s1 + $0x480] sm:$0xff]
      %v442 = vld [vmem:[%s1 + $0x488] sm:$0xff]
      %v443 = vld [vmem:[%s1 + $0x490] sm:$0xff]
      %v444 = vld [vmem:[%s1 + $0x498] sm:$0xff]
      %v445 = vld [vmem:[%s1 + $0x4a0] sm:$0xff]
      %v446 = vld [vmem:[%s1 + $0x4a8] sm:$0xff]
      %v447 = vld [vmem:[%s1 + $0x4b0] sm:$0xff]
      %v448 = vld [vmem:[%s1 + $0x4b8] sm:$0xff]
      %v449 = vld [vmem:[%s1 + $0x4c0] sm:$0xff]
      %v450 = vld [vmem:[%s1 + $0x4c8] sm:$0xff]
      %v451 = vld [vmem:[%s1 + $0x4d0] sm:$0xff]
      %v452 = vld [vmem:[%s1 + $0x4d8] sm:$0xff]
      %v453 = vld [vmem:[%s1 + $0x4e0] sm:$0xff]
      %v454 = vld [vmem:[%s1 + $0x4e8] sm:$0xff]
      %v455 = vld [vmem:[%s1 + $0x4f0] sm:$0xff]
      %v456 = vld [vmem:[%s1 + $0x4f8] sm:$0xff]
      %v457 = vld [vmem:[%s1 + $0x500] sm:$0xff]
      %v458 = vld [vmem:[%s1 + $0x508] sm:$0xff]
      %v459 = vld [vmem:[%s1 + $0x510] sm:$0xff]
      %v460 = vld [vmem:[%s1 + $0x518] sm:$0xff]
      %v461 = vld [vmem:[%s1 + $0x520] sm:$0xff]
      %v462 = vld [vmem:[%s1 + $0x528] sm:$0xff]
      %v463 = vld [vmem:[%s1 + $0x530] sm:$0xff]
      %v464 = vld [vmem:[%s1 + $0x538] sm:$0xff]
      %v465 = vld [vmem:[%s1 + $0x540] sm:$0xff]
      %v466 = vld [vmem:[%s1 + $0x548] sm:$0xff]
      %v467 = vld [vmem:[%s1 + $0x550] sm:$0xff]
      %v468 = vld [vmem:[%s1 + $0x558] sm:$0xff]
      %v469 = vld [vmem:[%s1 + $0x560] sm:$0xff]
      %v470 = vld [vmem:[%s1 + $0x568] sm:$0xff]
      %v471 = vld [vmem:[%s1 + $0x570] sm:$0xff]
      %v472 = vld [vmem:[%s1 + $0x578] sm:$0xff]
      %v473 = vld [vmem:[%s1 + $0x580] sm:$0xff]
      %v474 = vld [vmem:[%s1 + $0x588] sm:$0xff]
      %v475 = vld [vmem:[%s1 + $0x590] sm:$0xff]
      %v476 = vld [vmem:[%s1 + $0x598] sm:$0xff]
      %v477 = vld [vmem:[%s1 + $0x5a0] sm:$0xff]
      %v478 = vld [vmem:[%s1 + $0x5a8] sm:$0xff]
      %v479 = vld [vmem:[%s1 + $0x5b0] sm:$0xff]
      %v480 = vld [vmem:[%s1 + $0x5b8] sm:$0xff]
      %v481 = vld [vmem:[%s1 + $0x5c0] sm:$0xff]
      %v482 = vld [vmem:[%s1 + $0x5c8] sm:$0xff]
      %v483 = vld [vmem:[%s1 + $0x5d0] sm:$0xff]
      %v484 = vld [vmem:[%s1 + $0x5d8] sm:$0xff]
      %v485 = vld [vmem:[%s1 + $0x5e0] sm:$0xff]
      %v486 = vld [vmem:[%s1 + $0x5e8] sm:$0xff]
      %v487 = vld [vmem:[%s1 + $0x5f0] sm:$0xff]
      %v488 = vld [vmem:[%s1 + $0x5f8] sm:$0xff]
      %v489 = vld [vmem:[%s1 + $0x600] sm:$0xff]
      %v490 = vld [vmem:[%s1 + $0x608] sm:$0xff]
      %v491 = vld [vmem:[%s1 + $0x610] sm:$0xff]
      %v492 = vld [vmem:[%s1 + $0x618] sm:$0xff]
      %v493 = vld [vmem:[%s1 + $0x620] sm:$0xff]
      %v494 = vld [vmem:[%s1 + $0x628] sm:$0xff]
      %v495 = vld [vmem:[%s1 + $0x630] sm:$0xff]
      %v496 = vld [vmem:[%s1 + $0x638] sm:$0xff]
      %v497 = vld [vmem:[%s1 + $0x640] sm:$0xff]
      %v498 = vld [vmem:[%s1 + $0x648] sm:$0xff]
      %v499 = vld [vmem:[%s1 + $0x650] sm:$0xff]
      %v500 = vld [vmem:[%s1 + $0x658] sm:$0xff]
      %v501 = vld [vmem:[%s1 + $0x660] sm:$0xff]
      %v502 = vld [vmem:[%s1 + $0x668] sm:$0xff]
      %v503 = vld [vmem:[%s1 + $0x670] sm:$0xff]
      %v504 = vld [vmem:[%s1 + $0x678] sm:$0xff]
      %v505 = vld [vmem:[%s1 + $0x680] sm:$0xff]
      %v506 = vld [vmem:[%s1 + $0x688] sm:$0xff]
      %v507 = vld [vmem:[%s1 + $0x690] sm:$0xff]
      %v508 = vld [vmem:[%s1 + $0x698] sm:$0xff]
      %v509 = vld [vmem:[%s1 + $0x6a0] sm:$0xff]
      %v510 = vld [vmem:[%s1 + $0x6a8] sm:$0xff]
      %v511 = vld [vmem:[%s1 + $0x6b0] sm:$0xff]
      %v512 = vld [vmem:[%s1 + $0x6b8] sm:$0xff]
      %v513 = vld [vmem:[%s1 + $0x6c0] sm:$0xff]
      %v514 = vld [vmem:[%s1 + $0x6c8] sm:$0xff]
      %v515 = vld [vmem:[%s1 + $0x6d0] sm:$0xff]
      %v516 = vld [vmem:[%s1 + $0x6d8] sm:$0xff]
      %v517 = vld [vmem:[%s1 + $0x6e0] sm:$0xff]
      %v518 = vld [vmem:[%s1 + $0x6e8] sm:$0xff]
      %v519 = vld [vmem:[%s1 + $0x6f0] sm:$0xff]
      %v520 = vld [vmem:[%s1 + $0x6f8] sm:$0xff]
      %v521 = vld [vmem:[%s1 + $0x700] sm:$0xff]
      %v522 = vld [vmem:[%s1 + $0x708] sm:$0xff]
      %v523 = vld [vmem:[%s1 + $0x710] sm:$0xff]
      %v524 = vld [vmem:[%s1 + $0x718] sm:$0xff]
      %v525 = vld [vmem:[%s1 + $0x720] sm:$0xff]
      %v526 = vld [vmem:[%s1 + $0x728] sm:$0xff]
      %v527 = vld [vmem:[%s1 + $0x730] sm:$0xff]
      %v528 = vld [vmem:[%s1 + $0x738] sm:$0xff]
      %v529 = vld [vmem:[%s1 + $0x740] sm:$0xff]
      %v530 = vld [vmem:[%s1 + $0x748] sm:$0xff]
      %v531 = vld [vmem:[%s1 + $0x750] sm:$0xff]
      %v532 = vld [vmem:[%s1 + $0x758] sm:$0xff]
      %v533 = vld [vmem:[%s1 + $0x760] sm:$0xff]
      %v534 = vld [vmem:[%s1 + $0x768] sm:$0xff]
      %v535 = vld [vmem:[%s1 + $0x770] sm:$0xff]
      %v536 = vld [vmem:[%s1 + $0x778] sm:$0xff]
      %v537 = vld [vmem:[%s1 + $0x780] sm:$0xff]
      %v538 = vld [vmem:[%s1 + $0x788] sm:$0xff]
      %v539 = vld [vmem:[%s1 + $0x790] sm:$0xff]
      %v540 = vld [vmem:[%s1 + $0x798] sm:$0xff]
      %v541 = vld [vmem:[%s1 + $0x7a0] sm:$0xff]
      %v542 = vld [vmem:[%s1 + $0x7a8] sm:$0xff]
      %v543 = vld [vmem:[%s1 + $0x7b0] sm:$0xff]
      %v544 = vld [vmem:[%s1 + $0x7b8] sm:$0xff]
      %v545 = vld [vmem:[%s1 + $0x7c0] sm:$0xff]
      %v546 = vld [vmem:[%s1 + $0x7c8] sm:$0xff]
      %v547 = vld [vmem:[%s1 + $0x7d0] sm:$0xff]
      %v548 = vld [vmem:[%s1 + $0x7d8] sm:$0xff]
      %v549 = vld [vmem:[%s1 + $0x7e0] sm:$0xff]
      %v550 = vld [vmem:[%s1 + $0x7e8] sm:$0xff]
      %v551 = vld [vmem:[%s1 + $0x7f0] sm:$0xff]
      %v552 = vld [vmem:[%s1 + $0x7f8] sm:$0xff]
      %v553 = vld [vmem:[%s1 + $0x800] sm:$0xff]
      %v554 = vld [vmem:[%s1 + $0x808] sm:$0xff]
      %v555 = vld [vmem:[%s1 + $0x810] sm:$0xff]
      %v556 = vld [vmem:[%s1 + $0x818] sm:$0xff]
      %v557 = vld [vmem:[%s1 + $0x820] sm:$0xff]
      %v558 = vld [vmem:[%s1 + $0x828] sm:$0xff]
      %v559 = vld [vmem:[%s1 + $0x830] sm:$0xff]
      %v560 = vld [vmem:[%s1 + $0x838] sm:$0xff]
      %v561 = vld [vmem:[%s1 + $0x840] sm:$0xff]
      %v562 = vld [vmem:[%s1 + $0x848] sm:$0xff]
      %v563 = vld [vmem:[%s1 + $0x850] sm:$0xff]
      %v564 = vld [vmem:[%s1 + $0x858] sm:$0xff]
      %v565 = vld [vmem:[%s1 + $0x860] sm:$0xff]
      %v566 = vld [vmem:[%s1 + $0x868] sm:$0xff]
      %v567 = vld [vmem:[%s1 + $0x870] sm:$0xff]
      %v568 = vld [vmem:[%s1 + $0x878] sm:$0xff]
      %v569 = vld [vmem:[%s1 + $0x880] sm:$0xff]
      %v570 = vld [vmem:[%s1 + $0x888] sm:$0xff]
      %v571 = vld [vmem:[%s1 + $0x890] sm:$0xff]
      %v572 = vld [vmem:[%s1 + $0x898] sm:$0xff]
      %v573 = vld [vmem:[%s1 + $0x8a0] sm:$0xff]
      %v574 = vld [vmem:[%s1 + $0x8a8] sm:$0xff]
      %v575 = vld [vmem:[%s1 + $0x8b0] sm:$0xff]
      %v576 = vld [vmem:[%s1 + $0x8b8] sm:$0xff]
      %v577 = vld [vmem:[%s1 + $0x8c0] sm:$0xff]
      %v578 = vld [vmem:[%s1 + $0x8c8] sm:$0xff]
      %v579 = vld [vmem:[%s1 + $0x8d0] sm:$0xff]
      %v580 = vld [vmem:[%s1 + $0x8d8] sm:$0xff]
      %v581 = vld [vmem:[%s1 + $0x8e0] sm:$0xff]
      %v582 = vld [vmem:[%s1 + $0x8e8] sm:$0xff]
      %v583 = vld [vmem:[%s1 + $0x8f0] sm:$0xff]
      %v584 = vld [vmem:[%s1 + $0x8f8] sm:$0xff]
      %v585 = vld [vmem:[%s2] sm:$0xff]
      %v586 = vld [vmem:[%s2 + $0x8] sm:$0xf]
      %v589 = vperm.slane %v585, 0
      %v590 = vperm.slane %v585, 1
      %v591 = vperm.slane %v585, 2
      %v592 = vperm.slane %v585, 3
      %v593 = vperm.slane %v585, 4
      %v594 = vperm.slane %v585, 5
      %v595 = vperm.slane %v585, 6
      %v596 = vperm.slane %v585, 7
      %v597 = vperm.slane %v586, 0
      %v598 = vperm.slane %v586, 1
      %v599 = vperm.slane %v586, 2
      %v600 = vperm.slane %v586, 3
      %v677 = vunpack.c.l.b16 %v233
      %v678 = vunpack.c.h.b16 %v233
      %v679 = vunpack.c.l.b16 %v234
      %v680 = vunpack.c.l.b16 %v235
      %v681 = vunpack.c.h.b16 %v235
      %v682 = vunpack.c.l.b16 %v236
      %v683 = vunpack.c.l.b16 %v237
      %v684 = vunpack.c.h.b16 %v237
      %v685 = vunpack.c.l.b16 %v238
      %v686 = vunpack.c.l.b16 %v239
      %v687 = vunpack.c.h.b16 %v239
      %v688 = vunpack.c.l.b16 %v240
      %v689 = vunpack.c.l.b16 %v241
      %v690 = vunpack.c.h.b16 %v241
      %v691 = vunpack.c.l.b16 %v242
      %v692 = vunpack.c.l.b16 %v243
      %v693 = vunpack.c.h.b16 %v243
      %v694 = vunpack.c.l.b16 %v244
      %v695 = vunpack.c.l.b16 %v245
      %v696 = vunpack.c.h.b16 %v245
      %v697 = vunpack.c.l.b16 %v246
      %v698 = vunpack.c.l.b16 %v247
      %v699 = vunpack.c.h.b16 %v247
      %v700 = vunpack.c.l.b16 %v248
      %v701 = vunpack.c.l.b16 %v249
      %v702 = vunpack.c.h.b16 %v249
      %v703 = vunpack.c.l.b16 %v250
      %v704 = vunpack.c.l.b16 %v251
      %v705 = vunpack.c.h.b16 %v251
      %v706 = vunpack.c.l.b16 %v252
      %v707 = vunpack.c.l.b16 %v253
      %v708 = vunpack.c.h.b16 %v253
      %v709 = vunpack.c.l.b16 %v254
      %v710 = vunpack.c.l.b16 %v255
      %v711 = vunpack.c.h.b16 %v255
      %v712 = vunpack.c.l.b16 %v256
      %v713 = vunpack.c.l.b16 %v257
      %v714 = vunpack.c.h.b16 %v257
      %v715 = vunpack.c.l.b16 %v258
      %v716 = vunpack.c.l.b16 %v259
      %v717 = vunpack.c.h.b16 %v259
      %v718 = vunpack.c.l.b16 %v260
      %v719 = vunpack.c.l.b16 %v261
      %v720 = vunpack.c.h.b16 %v261
      %v721 = vunpack.c.l.b16 %v262
      %v722 = vunpack.c.l.b16 %v263
      %v723 = vunpack.c.h.b16 %v263
      %v724 = vunpack.c.l.b16 %v264
      %v725 = vunpack.c.l.b16 %v265
      %v726 = vunpack.c.h.b16 %v265
      %v727 = vunpack.c.l.b16 %v266
      %v728 = vunpack.c.l.b16 %v267
      %v729 = vunpack.c.h.b16 %v267
      %v730 = vunpack.c.l.b16 %v268
      %v731 = vunpack.c.l.b16 %v269
      %v732 = vunpack.c.h.b16 %v269
      %v733 = vunpack.c.l.b16 %v270
      %v734 = vunpack.c.l.b16 %v271
      %v735 = vunpack.c.h.b16 %v271
      %v736 = vunpack.c.l.b16 %v272
      %v737 = vunpack.c.l.b16 %v273
      %v738 = vunpack.c.h.b16 %v273
      %v739 = vunpack.c.l.b16 %v274
      %v740 = vunpack.c.l.b16 %v275
      %v741 = vunpack.c.h.b16 %v275
      %v742 = vunpack.c.l.b16 %v276
      %v743 = vunpack.c.l.b16 %v277
      %v744 = vunpack.c.h.b16 %v277
      %v745 = vunpack.c.l.b16 %v278
      %v746 = vunpack.c.l.b16 %v279
      %v747 = vunpack.c.h.b16 %v279
      %v748 = vunpack.c.l.b16 %v280
      %v749 = vunpack.c.l.b16 %v281
      %v750 = vunpack.c.h.b16 %v281
      %v751 = vunpack.c.l.b16 %v282
      %v752 = vunpack.c.l.b16 %v283
      %v753 = vunpack.c.h.b16 %v283
      %v754 = vunpack.c.l.b16 %v284
      %v755 = vunpack.c.l.b16 %v285
      %v756 = vunpack.c.h.b16 %v285
      %v757 = vunpack.c.l.b16 %v286
      %v758 = vunpack.c.l.b16 %v287
      %v759 = vunpack.c.h.b16 %v287
      %v760 = vunpack.c.l.b16 %v288
      %v761 = vunpack.c.l.b16 %v289
      %v762 = vunpack.c.h.b16 %v289
      %v763 = vunpack.c.l.b16 %v290
      %v764 = vunpack.c.l.b16 %v291
      %v765 = vunpack.c.h.b16 %v291
      %v766 = vunpack.c.l.b16 %v292
      %v767 = vunpack.c.l.b16 %v293
      %v768 = vunpack.c.h.b16 %v293
      %v769 = vunpack.c.l.b16 %v294
      %v770 = vunpack.c.l.b16 %v295
      %v771 = vunpack.c.h.b16 %v295
      %v772 = vunpack.c.l.b16 %v296
      %v773 = vpack.c.b16 %v680, %v677
      %v774 = vpack.c.b16 %v681, %v678
      %v775 = vpack.c.b16 %v682, %v679
      %v776 = vpack.c.b16 %v686, %v683
      %v777 = vpack.c.b16 %v687, %v684
      %v778 = vpack.c.b16 %v688, %v685
      %v779 = vpack.c.b16 %v692, %v689
      %v780 = vpack.c.b16 %v693, %v690
      %v781 = vpack.c.b16 %v694, %v691
      %v782 = vpack.c.b16 %v698, %v695
      %v783 = vpack.c.b16 %v699, %v696
      %v784 = vpack.c.b16 %v700, %v697
      %v785 = vpack.c.b16 %v704, %v701
      %v786 = vpack.c.b16 %v705, %v702
      %v787 = vpack.c.b16 %v706, %v703
      %v788 = vpack.c.b16 %v710, %v707
      %v789 = vpack.c.b16 %v711, %v708
      %v790 = vpack.c.b16 %v712, %v709
      %v791 = vpack.c.b16 %v716, %v713
      %v792 = vpack.c.b16 %v717, %v714
      %v793 = vpack.c.b16 %v718, %v715
      %v794 = vpack.c.b16 %v722, %v719
      %v795 = vpack.c.b16 %v723, %v720
      %v796 = vpack.c.b16 %v724, %v721
      %v797 = vpack.c.b16 %v728, %v725
      %v798 = vpack.c.b16 %v729, %v726
      %v799 = vpack.c.b16 %v730, %v727
      %v800 = vpack.c.b16 %v734, %v731
      %v801 = vpack.c.b16 %v735, %v732
      %v802 = vpack.c.b16 %v736, %v733
      %v803 = vpack.c.b16 %v740, %v737
      %v804 = vpack.c.b16 %v741, %v738
      %v805 = vpack.c.b16 %v742, %v739
      %v806 = vpack.c.b16 %v746, %v743
      %v807 = vpack.c.b16 %v747, %v744
      %v808 = vpack.c.b16 %v748, %v745
      %v809 = vpack.c.b16 %v752, %v749
      %v810 = vpack.c.b16 %v753, %v750
      %v811 = vpack.c.b16 %v754, %v751
      %v812 = vpack.c.b16 %v758, %v755
      %v813 = vpack.c.b16 %v759, %v756
      %v814 = vpack.c.b16 %v760, %v757
      %v815 = vpack.c.b16 %v764, %v761
      %v816 = vpack.c.b16 %v765, %v762
      %v817 = vpack.c.b16 %v766, %v763
      %v818 = vpack.c.b16 %v770, %v767
      %v819 = vpack.c.b16 %v771, %v768
      %v820 = vpack.c.b16 %v772, %v769
      %v1157 = vunpack.c.l.b16 %v297
      %v1158 = vunpack.c.h.b16 %v297
      %v1159 = vunpack.c.l.b16 %v298
      %v1160 = vunpack.c.h.b16 %v298
      %v1161 = vunpack.c.l.b16 %v299
      %v1162 = vunpack.c.h.b16 %v299
      %v1163 = vunpack.c.l.b16 %v300
      %v1164 = vunpack.c.h.b16 %v300
      %v1165 = vunpack.c.l.b16 %v301
      %v1166 = vunpack.c.h.b16 %v301
      %v1167 = vunpack.c.l.b16 %v302
      %v1168 = vunpack.c.h.b16 %v302
      %v1169 = vunpack.c.l.b16 %v303
      %v1170 = vunpack.c.h.b16 %v303
      %v1171 = vunpack.c.l.b16 %v304
      %v1172 = vunpack.c.h.b16 %v304
      %v1173 = vunpack.c.l.b16 %v305
      %v1174 = vunpack.c.h.b16 %v305
      %v1175 = vunpack.c.l.b16 %v306
      %v1176 = vunpack.c.h.b16 %v306
      %v1177 = vunpack.c.l.b16 %v307
      %v1178 = vunpack.c.h.b16 %v307
      %v1179 = vunpack.c.l.b16 %v308
      %v1180 = vunpack.c.h.b16 %v308
      %v1181 = vunpack.c.l.b16 %v309
      %v1182 = vunpack.c.h.b16 %v309
      %v1183 = vunpack.c.l.b16 %v310
      %v1184 = vunpack.c.h.b16 %v310
      %v1185 = vunpack.c.l.b16 %v311
      %v1186 = vunpack.c.h.b16 %v311
      %v1187 = vunpack.c.l.b16 %v312
      %v1188 = vunpack.c.h.b16 %v312
      %v1189 = vunpack.c.l.b16 %v313
      %v1190 = vunpack.c.h.b16 %v313
      %v1191 = vunpack.c.l.b16 %v314
      %v1192 = vunpack.c.h.b16 %v314
      %v1193 = vunpack.c.l.b16 %v315
      %v1194 = vunpack.c.h.b16 %v315
      %v1195 = vunpack.c.l.b16 %v316
      %v1196 = vunpack.c.h.b16 %v316
      %v1197 = vunpack.c.l.b16 %v317
      %v1198 = vunpack.c.h.b16 %v317
      %v1199 = vunpack.c.l.b16 %v318
      %v1200 = vunpack.c.h.b16 %v318
      %v1201 = vunpack.c.l.b16 %v319
      %v1202 = vunpack.c.h.b16 %v319
      %v1203 = vunpack.c.l.b16 %v320
      %v1204 = vunpack.c.h.b16 %v320
      %v1205 = vunpack.c.l.b16 %v321
      %v1206 = vunpack.c.h.b16 %v321
      %v1207 = vunpack.c.l.b16 %v322
      %v1208 = vunpack.c.h.b16 %v322
      %v1209 = vunpack.c.l.b16 %v323
      %v1210 = vunpack.c.h.b16 %v323
      %v1211 = vunpack.c.l.b16 %v324
      %v1212 = vunpack.c.h.b16 %v324
      %v1213 = vunpack.c.l.b16 %v325
      %v1214 = vunpack.c.h.b16 %v325
      %v1215 = vunpack.c.l.b16 %v326
      %v1216 = vunpack.c.h.b16 %v326
      %v1217 = vunpack.c.l.b16 %v327
      %v1218 = vunpack.c.h.b16 %v327
      %v1219 = vunpack.c.l.b16 %v328
      %v1220 = vunpack.c.h.b16 %v328
      %v1221 = vunpack.c.l.b16 %v329
      %v1222 = vunpack.c.h.b16 %v329
      %v1223 = vunpack.c.l.b16 %v330
      %v1224 = vunpack.c.h.b16 %v330
      %v1225 = vunpack.c.l.b16 %v331
      %v1226 = vunpack.c.h.b16 %v331
      %v1227 = vunpack.c.l.b16 %v332
      %v1228 = vunpack.c.h.b16 %v332
      %v1229 = vunpack.c.l.b16 %v333
      %v1230 = vunpack.c.h.b16 %v333
      %v1231 = vunpack.c.l.b16 %v334
      %v1232 = vunpack.c.h.b16 %v334
      %v1233 = vunpack.c.l.b16 %v335
      %v1234 = vunpack.c.h.b16 %v335
      %v1235 = vunpack.c.l.b16 %v336
      %v1236 = vunpack.c.h.b16 %v336
      %v1237 = vunpack.c.l.b16 %v337
      %v1238 = vunpack.c.h.b16 %v337
      %v1239 = vunpack.c.l.b16 %v338
      %v1240 = vunpack.c.h.b16 %v338
      %v1241 = vunpack.c.l.b16 %v339
      %v1242 = vunpack.c.h.b16 %v339
      %v1243 = vunpack.c.l.b16 %v340
      %v1244 = vunpack.c.h.b16 %v340
      %v1245 = vunpack.c.l.b16 %v341
      %v1246 = vunpack.c.h.b16 %v341
      %v1247 = vunpack.c.l.b16 %v342
      %v1248 = vunpack.c.h.b16 %v342
      %v1249 = vunpack.c.l.b16 %v343
      %v1250 = vunpack.c.h.b16 %v343
      %v1251 = vunpack.c.l.b16 %v344
      %v1252 = vunpack.c.h.b16 %v344
      %v1253 = vunpack.c.l.b16 %v345
      %v1254 = vunpack.c.h.b16 %v345
      %v1255 = vunpack.c.l.b16 %v346
      %v1256 = vunpack.c.h.b16 %v346
      %v1257 = vunpack.c.l.b16 %v347
      %v1258 = vunpack.c.h.b16 %v347
      %v1259 = vunpack.c.l.b16 %v348
      %v1260 = vunpack.c.h.b16 %v348
      %v1261 = vunpack.c.l.b16 %v349
      %v1262 = vunpack.c.h.b16 %v349
      %v1263 = vunpack.c.l.b16 %v350
      %v1264 = vunpack.c.h.b16 %v350
      %v1265 = vunpack.c.l.b16 %v351
      %v1266 = vunpack.c.h.b16 %v351
      %v1267 = vunpack.c.l.b16 %v352
      %v1268 = vunpack.c.h.b16 %v352
      %v1269 = vunpack.c.l.b16 %v353
      %v1270 = vunpack.c.h.b16 %v353
      %v1271 = vunpack.c.l.b16 %v354
      %v1272 = vunpack.c.h.b16 %v354
      %v1273 = vunpack.c.l.b16 %v355
      %v1274 = vunpack.c.h.b16 %v355
      %v1275 = vunpack.c.l.b16 %v356
      %v1276 = vunpack.c.h.b16 %v356
      %v1277 = vunpack.c.l.b16 %v357
      %v1278 = vunpack.c.h.b16 %v357
      %v1279 = vunpack.c.l.b16 %v358
      %v1280 = vunpack.c.h.b16 %v358
      %v1281 = vunpack.c.l.b16 %v359
      %v1282 = vunpack.c.h.b16 %v359
      %v1283 = vunpack.c.l.b16 %v360
      %v1284 = vunpack.c.h.b16 %v360
      %v1285 = vunpack.c.l.b16 %v361
      %v1286 = vunpack.c.h.b16 %v361
      %v1287 = vunpack.c.l.b16 %v362
      %v1288 = vunpack.c.h.b16 %v362
      %v1289 = vunpack.c.l.b16 %v363
      %v1290 = vunpack.c.h.b16 %v363
      %v1291 = vunpack.c.l.b16 %v364
      %v1292 = vunpack.c.h.b16 %v364
      %v1293 = vunpack.c.l.b16 %v365
      %v1294 = vunpack.c.h.b16 %v365
      %v1295 = vunpack.c.l.b16 %v366
      %v1296 = vunpack.c.h.b16 %v366
      %v1297 = vunpack.c.l.b16 %v367
      %v1298 = vunpack.c.h.b16 %v367
      %v1299 = vunpack.c.l.b16 %v368
      %v1300 = vunpack.c.h.b16 %v368
      %v1301 = vunpack.c.l.b16 %v369
      %v1302 = vunpack.c.h.b16 %v369
      %v1303 = vunpack.c.l.b16 %v370
      %v1304 = vunpack.c.h.b16 %v370
      %v1305 = vunpack.c.l.b16 %v371
      %v1306 = vunpack.c.h.b16 %v371
      %v1307 = vunpack.c.l.b16 %v372
      %v1308 = vunpack.c.h.b16 %v372
      %v1309 = vunpack.c.l.b16 %v373
      %v1310 = vunpack.c.h.b16 %v373
      %v1311 = vunpack.c.l.b16 %v374
      %v1312 = vunpack.c.h.b16 %v374
      %v1313 = vunpack.c.l.b16 %v375
      %v1314 = vunpack.c.h.b16 %v375
      %v1315 = vunpack.c.l.b16 %v376
      %v1316 = vunpack.c.h.b16 %v376
      %v1317 = vunpack.c.l.b16 %v377
      %v1318 = vunpack.c.h.b16 %v377
      %v1319 = vunpack.c.l.b16 %v378
      %v1320 = vunpack.c.h.b16 %v378
      %v1321 = vunpack.c.l.b16 %v379
      %v1322 = vunpack.c.h.b16 %v379
      %v1323 = vunpack.c.l.b16 %v380
      %v1324 = vunpack.c.h.b16 %v380
      %v1325 = vunpack.c.l.b16 %v381
      %v1326 = vunpack.c.h.b16 %v381
      %v1327 = vunpack.c.l.b16 %v382
      %v1328 = vunpack.c.h.b16 %v382
      %v1329 = vunpack.c.l.b16 %v383
      %v1330 = vunpack.c.h.b16 %v383
      %v1331 = vunpack.c.l.b16 %v384
      %v1332 = vunpack.c.h.b16 %v384
      %v1333 = vunpack.c.l.b16 %v385
      %v1334 = vunpack.c.h.b16 %v385
      %v1335 = vunpack.c.l.b16 %v386
      %v1336 = vunpack.c.h.b16 %v386
      %v1337 = vunpack.c.l.b16 %v387
      %v1338 = vunpack.c.h.b16 %v387
      %v1339 = vunpack.c.l.b16 %v388
      %v1340 = vunpack.c.h.b16 %v388
      %v1341 = vunpack.c.l.b16 %v389
      %v1342 = vunpack.c.h.b16 %v389
      %v1343 = vunpack.c.l.b16 %v390
      %v1344 = vunpack.c.h.b16 %v390
      %v1345 = vunpack.c.l.b16 %v391
      %v1346 = vunpack.c.h.b16 %v391
      %v1347 = vunpack.c.l.b16 %v392
      %v1348 = vunpack.c.h.b16 %v392
      %v1349 = vunpack.c.l.b16 %v393
      %v1350 = vunpack.c.h.b16 %v393
      %v1351 = vunpack.c.l.b16 %v394
      %v1352 = vunpack.c.h.b16 %v394
      %v1353 = vunpack.c.l.b16 %v395
      %v1354 = vunpack.c.h.b16 %v395
      %v1355 = vunpack.c.l.b16 %v396
      %v1356 = vunpack.c.h.b16 %v396
      %v1357 = vunpack.c.l.b16 %v397
      %v1358 = vunpack.c.h.b16 %v397
      %v1359 = vunpack.c.l.b16 %v398
      %v1360 = vunpack.c.h.b16 %v398
      %v1361 = vunpack.c.l.b16 %v399
      %v1362 = vunpack.c.h.b16 %v399
      %v1363 = vunpack.c.l.b16 %v400
      %v1364 = vunpack.c.h.b16 %v400
      %v1365 = vunpack.c.l.b16 %v401
      %v1366 = vunpack.c.h.b16 %v401
      %v1367 = vunpack.c.l.b16 %v402
      %v1368 = vunpack.c.h.b16 %v402
      %v1369 = vunpack.c.l.b16 %v403
      %v1370 = vunpack.c.h.b16 %v403
      %v1371 = vunpack.c.l.b16 %v404
      %v1372 = vunpack.c.h.b16 %v404
      %v1373 = vunpack.c.l.b16 %v405
      %v1374 = vunpack.c.h.b16 %v405
      %v1375 = vunpack.c.l.b16 %v406
      %v1376 = vunpack.c.h.b16 %v406
      %v1377 = vunpack.c.l.b16 %v407
      %v1378 = vunpack.c.h.b16 %v407
      %v1379 = vunpack.c.l.b16 %v408
      %v1380 = vunpack.c.h.b16 %v408
      %v1381 = vunpack.c.l.b16 %v409
      %v1382 = vunpack.c.h.b16 %v409
      %v1383 = vunpack.c.l.b16 %v410
      %v1384 = vunpack.c.h.b16 %v410
      %v1385 = vunpack.c.l.b16 %v411
      %v1386 = vunpack.c.h.b16 %v411
      %v1387 = vunpack.c.l.b16 %v412
      %v1388 = vunpack.c.h.b16 %v412
      %v1389 = vunpack.c.l.b16 %v413
      %v1390 = vunpack.c.h.b16 %v413
      %v1391 = vunpack.c.l.b16 %v414
      %v1392 = vunpack.c.h.b16 %v414
      %v1393 = vunpack.c.l.b16 %v415
      %v1394 = vunpack.c.h.b16 %v415
      %v1395 = vunpack.c.l.b16 %v416
      %v1396 = vunpack.c.h.b16 %v416
      %v1397 = vunpack.c.l.b16 %v417
      %v1398 = vunpack.c.h.b16 %v417
      %v1399 = vunpack.c.l.b16 %v418
      %v1400 = vunpack.c.h.b16 %v418
      %v1401 = vunpack.c.l.b16 %v419
      %v1402 = vunpack.c.h.b16 %v419
      %v1403 = vunpack.c.l.b16 %v420
      %v1404 = vunpack.c.h.b16 %v420
      %v1405 = vunpack.c.l.b16 %v421
      %v1406 = vunpack.c.h.b16 %v421
      %v1407 = vunpack.c.l.b16 %v422
      %v1408 = vunpack.c.h.b16 %v422
      %v1409 = vunpack.c.l.b16 %v423
      %v1410 = vunpack.c.h.b16 %v423
      %v1411 = vunpack.c.l.b16 %v424
      %v1412 = vunpack.c.h.b16 %v424
      %v1413 = vunpack.c.l.b16 %v425
      %v1414 = vunpack.c.h.b16 %v425
      %v1415 = vunpack.c.l.b16 %v426
      %v1416 = vunpack.c.h.b16 %v426
      %v1417 = vunpack.c.l.b16 %v427
      %v1418 = vunpack.c.h.b16 %v427
      %v1419 = vunpack.c.l.b16 %v428
      %v1420 = vunpack.c.h.b16 %v428
      %v1421 = vunpack.c.l.b16 %v429
      %v1422 = vunpack.c.h.b16 %v429
      %v1423 = vunpack.c.l.b16 %v430
      %v1424 = vunpack.c.h.b16 %v430
      %v1425 = vunpack.c.l.b16 %v431
      %v1426 = vunpack.c.h.b16 %v431
      %v1427 = vunpack.c.l.b16 %v432
      %v1428 = vunpack.c.h.b16 %v432
      %v1429 = vunpack.c.l.b16 %v433
      %v1430 = vunpack.c.h.b16 %v433
      %v1431 = vunpack.c.l.b16 %v434
      %v1432 = vunpack.c.h.b16 %v434
      %v1433 = vunpack.c.l.b16 %v435
      %v1434 = vunpack.c.h.b16 %v435
      %v1435 = vunpack.c.l.b16 %v436
      %v1436 = vunpack.c.h.b16 %v436
      %v1437 = vunpack.c.l.b16 %v437
      %v1438 = vunpack.c.h.b16 %v437
      %v1439 = vunpack.c.l.b16 %v438
      %v1440 = vunpack.c.h.b16 %v438
      %v1441 = vunpack.c.l.b16 %v439
      %v1442 = vunpack.c.h.b16 %v439
      %v1443 = vunpack.c.l.b16 %v440
      %v1444 = vunpack.c.h.b16 %v440
      %v1445 = vunpack.c.l.b16 %v441
      %v1446 = vunpack.c.h.b16 %v441
      %v1447 = vunpack.c.l.b16 %v442
      %v1448 = vunpack.c.h.b16 %v442
      %v1449 = vunpack.c.l.b16 %v443
      %v1450 = vunpack.c.h.b16 %v443
      %v1451 = vunpack.c.l.b16 %v444
      %v1452 = vunpack.c.h.b16 %v444
      %v1453 = vunpack.c.l.b16 %v445
      %v1454 = vunpack.c.h.b16 %v445
      %v1455 = vunpack.c.l.b16 %v446
      %v1456 = vunpack.c.h.b16 %v446
      %v1457 = vunpack.c.l.b16 %v447
      %v1458 = vunpack.c.h.b16 %v447
      %v1459 = vunpack.c.l.b16 %v448
      %v1460 = vunpack.c.h.b16 %v448
      %v1461 = vunpack.c.l.b16 %v449
      %v1462 = vunpack.c.h.b16 %v449
      %v1463 = vunpack.c.l.b16 %v450
      %v1464 = vunpack.c.h.b16 %v450
      %v1465 = vunpack.c.l.b16 %v451
      %v1466 = vunpack.c.h.b16 %v451
      %v1467 = vunpack.c.l.b16 %v452
      %v1468 = vunpack.c.h.b16 %v452
      %v1469 = vunpack.c.l.b16 %v453
      %v1470 = vunpack.c.h.b16 %v453
      %v1471 = vunpack.c.l.b16 %v454
      %v1472 = vunpack.c.h.b16 %v454
      %v1473 = vunpack.c.l.b16 %v455
      %v1474 = vunpack.c.h.b16 %v455
      %v1475 = vunpack.c.l.b16 %v456
      %v1476 = vunpack.c.h.b16 %v456
      %v1477 = vunpack.c.l.b16 %v457
      %v1478 = vunpack.c.h.b16 %v457
      %v1479 = vunpack.c.l.b16 %v458
      %v1480 = vunpack.c.h.b16 %v458
      %v1481 = vunpack.c.l.b16 %v459
      %v1482 = vunpack.c.h.b16 %v459
      %v1483 = vunpack.c.l.b16 %v460
      %v1484 = vunpack.c.h.b16 %v460
      %v1485 = vunpack.c.l.b16 %v461
      %v1486 = vunpack.c.h.b16 %v461
      %v1487 = vunpack.c.l.b16 %v462
      %v1488 = vunpack.c.h.b16 %v462
      %v1489 = vunpack.c.l.b16 %v463
      %v1490 = vunpack.c.h.b16 %v463
      %v1491 = vunpack.c.l.b16 %v464
      %v1492 = vunpack.c.h.b16 %v464
      %v1493 = vunpack.c.l.b16 %v465
      %v1494 = vunpack.c.h.b16 %v465
      %v1495 = vunpack.c.l.b16 %v466
      %v1496 = vunpack.c.h.b16 %v466
      %v1497 = vunpack.c.l.b16 %v467
      %v1498 = vunpack.c.h.b16 %v467
      %v1499 = vunpack.c.l.b16 %v468
      %v1500 = vunpack.c.h.b16 %v468
      %v1501 = vunpack.c.l.b16 %v469
      %v1502 = vunpack.c.h.b16 %v469
      %v1503 = vunpack.c.l.b16 %v470
      %v1504 = vunpack.c.h.b16 %v470
      %v1505 = vunpack.c.l.b16 %v471
      %v1506 = vunpack.c.h.b16 %v471
      %v1507 = vunpack.c.l.b16 %v472
      %v1508 = vunpack.c.h.b16 %v472
      %v1509 = vunpack.c.l.b16 %v473
      %v1510 = vunpack.c.h.b16 %v473
      %v1511 = vunpack.c.l.b16 %v474
      %v1512 = vunpack.c.h.b16 %v474
      %v1513 = vunpack.c.l.b16 %v475
      %v1514 = vunpack.c.h.b16 %v475
      %v1515 = vunpack.c.l.b16 %v476
      %v1516 = vunpack.c.h.b16 %v476
      %v1517 = vunpack.c.l.b16 %v477
      %v1518 = vunpack.c.h.b16 %v477
      %v1519 = vunpack.c.l.b16 %v478
      %v1520 = vunpack.c.h.b16 %v478
      %v1521 = vunpack.c.l.b16 %v479
      %v1522 = vunpack.c.h.b16 %v479
      %v1523 = vunpack.c.l.b16 %v480
      %v1524 = vunpack.c.h.b16 %v480
      %v1525 = vunpack.c.l.b16 %v481
      %v1526 = vunpack.c.h.b16 %v481
      %v1527 = vunpack.c.l.b16 %v482
      %v1528 = vunpack.c.h.b16 %v482
      %v1529 = vunpack.c.l.b16 %v483
      %v1530 = vunpack.c.h.b16 %v483
      %v1531 = vunpack.c.l.b16 %v484
      %v1532 = vunpack.c.h.b16 %v484
      %v1533 = vunpack.c.l.b16 %v485
      %v1534 = vunpack.c.h.b16 %v485
      %v1535 = vunpack.c.l.b16 %v486
      %v1536 = vunpack.c.h.b16 %v486
      %v1537 = vunpack.c.l.b16 %v487
      %v1538 = vunpack.c.h.b16 %v487
      %v1539 = vunpack.c.l.b16 %v488
      %v1540 = vunpack.c.h.b16 %v488
      %v1541 = vunpack.c.l.b16 %v489
      %v1542 = vunpack.c.h.b16 %v489
      %v1543 = vunpack.c.l.b16 %v490
      %v1544 = vunpack.c.h.b16 %v490
      %v1545 = vunpack.c.l.b16 %v491
      %v1546 = vunpack.c.h.b16 %v491
      %v1547 = vunpack.c.l.b16 %v492
      %v1548 = vunpack.c.h.b16 %v492
      %v1549 = vunpack.c.l.b16 %v493
      %v1550 = vunpack.c.h.b16 %v493
      %v1551 = vunpack.c.l.b16 %v494
      %v1552 = vunpack.c.h.b16 %v494
      %v1553 = vunpack.c.l.b16 %v495
      %v1554 = vunpack.c.h.b16 %v495
      %v1555 = vunpack.c.l.b16 %v496
      %v1556 = vunpack.c.h.b16 %v496
      %v1557 = vunpack.c.l.b16 %v497
      %v1558 = vunpack.c.h.b16 %v497
      %v1559 = vunpack.c.l.b16 %v498
      %v1560 = vunpack.c.h.b16 %v498
      %v1561 = vunpack.c.l.b16 %v499
      %v1562 = vunpack.c.h.b16 %v499
      %v1563 = vunpack.c.l.b16 %v500
      %v1564 = vunpack.c.h.b16 %v500
      %v1565 = vunpack.c.l.b16 %v501
      %v1566 = vunpack.c.h.b16 %v501
      %v1567 = vunpack.c.l.b16 %v502
      %v1568 = vunpack.c.h.b16 %v502
      %v1569 = vunpack.c.l.b16 %v503
      %v1570 = vunpack.c.h.b16 %v503
      %v1571 = vunpack.c.l.b16 %v504
      %v1572 = vunpack.c.h.b16 %v504
      %v1573 = vunpack.c.l.b16 %v505
      %v1574 = vunpack.c.h.b16 %v505
      %v1575 = vunpack.c.l.b16 %v506
      %v1576 = vunpack.c.h.b16 %v506
      %v1577 = vunpack.c.l.b16 %v507
      %v1578 = vunpack.c.h.b16 %v507
      %v1579 = vunpack.c.l.b16 %v508
      %v1580 = vunpack.c.h.b16 %v508
      %v1581 = vunpack.c.l.b16 %v509
      %v1582 = vunpack.c.h.b16 %v509
      %v1583 = vunpack.c.l.b16 %v510
      %v1584 = vunpack.c.h.b16 %v510
      %v1585 = vunpack.c.l.b16 %v511
      %v1586 = vunpack.c.h.b16 %v511
      %v1587 = vunpack.c.l.b16 %v512
      %v1588 = vunpack.c.h.b16 %v512
      %v1589 = vunpack.c.l.b16 %v513
      %v1590 = vunpack.c.h.b16 %v513
      %v1591 = vunpack.c.l.b16 %v514
      %v1592 = vunpack.c.h.b16 %v514
      %v1593 = vunpack.c.l.b16 %v515
      %v1594 = vunpack.c.h.b16 %v515
      %v1595 = vunpack.c.l.b16 %v516
      %v1596 = vunpack.c.h.b16 %v516
      %v1597 = vunpack.c.l.b16 %v517
      %v1598 = vunpack.c.h.b16 %v517
      %v1599 = vunpack.c.l.b16 %v518
      %v1600 = vunpack.c.h.b16 %v518
      %v1601 = vunpack.c.l.b16 %v519
      %v1602 = vunpack.c.h.b16 %v519
      %v1603 = vunpack.c.l.b16 %v520
      %v1604 = vunpack.c.h.b16 %v520
      %v1605 = vunpack.c.l.b16 %v521
      %v1606 = vunpack.c.h.b16 %v521
      %v1607 = vunpack.c.l.b16 %v522
      %v1608 = vunpack.c.h.b16 %v522
      %v1609 = vunpack.c.l.b16 %v523
      %v1610 = vunpack.c.h.b16 %v523
      %v1611 = vunpack.c.l.b16 %v524
      %v1612 = vunpack.c.h.b16 %v524
      %v1613 = vunpack.c.l.b16 %v525
      %v1614 = vunpack.c.h.b16 %v525
      %v1615 = vunpack.c.l.b16 %v526
      %v1616 = vunpack.c.h.b16 %v526
      %v1617 = vunpack.c.l.b16 %v527
      %v1618 = vunpack.c.h.b16 %v527
      %v1619 = vunpack.c.l.b16 %v528
      %v1620 = vunpack.c.h.b16 %v528
      %v1621 = vunpack.c.l.b16 %v529
      %v1622 = vunpack.c.h.b16 %v529
      %v1623 = vunpack.c.l.b16 %v530
      %v1624 = vunpack.c.h.b16 %v530
      %v1625 = vunpack.c.l.b16 %v531
      %v1626 = vunpack.c.h.b16 %v531
      %v1627 = vunpack.c.l.b16 %v532
      %v1628 = vunpack.c.h.b16 %v532
      %v1629 = vunpack.c.l.b16 %v533
      %v1630 = vunpack.c.h.b16 %v533
      %v1631 = vunpack.c.l.b16 %v534
      %v1632 = vunpack.c.h.b16 %v534
      %v1633 = vunpack.c.l.b16 %v535
      %v1634 = vunpack.c.h.b16 %v535
      %v1635 = vunpack.c.l.b16 %v536
      %v1636 = vunpack.c.h.b16 %v536
      %v1637 = vunpack.c.l.b16 %v537
      %v1638 = vunpack.c.h.b16 %v537
      %v1639 = vunpack.c.l.b16 %v538
      %v1640 = vunpack.c.h.b16 %v538
      %v1641 = vunpack.c.l.b16 %v539
      %v1642 = vunpack.c.h.b16 %v539
      %v1643 = vunpack.c.l.b16 %v540
      %v1644 = vunpack.c.h.b16 %v540
      %v1645 = vunpack.c.l.b16 %v541
      %v1646 = vunpack.c.h.b16 %v541
      %v1647 = vunpack.c.l.b16 %v542
      %v1648 = vunpack.c.h.b16 %v542
      %v1649 = vunpack.c.l.b16 %v543
      %v1650 = vunpack.c.h.b16 %v543
      %v1651 = vunpack.c.l.b16 %v544
      %v1652 = vunpack.c.h.b16 %v544
      %v1653 = vunpack.c.l.b16 %v545
      %v1654 = vunpack.c.h.b16 %v545
      %v1655 = vunpack.c.l.b16 %v546
      %v1656 = vunpack.c.h.b16 %v546
      %v1657 = vunpack.c.l.b16 %v547
      %v1658 = vunpack.c.h.b16 %v547
      %v1659 = vunpack.c.l.b16 %v548
      %v1660 = vunpack.c.h.b16 %v548
      %v1661 = vunpack.c.l.b16 %v549
      %v1662 = vunpack.c.h.b16 %v549
      %v1663 = vunpack.c.l.b16 %v550
      %v1664 = vunpack.c.h.b16 %v550
      %v1665 = vunpack.c.l.b16 %v551
      %v1666 = vunpack.c.h.b16 %v551
      %v1667 = vunpack.c.l.b16 %v552
      %v1668 = vunpack.c.h.b16 %v552
      %v1669 = vunpack.c.l.b16 %v553
      %v1670 = vunpack.c.h.b16 %v553
      %v1671 = vunpack.c.l.b16 %v554
      %v1672 = vunpack.c.h.b16 %v554
      %v1673 = vunpack.c.l.b16 %v555
      %v1674 = vunpack.c.h.b16 %v555
      %v1675 = vunpack.c.l.b16 %v556
      %v1676 = vunpack.c.h.b16 %v556
      %v1677 = vunpack.c.l.b16 %v557
      %v1678 = vunpack.c.h.b16 %v557
      %v1679 = vunpack.c.l.b16 %v558
      %v1680 = vunpack.c.h.b16 %v558
      %v1681 = vunpack.c.l.b16 %v559
      %v1682 = vunpack.c.h.b16 %v559
      %v1683 = vunpack.c.l.b16 %v560
      %v1684 = vunpack.c.h.b16 %v560
      %v1685 = vunpack.c.l.b16 %v561
      %v1686 = vunpack.c.h.b16 %v561
      %v1687 = vunpack.c.l.b16 %v562
      %v1688 = vunpack.c.h.b16 %v562
      %v1689 = vunpack.c.l.b16 %v563
      %v1690 = vunpack.c.h.b16 %v563
      %v1691 = vunpack.c.l.b16 %v564
      %v1692 = vunpack.c.h.b16 %v564
      %v1693 = vunpack.c.l.b16 %v565
      %v1694 = vunpack.c.h.b16 %v565
      %v1695 = vunpack.c.l.b16 %v566
      %v1696 = vunpack.c.h.b16 %v566
      %v1697 = vunpack.c.l.b16 %v567
      %v1698 = vunpack.c.h.b16 %v567
      %v1699 = vunpack.c.l.b16 %v568
      %v1700 = vunpack.c.h.b16 %v568
      %v1701 = vunpack.c.l.b16 %v569
      %v1702 = vunpack.c.h.b16 %v569
      %v1703 = vunpack.c.l.b16 %v570
      %v1704 = vunpack.c.h.b16 %v570
      %v1705 = vunpack.c.l.b16 %v571
      %v1706 = vunpack.c.h.b16 %v571
      %v1707 = vunpack.c.l.b16 %v572
      %v1708 = vunpack.c.h.b16 %v572
      %v1709 = vunpack.c.l.b16 %v573
      %v1710 = vunpack.c.h.b16 %v573
      %v1711 = vunpack.c.l.b16 %v574
      %v1712 = vunpack.c.h.b16 %v574
      %v1713 = vunpack.c.l.b16 %v575
      %v1714 = vunpack.c.h.b16 %v575
      %v1715 = vunpack.c.l.b16 %v576
      %v1716 = vunpack.c.h.b16 %v576
      %v1717 = vunpack.c.l.b16 %v577
      %v1718 = vunpack.c.h.b16 %v577
      %v1719 = vunpack.c.l.b16 %v578
      %v1720 = vunpack.c.h.b16 %v578
      %v1721 = vunpack.c.l.b16 %v579
      %v1722 = vunpack.c.h.b16 %v579
      %v1723 = vunpack.c.l.b16 %v580
      %v1724 = vunpack.c.h.b16 %v580
      %v1725 = vunpack.c.l.b16 %v581
      %v1726 = vunpack.c.h.b16 %v581
      %v1727 = vunpack.c.l.b16 %v582
      %v1728 = vunpack.c.h.b16 %v582
      %v1729 = vunpack.c.l.b16 %v583
      %v1730 = vunpack.c.h.b16 %v583
      %v1731 = vunpack.c.l.b16 %v584
      %v1732 = vunpack.c.h.b16 %v584
      %v1733 = vpack.c.b16 %v1169, %v1157
      %v1734 = vpack.c.b16 %v1170, %v1158
      %v1735 = vpack.c.b16 %v1171, %v1159
      %v1736 = vpack.c.b16 %v1172, %v1160
      %v1737 = vpack.c.b16 %v1173, %v1161
      %v1738 = vpack.c.b16 %v1174, %v1162
      %v1739 = vpack.c.b16 %v1175, %v1163
      %v1740 = vpack.c.b16 %v1176, %v1164
      %v1741 = vpack.c.b16 %v1177, %v1165
      %v1742 = vpack.c.b16 %v1178, %v1166
      %v1743 = vpack.c.b16 %v1179, %v1167
      %v1744 = vpack.c.b16 %v1180, %v1168
      %v1745 = vpack.c.b16 %v1193, %v1181
      %v1746 = vpack.c.b16 %v1194, %v1182
      %v1747 = vpack.c.b16 %v1195, %v1183
      %v1748 = vpack.c.b16 %v1196, %v1184
      %v1749 = vpack.c.b16 %v1197, %v1185
      %v1750 = vpack.c.b16 %v1198, %v1186
      %v1751 = vpack.c.b16 %v1199, %v1187
      %v1752 = vpack.c.b16 %v1200, %v1188
      %v1753 = vpack.c.b16 %v1201, %v1189
      %v1754 = vpack.c.b16 %v1202, %v1190
      %v1755 = vpack.c.b16 %v1203, %v1191
      %v1756 = vpack.c.b16 %v1204, %v1192
      %v1757 = vpack.c.b16 %v1217, %v1205
      %v1758 = vpack.c.b16 %v1218, %v1206
      %v1759 = vpack.c.b16 %v1219, %v1207
      %v1760 = vpack.c.b16 %v1220, %v1208
      %v1761 = vpack.c.b16 %v1221, %v1209
      %v1762 = vpack.c.b16 %v1222, %v1210
      %v1763 = vpack.c.b16 %v1223, %v1211
      %v1764 = vpack.c.b16 %v1224, %v1212
      %v1765 = vpack.c.b16 %v1225, %v1213
      %v1766 = vpack.c.b16 %v1226, %v1214
      %v1767 = vpack.c.b16 %v1227, %v1215
      %v1768 = vpack.c.b16 %v1228, %v1216
      %v1769 = vpack.c.b16 %v1241, %v1229
      %v1770 = vpack.c.b16 %v1242, %v1230
      %v1771 = vpack.c.b16 %v1243, %v1231
      %v1772 = vpack.c.b16 %v1244, %v1232
      %v1773 = vpack.c.b16 %v1245, %v1233
      %v1774 = vpack.c.b16 %v1246, %v1234
      %v1775 = vpack.c.b16 %v1247, %v1235
      %v1776 = vpack.c.b16 %v1248, %v1236
      %v1777 = vpack.c.b16 %v1249, %v1237
      %v1778 = vpack.c.b16 %v1250, %v1238
      %v1779 = vpack.c.b16 %v1251, %v1239
      %v1780 = vpack.c.b16 %v1252, %v1240
      %v1781 = vpack.c.b16 %v1265, %v1253
      %v1782 = vpack.c.b16 %v1266, %v1254
      %v1783 = vpack.c.b16 %v1267, %v1255
      %v1784 = vpack.c.b16 %v1268, %v1256
      %v1785 = vpack.c.b16 %v1269, %v1257
      %v1786 = vpack.c.b16 %v1270, %v1258
      %v1787 = vpack.c.b16 %v1271, %v1259
      %v1788 = vpack.c.b16 %v1272, %v1260
      %v1789 = vpack.c.b16 %v1273, %v1261
      %v1790 = vpack.c.b16 %v1274, %v1262
      %v1791 = vpack.c.b16 %v1275, %v1263
      %v1792 = vpack.c.b16 %v1276, %v1264
      %v1793 = vpack.c.b16 %v1289, %v1277
      %v1794 = vpack.c.b16 %v1290, %v1278
      %v1795 = vpack.c.b16 %v1291, %v1279
      %v1796 = vpack.c.b16 %v1292, %v1280
      %v1797 = vpack.c.b16 %v1293, %v1281
      %v1798 = vpack.c.b16 %v1294, %v1282
      %v1799 = vpack.c.b16 %v1295, %v1283
      %v1800 = vpack.c.b16 %v1296, %v1284
      %v1801 = vpack.c.b16 %v1297, %v1285
      %v1802 = vpack.c.b16 %v1298, %v1286
      %v1803 = vpack.c.b16 %v1299, %v1287
      %v1804 = vpack.c.b16 %v1300, %v1288
      %v1805 = vpack.c.b16 %v1313, %v1301
      %v1806 = vpack.c.b16 %v1314, %v1302
      %v1807 = vpack.c.b16 %v1315, %v1303
      %v1808 = vpack.c.b16 %v1316, %v1304
      %v1809 = vpack.c.b16 %v1317, %v1305
      %v1810 = vpack.c.b16 %v1318, %v1306
      %v1811 = vpack.c.b16 %v1319, %v1307
      %v1812 = vpack.c.b16 %v1320, %v1308
      %v1813 = vpack.c.b16 %v1321, %v1309
      %v1814 = vpack.c.b16 %v1322, %v1310
      %v1815 = vpack.c.b16 %v1323, %v1311
      %v1816 = vpack.c.b16 %v1324, %v1312
      %v1817 = vpack.c.b16 %v1337, %v1325
      %v1818 = vpack.c.b16 %v1338, %v1326
      %v1819 = vpack.c.b16 %v1339, %v1327
      %v1820 = vpack.c.b16 %v1340, %v1328
      %v1821 = vpack.c.b16 %v1341, %v1329
      %v1822 = vpack.c.b16 %v1342, %v1330
      %v1823 = vpack.c.b16 %v1343, %v1331
      %v1824 = vpack.c.b16 %v1344, %v1332
      %v1825 = vpack.c.b16 %v1345, %v1333
      %v1826 = vpack.c.b16 %v1346, %v1334
      %v1827 = vpack.c.b16 %v1347, %v1335
      %v1828 = vpack.c.b16 %v1348, %v1336
      %v1829 = vpack.c.b16 %v1361, %v1349
      %v1830 = vpack.c.b16 %v1362, %v1350
      %v1831 = vpack.c.b16 %v1363, %v1351
      %v1832 = vpack.c.b16 %v1364, %v1352
      %v1833 = vpack.c.b16 %v1365, %v1353
      %v1834 = vpack.c.b16 %v1366, %v1354
      %v1835 = vpack.c.b16 %v1367, %v1355
      %v1836 = vpack.c.b16 %v1368, %v1356
      %v1837 = vpack.c.b16 %v1369, %v1357
      %v1838 = vpack.c.b16 %v1370, %v1358
      %v1839 = vpack.c.b16 %v1371, %v1359
      %v1840 = vpack.c.b16 %v1372, %v1360
      %v1841 = vpack.c.b16 %v1385, %v1373
      %v1842 = vpack.c.b16 %v1386, %v1374
      %v1843 = vpack.c.b16 %v1387, %v1375
      %v1844 = vpack.c.b16 %v1388, %v1376
      %v1845 = vpack.c.b16 %v1389, %v1377
      %v1846 = vpack.c.b16 %v1390, %v1378
      %v1847 = vpack.c.b16 %v1391, %v1379
      %v1848 = vpack.c.b16 %v1392, %v1380
      %v1849 = vpack.c.b16 %v1393, %v1381
      %v1850 = vpack.c.b16 %v1394, %v1382
      %v1851 = vpack.c.b16 %v1395, %v1383
      %v1852 = vpack.c.b16 %v1396, %v1384
      %v1853 = vpack.c.b16 %v1409, %v1397
      %v1854 = vpack.c.b16 %v1410, %v1398
      %v1855 = vpack.c.b16 %v1411, %v1399
      %v1856 = vpack.c.b16 %v1412, %v1400
      %v1857 = vpack.c.b16 %v1413, %v1401
      %v1858 = vpack.c.b16 %v1414, %v1402
      %v1859 = vpack.c.b16 %v1415, %v1403
      %v1860 = vpack.c.b16 %v1416, %v1404
      %v1861 = vpack.c.b16 %v1417, %v1405
      %v1862 = vpack.c.b16 %v1418, %v1406
      %v1863 = vpack.c.b16 %v1419, %v1407
      %v1864 = vpack.c.b16 %v1420, %v1408
      %v1865 = vpack.c.b16 %v1433, %v1421
      %v1866 = vpack.c.b16 %v1434, %v1422
      %v1867 = vpack.c.b16 %v1435, %v1423
      %v1868 = vpack.c.b16 %v1436, %v1424
      %v1869 = vpack.c.b16 %v1437, %v1425
      %v1870 = vpack.c.b16 %v1438, %v1426
      %v1871 = vpack.c.b16 %v1439, %v1427
      %v1872 = vpack.c.b16 %v1440, %v1428
      %v1873 = vpack.c.b16 %v1441, %v1429
      %v1874 = vpack.c.b16 %v1442, %v1430
      %v1875 = vpack.c.b16 %v1443, %v1431
      %v1876 = vpack.c.b16 %v1444, %v1432
      %v1877 = vpack.c.b16 %v1457, %v1445
      %v1878 = vpack.c.b16 %v1458, %v1446
      %v1879 = vpack.c.b16 %v1459, %v1447
      %v1880 = vpack.c.b16 %v1460, %v1448
      %v1881 = vpack.c.b16 %v1461, %v1449
      %v1882 = vpack.c.b16 %v1462, %v1450
      %v1883 = vpack.c.b16 %v1463, %v1451
      %v1884 = vpack.c.b16 %v1464, %v1452
      %v1885 = vpack.c.b16 %v1465, %v1453
      %v1886 = vpack.c.b16 %v1466, %v1454
      %v1887 = vpack.c.b16 %v1467, %v1455
      %v1888 = vpack.c.b16 %v1468, %v1456
      %v1889 = vpack.c.b16 %v1481, %v1469
      %v1890 = vpack.c.b16 %v1482, %v1470
      %v1891 = vpack.c.b16 %v1483, %v1471
      %v1892 = vpack.c.b16 %v1484, %v1472
      %v1893 = vpack.c.b16 %v1485, %v1473
      %v1894 = vpack.c.b16 %v1486, %v1474
      %v1895 = vpack.c.b16 %v1487, %v1475
      %v1896 = vpack.c.b16 %v1488, %v1476
      %v1897 = vpack.c.b16 %v1489, %v1477
      %v1898 = vpack.c.b16 %v1490, %v1478
      %v1899 = vpack.c.b16 %v1491, %v1479
      %v1900 = vpack.c.b16 %v1492, %v1480
      %v1901 = vpack.c.b16 %v1505, %v1493
      %v1902 = vpack.c.b16 %v1506, %v1494
      %v1903 = vpack.c.b16 %v1507, %v1495
      %v1904 = vpack.c.b16 %v1508, %v1496
      %v1905 = vpack.c.b16 %v1509, %v1497
      %v1906 = vpack.c.b16 %v1510, %v1498
      %v1907 = vpack.c.b16 %v1511, %v1499
      %v1908 = vpack.c.b16 %v1512, %v1500
      %v1909 = vpack.c.b16 %v1513, %v1501
      %v1910 = vpack.c.b16 %v1514, %v1502
      %v1911 = vpack.c.b16 %v1515, %v1503
      %v1912 = vpack.c.b16 %v1516, %v1504
      %v1913 = vpack.c.b16 %v1529, %v1517
      %v1914 = vpack.c.b16 %v1530, %v1518
      %v1915 = vpack.c.b16 %v1531, %v1519
      %v1916 = vpack.c.b16 %v1532, %v1520
      %v1917 = vpack.c.b16 %v1533, %v1521
      %v1918 = vpack.c.b16 %v1534, %v1522
      %v1919 = vpack.c.b16 %v1535, %v1523
      %v1920 = vpack.c.b16 %v1536, %v1524
      %v1921 = vpack.c.b16 %v1537, %v1525
      %v1922 = vpack.c.b16 %v1538, %v1526
      %v1923 = vpack.c.b16 %v1539, %v1527
      %v1924 = vpack.c.b16 %v1540, %v1528
      %v1925 = vpack.c.b16 %v1553, %v1541
      %v1926 = vpack.c.b16 %v1554, %v1542
      %v1927 = vpack.c.b16 %v1555, %v1543
      %v1928 = vpack.c.b16 %v1556, %v1544
      %v1929 = vpack.c.b16 %v1557, %v1545
      %v1930 = vpack.c.b16 %v1558, %v1546
      %v1931 = vpack.c.b16 %v1559, %v1547
      %v1932 = vpack.c.b16 %v1560, %v1548
      %v1933 = vpack.c.b16 %v1561, %v1549
      %v1934 = vpack.c.b16 %v1562, %v1550
      %v1935 = vpack.c.b16 %v1563, %v1551
      %v1936 = vpack.c.b16 %v1564, %v1552
      %v1937 = vpack.c.b16 %v1577, %v1565
      %v1938 = vpack.c.b16 %v1578, %v1566
      %v1939 = vpack.c.b16 %v1579, %v1567
      %v1940 = vpack.c.b16 %v1580, %v1568
      %v1941 = vpack.c.b16 %v1581, %v1569
      %v1942 = vpack.c.b16 %v1582, %v1570
      %v1943 = vpack.c.b16 %v1583, %v1571
      %v1944 = vpack.c.b16 %v1584, %v1572
      %v1945 = vpack.c.b16 %v1585, %v1573
      %v1946 = vpack.c.b16 %v1586, %v1574
      %v1947 = vpack.c.b16 %v1587, %v1575
      %v1948 = vpack.c.b16 %v1588, %v1576
      %v1949 = vpack.c.b16 %v1601, %v1589
      %v1950 = vpack.c.b16 %v1602, %v1590
      %v1951 = vpack.c.b16 %v1603, %v1591
      %v1952 = vpack.c.b16 %v1604, %v1592
      %v1953 = vpack.c.b16 %v1605, %v1593
      %v1954 = vpack.c.b16 %v1606, %v1594
      %v1955 = vpack.c.b16 %v1607, %v1595
      %v1956 = vpack.c.b16 %v1608, %v1596
      %v1957 = vpack.c.b16 %v1609, %v1597
      %v1958 = vpack.c.b16 %v1610, %v1598
      %v1959 = vpack.c.b16 %v1611, %v1599
      %v1960 = vpack.c.b16 %v1612, %v1600
      %v1961 = vpack.c.b16 %v1625, %v1613
      %v1962 = vpack.c.b16 %v1626, %v1614
      %v1963 = vpack.c.b16 %v1627, %v1615
      %v1964 = vpack.c.b16 %v1628, %v1616
      %v1965 = vpack.c.b16 %v1629, %v1617
      %v1966 = vpack.c.b16 %v1630, %v1618
      %v1967 = vpack.c.b16 %v1631, %v1619
      %v1968 = vpack.c.b16 %v1632, %v1620
      %v1969 = vpack.c.b16 %v1633, %v1621
      %v1970 = vpack.c.b16 %v1634, %v1622
      %v1971 = vpack.c.b16 %v1635, %v1623
      %v1972 = vpack.c.b16 %v1636, %v1624
      %v1973 = vpack.c.b16 %v1649, %v1637
      %v1974 = vpack.c.b16 %v1650, %v1638
      %v1975 = vpack.c.b16 %v1651, %v1639
      %v1976 = vpack.c.b16 %v1652, %v1640
      %v1977 = vpack.c.b16 %v1653, %v1641
      %v1978 = vpack.c.b16 %v1654, %v1642
      %v1979 = vpack.c.b16 %v1655, %v1643
      %v1980 = vpack.c.b16 %v1656, %v1644
      %v1981 = vpack.c.b16 %v1657, %v1645
      %v1982 = vpack.c.b16 %v1658, %v1646
      %v1983 = vpack.c.b16 %v1659, %v1647
      %v1984 = vpack.c.b16 %v1660, %v1648
      %v1985 = vpack.c.b16 %v1673, %v1661
      %v1986 = vpack.c.b16 %v1674, %v1662
      %v1987 = vpack.c.b16 %v1675, %v1663
      %v1988 = vpack.c.b16 %v1676, %v1664
      %v1989 = vpack.c.b16 %v1677, %v1665
      %v1990 = vpack.c.b16 %v1678, %v1666
      %v1991 = vpack.c.b16 %v1679, %v1667
      %v1992 = vpack.c.b16 %v1680, %v1668
      %v1993 = vpack.c.b16 %v1681, %v1669
      %v1994 = vpack.c.b16 %v1682, %v1670
      %v1995 = vpack.c.b16 %v1683, %v1671
      %v1996 = vpack.c.b16 %v1684, %v1672
      %v1997 = vpack.c.b16 %v1697, %v1685
      %v1998 = vpack.c.b16 %v1698, %v1686
      %v1999 = vpack.c.b16 %v1699, %v1687
      %v2000 = vpack.c.b16 %v1700, %v1688
      %v2001 = vpack.c.b16 %v1701, %v1689
      %v2002 = vpack.c.b16 %v1702, %v1690
      %v2003 = vpack.c.b16 %v1703, %v1691
      %v2004 = vpack.c.b16 %v1704, %v1692
      %v2005 = vpack.c.b16 %v1705, %v1693
      %v2006 = vpack.c.b16 %v1706, %v1694
      %v2007 = vpack.c.b16 %v1707, %v1695
      %v2008 = vpack.c.b16 %v1708, %v1696
      %v2009 = vpack.c.b16 %v1721, %v1709
      %v2010 = vpack.c.b16 %v1722, %v1710
      %v2011 = vpack.c.b16 %v1723, %v1711
      %v2012 = vpack.c.b16 %v1724, %v1712
      %v2013 = vpack.c.b16 %v1725, %v1713
      %v2014 = vpack.c.b16 %v1726, %v1714
      %v2015 = vpack.c.b16 %v1727, %v1715
      %v2016 = vpack.c.b16 %v1728, %v1716
      %v2017 = vpack.c.b16 %v1729, %v1717
      %v2018 = vpack.c.b16 %v1730, %v1718
      %v2019 = vpack.c.b16 %v1731, %v1719
      %v2020 = vpack.c.b16 %v1732, %v1720
      %2309 = vmatpush.bf16.msra.mxu0 %v1817
      %2310 = vmatpush.bf16.msra.mxu0 %v1805
      %2311 = vmatpush.bf16.msra.mxu0 %v1793
      %2312 = vmatpush.bf16.msra.mxu0 %v1781
      %2313 = vmatpush.bf16.msra.mxu0 %v1769
      %2314 = vmatpush.bf16.msra.mxu0 %v1757
      %2315 = vmatpush.bf16.msra.mxu0 %v1745
      %2316 = vmatpush.bf16.msra.mxu0 %v1733
      %2317 = vmatmul.bf16.gmra.mxu0 %v773
      %v2318 = vpop.f32.mrf.mxu0
      %v2319 = vadd.f32 %v589, %v2318
      %v2320 = vpop.f32.mrf.mxu0
      %v2321 = vadd.f32 %v589, %v2320
      %2322 = vmatmul.bf16.gmra.mxu0 %v776
      %v2323 = vpop.f32.mrf.mxu0
      %v2324 = vadd.f32 %v589, %v2323
      %v2325 = vpop.f32.mrf.mxu0
      %v2326 = vadd.f32 %v589, %v2325
      %2327 = vmatmul.bf16.gmra.mxu0 %v779
      %v2328 = vpop.f32.mrf.mxu0
      %v2329 = vadd.f32 %v589, %v2328
      %v2330 = vpop.f32.mrf.mxu0
      %v2331 = vadd.f32 %v589, %v2330
      %2332 = vmatmul.bf16.gmra.mxu0 %v782
      %v2333 = vpop.f32.mrf.mxu0
      %v2334 = vadd.f32 %v589, %v2333
      %v2335 = vpop.f32.mrf.mxu0
      %v2336 = vadd.f32 %v589, %v2335
      %2337 = vmatmul.bf16.gmra.mxu0 %v785
      %v2338 = vpop.f32.mrf.mxu0
      %v2339 = vadd.f32 %v589, %v2338
      %v2340 = vpop.f32.mrf.mxu0
      %v2341 = vadd.f32 %v589, %v2340
      %2342 = vmatmul.bf16.gmra.mxu0 %v788
      %v2343 = vpop.f32.mrf.mxu0
      %v2344 = vadd.f32 %v589, %v2343
      %v2345 = vpop.f32.mrf.mxu0
      %v2346 = vadd.f32 %v589, %v2345
      %2347 = vmatmul.bf16.gmra.mxu0 %v791
      %v2348 = vpop.f32.mrf.mxu0
      %v2349 = vadd.f32 %v589, %v2348
      %v2350 = vpop.f32.mrf.mxu0
      %v2351 = vadd.f32 %v589, %v2350
      %2352 = vmatmul.bf16.gmra.mxu0 %v794
      %v2353 = vpop.f32.mrf.mxu0
      %v2354 = vadd.f32 %v589, %v2353
      %v2355 = vpop.f32.mrf.mxu0
      %v2356 = vadd.f32 %v589, %v2355
      %2357 = vmatmul.bf16.gmra.mxu0 %v797
      %v2358 = vpop.f32.mrf.mxu0
      %v2359 = vadd.f32 %v589, %v2358
      %v2360 = vpop.f32.mrf.mxu0
      %v2361 = vadd.f32 %v589, %v2360
      %2362 = vmatmul.bf16.gmra.mxu0 %v800
      %v2363 = vpop.f32.mrf.mxu0
      %v2364 = vadd.f32 %v589, %v2363
      %v2365 = vpop.f32.mrf.mxu0
      %v2366 = vadd.f32 %v589, %v2365
      %2367 = vmatmul.bf16.gmra.mxu0 %v803
      %v2368 = vpop.f32.mrf.mxu0
      %v2369 = vadd.f32 %v589, %v2368
      %v2370 = vpop.f32.mrf.mxu0
      %v2371 = vadd.f32 %v589, %v2370
      %2372 = vmatmul.bf16.gmra.mxu0 %v806
      %v2373 = vpop.f32.mrf.mxu0
      %v2374 = vadd.f32 %v589, %v2373
      %v2375 = vpop.f32.mrf.mxu0
      %v2376 = vadd.f32 %v589, %v2375
      %2377 = vmatmul.bf16.gmra.mxu0 %v809
      %v2378 = vpop.f32.mrf.mxu0
      %v2379 = vadd.f32 %v589, %v2378
      %v2380 = vpop.f32.mrf.mxu0
      %v2381 = vadd.f32 %v589, %v2380
      %2382 = vmatmul.bf16.gmra.mxu0 %v812
      %v2383 = vpop.f32.mrf.mxu0
      %v2384 = vadd.f32 %v589, %v2383
      %v2385 = vpop.f32.mrf.mxu0
      %v2386 = vadd.f32 %v589, %v2385
      %2387 = vmatmul.bf16.gmra.mxu0 %v815
      %v2388 = vpop.f32.mrf.mxu0
      %v2389 = vadd.f32 %v589, %v2388
      %v2390 = vpop.f32.mrf.mxu0
      %v2391 = vadd.f32 %v589, %v2390
      %2392 = vmatmul.bf16.gmra.mxu0 %v818
      %v2393 = vpop.f32.mrf.mxu0
      %v2394 = vadd.f32 %v589, %v2393
      %v2395 = vpop.f32.mrf.mxu0
      %v2396 = vadd.f32 %v589, %v2395
      %2397 = vdwg.mxu0
      %2398 = vmatpush.bf16.msra.mxu0 %v1913
      %2399 = vmatpush.bf16.msra.mxu0 %v1901
      %2400 = vmatpush.bf16.msra.mxu0 %v1889
      %2401 = vmatpush.bf16.msra.mxu0 %v1877
      %2402 = vmatpush.bf16.msra.mxu0 %v1865
      %2403 = vmatpush.bf16.msra.mxu0 %v1853
      %2404 = vmatpush.bf16.msra.mxu0 %v1841
      %2405 = vmatpush.bf16.msra.mxu0 %v1829
      %2406 = vmatmul.bf16.gmra.mxu0 %v774
      %v2407 = vpop.f32.mrf.mxu0
      %v2408 = vadd.f32 %v2319, %v2407
      %v2409 = vpop.f32.mrf.mxu0
      %v2410 = vadd.f32 %v2321, %v2409
      %2411 = vmatmul.bf16.gmra.mxu0 %v777
      %v2412 = vpop.f32.mrf.mxu0
      %v2413 = vadd.f32 %v2324, %v2412
      %v2414 = vpop.f32.mrf.mxu0
      %v2415 = vadd.f32 %v2326, %v2414
      %2416 = vmatmul.bf16.gmra.mxu0 %v780
      %v2417 = vpop.f32.mrf.mxu0
      %v2418 = vadd.f32 %v2329, %v2417
      %v2419 = vpop.f32.mrf.mxu0
      %v2420 = vadd.f32 %v2331, %v2419
      %2421 = vmatmul.bf16.gmra.mxu0 %v783
      %v2422 = vpop.f32.mrf.mxu0
      %v2423 = vadd.f32 %v2334, %v2422
      %v2424 = vpop.f32.mrf.mxu0
      %v2425 = vadd.f32 %v2336, %v2424
      %2426 = vmatmul.bf16.gmra.mxu0 %v786
      %v2427 = vpop.f32.mrf.mxu0
      %v2428 = vadd.f32 %v2339, %v2427
      %v2429 = vpop.f32.mrf.mxu0
      %v2430 = vadd.f32 %v2341, %v2429
      %2431 = vmatmul.bf16.gmra.mxu0 %v789
      %v2432 = vpop.f32.mrf.mxu0
      %v2433 = vadd.f32 %v2344, %v2432
      %v2434 = vpop.f32.mrf.mxu0
      %v2435 = vadd.f32 %v2346, %v2434
      %2436 = vmatmul.bf16.gmra.mxu0 %v792
      %v2437 = vpop.f32.mrf.mxu0
      %v2438 = vadd.f32 %v2349, %v2437
      %v2439 = vpop.f32.mrf.mxu0
      %v2440 = vadd.f32 %v2351, %v2439
      %2441 = vmatmul.bf16.gmra.mxu0 %v795
      %v2442 = vpop.f32.mrf.mxu0
      %v2443 = vadd.f32 %v2354, %v2442
      %v2444 = vpop.f32.mrf.mxu0
      %v2445 = vadd.f32 %v2356, %v2444
      %2446 = vmatmul.bf16.gmra.mxu0 %v798
      %v2447 = vpop.f32.mrf.mxu0
      %v2448 = vadd.f32 %v2359, %v2447
      %v2449 = vpop.f32.mrf.mxu0
      %v2450 = vadd.f32 %v2361, %v2449
      %2451 = vmatmul.bf16.gmra.mxu0 %v801
      %v2452 = vpop.f32.mrf.mxu0
      %v2453 = vadd.f32 %v2364, %v2452
      %v2454 = vpop.f32.mrf.mxu0
      %v2455 = vadd.f32 %v2366, %v2454
      %2456 = vmatmul.bf16.gmra.mxu0 %v804
      %v2457 = vpop.f32.mrf.mxu0
      %v2458 = vadd.f32 %v2369, %v2457
      %v2459 = vpop.f32.mrf.mxu0
      %v2460 = vadd.f32 %v2371, %v2459
      %2461 = vmatmul.bf16.gmra.mxu0 %v807
      %v2462 = vpop.f32.mrf.mxu0
      %v2463 = vadd.f32 %v2374, %v2462
      %v2464 = vpop.f32.mrf.mxu0
      %v2465 = vadd.f32 %v2376, %v2464
      %2466 = vmatmul.bf16.gmra.mxu0 %v810
      %v2467 = vpop.f32.mrf.mxu0
      %v2468 = vadd.f32 %v2379, %v2467
      %v2469 = vpop.f32.mrf.mxu0
      %v2470 = vadd.f32 %v2381, %v2469
      %2471 = vmatmul.bf16.gmra.mxu0 %v813
      %v2472 = vpop.f32.mrf.mxu0
      %v2473 = vadd.f32 %v2384, %v2472
      %v2474 = vpop.f32.mrf.mxu0
      %v2475 = vadd.f32 %v2386, %v2474
      %2476 = vmatmul.bf16.gmra.mxu0 %v816
      %v2477 = vpop.f32.mrf.mxu0
      %v2478 = vadd.f32 %v2389, %v2477
      %v2479 = vpop.f32.mrf.mxu0
      %v2480 = vadd.f32 %v2391, %v2479
      %2481 = vmatmul.bf16.gmra.mxu0 %v819
      %v2482 = vpop.f32.mrf.mxu0
      %v2483 = vadd.f32 %v2394, %v2482
      %v2484 = vpop.f32.mrf.mxu0
      %v2485 = vadd.f32 %v2396, %v2484
      %2486 = vdwg.mxu0
      %2487 = vmatpush.bf16.msra.mxu0 %v2009
      %2488 = vmatpush.bf16.msra.mxu0 %v1997
      %2489 = vmatpush.bf16.msra.mxu0 %v1985
      %2490 = vmatpush.bf16.msra.mxu0 %v1973
      %2491 = vmatpush.bf16.msra.mxu0 %v1961
      %2492 = vmatpush.bf16.msra.mxu0 %v1949
      %2493 = vmatpush.bf16.msra.mxu0 %v1937
      %2494 = vmatpush.bf16.msra.mxu0 %v1925
      %2495 = vmatmul.bf16.gmra.mxu0 %v775
      %v2496 = vpop.f32.mrf.mxu0
      %v2497 = vadd.f32 %v2408, %v2496
      %v2498 = vpop.f32.mrf.mxu0
      %v2499 = vadd.f32 %v2410, %v2498
      %2500 = vmatmul.bf16.gmra.mxu0 %v778
      %v2501 = vpop.f32.mrf.mxu0
      %v2502 = vadd.f32 %v2413, %v2501
      %v2503 = vpop.f32.mrf.mxu0
      %v2504 = vadd.f32 %v2415, %v2503
      %2505 = vmatmul.bf16.gmra.mxu0 %v781
      %v2506 = vpop.f32.mrf.mxu0
      %v2507 = vadd.f32 %v2418, %v2506
      %v2508 = vpop.f32.mrf.mxu0
      %v2509 = vadd.f32 %v2420, %v2508
      %2510 = vmatmul.bf16.gmra.mxu0 %v784
      %v2511 = vpop.f32.mrf.mxu0
      %v2512 = vadd.f32 %v2423, %v2511
      %v2513 = vpop.f32.mrf.mxu0
      %v2514 = vadd.f32 %v2425, %v2513
      %2515 = vmatmul.bf16.gmra.mxu0 %v787
      %v2516 = vpop.f32.mrf.mxu0
      %v2517 = vadd.f32 %v2428, %v2516
      %v2518 = vpop.f32.mrf.mxu0
      %v2519 = vadd.f32 %v2430, %v2518
      %2520 = vmatmul.bf16.gmra.mxu0 %v790
      %v2521 = vpop.f32.mrf.mxu0
      %v2522 = vadd.f32 %v2433, %v2521
      %v2523 = vpop.f32.mrf.mxu0
      %v2524 = vadd.f32 %v2435, %v2523
      %2525 = vmatmul.bf16.gmra.mxu0 %v793
      %v2526 = vpop.f32.mrf.mxu0
      %v2527 = vadd.f32 %v2438, %v2526
      %v2528 = vpop.f32.mrf.mxu0
      %v2529 = vadd.f32 %v2440, %v2528
      %2530 = vmatmul.bf16.gmra.mxu0 %v796
      %v2531 = vpop.f32.mrf.mxu0
      %v2532 = vadd.f32 %v2443, %v2531
      %v2533 = vpop.f32.mrf.mxu0
      %v2534 = vadd.f32 %v2445, %v2533
      %2535 = vmatmul.bf16.gmra.mxu0 %v799
      %v2536 = vpop.f32.mrf.mxu0
      %v2537 = vadd.f32 %v2448, %v2536
      %v2538 = vpop.f32.mrf.mxu0
      %v2539 = vadd.f32 %v2450, %v2538
      %2540 = vmatmul.bf16.gmra.mxu0 %v802
      %v2541 = vpop.f32.mrf.mxu0
      %v2542 = vadd.f32 %v2453, %v2541
      %v2543 = vpop.f32.mrf.mxu0
      %v2544 = vadd.f32 %v2455, %v2543
      %2545 = vmatmul.bf16.gmra.mxu0 %v805
      %v2546 = vpop.f32.mrf.mxu0
      %v2547 = vadd.f32 %v2458, %v2546
      %v2548 = vpop.f32.mrf.mxu0
      %v2549 = vadd.f32 %v2460, %v2548
      %2550 = vmatmul.bf16.gmra.mxu0 %v808
      %v2551 = vpop.f32.mrf.mxu0
      %v2552 = vadd.f32 %v2463, %v2551
      %v2553 = vpop.f32.mrf.mxu0
      %v2554 = vadd.f32 %v2465, %v2553
      %2555 = vmatmul.bf16.gmra.mxu0 %v811
      %v2556 = vpop.f32.mrf.mxu0
      %v2557 = vadd.f32 %v2468, %v2556
      %v2558 = vpop.f32.mrf.mxu0
      %v2559 = vadd.f32 %v2470, %v2558
      %2560 = vmatmul.bf16.gmra.mxu0 %v814
      %v2561 = vpop.f32.mrf.mxu0
      %v2562 = vadd.f32 %v2473, %v2561
      %v2563 = vpop.f32.mrf.mxu0
      %v2564 = vadd.f32 %v2475, %v2563
      %2565 = vmatmul.bf16.gmra.mxu0 %v817
      %v2566 = vpop.f32.mrf.mxu0
      %v2567 = vadd.f32 %v2478, %v2566
      %v2568 = vpop.f32.mrf.mxu0
      %v2569 = vadd.f32 %v2480, %v2568
      %2570 = vmatmul.bf16.gmra.mxu0 %v820
      %v2571 = vpop.f32.mrf.mxu0
      %v2572 = vadd.f32 %v2483, %v2571
      %v2573 = vpop.f32.mrf.mxu0
      %v2574 = vadd.f32 %v2485, %v2573
      %2575 = vdwg.mxu0
      %2576 = vmatpush.bf16.msra.mxu0 %v1818
      %2577 = vmatpush.bf16.msra.mxu0 %v1806
      %2578 = vmatpush.bf16.msra.mxu0 %v1794
      %2579 = vmatpush.bf16.msra.mxu0 %v1782
      %2580 = vmatpush.bf16.msra.mxu0 %v1770
      %2581 = vmatpush.bf16.msra.mxu0 %v1758
      %2582 = vmatpush.bf16.msra.mxu0 %v1746
      %2583 = vmatpush.bf16.msra.mxu0 %v1734
      %2584 = vmatmul.bf16.gmra.mxu0 %v773
      %v2585 = vpop.f32.mrf.mxu0
      %v2586 = vadd.f32 %v590, %v2585
      %v2587 = vpop.f32.mrf.mxu0
      %v2588 = vadd.f32 %v590, %v2587
      %2589 = vmatmul.bf16.gmra.mxu0 %v776
      %v2590 = vpop.f32.mrf.mxu0
      %v2591 = vadd.f32 %v590, %v2590
      %v2592 = vpop.f32.mrf.mxu0
      %v2593 = vadd.f32 %v590, %v2592
      %2594 = vmatmul.bf16.gmra.mxu0 %v779
      %v2595 = vpop.f32.mrf.mxu0
      %v2596 = vadd.f32 %v590, %v2595
      %v2597 = vpop.f32.mrf.mxu0
      %v2598 = vadd.f32 %v590, %v2597
      %2599 = vmatmul.bf16.gmra.mxu0 %v782
      %v2600 = vpop.f32.mrf.mxu0
      %v2601 = vadd.f32 %v590, %v2600
      %v2602 = vpop.f32.mrf.mxu0
      %v2603 = vadd.f32 %v590, %v2602
      %2604 = vmatmul.bf16.gmra.mxu0 %v785
      %v2605 = vpop.f32.mrf.mxu0
      %v2606 = vadd.f32 %v590, %v2605
      %v2607 = vpop.f32.mrf.mxu0
      %v2608 = vadd.f32 %v590, %v2607
      %2609 = vmatmul.bf16.gmra.mxu0 %v788
      %v2610 = vpop.f32.mrf.mxu0
      %v2611 = vadd.f32 %v590, %v2610
      %v2612 = vpop.f32.mrf.mxu0
      %v2613 = vadd.f32 %v590, %v2612
      %2614 = vmatmul.bf16.gmra.mxu0 %v791
      %v2615 = vpop.f32.mrf.mxu0
      %v2616 = vadd.f32 %v590, %v2615
      %v2617 = vpop.f32.mrf.mxu0
      %v2618 = vadd.f32 %v590, %v2617
      %2619 = vmatmul.bf16.gmra.mxu0 %v794
      %v2620 = vpop.f32.mrf.mxu0
      %v2621 = vadd.f32 %v590, %v2620
      %v2622 = vpop.f32.mrf.mxu0
      %v2623 = vadd.f32 %v590, %v2622
      %2624 = vmatmul.bf16.gmra.mxu0 %v797
      %v2625 = vpop.f32.mrf.mxu0
      %v2626 = vadd.f32 %v590, %v2625
      %v2627 = vpop.f32.mrf.mxu0
      %v2628 = vadd.f32 %v590, %v2627
      %2629 = vmatmul.bf16.gmra.mxu0 %v800
      %v2630 = vpop.f32.mrf.mxu0
      %v2631 = vadd.f32 %v590, %v2630
      %v2632 = vpop.f32.mrf.mxu0
      %v2633 = vadd.f32 %v590, %v2632
      %2634 = vmatmul.bf16.gmra.mxu0 %v803
      %v2635 = vpop.f32.mrf.mxu0
      %v2636 = vadd.f32 %v590, %v2635
      %v2637 = vpop.f32.mrf.mxu0
      %v2638 = vadd.f32 %v590, %v2637
      %2639 = vmatmul.bf16.gmra.mxu0 %v806
      %v2640 = vpop.f32.mrf.mxu0
      %v2641 = vadd.f32 %v590, %v2640
      %v2642 = vpop.f32.mrf.mxu0
      %v2643 = vadd.f32 %v590, %v2642
      %2644 = vmatmul.bf16.gmra.mxu0 %v809
      %v2645 = vpop.f32.mrf.mxu0
      %v2646 = vadd.f32 %v590, %v2645
      %v2647 = vpop.f32.mrf.mxu0
      %v2648 = vadd.f32 %v590, %v2647
      %2649 = vmatmul.bf16.gmra.mxu0 %v812
      %v2650 = vpop.f32.mrf.mxu0
      %v2651 = vadd.f32 %v590, %v2650
      %v2652 = vpop.f32.mrf.mxu0
      %v2653 = vadd.f32 %v590, %v2652
      %2654 = vmatmul.bf16.gmra.mxu0 %v815
      %v2655 = vpop.f32.mrf.mxu0
      %v2656 = vadd.f32 %v590, %v2655
      %v2657 = vpop.f32.mrf.mxu0
      %v2658 = vadd.f32 %v590, %v2657
      %2659 = vmatmul.bf16.gmra.mxu0 %v818
      %v2660 = vpop.f32.mrf.mxu0
      %v2661 = vadd.f32 %v590, %v2660
      %v2662 = vpop.f32.mrf.mxu0
      %v2663 = vadd.f32 %v590, %v2662
      %2664 = vdwg.mxu0
      %2665 = vmatpush.bf16.msra.mxu0 %v1914
      %2666 = vmatpush.bf16.msra.mxu0 %v1902
      %2667 = vmatpush.bf16.msra.mxu0 %v1890
      %2668 = vmatpush.bf16.msra.mxu0 %v1878
      %2669 = vmatpush.bf16.msra.mxu0 %v1866
      %2670 = vmatpush.bf16.msra.mxu0 %v1854
      %2671 = vmatpush.bf16.msra.mxu0 %v1842
      %2672 = vmatpush.bf16.msra.mxu0 %v1830
      %2673 = vmatmul.bf16.gmra.mxu0 %v774
      %v2674 = vpop.f32.mrf.mxu0
      %v2675 = vadd.f32 %v2586, %v2674
      %v2676 = vpop.f32.mrf.mxu0
      %v2677 = vadd.f32 %v2588, %v2676
      %2678 = vmatmul.bf16.gmra.mxu0 %v777
      %v2679 = vpop.f32.mrf.mxu0
      %v2680 = vadd.f32 %v2591, %v2679
      %v2681 = vpop.f32.mrf.mxu0
      %v2682 = vadd.f32 %v2593, %v2681
      %2683 = vmatmul.bf16.gmra.mxu0 %v780
      %v2684 = vpop.f32.mrf.mxu0
      %v2685 = vadd.f32 %v2596, %v2684
      %v2686 = vpop.f32.mrf.mxu0
      %v2687 = vadd.f32 %v2598, %v2686
      %2688 = vmatmul.bf16.gmra.mxu0 %v783
      %v2689 = vpop.f32.mrf.mxu0
      %v2690 = vadd.f32 %v2601, %v2689
      %v2691 = vpop.f32.mrf.mxu0
      %v2692 = vadd.f32 %v2603, %v2691
      %2693 = vmatmul.bf16.gmra.mxu0 %v786
      %v2694 = vpop.f32.mrf.mxu0
      %v2695 = vadd.f32 %v2606, %v2694
      %v2696 = vpop.f32.mrf.mxu0
      %v2697 = vadd.f32 %v2608, %v2696
      %2698 = vmatmul.bf16.gmra.mxu0 %v789
      %v2699 = vpop.f32.mrf.mxu0
      %v2700 = vadd.f32 %v2611, %v2699
      %v2701 = vpop.f32.mrf.mxu0
      %v2702 = vadd.f32 %v2613, %v2701
      %2703 = vmatmul.bf16.gmra.mxu0 %v792
      %v2704 = vpop.f32.mrf.mxu0
      %v2705 = vadd.f32 %v2616, %v2704
      %v2706 = vpop.f32.mrf.mxu0
      %v2707 = vadd.f32 %v2618, %v2706
      %2708 = vmatmul.bf16.gmra.mxu0 %v795
      %v2709 = vpop.f32.mrf.mxu0
      %v2710 = vadd.f32 %v2621, %v2709
      %v2711 = vpop.f32.mrf.mxu0
      %v2712 = vadd.f32 %v2623, %v2711
      %2713 = vmatmul.bf16.gmra.mxu0 %v798
      %v2714 = vpop.f32.mrf.mxu0
      %v2715 = vadd.f32 %v2626, %v2714
      %v2716 = vpop.f32.mrf.mxu0
      %v2717 = vadd.f32 %v2628, %v2716
      %2718 = vmatmul.bf16.gmra.mxu0 %v801
      %v2719 = vpop.f32.mrf.mxu0
      %v2720 = vadd.f32 %v2631, %v2719
      %v2721 = vpop.f32.mrf.mxu0
      %v2722 = vadd.f32 %v2633, %v2721
      %2723 = vmatmul.bf16.gmra.mxu0 %v804
      %v2724 = vpop.f32.mrf.mxu0
      %v2725 = vadd.f32 %v2636, %v2724
      %v2726 = vpop.f32.mrf.mxu0
      %v2727 = vadd.f32 %v2638, %v2726
      %2728 = vmatmul.bf16.gmra.mxu0 %v807
      %v2729 = vpop.f32.mrf.mxu0
      %v2730 = vadd.f32 %v2641, %v2729
      %v2731 = vpop.f32.mrf.mxu0
      %v2732 = vadd.f32 %v2643, %v2731
      %2733 = vmatmul.bf16.gmra.mxu0 %v810
      %v2734 = vpop.f32.mrf.mxu0
      %v2735 = vadd.f32 %v2646, %v2734
      %v2736 = vpop.f32.mrf.mxu0
      %v2737 = vadd.f32 %v2648, %v2736
      %2738 = vmatmul.bf16.gmra.mxu0 %v813
      %v2739 = vpop.f32.mrf.mxu0
      %v2740 = vadd.f32 %v2651, %v2739
      %v2741 = vpop.f32.mrf.mxu0
      %v2742 = vadd.f32 %v2653, %v2741
      %2743 = vmatmul.bf16.gmra.mxu0 %v816
      %v2744 = vpop.f32.mrf.mxu0
      %v2745 = vadd.f32 %v2656, %v2744
      %v2746 = vpop.f32.mrf.mxu0
      %v2747 = vadd.f32 %v2658, %v2746
      %2748 = vmatmul.bf16.gmra.mxu0 %v819
      %v2749 = vpop.f32.mrf.mxu0
      %v2750 = vadd.f32 %v2661, %v2749
      %v2751 = vpop.f32.mrf.mxu0
      %v2752 = vadd.f32 %v2663, %v2751
      %2753 = vdwg.mxu0
      %2754 = vmatpush.bf16.msra.mxu0 %v2010
      %2755 = vmatpush.bf16.msra.mxu0 %v1998
      %2756 = vmatpush.bf16.msra.mxu0 %v1986
      %2757 = vmatpush.bf16.msra.mxu0 %v1974
      %2758 = vmatpush.bf16.msra.mxu0 %v1962
      %2759 = vmatpush.bf16.msra.mxu0 %v1950
      %2760 = vmatpush.bf16.msra.mxu0 %v1938
      %2761 = vmatpush.bf16.msra.mxu0 %v1926
      %2762 = vmatmul.bf16.gmra.mxu0 %v775
      %v2763 = vpop.f32.mrf.mxu0
      %v2764 = vadd.f32 %v2675, %v2763
      %v2765 = vpop.f32.mrf.mxu0
      %v2766 = vadd.f32 %v2677, %v2765
      %2767 = vmatmul.bf16.gmra.mxu0 %v778
      %v2768 = vpop.f32.mrf.mxu0
      %v2769 = vadd.f32 %v2680, %v2768
      %v2770 = vpop.f32.mrf.mxu0
      %v2771 = vadd.f32 %v2682, %v2770
      %2772 = vmatmul.bf16.gmra.mxu0 %v781
      %v2773 = vpop.f32.mrf.mxu0
      %v2774 = vadd.f32 %v2685, %v2773
      %v2775 = vpop.f32.mrf.mxu0
      %v2776 = vadd.f32 %v2687, %v2775
      %2777 = vmatmul.bf16.gmra.mxu0 %v784
      %v2778 = vpop.f32.mrf.mxu0
      %v2779 = vadd.f32 %v2690, %v2778
      %v2780 = vpop.f32.mrf.mxu0
      %v2781 = vadd.f32 %v2692, %v2780
      %2782 = vmatmul.bf16.gmra.mxu0 %v787
      %v2783 = vpop.f32.mrf.mxu0
      %v2784 = vadd.f32 %v2695, %v2783
      %v2785 = vpop.f32.mrf.mxu0
      %v2786 = vadd.f32 %v2697, %v2785
      %2787 = vmatmul.bf16.gmra.mxu0 %v790
      %v2788 = vpop.f32.mrf.mxu0
      %v2789 = vadd.f32 %v2700, %v2788
      %v2790 = vpop.f32.mrf.mxu0
      %v2791 = vadd.f32 %v2702, %v2790
      %2792 = vmatmul.bf16.gmra.mxu0 %v793
      %v2793 = vpop.f32.mrf.mxu0
      %v2794 = vadd.f32 %v2705, %v2793
      %v2795 = vpop.f32.mrf.mxu0
      %v2796 = vadd.f32 %v2707, %v2795
      %2797 = vmatmul.bf16.gmra.mxu0 %v796
      %v2798 = vpop.f32.mrf.mxu0
      %v2799 = vadd.f32 %v2710, %v2798
      %v2800 = vpop.f32.mrf.mxu0
      %v2801 = vadd.f32 %v2712, %v2800
      %2802 = vmatmul.bf16.gmra.mxu0 %v799
      %v2803 = vpop.f32.mrf.mxu0
      %v2804 = vadd.f32 %v2715, %v2803
      %v2805 = vpop.f32.mrf.mxu0
      %v2806 = vadd.f32 %v2717, %v2805
      %2807 = vmatmul.bf16.gmra.mxu0 %v802
      %v2808 = vpop.f32.mrf.mxu0
      %v2809 = vadd.f32 %v2720, %v2808
      %v2810 = vpop.f32.mrf.mxu0
      %v2811 = vadd.f32 %v2722, %v2810
      %2812 = vmatmul.bf16.gmra.mxu0 %v805
      %v2813 = vpop.f32.mrf.mxu0
      %v2814 = vadd.f32 %v2725, %v2813
      %v2815 = vpop.f32.mrf.mxu0
      %v2816 = vadd.f32 %v2727, %v2815
      %2817 = vmatmul.bf16.gmra.mxu0 %v808
      %v2818 = vpop.f32.mrf.mxu0
      %v2819 = vadd.f32 %v2730, %v2818
      %v2820 = vpop.f32.mrf.mxu0
      %v2821 = vadd.f32 %v2732, %v2820
      %2822 = vmatmul.bf16.gmra.mxu0 %v811
      %v2823 = vpop.f32.mrf.mxu0
      %v2824 = vadd.f32 %v2735, %v2823
      %v2825 = vpop.f32.mrf.mxu0
      %v2826 = vadd.f32 %v2737, %v2825
      %2827 = vmatmul.bf16.gmra.mxu0 %v814
      %v2828 = vpop.f32.mrf.mxu0
      %v2829 = vadd.f32 %v2740, %v2828
      %v2830 = vpop.f32.mrf.mxu0
      %v2831 = vadd.f32 %v2742, %v2830
      %2832 = vmatmul.bf16.gmra.mxu0 %v817
      %v2833 = vpop.f32.mrf.mxu0
      %v2834 = vadd.f32 %v2745, %v2833
      %v2835 = vpop.f32.mrf.mxu0
      %v2836 = vadd.f32 %v2747, %v2835
      %2837 = vmatmul.bf16.gmra.mxu0 %v820
      %v2838 = vpop.f32.mrf.mxu0
      %v2839 = vadd.f32 %v2750, %v2838
      %v2840 = vpop.f32.mrf.mxu0
      %v2841 = vadd.f32 %v2752, %v2840
      %2842 = vdwg.mxu0
      %2843 = vmatpush.bf16.msra.mxu0 %v1819
      %2844 = vmatpush.bf16.msra.mxu0 %v1807
      %2845 = vmatpush.bf16.msra.mxu0 %v1795
      %2846 = vmatpush.bf16.msra.mxu0 %v1783
      %2847 = vmatpush.bf16.msra.mxu0 %v1771
      %2848 = vmatpush.bf16.msra.mxu0 %v1759
      %2849 = vmatpush.bf16.msra.mxu0 %v1747
      %2850 = vmatpush.bf16.msra.mxu0 %v1735
      %2851 = vmatmul.bf16.gmra.mxu0 %v773
      %v2852 = vpop.f32.mrf.mxu0
      %v2853 = vadd.f32 %v591, %v2852
      %v2854 = vpop.f32.mrf.mxu0
      %v2855 = vadd.f32 %v591, %v2854
      %2856 = vmatmul.bf16.gmra.mxu0 %v776
      %v2857 = vpop.f32.mrf.mxu0
      %v2858 = vadd.f32 %v591, %v2857
      %v2859 = vpop.f32.mrf.mxu0
      %v2860 = vadd.f32 %v591, %v2859
      %2861 = vmatmul.bf16.gmra.mxu0 %v779
      %v2862 = vpop.f32.mrf.mxu0
      %v2863 = vadd.f32 %v591, %v2862
      %v2864 = vpop.f32.mrf.mxu0
      %v2865 = vadd.f32 %v591, %v2864
      %2866 = vmatmul.bf16.gmra.mxu0 %v782
      %v2867 = vpop.f32.mrf.mxu0
      %v2868 = vadd.f32 %v591, %v2867
      %v2869 = vpop.f32.mrf.mxu0
      %v2870 = vadd.f32 %v591, %v2869
      %2871 = vmatmul.bf16.gmra.mxu0 %v785
      %v2872 = vpop.f32.mrf.mxu0
      %v2873 = vadd.f32 %v591, %v2872
      %v2874 = vpop.f32.mrf.mxu0
      %v2875 = vadd.f32 %v591, %v2874
      %2876 = vmatmul.bf16.gmra.mxu0 %v788
      %v2877 = vpop.f32.mrf.mxu0
      %v2878 = vadd.f32 %v591, %v2877
      %v2879 = vpop.f32.mrf.mxu0
      %v2880 = vadd.f32 %v591, %v2879
      %2881 = vmatmul.bf16.gmra.mxu0 %v791
      %v2882 = vpop.f32.mrf.mxu0
      %v2883 = vadd.f32 %v591, %v2882
      %v2884 = vpop.f32.mrf.mxu0
      %v2885 = vadd.f32 %v591, %v2884
      %2886 = vmatmul.bf16.gmra.mxu0 %v794
      %v2887 = vpop.f32.mrf.mxu0
      %v2888 = vadd.f32 %v591, %v2887
      %v2889 = vpop.f32.mrf.mxu0
      %v2890 = vadd.f32 %v591, %v2889
      %2891 = vmatmul.bf16.gmra.mxu0 %v797
      %v2892 = vpop.f32.mrf.mxu0
      %v2893 = vadd.f32 %v591, %v2892
      %v2894 = vpop.f32.mrf.mxu0
      %v2895 = vadd.f32 %v591, %v2894
      %2896 = vmatmul.bf16.gmra.mxu0 %v800
      %v2897 = vpop.f32.mrf.mxu0
      %v2898 = vadd.f32 %v591, %v2897
      %v2899 = vpop.f32.mrf.mxu0
      %v2900 = vadd.f32 %v591, %v2899
      %2901 = vmatmul.bf16.gmra.mxu0 %v803
      %v2902 = vpop.f32.mrf.mxu0
      %v2903 = vadd.f32 %v591, %v2902
      %v2904 = vpop.f32.mrf.mxu0
      %v2905 = vadd.f32 %v591, %v2904
      %2906 = vmatmul.bf16.gmra.mxu0 %v806
      %v2907 = vpop.f32.mrf.mxu0
      %v2908 = vadd.f32 %v591, %v2907
      %v2909 = vpop.f32.mrf.mxu0
      %v2910 = vadd.f32 %v591, %v2909
      %2911 = vmatmul.bf16.gmra.mxu0 %v809
      %v2912 = vpop.f32.mrf.mxu0
      %v2913 = vadd.f32 %v591, %v2912
      %v2914 = vpop.f32.mrf.mxu0
      %v2915 = vadd.f32 %v591, %v2914
      %2916 = vmatmul.bf16.gmra.mxu0 %v812
      %v2917 = vpop.f32.mrf.mxu0
      %v2918 = vadd.f32 %v591, %v2917
      %v2919 = vpop.f32.mrf.mxu0
      %v2920 = vadd.f32 %v591, %v2919
      %2921 = vmatmul.bf16.gmra.mxu0 %v815
      %v2922 = vpop.f32.mrf.mxu0
      %v2923 = vadd.f32 %v591, %v2922
      %v2924 = vpop.f32.mrf.mxu0
      %v2925 = vadd.f32 %v591, %v2924
      %2926 = vmatmul.bf16.gmra.mxu0 %v818
      %v2927 = vpop.f32.mrf.mxu0
      %v2928 = vadd.f32 %v591, %v2927
      %v2929 = vpop.f32.mrf.mxu0
      %v2930 = vadd.f32 %v591, %v2929
      %2931 = vdwg.mxu0
      %2932 = vmatpush.bf16.msra.mxu0 %v1915
      %2933 = vmatpush.bf16.msra.mxu0 %v1903
      %2934 = vmatpush.bf16.msra.mxu0 %v1891
      %2935 = vmatpush.bf16.msra.mxu0 %v1879
      %2936 = vmatpush.bf16.msra.mxu0 %v1867
      %2937 = vmatpush.bf16.msra.mxu0 %v1855
      %2938 = vmatpush.bf16.msra.mxu0 %v1843
      %2939 = vmatpush.bf16.msra.mxu0 %v1831
      %2940 = vmatmul.bf16.gmra.mxu0 %v774
      %v2941 = vpop.f32.mrf.mxu0
      %v2942 = vadd.f32 %v2853, %v2941
      %v2943 = vpop.f32.mrf.mxu0
      %v2944 = vadd.f32 %v2855, %v2943
      %2945 = vmatmul.bf16.gmra.mxu0 %v777
      %v2946 = vpop.f32.mrf.mxu0
      %v2947 = vadd.f32 %v2858, %v2946
      %v2948 = vpop.f32.mrf.mxu0
      %v2949 = vadd.f32 %v2860, %v2948
      %2950 = vmatmul.bf16.gmra.mxu0 %v780
      %v2951 = vpop.f32.mrf.mxu0
      %v2952 = vadd.f32 %v2863, %v2951
      %v2953 = vpop.f32.mrf.mxu0
      %v2954 = vadd.f32 %v2865, %v2953
      %2955 = vmatmul.bf16.gmra.mxu0 %v783
      %v2956 = vpop.f32.mrf.mxu0
      %v2957 = vadd.f32 %v2868, %v2956
      %v2958 = vpop.f32.mrf.mxu0
      %v2959 = vadd.f32 %v2870, %v2958
      %2960 = vmatmul.bf16.gmra.mxu0 %v786
      %v2961 = vpop.f32.mrf.mxu0
      %v2962 = vadd.f32 %v2873, %v2961
      %v2963 = vpop.f32.mrf.mxu0
      %v2964 = vadd.f32 %v2875, %v2963
      %2965 = vmatmul.bf16.gmra.mxu0 %v789
      %v2966 = vpop.f32.mrf.mxu0
      %v2967 = vadd.f32 %v2878, %v2966
      %v2968 = vpop.f32.mrf.mxu0
      %v2969 = vadd.f32 %v2880, %v2968
      %2970 = vmatmul.bf16.gmra.mxu0 %v792
      %v2971 = vpop.f32.mrf.mxu0
      %v2972 = vadd.f32 %v2883, %v2971
      %v2973 = vpop.f32.mrf.mxu0
      %v2974 = vadd.f32 %v2885, %v2973
      %2975 = vmatmul.bf16.gmra.mxu0 %v795
      %v2976 = vpop.f32.mrf.mxu0
      %v2977 = vadd.f32 %v2888, %v2976
      %v2978 = vpop.f32.mrf.mxu0
      %v2979 = vadd.f32 %v2890, %v2978
      %2980 = vmatmul.bf16.gmra.mxu0 %v798
      %v2981 = vpop.f32.mrf.mxu0
      %v2982 = vadd.f32 %v2893, %v2981
      %v2983 = vpop.f32.mrf.mxu0
      %v2984 = vadd.f32 %v2895, %v2983
      %2985 = vmatmul.bf16.gmra.mxu0 %v801
      %v2986 = vpop.f32.mrf.mxu0
      %v2987 = vadd.f32 %v2898, %v2986
      %v2988 = vpop.f32.mrf.mxu0
      %v2989 = vadd.f32 %v2900, %v2988
      %2990 = vmatmul.bf16.gmra.mxu0 %v804
      %v2991 = vpop.f32.mrf.mxu0
      %v2992 = vadd.f32 %v2903, %v2991
      %v2993 = vpop.f32.mrf.mxu0
      %v2994 = vadd.f32 %v2905, %v2993
      %2995 = vmatmul.bf16.gmra.mxu0 %v807
      %v2996 = vpop.f32.mrf.mxu0
      %v2997 = vadd.f32 %v2908, %v2996
      %v2998 = vpop.f32.mrf.mxu0
      %v2999 = vadd.f32 %v2910, %v2998
      %3000 = vmatmul.bf16.gmra.mxu0 %v810
      %v3001 = vpop.f32.mrf.mxu0
      %v3002 = vadd.f32 %v2913, %v3001
      %v3003 = vpop.f32.mrf.mxu0
      %v3004 = vadd.f32 %v2915, %v3003
      %3005 = vmatmul.bf16.gmra.mxu0 %v813
      %v3006 = vpop.f32.mrf.mxu0
      %v3007 = vadd.f32 %v2918, %v3006
      %v3008 = vpop.f32.mrf.mxu0
      %v3009 = vadd.f32 %v2920, %v3008
      %3010 = vmatmul.bf16.gmra.mxu0 %v816
      %v3011 = vpop.f32.mrf.mxu0
      %v3012 = vadd.f32 %v2923, %v3011
      %v3013 = vpop.f32.mrf.mxu0
      %v3014 = vadd.f32 %v2925, %v3013
      %3015 = vmatmul.bf16.gmra.mxu0 %v819
      %v3016 = vpop.f32.mrf.mxu0
      %v3017 = vadd.f32 %v2928, %v3016
      %v3018 = vpop.f32.mrf.mxu0
      %v3019 = vadd.f32 %v2930, %v3018
      %3020 = vdwg.mxu0
      %3021 = vmatpush.bf16.msra.mxu0 %v2011
      %3022 = vmatpush.bf16.msra.mxu0 %v1999
      %3023 = vmatpush.bf16.msra.mxu0 %v1987
      %3024 = vmatpush.bf16.msra.mxu0 %v1975
      %3025 = vmatpush.bf16.msra.mxu0 %v1963
      %3026 = vmatpush.bf16.msra.mxu0 %v1951
      %3027 = vmatpush.bf16.msra.mxu0 %v1939
      %3028 = vmatpush.bf16.msra.mxu0 %v1927
      %3029 = vmatmul.bf16.gmra.mxu0 %v775
      %v3030 = vpop.f32.mrf.mxu0
      %v3031 = vadd.f32 %v2942, %v3030
      %v3032 = vpop.f32.mrf.mxu0
      %v3033 = vadd.f32 %v2944, %v3032
      %3034 = vmatmul.bf16.gmra.mxu0 %v778
      %v3035 = vpop.f32.mrf.mxu0
      %v3036 = vadd.f32 %v2947, %v3035
      %v3037 = vpop.f32.mrf.mxu0
      %v3038 = vadd.f32 %v2949, %v3037
      %3039 = vmatmul.bf16.gmra.mxu0 %v781
      %v3040 = vpop.f32.mrf.mxu0
      %v3041 = vadd.f32 %v2952, %v3040
      %v3042 = vpop.f32.mrf.mxu0
      %v3043 = vadd.f32 %v2954, %v3042
      %3044 = vmatmul.bf16.gmra.mxu0 %v784
      %v3045 = vpop.f32.mrf.mxu0
      %v3046 = vadd.f32 %v2957, %v3045
      %v3047 = vpop.f32.mrf.mxu0
      %v3048 = vadd.f32 %v2959, %v3047
      %3049 = vmatmul.bf16.gmra.mxu0 %v787
      %v3050 = vpop.f32.mrf.mxu0
      %v3051 = vadd.f32 %v2962, %v3050
      %v3052 = vpop.f32.mrf.mxu0
      %v3053 = vadd.f32 %v2964, %v3052
      %3054 = vmatmul.bf16.gmra.mxu0 %v790
      %v3055 = vpop.f32.mrf.mxu0
      %v3056 = vadd.f32 %v2967, %v3055
      %v3057 = vpop.f32.mrf.mxu0
      %v3058 = vadd.f32 %v2969, %v3057
      %3059 = vmatmul.bf16.gmra.mxu0 %v793
      %v3060 = vpop.f32.mrf.mxu0
      %v3061 = vadd.f32 %v2972, %v3060
      %v3062 = vpop.f32.mrf.mxu0
      %v3063 = vadd.f32 %v2974, %v3062
      %3064 = vmatmul.bf16.gmra.mxu0 %v796
      %v3065 = vpop.f32.mrf.mxu0
      %v3066 = vadd.f32 %v2977, %v3065
      %v3067 = vpop.f32.mrf.mxu0
      %v3068 = vadd.f32 %v2979, %v3067
      %3069 = vmatmul.bf16.gmra.mxu0 %v799
      %v3070 = vpop.f32.mrf.mxu0
      %v3071 = vadd.f32 %v2982, %v3070
      %v3072 = vpop.f32.mrf.mxu0
      %v3073 = vadd.f32 %v2984, %v3072
      %3074 = vmatmul.bf16.gmra.mxu0 %v802
      %v3075 = vpop.f32.mrf.mxu0
      %v3076 = vadd.f32 %v2987, %v3075
      %v3077 = vpop.f32.mrf.mxu0
      %v3078 = vadd.f32 %v2989, %v3077
      %3079 = vmatmul.bf16.gmra.mxu0 %v805
      %v3080 = vpop.f32.mrf.mxu0
      %v3081 = vadd.f32 %v2992, %v3080
      %v3082 = vpop.f32.mrf.mxu0
      %v3083 = vadd.f32 %v2994, %v3082
      %3084 = vmatmul.bf16.gmra.mxu0 %v808
      %v3085 = vpop.f32.mrf.mxu0
      %v3086 = vadd.f32 %v2997, %v3085
      %v3087 = vpop.f32.mrf.mxu0
      %v3088 = vadd.f32 %v2999, %v3087
      %3089 = vmatmul.bf16.gmra.mxu0 %v811
      %v3090 = vpop.f32.mrf.mxu0
      %v3091 = vadd.f32 %v3002, %v3090
      %v3092 = vpop.f32.mrf.mxu0
      %v3093 = vadd.f32 %v3004, %v3092
      %3094 = vmatmul.bf16.gmra.mxu0 %v814
      %v3095 = vpop.f32.mrf.mxu0
      %v3096 = vadd.f32 %v3007, %v3095
      %v3097 = vpop.f32.mrf.mxu0
      %v3098 = vadd.f32 %v3009, %v3097
      %3099 = vmatmul.bf16.gmra.mxu0 %v817
      %v3100 = vpop.f32.mrf.mxu0
      %v3101 = vadd.f32 %v3012, %v3100
      %v3102 = vpop.f32.mrf.mxu0
      %v3103 = vadd.f32 %v3014, %v3102
      %3104 = vmatmul.bf16.gmra.mxu0 %v820
      %v3105 = vpop.f32.mrf.mxu0
      %v3106 = vadd.f32 %v3017, %v3105
      %v3107 = vpop.f32.mrf.mxu0
      %v3108 = vadd.f32 %v3019, %v3107
      %3109 = vdwg.mxu0
      %3110 = vmatpush.bf16.msra.mxu0 %v1820
      %3111 = vmatpush.bf16.msra.mxu0 %v1808
      %3112 = vmatpush.bf16.msra.mxu0 %v1796
      %3113 = vmatpush.bf16.msra.mxu0 %v1784
      %3114 = vmatpush.bf16.msra.mxu0 %v1772
      %3115 = vmatpush.bf16.msra.mxu0 %v1760
      %3116 = vmatpush.bf16.msra.mxu0 %v1748
      %3117 = vmatpush.bf16.msra.mxu0 %v1736
      %3118 = vmatmul.bf16.gmra.mxu0 %v773
      %v3119 = vpop.f32.mrf.mxu0
      %v3120 = vadd.f32 %v592, %v3119
      %v3121 = vpop.f32.mrf.mxu0
      %v3122 = vadd.f32 %v592, %v3121
      %3123 = vmatmul.bf16.gmra.mxu0 %v776
      %v3124 = vpop.f32.mrf.mxu0
      %v3125 = vadd.f32 %v592, %v3124
      %v3126 = vpop.f32.mrf.mxu0
      %v3127 = vadd.f32 %v592, %v3126
      %3128 = vmatmul.bf16.gmra.mxu0 %v779
      %v3129 = vpop.f32.mrf.mxu0
      %v3130 = vadd.f32 %v592, %v3129
      %v3131 = vpop.f32.mrf.mxu0
      %v3132 = vadd.f32 %v592, %v3131
      %3133 = vmatmul.bf16.gmra.mxu0 %v782
      %v3134 = vpop.f32.mrf.mxu0
      %v3135 = vadd.f32 %v592, %v3134
      %v3136 = vpop.f32.mrf.mxu0
      %v3137 = vadd.f32 %v592, %v3136
      %3138 = vmatmul.bf16.gmra.mxu0 %v785
      %v3139 = vpop.f32.mrf.mxu0
      %v3140 = vadd.f32 %v592, %v3139
      %v3141 = vpop.f32.mrf.mxu0
      %v3142 = vadd.f32 %v592, %v3141
      %3143 = vmatmul.bf16.gmra.mxu0 %v788
      %v3144 = vpop.f32.mrf.mxu0
      %v3145 = vadd.f32 %v592, %v3144
      %v3146 = vpop.f32.mrf.mxu0
      %v3147 = vadd.f32 %v592, %v3146
      %3148 = vmatmul.bf16.gmra.mxu0 %v791
      %v3149 = vpop.f32.mrf.mxu0
      %v3150 = vadd.f32 %v592, %v3149
      %v3151 = vpop.f32.mrf.mxu0
      %v3152 = vadd.f32 %v592, %v3151
      %3153 = vmatmul.bf16.gmra.mxu0 %v794
      %v3154 = vpop.f32.mrf.mxu0
      %v3155 = vadd.f32 %v592, %v3154
      %v3156 = vpop.f32.mrf.mxu0
      %v3157 = vadd.f32 %v592, %v3156
      %3158 = vmatmul.bf16.gmra.mxu0 %v797
      %v3159 = vpop.f32.mrf.mxu0
      %v3160 = vadd.f32 %v592, %v3159
      %v3161 = vpop.f32.mrf.mxu0
      %v3162 = vadd.f32 %v592, %v3161
      %3163 = vmatmul.bf16.gmra.mxu0 %v800
      %v3164 = vpop.f32.mrf.mxu0
      %v3165 = vadd.f32 %v592, %v3164
      %v3166 = vpop.f32.mrf.mxu0
      %v3167 = vadd.f32 %v592, %v3166
      %3168 = vmatmul.bf16.gmra.mxu0 %v803
      %v3169 = vpop.f32.mrf.mxu0
      %v3170 = vadd.f32 %v592, %v3169
      %v3171 = vpop.f32.mrf.mxu0
      %v3172 = vadd.f32 %v592, %v3171
      %3173 = vmatmul.bf16.gmra.mxu0 %v806
      %v3174 = vpop.f32.mrf.mxu0
      %v3175 = vadd.f32 %v592, %v3174
      %v3176 = vpop.f32.mrf.mxu0
      %v3177 = vadd.f32 %v592, %v3176
      %3178 = vmatmul.bf16.gmra.mxu0 %v809
      %v3179 = vpop.f32.mrf.mxu0
      %v3180 = vadd.f32 %v592, %v3179
      %v3181 = vpop.f32.mrf.mxu0
      %v3182 = vadd.f32 %v592, %v3181
      %3183 = vmatmul.bf16.gmra.mxu0 %v812
      %v3184 = vpop.f32.mrf.mxu0
      %v3185 = vadd.f32 %v592, %v3184
      %v3186 = vpop.f32.mrf.mxu0
      %v3187 = vadd.f32 %v592, %v3186
      %3188 = vmatmul.bf16.gmra.mxu0 %v815
      %v3189 = vpop.f32.mrf.mxu0
      %v3190 = vadd.f32 %v592, %v3189
      %v3191 = vpop.f32.mrf.mxu0
      %v3192 = vadd.f32 %v592, %v3191
      %3193 = vmatmul.bf16.gmra.mxu0 %v818
      %v3194 = vpop.f32.mrf.mxu0
      %v3195 = vadd.f32 %v592, %v3194
      %v3196 = vpop.f32.mrf.mxu0
      %v3197 = vadd.f32 %v592, %v3196
      %3198 = vdwg.mxu0
      %3199 = vmatpush.bf16.msra.mxu0 %v1916
      %3200 = vmatpush.bf16.msra.mxu0 %v1904
      %3201 = vmatpush.bf16.msra.mxu0 %v1892
      %3202 = vmatpush.bf16.msra.mxu0 %v1880
      %3203 = vmatpush.bf16.msra.mxu0 %v1868
      %3204 = vmatpush.bf16.msra.mxu0 %v1856
      %3205 = vmatpush.bf16.msra.mxu0 %v1844
      %3206 = vmatpush.bf16.msra.mxu0 %v1832
      %3207 = vmatmul.bf16.gmra.mxu0 %v774
      %v3208 = vpop.f32.mrf.mxu0
      %v3209 = vadd.f32 %v3120, %v3208
      %v3210 = vpop.f32.mrf.mxu0
      %v3211 = vadd.f32 %v3122, %v3210
      %3212 = vmatmul.bf16.gmra.mxu0 %v777
      %v3213 = vpop.f32.mrf.mxu0
      %v3214 = vadd.f32 %v3125, %v3213
      %v3215 = vpop.f32.mrf.mxu0
      %v3216 = vadd.f32 %v3127, %v3215
      %3217 = vmatmul.bf16.gmra.mxu0 %v780
      %v3218 = vpop.f32.mrf.mxu0
      %v3219 = vadd.f32 %v3130, %v3218
      %v3220 = vpop.f32.mrf.mxu0
      %v3221 = vadd.f32 %v3132, %v3220
      %3222 = vmatmul.bf16.gmra.mxu0 %v783
      %v3223 = vpop.f32.mrf.mxu0
      %v3224 = vadd.f32 %v3135, %v3223
      %v3225 = vpop.f32.mrf.mxu0
      %v3226 = vadd.f32 %v3137, %v3225
      %3227 = vmatmul.bf16.gmra.mxu0 %v786
      %v3228 = vpop.f32.mrf.mxu0
      %v3229 = vadd.f32 %v3140, %v3228
      %v3230 = vpop.f32.mrf.mxu0
      %v3231 = vadd.f32 %v3142, %v3230
      %3232 = vmatmul.bf16.gmra.mxu0 %v789
      %v3233 = vpop.f32.mrf.mxu0
      %v3234 = vadd.f32 %v3145, %v3233
      %v3235 = vpop.f32.mrf.mxu0
      %v3236 = vadd.f32 %v3147, %v3235
      %3237 = vmatmul.bf16.gmra.mxu0 %v792
      %v3238 = vpop.f32.mrf.mxu0
      %v3239 = vadd.f32 %v3150, %v3238
      %v3240 = vpop.f32.mrf.mxu0
      %v3241 = vadd.f32 %v3152, %v3240
      %3242 = vmatmul.bf16.gmra.mxu0 %v795
      %v3243 = vpop.f32.mrf.mxu0
      %v3244 = vadd.f32 %v3155, %v3243
      %v3245 = vpop.f32.mrf.mxu0
      %v3246 = vadd.f32 %v3157, %v3245
      %3247 = vmatmul.bf16.gmra.mxu0 %v798
      %v3248 = vpop.f32.mrf.mxu0
      %v3249 = vadd.f32 %v3160, %v3248
      %v3250 = vpop.f32.mrf.mxu0
      %v3251 = vadd.f32 %v3162, %v3250
      %3252 = vmatmul.bf16.gmra.mxu0 %v801
      %v3253 = vpop.f32.mrf.mxu0
      %v3254 = vadd.f32 %v3165, %v3253
      %v3255 = vpop.f32.mrf.mxu0
      %v3256 = vadd.f32 %v3167, %v3255
      %3257 = vmatmul.bf16.gmra.mxu0 %v804
      %v3258 = vpop.f32.mrf.mxu0
      %v3259 = vadd.f32 %v3170, %v3258
      %v3260 = vpop.f32.mrf.mxu0
      %v3261 = vadd.f32 %v3172, %v3260
      %3262 = vmatmul.bf16.gmra.mxu0 %v807
      %v3263 = vpop.f32.mrf.mxu0
      %v3264 = vadd.f32 %v3175, %v3263
      %v3265 = vpop.f32.mrf.mxu0
      %v3266 = vadd.f32 %v3177, %v3265
      %3267 = vmatmul.bf16.gmra.mxu0 %v810
      %v3268 = vpop.f32.mrf.mxu0
      %v3269 = vadd.f32 %v3180, %v3268
      %v3270 = vpop.f32.mrf.mxu0
      %v3271 = vadd.f32 %v3182, %v3270
      %3272 = vmatmul.bf16.gmra.mxu0 %v813
      %v3273 = vpop.f32.mrf.mxu0
      %v3274 = vadd.f32 %v3185, %v3273
      %v3275 = vpop.f32.mrf.mxu0
      %v3276 = vadd.f32 %v3187, %v3275
      %3277 = vmatmul.bf16.gmra.mxu0 %v816
      %v3278 = vpop.f32.mrf.mxu0
      %v3279 = vadd.f32 %v3190, %v3278
      %v3280 = vpop.f32.mrf.mxu0
      %v3281 = vadd.f32 %v3192, %v3280
      %3282 = vmatmul.bf16.gmra.mxu0 %v819
      %v3283 = vpop.f32.mrf.mxu0
      %v3284 = vadd.f32 %v3195, %v3283
      %v3285 = vpop.f32.mrf.mxu0
      %v3286 = vadd.f32 %v3197, %v3285
      %3287 = vdwg.mxu0
      %3288 = vmatpush.bf16.msra.mxu0 %v2012
      %3289 = vmatpush.bf16.msra.mxu0 %v2000
      %3290 = vmatpush.bf16.msra.mxu0 %v1988
      %3291 = vmatpush.bf16.msra.mxu0 %v1976
      %3292 = vmatpush.bf16.msra.mxu0 %v1964
      %3293 = vmatpush.bf16.msra.mxu0 %v1952
      %3294 = vmatpush.bf16.msra.mxu0 %v1940
      %3295 = vmatpush.bf16.msra.mxu0 %v1928
      %3296 = vmatmul.bf16.gmra.mxu0 %v775
      %v3297 = vpop.f32.mrf.mxu0
      %v3298 = vadd.f32 %v3209, %v3297
      %v3299 = vpop.f32.mrf.mxu0
      %v3300 = vadd.f32 %v3211, %v3299
      %3301 = vmatmul.bf16.gmra.mxu0 %v778
      %v3302 = vpop.f32.mrf.mxu0
      %v3303 = vadd.f32 %v3214, %v3302
      %v3304 = vpop.f32.mrf.mxu0
      %v3305 = vadd.f32 %v3216, %v3304
      %3306 = vmatmul.bf16.gmra.mxu0 %v781
      %v3307 = vpop.f32.mrf.mxu0
      %v3308 = vadd.f32 %v3219, %v3307
      %v3309 = vpop.f32.mrf.mxu0
      %v3310 = vadd.f32 %v3221, %v3309
      %3311 = vmatmul.bf16.gmra.mxu0 %v784
      %v3312 = vpop.f32.mrf.mxu0
      %v3313 = vadd.f32 %v3224, %v3312
      %v3314 = vpop.f32.mrf.mxu0
      %v3315 = vadd.f32 %v3226, %v3314
      %3316 = vmatmul.bf16.gmra.mxu0 %v787
      %v3317 = vpop.f32.mrf.mxu0
      %v3318 = vadd.f32 %v3229, %v3317
      %v3319 = vpop.f32.mrf.mxu0
      %v3320 = vadd.f32 %v3231, %v3319
      %3321 = vmatmul.bf16.gmra.mxu0 %v790
      %v3322 = vpop.f32.mrf.mxu0
      %v3323 = vadd.f32 %v3234, %v3322
      %v3324 = vpop.f32.mrf.mxu0
      %v3325 = vadd.f32 %v3236, %v3324
      %3326 = vmatmul.bf16.gmra.mxu0 %v793
      %v3327 = vpop.f32.mrf.mxu0
      %v3328 = vadd.f32 %v3239, %v3327
      %v3329 = vpop.f32.mrf.mxu0
      %v3330 = vadd.f32 %v3241, %v3329
      %3331 = vmatmul.bf16.gmra.mxu0 %v796
      %v3332 = vpop.f32.mrf.mxu0
      %v3333 = vadd.f32 %v3244, %v3332
      %v3334 = vpop.f32.mrf.mxu0
      %v3335 = vadd.f32 %v3246, %v3334
      %3336 = vmatmul.bf16.gmra.mxu0 %v799
      %v3337 = vpop.f32.mrf.mxu0
      %v3338 = vadd.f32 %v3249, %v3337
      %v3339 = vpop.f32.mrf.mxu0
      %v3340 = vadd.f32 %v3251, %v3339
      %3341 = vmatmul.bf16.gmra.mxu0 %v802
      %v3342 = vpop.f32.mrf.mxu0
      %v3343 = vadd.f32 %v3254, %v3342
      %v3344 = vpop.f32.mrf.mxu0
      %v3345 = vadd.f32 %v3256, %v3344
      %3346 = vmatmul.bf16.gmra.mxu0 %v805
      %v3347 = vpop.f32.mrf.mxu0
      %v3348 = vadd.f32 %v3259, %v3347
      %v3349 = vpop.f32.mrf.mxu0
      %v3350 = vadd.f32 %v3261, %v3349
      %3351 = vmatmul.bf16.gmra.mxu0 %v808
      %v3352 = vpop.f32.mrf.mxu0
      %v3353 = vadd.f32 %v3264, %v3352
      %v3354 = vpop.f32.mrf.mxu0
      %v3355 = vadd.f32 %v3266, %v3354
      %3356 = vmatmul.bf16.gmra.mxu0 %v811
      %v3357 = vpop.f32.mrf.mxu0
      %v3358 = vadd.f32 %v3269, %v3357
      %v3359 = vpop.f32.mrf.mxu0
      %v3360 = vadd.f32 %v3271, %v3359
      %3361 = vmatmul.bf16.gmra.mxu0 %v814
      %v3362 = vpop.f32.mrf.mxu0
      %v3363 = vadd.f32 %v3274, %v3362
      %v3364 = vpop.f32.mrf.mxu0
      %v3365 = vadd.f32 %v3276, %v3364
      %3366 = vmatmul.bf16.gmra.mxu0 %v817
      %v3367 = vpop.f32.mrf.mxu0
      %v3368 = vadd.f32 %v3279, %v3367
      %v3369 = vpop.f32.mrf.mxu0
      %v3370 = vadd.f32 %v3281, %v3369
      %3371 = vmatmul.bf16.gmra.mxu0 %v820
      %v3372 = vpop.f32.mrf.mxu0
      %v3373 = vadd.f32 %v3284, %v3372
      %v3374 = vpop.f32.mrf.mxu0
      %v3375 = vadd.f32 %v3286, %v3374
      %3376 = vdwg.mxu0
      %3377 = vmatpush.bf16.msra.mxu0 %v1821
      %3378 = vmatpush.bf16.msra.mxu0 %v1809
      %3379 = vmatpush.bf16.msra.mxu0 %v1797
      %3380 = vmatpush.bf16.msra.mxu0 %v1785
      %3381 = vmatpush.bf16.msra.mxu0 %v1773
      %3382 = vmatpush.bf16.msra.mxu0 %v1761
      %3383 = vmatpush.bf16.msra.mxu0 %v1749
      %3384 = vmatpush.bf16.msra.mxu0 %v1737
      %3385 = vmatmul.bf16.gmra.mxu0 %v773
      %v3386 = vpop.f32.mrf.mxu0
      %v3387 = vadd.f32 %v593, %v3386
      %v3388 = vpop.f32.mrf.mxu0
      %v3389 = vadd.f32 %v593, %v3388
      %3390 = vmatmul.bf16.gmra.mxu0 %v776
      %v3391 = vpop.f32.mrf.mxu0
      %v3392 = vadd.f32 %v593, %v3391
      %v3393 = vpop.f32.mrf.mxu0
      %v3394 = vadd.f32 %v593, %v3393
      %3395 = vmatmul.bf16.gmra.mxu0 %v779
      %v3396 = vpop.f32.mrf.mxu0
      %v3397 = vadd.f32 %v593, %v3396
      %v3398 = vpop.f32.mrf.mxu0
      %v3399 = vadd.f32 %v593, %v3398
      %3400 = vmatmul.bf16.gmra.mxu0 %v782
      %v3401 = vpop.f32.mrf.mxu0
      %v3402 = vadd.f32 %v593, %v3401
      %v3403 = vpop.f32.mrf.mxu0
      %v3404 = vadd.f32 %v593, %v3403
      %3405 = vmatmul.bf16.gmra.mxu0 %v785
      %v3406 = vpop.f32.mrf.mxu0
      %v3407 = vadd.f32 %v593, %v3406
      %v3408 = vpop.f32.mrf.mxu0
      %v3409 = vadd.f32 %v593, %v3408
      %3410 = vmatmul.bf16.gmra.mxu0 %v788
      %v3411 = vpop.f32.mrf.mxu0
      %v3412 = vadd.f32 %v593, %v3411
      %v3413 = vpop.f32.mrf.mxu0
      %v3414 = vadd.f32 %v593, %v3413
      %3415 = vmatmul.bf16.gmra.mxu0 %v791
      %v3416 = vpop.f32.mrf.mxu0
      %v3417 = vadd.f32 %v593, %v3416
      %v3418 = vpop.f32.mrf.mxu0
      %v3419 = vadd.f32 %v593, %v3418
      %3420 = vmatmul.bf16.gmra.mxu0 %v794
      %v3421 = vpop.f32.mrf.mxu0
      %v3422 = vadd.f32 %v593, %v3421
      %v3423 = vpop.f32.mrf.mxu0
      %v3424 = vadd.f32 %v593, %v3423
      %3425 = vmatmul.bf16.gmra.mxu0 %v797
      %v3426 = vpop.f32.mrf.mxu0
      %v3427 = vadd.f32 %v593, %v3426
      %v3428 = vpop.f32.mrf.mxu0
      %v3429 = vadd.f32 %v593, %v3428
      %3430 = vmatmul.bf16.gmra.mxu0 %v800
      %v3431 = vpop.f32.mrf.mxu0
      %v3432 = vadd.f32 %v593, %v3431
      %v3433 = vpop.f32.mrf.mxu0
      %v3434 = vadd.f32 %v593, %v3433
      %3435 = vmatmul.bf16.gmra.mxu0 %v803
      %v3436 = vpop.f32.mrf.mxu0
      %v3437 = vadd.f32 %v593, %v3436
      %v3438 = vpop.f32.mrf.mxu0
      %v3439 = vadd.f32 %v593, %v3438
      %3440 = vmatmul.bf16.gmra.mxu0 %v806
      %v3441 = vpop.f32.mrf.mxu0
      %v3442 = vadd.f32 %v593, %v3441
      %v3443 = vpop.f32.mrf.mxu0
      %v3444 = vadd.f32 %v593, %v3443
      %3445 = vmatmul.bf16.gmra.mxu0 %v809
      %v3446 = vpop.f32.mrf.mxu0
      %v3447 = vadd.f32 %v593, %v3446
      %v3448 = vpop.f32.mrf.mxu0
      %v3449 = vadd.f32 %v593, %v3448
      %3450 = vmatmul.bf16.gmra.mxu0 %v812
      %v3451 = vpop.f32.mrf.mxu0
      %v3452 = vadd.f32 %v593, %v3451
      %v3453 = vpop.f32.mrf.mxu0
      %v3454 = vadd.f32 %v593, %v3453
      %3455 = vmatmul.bf16.gmra.mxu0 %v815
      %v3456 = vpop.f32.mrf.mxu0
      %v3457 = vadd.f32 %v593, %v3456
      %v3458 = vpop.f32.mrf.mxu0
      %v3459 = vadd.f32 %v593, %v3458
      %3460 = vmatmul.bf16.gmra.mxu0 %v818
      %v3461 = vpop.f32.mrf.mxu0
      %v3462 = vadd.f32 %v593, %v3461
      %v3463 = vpop.f32.mrf.mxu0
      %v3464 = vadd.f32 %v593, %v3463
      %3465 = vdwg.mxu0
      %3466 = vmatpush.bf16.msra.mxu0 %v1917
      %3467 = vmatpush.bf16.msra.mxu0 %v1905
      %3468 = vmatpush.bf16.msra.mxu0 %v1893
      %3469 = vmatpush.bf16.msra.mxu0 %v1881
      %3470 = vmatpush.bf16.msra.mxu0 %v1869
      %3471 = vmatpush.bf16.msra.mxu0 %v1857
      %3472 = vmatpush.bf16.msra.mxu0 %v1845
      %3473 = vmatpush.bf16.msra.mxu0 %v1833
      %3474 = vmatmul.bf16.gmra.mxu0 %v774
      %v3475 = vpop.f32.mrf.mxu0
      %v3476 = vadd.f32 %v3387, %v3475
      %v3477 = vpop.f32.mrf.mxu0
      %v3478 = vadd.f32 %v3389, %v3477
      %3479 = vmatmul.bf16.gmra.mxu0 %v777
      %v3480 = vpop.f32.mrf.mxu0
      %v3481 = vadd.f32 %v3392, %v3480
      %v3482 = vpop.f32.mrf.mxu0
      %v3483 = vadd.f32 %v3394, %v3482
      %3484 = vmatmul.bf16.gmra.mxu0 %v780
      %v3485 = vpop.f32.mrf.mxu0
      %v3486 = vadd.f32 %v3397, %v3485
      %v3487 = vpop.f32.mrf.mxu0
      %v3488 = vadd.f32 %v3399, %v3487
      %3489 = vmatmul.bf16.gmra.mxu0 %v783
      %v3490 = vpop.f32.mrf.mxu0
      %v3491 = vadd.f32 %v3402, %v3490
      %v3492 = vpop.f32.mrf.mxu0
      %v3493 = vadd.f32 %v3404, %v3492
      %3494 = vmatmul.bf16.gmra.mxu0 %v786
      %v3495 = vpop.f32.mrf.mxu0
      %v3496 = vadd.f32 %v3407, %v3495
      %v3497 = vpop.f32.mrf.mxu0
      %v3498 = vadd.f32 %v3409, %v3497
      %3499 = vmatmul.bf16.gmra.mxu0 %v789
      %v3500 = vpop.f32.mrf.mxu0
      %v3501 = vadd.f32 %v3412, %v3500
      %v3502 = vpop.f32.mrf.mxu0
      %v3503 = vadd.f32 %v3414, %v3502
      %3504 = vmatmul.bf16.gmra.mxu0 %v792
      %v3505 = vpop.f32.mrf.mxu0
      %v3506 = vadd.f32 %v3417, %v3505
      %v3507 = vpop.f32.mrf.mxu0
      %v3508 = vadd.f32 %v3419, %v3507
      %3509 = vmatmul.bf16.gmra.mxu0 %v795
      %v3510 = vpop.f32.mrf.mxu0
      %v3511 = vadd.f32 %v3422, %v3510
      %v3512 = vpop.f32.mrf.mxu0
      %v3513 = vadd.f32 %v3424, %v3512
      %3514 = vmatmul.bf16.gmra.mxu0 %v798
      %v3515 = vpop.f32.mrf.mxu0
      %v3516 = vadd.f32 %v3427, %v3515
      %v3517 = vpop.f32.mrf.mxu0
      %v3518 = vadd.f32 %v3429, %v3517
      %3519 = vmatmul.bf16.gmra.mxu0 %v801
      %v3520 = vpop.f32.mrf.mxu0
      %v3521 = vadd.f32 %v3432, %v3520
      %v3522 = vpop.f32.mrf.mxu0
      %v3523 = vadd.f32 %v3434, %v3522
      %3524 = vmatmul.bf16.gmra.mxu0 %v804
      %v3525 = vpop.f32.mrf.mxu0
      %v3526 = vadd.f32 %v3437, %v3525
      %v3527 = vpop.f32.mrf.mxu0
      %v3528 = vadd.f32 %v3439, %v3527
      %3529 = vmatmul.bf16.gmra.mxu0 %v807
      %v3530 = vpop.f32.mrf.mxu0
      %v3531 = vadd.f32 %v3442, %v3530
      %v3532 = vpop.f32.mrf.mxu0
      %v3533 = vadd.f32 %v3444, %v3532
      %3534 = vmatmul.bf16.gmra.mxu0 %v810
      %v3535 = vpop.f32.mrf.mxu0
      %v3536 = vadd.f32 %v3447, %v3535
      %v3537 = vpop.f32.mrf.mxu0
      %v3538 = vadd.f32 %v3449, %v3537
      %3539 = vmatmul.bf16.gmra.mxu0 %v813
      %v3540 = vpop.f32.mrf.mxu0
      %v3541 = vadd.f32 %v3452, %v3540
      %v3542 = vpop.f32.mrf.mxu0
      %v3543 = vadd.f32 %v3454, %v3542
      %3544 = vmatmul.bf16.gmra.mxu0 %v816
      %v3545 = vpop.f32.mrf.mxu0
      %v3546 = vadd.f32 %v3457, %v3545
      %v3547 = vpop.f32.mrf.mxu0
      %v3548 = vadd.f32 %v3459, %v3547
      %3549 = vmatmul.bf16.gmra.mxu0 %v819
      %v3550 = vpop.f32.mrf.mxu0
      %v3551 = vadd.f32 %v3462, %v3550
      %v3552 = vpop.f32.mrf.mxu0
      %v3553 = vadd.f32 %v3464, %v3552
      %3554 = vdwg.mxu0
      %3555 = vmatpush.bf16.msra.mxu0 %v2013
      %3556 = vmatpush.bf16.msra.mxu0 %v2001
      %3557 = vmatpush.bf16.msra.mxu0 %v1989
      %3558 = vmatpush.bf16.msra.mxu0 %v1977
      %3559 = vmatpush.bf16.msra.mxu0 %v1965
      %3560 = vmatpush.bf16.msra.mxu0 %v1953
      %3561 = vmatpush.bf16.msra.mxu0 %v1941
      %3562 = vmatpush.bf16.msra.mxu0 %v1929
      %3563 = vmatmul.bf16.gmra.mxu0 %v775
      %v3564 = vpop.f32.mrf.mxu0
      %v3565 = vadd.f32 %v3476, %v3564
      %v3566 = vpop.f32.mrf.mxu0
      %v3567 = vadd.f32 %v3478, %v3566
      %3568 = vmatmul.bf16.gmra.mxu0 %v778
      %v3569 = vpop.f32.mrf.mxu0
      %v3570 = vadd.f32 %v3481, %v3569
      %v3571 = vpop.f32.mrf.mxu0
      %v3572 = vadd.f32 %v3483, %v3571
      %3573 = vmatmul.bf16.gmra.mxu0 %v781
      %v3574 = vpop.f32.mrf.mxu0
      %v3575 = vadd.f32 %v3486, %v3574
      %v3576 = vpop.f32.mrf.mxu0
      %v3577 = vadd.f32 %v3488, %v3576
      %3578 = vmatmul.bf16.gmra.mxu0 %v784
      %v3579 = vpop.f32.mrf.mxu0
      %v3580 = vadd.f32 %v3491, %v3579
      %v3581 = vpop.f32.mrf.mxu0
      %v3582 = vadd.f32 %v3493, %v3581
      %3583 = vmatmul.bf16.gmra.mxu0 %v787
      %v3584 = vpop.f32.mrf.mxu0
      %v3585 = vadd.f32 %v3496, %v3584
      %v3586 = vpop.f32.mrf.mxu0
      %v3587 = vadd.f32 %v3498, %v3586
      %3588 = vmatmul.bf16.gmra.mxu0 %v790
      %v3589 = vpop.f32.mrf.mxu0
      %v3590 = vadd.f32 %v3501, %v3589
      %v3591 = vpop.f32.mrf.mxu0
      %v3592 = vadd.f32 %v3503, %v3591
      %3593 = vmatmul.bf16.gmra.mxu0 %v793
      %v3594 = vpop.f32.mrf.mxu0
      %v3595 = vadd.f32 %v3506, %v3594
      %v3596 = vpop.f32.mrf.mxu0
      %v3597 = vadd.f32 %v3508, %v3596
      %3598 = vmatmul.bf16.gmra.mxu0 %v796
      %v3599 = vpop.f32.mrf.mxu0
      %v3600 = vadd.f32 %v3511, %v3599
      %v3601 = vpop.f32.mrf.mxu0
      %v3602 = vadd.f32 %v3513, %v3601
      %3603 = vmatmul.bf16.gmra.mxu0 %v799
      %v3604 = vpop.f32.mrf.mxu0
      %v3605 = vadd.f32 %v3516, %v3604
      %v3606 = vpop.f32.mrf.mxu0
      %v3607 = vadd.f32 %v3518, %v3606
      %3608 = vmatmul.bf16.gmra.mxu0 %v802
      %v3609 = vpop.f32.mrf.mxu0
      %v3610 = vadd.f32 %v3521, %v3609
      %v3611 = vpop.f32.mrf.mxu0
      %v3612 = vadd.f32 %v3523, %v3611
      %3613 = vmatmul.bf16.gmra.mxu0 %v805
      %v3614 = vpop.f32.mrf.mxu0
      %v3615 = vadd.f32 %v3526, %v3614
      %v3616 = vpop.f32.mrf.mxu0
      %v3617 = vadd.f32 %v3528, %v3616
      %3618 = vmatmul.bf16.gmra.mxu0 %v808
      %v3619 = vpop.f32.mrf.mxu0
      %v3620 = vadd.f32 %v3531, %v3619
      %v3621 = vpop.f32.mrf.mxu0
      %v3622 = vadd.f32 %v3533, %v3621
      %3623 = vmatmul.bf16.gmra.mxu0 %v811
      %v3624 = vpop.f32.mrf.mxu0
      %v3625 = vadd.f32 %v3536, %v3624
      %v3626 = vpop.f32.mrf.mxu0
      %v3627 = vadd.f32 %v3538, %v3626
      %3628 = vmatmul.bf16.gmra.mxu0 %v814
      %v3629 = vpop.f32.mrf.mxu0
      %v3630 = vadd.f32 %v3541, %v3629
      %v3631 = vpop.f32.mrf.mxu0
      %v3632 = vadd.f32 %v3543, %v3631
      %3633 = vmatmul.bf16.gmra.mxu0 %v817
      %v3634 = vpop.f32.mrf.mxu0
      %v3635 = vadd.f32 %v3546, %v3634
      %v3636 = vpop.f32.mrf.mxu0
      %v3637 = vadd.f32 %v3548, %v3636
      %3638 = vmatmul.bf16.gmra.mxu0 %v820
      %v3639 = vpop.f32.mrf.mxu0
      %v3640 = vadd.f32 %v3551, %v3639
      %v3641 = vpop.f32.mrf.mxu0
      %v3642 = vadd.f32 %v3553, %v3641
      %3643 = vdwg.mxu0
      %3644 = vmatpush.bf16.msra.mxu0 %v1822
      %3645 = vmatpush.bf16.msra.mxu0 %v1810
      %3646 = vmatpush.bf16.msra.mxu0 %v1798
      %3647 = vmatpush.bf16.msra.mxu0 %v1786
      %3648 = vmatpush.bf16.msra.mxu0 %v1774
      %3649 = vmatpush.bf16.msra.mxu0 %v1762
      %3650 = vmatpush.bf16.msra.mxu0 %v1750
      %3651 = vmatpush.bf16.msra.mxu0 %v1738
      %3652 = vmatmul.bf16.gmra.mxu0 %v773
      %v3653 = vpop.f32.mrf.mxu0
      %v3654 = vadd.f32 %v594, %v3653
      %v3655 = vpop.f32.mrf.mxu0
      %v3656 = vadd.f32 %v594, %v3655
      %3657 = vmatmul.bf16.gmra.mxu0 %v776
      %v3658 = vpop.f32.mrf.mxu0
      %v3659 = vadd.f32 %v594, %v3658
      %v3660 = vpop.f32.mrf.mxu0
      %v3661 = vadd.f32 %v594, %v3660
      %3662 = vmatmul.bf16.gmra.mxu0 %v779
      %v3663 = vpop.f32.mrf.mxu0
      %v3664 = vadd.f32 %v594, %v3663
      %v3665 = vpop.f32.mrf.mxu0
      %v3666 = vadd.f32 %v594, %v3665
      %3667 = vmatmul.bf16.gmra.mxu0 %v782
      %v3668 = vpop.f32.mrf.mxu0
      %v3669 = vadd.f32 %v594, %v3668
      %v3670 = vpop.f32.mrf.mxu0
      %v3671 = vadd.f32 %v594, %v3670
      %3672 = vmatmul.bf16.gmra.mxu0 %v785
      %v3673 = vpop.f32.mrf.mxu0
      %v3674 = vadd.f32 %v594, %v3673
      %v3675 = vpop.f32.mrf.mxu0
      %v3676 = vadd.f32 %v594, %v3675
      %3677 = vmatmul.bf16.gmra.mxu0 %v788
      %v3678 = vpop.f32.mrf.mxu0
      %v3679 = vadd.f32 %v594, %v3678
      %v3680 = vpop.f32.mrf.mxu0
      %v3681 = vadd.f32 %v594, %v3680
      %3682 = vmatmul.bf16.gmra.mxu0 %v791
      %v3683 = vpop.f32.mrf.mxu0
      %v3684 = vadd.f32 %v594, %v3683
      %v3685 = vpop.f32.mrf.mxu0
      %v3686 = vadd.f32 %v594, %v3685
      %3687 = vmatmul.bf16.gmra.mxu0 %v794
      %v3688 = vpop.f32.mrf.mxu0
      %v3689 = vadd.f32 %v594, %v3688
      %v3690 = vpop.f32.mrf.mxu0
      %v3691 = vadd.f32 %v594, %v3690
      %3692 = vmatmul.bf16.gmra.mxu0 %v797
      %v3693 = vpop.f32.mrf.mxu0
      %v3694 = vadd.f32 %v594, %v3693
      %v3695 = vpop.f32.mrf.mxu0
      %v3696 = vadd.f32 %v594, %v3695
      %3697 = vmatmul.bf16.gmra.mxu0 %v800
      %v3698 = vpop.f32.mrf.mxu0
      %v3699 = vadd.f32 %v594, %v3698
      %v3700 = vpop.f32.mrf.mxu0
      %v3701 = vadd.f32 %v594, %v3700
      %3702 = vmatmul.bf16.gmra.mxu0 %v803
      %v3703 = vpop.f32.mrf.mxu0
      %v3704 = vadd.f32 %v594, %v3703
      %v3705 = vpop.f32.mrf.mxu0
      %v3706 = vadd.f32 %v594, %v3705
      %3707 = vmatmul.bf16.gmra.mxu0 %v806
      %v3708 = vpop.f32.mrf.mxu0
      %v3709 = vadd.f32 %v594, %v3708
      %v3710 = vpop.f32.mrf.mxu0
      %v3711 = vadd.f32 %v594, %v3710
      %3712 = vmatmul.bf16.gmra.mxu0 %v809
      %v3713 = vpop.f32.mrf.mxu0
      %v3714 = vadd.f32 %v594, %v3713
      %v3715 = vpop.f32.mrf.mxu0
      %v3716 = vadd.f32 %v594, %v3715
      %3717 = vmatmul.bf16.gmra.mxu0 %v812
      %v3718 = vpop.f32.mrf.mxu0
      %v3719 = vadd.f32 %v594, %v3718
      %v3720 = vpop.f32.mrf.mxu0
      %v3721 = vadd.f32 %v594, %v3720
      %3722 = vmatmul.bf16.gmra.mxu0 %v815
      %v3723 = vpop.f32.mrf.mxu0
      %v3724 = vadd.f32 %v594, %v3723
      %v3725 = vpop.f32.mrf.mxu0
      %v3726 = vadd.f32 %v594, %v3725
      %3727 = vmatmul.bf16.gmra.mxu0 %v818
      %v3728 = vpop.f32.mrf.mxu0
      %v3729 = vadd.f32 %v594, %v3728
      %v3730 = vpop.f32.mrf.mxu0
      %v3731 = vadd.f32 %v594, %v3730
      %3732 = vdwg.mxu0
      %3733 = vmatpush.bf16.msra.mxu0 %v1918
      %3734 = vmatpush.bf16.msra.mxu0 %v1906
      %3735 = vmatpush.bf16.msra.mxu0 %v1894
      %3736 = vmatpush.bf16.msra.mxu0 %v1882
      %3737 = vmatpush.bf16.msra.mxu0 %v1870
      %3738 = vmatpush.bf16.msra.mxu0 %v1858
      %3739 = vmatpush.bf16.msra.mxu0 %v1846
      %3740 = vmatpush.bf16.msra.mxu0 %v1834
      %3741 = vmatmul.bf16.gmra.mxu0 %v774
      %v3742 = vpop.f32.mrf.mxu0
      %v3743 = vadd.f32 %v3654, %v3742
      %v3744 = vpop.f32.mrf.mxu0
      %v3745 = vadd.f32 %v3656, %v3744
      %3746 = vmatmul.bf16.gmra.mxu0 %v777
      %v3747 = vpop.f32.mrf.mxu0
      %v3748 = vadd.f32 %v3659, %v3747
      %v3749 = vpop.f32.mrf.mxu0
      %v3750 = vadd.f32 %v3661, %v3749
      %3751 = vmatmul.bf16.gmra.mxu0 %v780
      %v3752 = vpop.f32.mrf.mxu0
      %v3753 = vadd.f32 %v3664, %v3752
      %v3754 = vpop.f32.mrf.mxu0
      %v3755 = vadd.f32 %v3666, %v3754
      %3756 = vmatmul.bf16.gmra.mxu0 %v783
      %v3757 = vpop.f32.mrf.mxu0
      %v3758 = vadd.f32 %v3669, %v3757
      %v3759 = vpop.f32.mrf.mxu0
      %v3760 = vadd.f32 %v3671, %v3759
      %3761 = vmatmul.bf16.gmra.mxu0 %v786
      %v3762 = vpop.f32.mrf.mxu0
      %v3763 = vadd.f32 %v3674, %v3762
      %v3764 = vpop.f32.mrf.mxu0
      %v3765 = vadd.f32 %v3676, %v3764
      %3766 = vmatmul.bf16.gmra.mxu0 %v789
      %v3767 = vpop.f32.mrf.mxu0
      %v3768 = vadd.f32 %v3679, %v3767
      %v3769 = vpop.f32.mrf.mxu0
      %v3770 = vadd.f32 %v3681, %v3769
      %3771 = vmatmul.bf16.gmra.mxu0 %v792
      %v3772 = vpop.f32.mrf.mxu0
      %v3773 = vadd.f32 %v3684, %v3772
      %v3774 = vpop.f32.mrf.mxu0
      %v3775 = vadd.f32 %v3686, %v3774
      %3776 = vmatmul.bf16.gmra.mxu0 %v795
      %v3777 = vpop.f32.mrf.mxu0
      %v3778 = vadd.f32 %v3689, %v3777
      %v3779 = vpop.f32.mrf.mxu0
      %v3780 = vadd.f32 %v3691, %v3779
      %3781 = vmatmul.bf16.gmra.mxu0 %v798
      %v3782 = vpop.f32.mrf.mxu0
      %v3783 = vadd.f32 %v3694, %v3782
      %v3784 = vpop.f32.mrf.mxu0
      %v3785 = vadd.f32 %v3696, %v3784
      %3786 = vmatmul.bf16.gmra.mxu0 %v801
      %v3787 = vpop.f32.mrf.mxu0
      %v3788 = vadd.f32 %v3699, %v3787
      %v3789 = vpop.f32.mrf.mxu0
      %v3790 = vadd.f32 %v3701, %v3789
      %3791 = vmatmul.bf16.gmra.mxu0 %v804
      %v3792 = vpop.f32.mrf.mxu0
      %v3793 = vadd.f32 %v3704, %v3792
      %v3794 = vpop.f32.mrf.mxu0
      %v3795 = vadd.f32 %v3706, %v3794
      %3796 = vmatmul.bf16.gmra.mxu0 %v807
      %v3797 = vpop.f32.mrf.mxu0
      %v3798 = vadd.f32 %v3709, %v3797
      %v3799 = vpop.f32.mrf.mxu0
      %v3800 = vadd.f32 %v3711, %v3799
      %3801 = vmatmul.bf16.gmra.mxu0 %v810
      %v3802 = vpop.f32.mrf.mxu0
      %v3803 = vadd.f32 %v3714, %v3802
      %v3804 = vpop.f32.mrf.mxu0
      %v3805 = vadd.f32 %v3716, %v3804
      %3806 = vmatmul.bf16.gmra.mxu0 %v813
      %v3807 = vpop.f32.mrf.mxu0
      %v3808 = vadd.f32 %v3719, %v3807
      %v3809 = vpop.f32.mrf.mxu0
      %v3810 = vadd.f32 %v3721, %v3809
      %3811 = vmatmul.bf16.gmra.mxu0 %v816
      %v3812 = vpop.f32.mrf.mxu0
      %v3813 = vadd.f32 %v3724, %v3812
      %v3814 = vpop.f32.mrf.mxu0
      %v3815 = vadd.f32 %v3726, %v3814
      %3816 = vmatmul.bf16.gmra.mxu0 %v819
      %v3817 = vpop.f32.mrf.mxu0
      %v3818 = vadd.f32 %v3729, %v3817
      %v3819 = vpop.f32.mrf.mxu0
      %v3820 = vadd.f32 %v3731, %v3819
      %3821 = vdwg.mxu0
      %3822 = vmatpush.bf16.msra.mxu0 %v2014
      %3823 = vmatpush.bf16.msra.mxu0 %v2002
      %3824 = vmatpush.bf16.msra.mxu0 %v1990
      %3825 = vmatpush.bf16.msra.mxu0 %v1978
      %3826 = vmatpush.bf16.msra.mxu0 %v1966
      %3827 = vmatpush.bf16.msra.mxu0 %v1954
      %3828 = vmatpush.bf16.msra.mxu0 %v1942
      %3829 = vmatpush.bf16.msra.mxu0 %v1930
      %3830 = vmatmul.bf16.gmra.mxu0 %v775
      %v3831 = vpop.f32.mrf.mxu0
      %v3832 = vadd.f32 %v3743, %v3831
      %v3833 = vpop.f32.mrf.mxu0
      %v3834 = vadd.f32 %v3745, %v3833
      %3835 = vmatmul.bf16.gmra.mxu0 %v778
      %v3836 = vpop.f32.mrf.mxu0
      %v3837 = vadd.f32 %v3748, %v3836
      %v3838 = vpop.f32.mrf.mxu0
      %v3839 = vadd.f32 %v3750, %v3838
      %3840 = vmatmul.bf16.gmra.mxu0 %v781
      %v3841 = vpop.f32.mrf.mxu0
      %v3842 = vadd.f32 %v3753, %v3841
      %v3843 = vpop.f32.mrf.mxu0
      %v3844 = vadd.f32 %v3755, %v3843
      %3845 = vmatmul.bf16.gmra.mxu0 %v784
      %v3846 = vpop.f32.mrf.mxu0
      %v3847 = vadd.f32 %v3758, %v3846
      %v3848 = vpop.f32.mrf.mxu0
      %v3849 = vadd.f32 %v3760, %v3848
      %3850 = vmatmul.bf16.gmra.mxu0 %v787
      %v3851 = vpop.f32.mrf.mxu0
      %v3852 = vadd.f32 %v3763, %v3851
      %v3853 = vpop.f32.mrf.mxu0
      %v3854 = vadd.f32 %v3765, %v3853
      %3855 = vmatmul.bf16.gmra.mxu0 %v790
      %v3856 = vpop.f32.mrf.mxu0
      %v3857 = vadd.f32 %v3768, %v3856
      %v3858 = vpop.f32.mrf.mxu0
      %v3859 = vadd.f32 %v3770, %v3858
      %3860 = vmatmul.bf16.gmra.mxu0 %v793
      %v3861 = vpop.f32.mrf.mxu0
      %v3862 = vadd.f32 %v3773, %v3861
      %v3863 = vpop.f32.mrf.mxu0
      %v3864 = vadd.f32 %v3775, %v3863
      %3865 = vmatmul.bf16.gmra.mxu0 %v796
      %v3866 = vpop.f32.mrf.mxu0
      %v3867 = vadd.f32 %v3778, %v3866
      %v3868 = vpop.f32.mrf.mxu0
      %v3869 = vadd.f32 %v3780, %v3868
      %3870 = vmatmul.bf16.gmra.mxu0 %v799
      %v3871 = vpop.f32.mrf.mxu0
      %v3872 = vadd.f32 %v3783, %v3871
      %v3873 = vpop.f32.mrf.mxu0
      %v3874 = vadd.f32 %v3785, %v3873
      %3875 = vmatmul.bf16.gmra.mxu0 %v802
      %v3876 = vpop.f32.mrf.mxu0
      %v3877 = vadd.f32 %v3788, %v3876
      %v3878 = vpop.f32.mrf.mxu0
      %v3879 = vadd.f32 %v3790, %v3878
      %3880 = vmatmul.bf16.gmra.mxu0 %v805
      %v3881 = vpop.f32.mrf.mxu0
      %v3882 = vadd.f32 %v3793, %v3881
      %v3883 = vpop.f32.mrf.mxu0
      %v3884 = vadd.f32 %v3795, %v3883
      %3885 = vmatmul.bf16.gmra.mxu0 %v808
      %v3886 = vpop.f32.mrf.mxu0
      %v3887 = vadd.f32 %v3798, %v3886
      %v3888 = vpop.f32.mrf.mxu0
      %v3889 = vadd.f32 %v3800, %v3888
      %3890 = vmatmul.bf16.gmra.mxu0 %v811
      %v3891 = vpop.f32.mrf.mxu0
      %v3892 = vadd.f32 %v3803, %v3891
      %v3893 = vpop.f32.mrf.mxu0
      %v3894 = vadd.f32 %v3805, %v3893
      %3895 = vmatmul.bf16.gmra.mxu0 %v814
      %v3896 = vpop.f32.mrf.mxu0
      %v3897 = vadd.f32 %v3808, %v3896
      %v3898 = vpop.f32.mrf.mxu0
      %v3899 = vadd.f32 %v3810, %v3898
      %3900 = vmatmul.bf16.gmra.mxu0 %v817
      %v3901 = vpop.f32.mrf.mxu0
      %v3902 = vadd.f32 %v3813, %v3901
      %v3903 = vpop.f32.mrf.mxu0
      %v3904 = vadd.f32 %v3815, %v3903
      %3905 = vmatmul.bf16.gmra.mxu0 %v820
      %v3906 = vpop.f32.mrf.mxu0
      %v3907 = vadd.f32 %v3818, %v3906
      %v3908 = vpop.f32.mrf.mxu0
      %v3909 = vadd.f32 %v3820, %v3908
      %3910 = vdwg.mxu0
      %3911 = vmatpush.bf16.msra.mxu0 %v1823
      %3912 = vmatpush.bf16.msra.mxu0 %v1811
      %3913 = vmatpush.bf16.msra.mxu0 %v1799
      %3914 = vmatpush.bf16.msra.mxu0 %v1787
      %3915 = vmatpush.bf16.msra.mxu0 %v1775
      %3916 = vmatpush.bf16.msra.mxu0 %v1763
      %3917 = vmatpush.bf16.msra.mxu0 %v1751
      %3918 = vmatpush.bf16.msra.mxu0 %v1739
      %3919 = vmatmul.bf16.gmra.mxu0 %v773
      %v3920 = vpop.f32.mrf.mxu0
      %v3921 = vadd.f32 %v595, %v3920
      %v3922 = vpop.f32.mrf.mxu0
      %v3923 = vadd.f32 %v595, %v3922
      %3924 = vmatmul.bf16.gmra.mxu0 %v776
      %v3925 = vpop.f32.mrf.mxu0
      %v3926 = vadd.f32 %v595, %v3925
      %v3927 = vpop.f32.mrf.mxu0
      %v3928 = vadd.f32 %v595, %v3927
      %3929 = vmatmul.bf16.gmra.mxu0 %v779
      %v3930 = vpop.f32.mrf.mxu0
      %v3931 = vadd.f32 %v595, %v3930
      %v3932 = vpop.f32.mrf.mxu0
      %v3933 = vadd.f32 %v595, %v3932
      %3934 = vmatmul.bf16.gmra.mxu0 %v782
      %v3935 = vpop.f32.mrf.mxu0
      %v3936 = vadd.f32 %v595, %v3935
      %v3937 = vpop.f32.mrf.mxu0
      %v3938 = vadd.f32 %v595, %v3937
      %3939 = vmatmul.bf16.gmra.mxu0 %v785
      %v3940 = vpop.f32.mrf.mxu0
      %v3941 = vadd.f32 %v595, %v3940
      %v3942 = vpop.f32.mrf.mxu0
      %v3943 = vadd.f32 %v595, %v3942
      %3944 = vmatmul.bf16.gmra.mxu0 %v788
      %v3945 = vpop.f32.mrf.mxu0
      %v3946 = vadd.f32 %v595, %v3945
      %v3947 = vpop.f32.mrf.mxu0
      %v3948 = vadd.f32 %v595, %v3947
      %3949 = vmatmul.bf16.gmra.mxu0 %v791
      %v3950 = vpop.f32.mrf.mxu0
      %v3951 = vadd.f32 %v595, %v3950
      %v3952 = vpop.f32.mrf.mxu0
      %v3953 = vadd.f32 %v595, %v3952
      %3954 = vmatmul.bf16.gmra.mxu0 %v794
      %v3955 = vpop.f32.mrf.mxu0
      %v3956 = vadd.f32 %v595, %v3955
      %v3957 = vpop.f32.mrf.mxu0
      %v3958 = vadd.f32 %v595, %v3957
      %3959 = vmatmul.bf16.gmra.mxu0 %v797
      %v3960 = vpop.f32.mrf.mxu0
      %v3961 = vadd.f32 %v595, %v3960
      %v3962 = vpop.f32.mrf.mxu0
      %v3963 = vadd.f32 %v595, %v3962
      %3964 = vmatmul.bf16.gmra.mxu0 %v800
      %v3965 = vpop.f32.mrf.mxu0
      %v3966 = vadd.f32 %v595, %v3965
      %v3967 = vpop.f32.mrf.mxu0
      %v3968 = vadd.f32 %v595, %v3967
      %3969 = vmatmul.bf16.gmra.mxu0 %v803
      %v3970 = vpop.f32.mrf.mxu0
      %v3971 = vadd.f32 %v595, %v3970
      %v3972 = vpop.f32.mrf.mxu0
      %v3973 = vadd.f32 %v595, %v3972
      %3974 = vmatmul.bf16.gmra.mxu0 %v806
      %v3975 = vpop.f32.mrf.mxu0
      %v3976 = vadd.f32 %v595, %v3975
      %v3977 = vpop.f32.mrf.mxu0
      %v3978 = vadd.f32 %v595, %v3977
      %3979 = vmatmul.bf16.gmra.mxu0 %v809
      %v3980 = vpop.f32.mrf.mxu0
      %v3981 = vadd.f32 %v595, %v3980
      %v3982 = vpop.f32.mrf.mxu0
      %v3983 = vadd.f32 %v595, %v3982
      %3984 = vmatmul.bf16.gmra.mxu0 %v812
      %v3985 = vpop.f32.mrf.mxu0
      %v3986 = vadd.f32 %v595, %v3985
      %v3987 = vpop.f32.mrf.mxu0
      %v3988 = vadd.f32 %v595, %v3987
      %3989 = vmatmul.bf16.gmra.mxu0 %v815
      %v3990 = vpop.f32.mrf.mxu0
      %v3991 = vadd.f32 %v595, %v3990
      %v3992 = vpop.f32.mrf.mxu0
      %v3993 = vadd.f32 %v595, %v3992
      %3994 = vmatmul.bf16.gmra.mxu0 %v818
      %v3995 = vpop.f32.mrf.mxu0
      %v3996 = vadd.f32 %v595, %v3995
      %v3997 = vpop.f32.mrf.mxu0
      %v3998 = vadd.f32 %v595, %v3997
      %3999 = vdwg.mxu0
      %4000 = vmatpush.bf16.msra.mxu0 %v1919
      %4001 = vmatpush.bf16.msra.mxu0 %v1907
      %4002 = vmatpush.bf16.msra.mxu0 %v1895
      %4003 = vmatpush.bf16.msra.mxu0 %v1883
      %4004 = vmatpush.bf16.msra.mxu0 %v1871
      %4005 = vmatpush.bf16.msra.mxu0 %v1859
      %4006 = vmatpush.bf16.msra.mxu0 %v1847
      %4007 = vmatpush.bf16.msra.mxu0 %v1835
      %4008 = vmatmul.bf16.gmra.mxu0 %v774
      %v4009 = vpop.f32.mrf.mxu0
      %v4010 = vadd.f32 %v3921, %v4009
      %v4011 = vpop.f32.mrf.mxu0
      %v4012 = vadd.f32 %v3923, %v4011
      %4013 = vmatmul.bf16.gmra.mxu0 %v777
      %v4014 = vpop.f32.mrf.mxu0
      %v4015 = vadd.f32 %v3926, %v4014
      %v4016 = vpop.f32.mrf.mxu0
      %v4017 = vadd.f32 %v3928, %v4016
      %4018 = vmatmul.bf16.gmra.mxu0 %v780
      %v4019 = vpop.f32.mrf.mxu0
      %v4020 = vadd.f32 %v3931, %v4019
      %v4021 = vpop.f32.mrf.mxu0
      %v4022 = vadd.f32 %v3933, %v4021
      %4023 = vmatmul.bf16.gmra.mxu0 %v783
      %v4024 = vpop.f32.mrf.mxu0
      %v4025 = vadd.f32 %v3936, %v4024
      %v4026 = vpop.f32.mrf.mxu0
      %v4027 = vadd.f32 %v3938, %v4026
      %4028 = vmatmul.bf16.gmra.mxu0 %v786
      %v4029 = vpop.f32.mrf.mxu0
      %v4030 = vadd.f32 %v3941, %v4029
      %v4031 = vpop.f32.mrf.mxu0
      %v4032 = vadd.f32 %v3943, %v4031
      %4033 = vmatmul.bf16.gmra.mxu0 %v789
      %v4034 = vpop.f32.mrf.mxu0
      %v4035 = vadd.f32 %v3946, %v4034
      %v4036 = vpop.f32.mrf.mxu0
      %v4037 = vadd.f32 %v3948, %v4036
      %4038 = vmatmul.bf16.gmra.mxu0 %v792
      %v4039 = vpop.f32.mrf.mxu0
      %v4040 = vadd.f32 %v3951, %v4039
      %v4041 = vpop.f32.mrf.mxu0
      %v4042 = vadd.f32 %v3953, %v4041
      %4043 = vmatmul.bf16.gmra.mxu0 %v795
      %v4044 = vpop.f32.mrf.mxu0
      %v4045 = vadd.f32 %v3956, %v4044
      %v4046 = vpop.f32.mrf.mxu0
      %v4047 = vadd.f32 %v3958, %v4046
      %4048 = vmatmul.bf16.gmra.mxu0 %v798
      %v4049 = vpop.f32.mrf.mxu0
      %v4050 = vadd.f32 %v3961, %v4049
      %v4051 = vpop.f32.mrf.mxu0
      %v4052 = vadd.f32 %v3963, %v4051
      %4053 = vmatmul.bf16.gmra.mxu0 %v801
      %v4054 = vpop.f32.mrf.mxu0
      %v4055 = vadd.f32 %v3966, %v4054
      %v4056 = vpop.f32.mrf.mxu0
      %v4057 = vadd.f32 %v3968, %v4056
      %4058 = vmatmul.bf16.gmra.mxu0 %v804
      %v4059 = vpop.f32.mrf.mxu0
      %v4060 = vadd.f32 %v3971, %v4059
      %v4061 = vpop.f32.mrf.mxu0
      %v4062 = vadd.f32 %v3973, %v4061
      %4063 = vmatmul.bf16.gmra.mxu0 %v807
      %v4064 = vpop.f32.mrf.mxu0
      %v4065 = vadd.f32 %v3976, %v4064
      %v4066 = vpop.f32.mrf.mxu0
      %v4067 = vadd.f32 %v3978, %v4066
      %4068 = vmatmul.bf16.gmra.mxu0 %v810
      %v4069 = vpop.f32.mrf.mxu0
      %v4070 = vadd.f32 %v3981, %v4069
      %v4071 = vpop.f32.mrf.mxu0
      %v4072 = vadd.f32 %v3983, %v4071
      %4073 = vmatmul.bf16.gmra.mxu0 %v813
      %v4074 = vpop.f32.mrf.mxu0
      %v4075 = vadd.f32 %v3986, %v4074
      %v4076 = vpop.f32.mrf.mxu0
      %v4077 = vadd.f32 %v3988, %v4076
      %4078 = vmatmul.bf16.gmra.mxu0 %v816
      %v4079 = vpop.f32.mrf.mxu0
      %v4080 = vadd.f32 %v3991, %v4079
      %v4081 = vpop.f32.mrf.mxu0
      %v4082 = vadd.f32 %v3993, %v4081
      %4083 = vmatmul.bf16.gmra.mxu0 %v819
      %v4084 = vpop.f32.mrf.mxu0
      %v4085 = vadd.f32 %v3996, %v4084
      %v4086 = vpop.f32.mrf.mxu0
      %v4087 = vadd.f32 %v3998, %v4086
      %4088 = vdwg.mxu0
      %4089 = vmatpush.bf16.msra.mxu0 %v2015
      %4090 = vmatpush.bf16.msra.mxu0 %v2003
      %4091 = vmatpush.bf16.msra.mxu0 %v1991
      %4092 = vmatpush.bf16.msra.mxu0 %v1979
      %4093 = vmatpush.bf16.msra.mxu0 %v1967
      %4094 = vmatpush.bf16.msra.mxu0 %v1955
      %4095 = vmatpush.bf16.msra.mxu0 %v1943
      %4096 = vmatpush.bf16.msra.mxu0 %v1931
      %4097 = vmatmul.bf16.gmra.mxu0 %v775
      %v4098 = vpop.f32.mrf.mxu0
      %v4099 = vadd.f32 %v4010, %v4098
      %v4100 = vpop.f32.mrf.mxu0
      %v4101 = vadd.f32 %v4012, %v4100
      %4102 = vmatmul.bf16.gmra.mxu0 %v778
      %v4103 = vpop.f32.mrf.mxu0
      %v4104 = vadd.f32 %v4015, %v4103
      %v4105 = vpop.f32.mrf.mxu0
      %v4106 = vadd.f32 %v4017, %v4105
      %4107 = vmatmul.bf16.gmra.mxu0 %v781
      %v4108 = vpop.f32.mrf.mxu0
      %v4109 = vadd.f32 %v4020, %v4108
      %v4110 = vpop.f32.mrf.mxu0
      %v4111 = vadd.f32 %v4022, %v4110
      %4112 = vmatmul.bf16.gmra.mxu0 %v784
      %v4113 = vpop.f32.mrf.mxu0
      %v4114 = vadd.f32 %v4025, %v4113
      %v4115 = vpop.f32.mrf.mxu0
      %v4116 = vadd.f32 %v4027, %v4115
      %4117 = vmatmul.bf16.gmra.mxu0 %v787
      %v4118 = vpop.f32.mrf.mxu0
      %v4119 = vadd.f32 %v4030, %v4118
      %v4120 = vpop.f32.mrf.mxu0
      %v4121 = vadd.f32 %v4032, %v4120
      %4122 = vmatmul.bf16.gmra.mxu0 %v790
      %v4123 = vpop.f32.mrf.mxu0
      %v4124 = vadd.f32 %v4035, %v4123
      %v4125 = vpop.f32.mrf.mxu0
      %v4126 = vadd.f32 %v4037, %v4125
      %4127 = vmatmul.bf16.gmra.mxu0 %v793
      %v4128 = vpop.f32.mrf.mxu0
      %v4129 = vadd.f32 %v4040, %v4128
      %v4130 = vpop.f32.mrf.mxu0
      %v4131 = vadd.f32 %v4042, %v4130
      %4132 = vmatmul.bf16.gmra.mxu0 %v796
      %v4133 = vpop.f32.mrf.mxu0
      %v4134 = vadd.f32 %v4045, %v4133
      %v4135 = vpop.f32.mrf.mxu0
      %v4136 = vadd.f32 %v4047, %v4135
      %4137 = vmatmul.bf16.gmra.mxu0 %v799
      %v4138 = vpop.f32.mrf.mxu0
      %v4139 = vadd.f32 %v4050, %v4138
      %v4140 = vpop.f32.mrf.mxu0
      %v4141 = vadd.f32 %v4052, %v4140
      %4142 = vmatmul.bf16.gmra.mxu0 %v802
      %v4143 = vpop.f32.mrf.mxu0
      %v4144 = vadd.f32 %v4055, %v4143
      %v4145 = vpop.f32.mrf.mxu0
      %v4146 = vadd.f32 %v4057, %v4145
      %4147 = vmatmul.bf16.gmra.mxu0 %v805
      %v4148 = vpop.f32.mrf.mxu0
      %v4149 = vadd.f32 %v4060, %v4148
      %v4150 = vpop.f32.mrf.mxu0
      %v4151 = vadd.f32 %v4062, %v4150
      %4152 = vmatmul.bf16.gmra.mxu0 %v808
      %v4153 = vpop.f32.mrf.mxu0
      %v4154 = vadd.f32 %v4065, %v4153
      %v4155 = vpop.f32.mrf.mxu0
      %v4156 = vadd.f32 %v4067, %v4155
      %4157 = vmatmul.bf16.gmra.mxu0 %v811
      %v4158 = vpop.f32.mrf.mxu0
      %v4159 = vadd.f32 %v4070, %v4158
      %v4160 = vpop.f32.mrf.mxu0
      %v4161 = vadd.f32 %v4072, %v4160
      %4162 = vmatmul.bf16.gmra.mxu0 %v814
      %v4163 = vpop.f32.mrf.mxu0
      %v4164 = vadd.f32 %v4075, %v4163
      %v4165 = vpop.f32.mrf.mxu0
      %v4166 = vadd.f32 %v4077, %v4165
      %4167 = vmatmul.bf16.gmra.mxu0 %v817
      %v4168 = vpop.f32.mrf.mxu0
      %v4169 = vadd.f32 %v4080, %v4168
      %v4170 = vpop.f32.mrf.mxu0
      %v4171 = vadd.f32 %v4082, %v4170
      %4172 = vmatmul.bf16.gmra.mxu0 %v820
      %v4173 = vpop.f32.mrf.mxu0
      %v4174 = vadd.f32 %v4085, %v4173
      %v4175 = vpop.f32.mrf.mxu0
      %v4176 = vadd.f32 %v4087, %v4175
      %4177 = vdwg.mxu0
      %4178 = vmatpush.bf16.msra.mxu0 %v1824
      %4179 = vmatpush.bf16.msra.mxu0 %v1812
      %4180 = vmatpush.bf16.msra.mxu0 %v1800
      %4181 = vmatpush.bf16.msra.mxu0 %v1788
      %4182 = vmatpush.bf16.msra.mxu0 %v1776
      %4183 = vmatpush.bf16.msra.mxu0 %v1764
      %4184 = vmatpush.bf16.msra.mxu0 %v1752
      %4185 = vmatpush.bf16.msra.mxu0 %v1740
      %4186 = vmatmul.bf16.gmra.mxu0 %v773
      %v4187 = vpop.f32.mrf.mxu0
      %v4188 = vadd.f32 %v596, %v4187
      %v4189 = vpop.f32.mrf.mxu0
      %v4190 = vadd.f32 %v596, %v4189
      %4191 = vmatmul.bf16.gmra.mxu0 %v776
      %v4192 = vpop.f32.mrf.mxu0
      %v4193 = vadd.f32 %v596, %v4192
      %v4194 = vpop.f32.mrf.mxu0
      %v4195 = vadd.f32 %v596, %v4194
      %4196 = vmatmul.bf16.gmra.mxu0 %v779
      %v4197 = vpop.f32.mrf.mxu0
      %v4198 = vadd.f32 %v596, %v4197
      %v4199 = vpop.f32.mrf.mxu0
      %v4200 = vadd.f32 %v596, %v4199
      %4201 = vmatmul.bf16.gmra.mxu0 %v782
      %v4202 = vpop.f32.mrf.mxu0
      %v4203 = vadd.f32 %v596, %v4202
      %v4204 = vpop.f32.mrf.mxu0
      %v4205 = vadd.f32 %v596, %v4204
      %4206 = vmatmul.bf16.gmra.mxu0 %v785
      %v4207 = vpop.f32.mrf.mxu0
      %v4208 = vadd.f32 %v596, %v4207
      %v4209 = vpop.f32.mrf.mxu0
      %v4210 = vadd.f32 %v596, %v4209
      %4211 = vmatmul.bf16.gmra.mxu0 %v788
      %v4212 = vpop.f32.mrf.mxu0
      %v4213 = vadd.f32 %v596, %v4212
      %v4214 = vpop.f32.mrf.mxu0
      %v4215 = vadd.f32 %v596, %v4214
      %4216 = vmatmul.bf16.gmra.mxu0 %v791
      %v4217 = vpop.f32.mrf.mxu0
      %v4218 = vadd.f32 %v596, %v4217
      %v4219 = vpop.f32.mrf.mxu0
      %v4220 = vadd.f32 %v596, %v4219
      %4221 = vmatmul.bf16.gmra.mxu0 %v794
      %v4222 = vpop.f32.mrf.mxu0
      %v4223 = vadd.f32 %v596, %v4222
      %v4224 = vpop.f32.mrf.mxu0
      %v4225 = vadd.f32 %v596, %v4224
      %4226 = vmatmul.bf16.gmra.mxu0 %v797
      %v4227 = vpop.f32.mrf.mxu0
      %v4228 = vadd.f32 %v596, %v4227
      %v4229 = vpop.f32.mrf.mxu0
      %v4230 = vadd.f32 %v596, %v4229
      %4231 = vmatmul.bf16.gmra.mxu0 %v800
      %v4232 = vpop.f32.mrf.mxu0
      %v4233 = vadd.f32 %v596, %v4232
      %v4234 = vpop.f32.mrf.mxu0
      %v4235 = vadd.f32 %v596, %v4234
      %4236 = vmatmul.bf16.gmra.mxu0 %v803
      %v4237 = vpop.f32.mrf.mxu0
      %v4238 = vadd.f32 %v596, %v4237
      %v4239 = vpop.f32.mrf.mxu0
      %v4240 = vadd.f32 %v596, %v4239
      %4241 = vmatmul.bf16.gmra.mxu0 %v806
      %v4242 = vpop.f32.mrf.mxu0
      %v4243 = vadd.f32 %v596, %v4242
      %v4244 = vpop.f32.mrf.mxu0
      %v4245 = vadd.f32 %v596, %v4244
      %4246 = vmatmul.bf16.gmra.mxu0 %v809
      %v4247 = vpop.f32.mrf.mxu0
      %v4248 = vadd.f32 %v596, %v4247
      %v4249 = vpop.f32.mrf.mxu0
      %v4250 = vadd.f32 %v596, %v4249
      %4251 = vmatmul.bf16.gmra.mxu0 %v812
      %v4252 = vpop.f32.mrf.mxu0
      %v4253 = vadd.f32 %v596, %v4252
      %v4254 = vpop.f32.mrf.mxu0
      %v4255 = vadd.f32 %v596, %v4254
      %4256 = vmatmul.bf16.gmra.mxu0 %v815
      %v4257 = vpop.f32.mrf.mxu0
      %v4258 = vadd.f32 %v596, %v4257
      %v4259 = vpop.f32.mrf.mxu0
      %v4260 = vadd.f32 %v596, %v4259
      %4261 = vmatmul.bf16.gmra.mxu0 %v818
      %v4262 = vpop.f32.mrf.mxu0
      %v4263 = vadd.f32 %v596, %v4262
      %v4264 = vpop.f32.mrf.mxu0
      %v4265 = vadd.f32 %v596, %v4264
      %4266 = vdwg.mxu0
      %4267 = vmatpush.bf16.msra.mxu0 %v1920
      %4268 = vmatpush.bf16.msra.mxu0 %v1908
      %4269 = vmatpush.bf16.msra.mxu0 %v1896
      %4270 = vmatpush.bf16.msra.mxu0 %v1884
      %4271 = vmatpush.bf16.msra.mxu0 %v1872
      %4272 = vmatpush.bf16.msra.mxu0 %v1860
      %4273 = vmatpush.bf16.msra.mxu0 %v1848
      %4274 = vmatpush.bf16.msra.mxu0 %v1836
      %4275 = vmatmul.bf16.gmra.mxu0 %v774
      %v4276 = vpop.f32.mrf.mxu0
      %v4277 = vadd.f32 %v4188, %v4276
      %v4278 = vpop.f32.mrf.mxu0
      %v4279 = vadd.f32 %v4190, %v4278
      %4280 = vmatmul.bf16.gmra.mxu0 %v777
      %v4281 = vpop.f32.mrf.mxu0
      %v4282 = vadd.f32 %v4193, %v4281
      %v4283 = vpop.f32.mrf.mxu0
      %v4284 = vadd.f32 %v4195, %v4283
      %4285 = vmatmul.bf16.gmra.mxu0 %v780
      %v4286 = vpop.f32.mrf.mxu0
      %v4287 = vadd.f32 %v4198, %v4286
      %v4288 = vpop.f32.mrf.mxu0
      %v4289 = vadd.f32 %v4200, %v4288
      %4290 = vmatmul.bf16.gmra.mxu0 %v783
      %v4291 = vpop.f32.mrf.mxu0
      %v4292 = vadd.f32 %v4203, %v4291
      %v4293 = vpop.f32.mrf.mxu0
      %v4294 = vadd.f32 %v4205, %v4293
      %4295 = vmatmul.bf16.gmra.mxu0 %v786
      %v4296 = vpop.f32.mrf.mxu0
      %v4297 = vadd.f32 %v4208, %v4296
      %v4298 = vpop.f32.mrf.mxu0
      %v4299 = vadd.f32 %v4210, %v4298
      %4300 = vmatmul.bf16.gmra.mxu0 %v789
      %v4301 = vpop.f32.mrf.mxu0
      %v4302 = vadd.f32 %v4213, %v4301
      %v4303 = vpop.f32.mrf.mxu0
      %v4304 = vadd.f32 %v4215, %v4303
      %4305 = vmatmul.bf16.gmra.mxu0 %v792
      %v4306 = vpop.f32.mrf.mxu0
      %v4307 = vadd.f32 %v4218, %v4306
      %v4308 = vpop.f32.mrf.mxu0
      %v4309 = vadd.f32 %v4220, %v4308
      %4310 = vmatmul.bf16.gmra.mxu0 %v795
      %v4311 = vpop.f32.mrf.mxu0
      %v4312 = vadd.f32 %v4223, %v4311
      %v4313 = vpop.f32.mrf.mxu0
      %v4314 = vadd.f32 %v4225, %v4313
      %4315 = vmatmul.bf16.gmra.mxu0 %v798
      %v4316 = vpop.f32.mrf.mxu0
      %v4317 = vadd.f32 %v4228, %v4316
      %v4318 = vpop.f32.mrf.mxu0
      %v4319 = vadd.f32 %v4230, %v4318
      %4320 = vmatmul.bf16.gmra.mxu0 %v801
      %v4321 = vpop.f32.mrf.mxu0
      %v4322 = vadd.f32 %v4233, %v4321
      %v4323 = vpop.f32.mrf.mxu0
      %v4324 = vadd.f32 %v4235, %v4323
      %4325 = vmatmul.bf16.gmra.mxu0 %v804
      %v4326 = vpop.f32.mrf.mxu0
      %v4327 = vadd.f32 %v4238, %v4326
      %v4328 = vpop.f32.mrf.mxu0
      %v4329 = vadd.f32 %v4240, %v4328
      %4330 = vmatmul.bf16.gmra.mxu0 %v807
      %v4331 = vpop.f32.mrf.mxu0
      %v4332 = vadd.f32 %v4243, %v4331
      %v4333 = vpop.f32.mrf.mxu0
      %v4334 = vadd.f32 %v4245, %v4333
      %4335 = vmatmul.bf16.gmra.mxu0 %v810
      %v4336 = vpop.f32.mrf.mxu0
      %v4337 = vadd.f32 %v4248, %v4336
      %v4338 = vpop.f32.mrf.mxu0
      %v4339 = vadd.f32 %v4250, %v4338
      %4340 = vmatmul.bf16.gmra.mxu0 %v813
      %v4341 = vpop.f32.mrf.mxu0
      %v4342 = vadd.f32 %v4253, %v4341
      %v4343 = vpop.f32.mrf.mxu0
      %v4344 = vadd.f32 %v4255, %v4343
      %4345 = vmatmul.bf16.gmra.mxu0 %v816
      %v4346 = vpop.f32.mrf.mxu0
      %v4347 = vadd.f32 %v4258, %v4346
      %v4348 = vpop.f32.mrf.mxu0
      %v4349 = vadd.f32 %v4260, %v4348
      %4350 = vmatmul.bf16.gmra.mxu0 %v819
      %v4351 = vpop.f32.mrf.mxu0
      %v4352 = vadd.f32 %v4263, %v4351
      %v4353 = vpop.f32.mrf.mxu0
      %v4354 = vadd.f32 %v4265, %v4353
      %4355 = vdwg.mxu0
      %4356 = vmatpush.bf16.msra.mxu0 %v2016
      %4357 = vmatpush.bf16.msra.mxu0 %v2004
      %4358 = vmatpush.bf16.msra.mxu0 %v1992
      %4359 = vmatpush.bf16.msra.mxu0 %v1980
      %4360 = vmatpush.bf16.msra.mxu0 %v1968
      %4361 = vmatpush.bf16.msra.mxu0 %v1956
      %4362 = vmatpush.bf16.msra.mxu0 %v1944
      %4363 = vmatpush.bf16.msra.mxu0 %v1932
      %4364 = vmatmul.bf16.gmra.mxu0 %v775
      %v4365 = vpop.f32.mrf.mxu0
      %v4366 = vadd.f32 %v4277, %v4365
      %v4367 = vpop.f32.mrf.mxu0
      %v4368 = vadd.f32 %v4279, %v4367
      %4369 = vmatmul.bf16.gmra.mxu0 %v778
      %v4370 = vpop.f32.mrf.mxu0
      %v4371 = vadd.f32 %v4282, %v4370
      %v4372 = vpop.f32.mrf.mxu0
      %v4373 = vadd.f32 %v4284, %v4372
      %4374 = vmatmul.bf16.gmra.mxu0 %v781
      %v4375 = vpop.f32.mrf.mxu0
      %v4376 = vadd.f32 %v4287, %v4375
      %v4377 = vpop.f32.mrf.mxu0
      %v4378 = vadd.f32 %v4289, %v4377
      %4379 = vmatmul.bf16.gmra.mxu0 %v784
      %v4380 = vpop.f32.mrf.mxu0
      %v4381 = vadd.f32 %v4292, %v4380
      %v4382 = vpop.f32.mrf.mxu0
      %v4383 = vadd.f32 %v4294, %v4382
      %4384 = vmatmul.bf16.gmra.mxu0 %v787
      %v4385 = vpop.f32.mrf.mxu0
      %v4386 = vadd.f32 %v4297, %v4385
      %v4387 = vpop.f32.mrf.mxu0
      %v4388 = vadd.f32 %v4299, %v4387
      %4389 = vmatmul.bf16.gmra.mxu0 %v790
      %v4390 = vpop.f32.mrf.mxu0
      %v4391 = vadd.f32 %v4302, %v4390
      %v4392 = vpop.f32.mrf.mxu0
      %v4393 = vadd.f32 %v4304, %v4392
      %4394 = vmatmul.bf16.gmra.mxu0 %v793
      %v4395 = vpop.f32.mrf.mxu0
      %v4396 = vadd.f32 %v4307, %v4395
      %v4397 = vpop.f32.mrf.mxu0
      %v4398 = vadd.f32 %v4309, %v4397
      %4399 = vmatmul.bf16.gmra.mxu0 %v796
      %v4400 = vpop.f32.mrf.mxu0
      %v4401 = vadd.f32 %v4312, %v4400
      %v4402 = vpop.f32.mrf.mxu0
      %v4403 = vadd.f32 %v4314, %v4402
      %4404 = vmatmul.bf16.gmra.mxu0 %v799
      %v4405 = vpop.f32.mrf.mxu0
      %v4406 = vadd.f32 %v4317, %v4405
      %v4407 = vpop.f32.mrf.mxu0
      %v4408 = vadd.f32 %v4319, %v4407
      %4409 = vmatmul.bf16.gmra.mxu0 %v802
      %v4410 = vpop.f32.mrf.mxu0
      %v4411 = vadd.f32 %v4322, %v4410
      %v4412 = vpop.f32.mrf.mxu0
      %v4413 = vadd.f32 %v4324, %v4412
      %4414 = vmatmul.bf16.gmra.mxu0 %v805
      %v4415 = vpop.f32.mrf.mxu0
      %v4416 = vadd.f32 %v4327, %v4415
      %v4417 = vpop.f32.mrf.mxu0
      %v4418 = vadd.f32 %v4329, %v4417
      %4419 = vmatmul.bf16.gmra.mxu0 %v808
      %v4420 = vpop.f32.mrf.mxu0
      %v4421 = vadd.f32 %v4332, %v4420
      %v4422 = vpop.f32.mrf.mxu0
      %v4423 = vadd.f32 %v4334, %v4422
      %4424 = vmatmul.bf16.gmra.mxu0 %v811
      %v4425 = vpop.f32.mrf.mxu0
      %v4426 = vadd.f32 %v4337, %v4425
      %v4427 = vpop.f32.mrf.mxu0
      %v4428 = vadd.f32 %v4339, %v4427
      %4429 = vmatmul.bf16.gmra.mxu0 %v814
      %v4430 = vpop.f32.mrf.mxu0
      %v4431 = vadd.f32 %v4342, %v4430
      %v4432 = vpop.f32.mrf.mxu0
      %v4433 = vadd.f32 %v4344, %v4432
      %4434 = vmatmul.bf16.gmra.mxu0 %v817
      %v4435 = vpop.f32.mrf.mxu0
      %v4436 = vadd.f32 %v4347, %v4435
      %v4437 = vpop.f32.mrf.mxu0
      %v4438 = vadd.f32 %v4349, %v4437
      %4439 = vmatmul.bf16.gmra.mxu0 %v820
      %v4440 = vpop.f32.mrf.mxu0
      %v4441 = vadd.f32 %v4352, %v4440
      %v4442 = vpop.f32.mrf.mxu0
      %v4443 = vadd.f32 %v4354, %v4442
      %4444 = vdwg.mxu0
      %4445 = vmatpush.bf16.msra.mxu0 %v1825
      %4446 = vmatpush.bf16.msra.mxu0 %v1813
      %4447 = vmatpush.bf16.msra.mxu0 %v1801
      %4448 = vmatpush.bf16.msra.mxu0 %v1789
      %4449 = vmatpush.bf16.msra.mxu0 %v1777
      %4450 = vmatpush.bf16.msra.mxu0 %v1765
      %4451 = vmatpush.bf16.msra.mxu0 %v1753
      %4452 = vmatpush.bf16.msra.mxu0 %v1741
      %4453 = vmatmul.bf16.gmra.mxu0 %v773
      %v4454 = vpop.f32.mrf.mxu0
      %v4455 = vadd.f32 %v597, %v4454
      %v4456 = vpop.f32.mrf.mxu0
      %v4457 = vadd.f32 %v597, %v4456
      %4458 = vmatmul.bf16.gmra.mxu0 %v776
      %v4459 = vpop.f32.mrf.mxu0
      %v4460 = vadd.f32 %v597, %v4459
      %v4461 = vpop.f32.mrf.mxu0
      %v4462 = vadd.f32 %v597, %v4461
      %4463 = vmatmul.bf16.gmra.mxu0 %v779
      %v4464 = vpop.f32.mrf.mxu0
      %v4465 = vadd.f32 %v597, %v4464
      %v4466 = vpop.f32.mrf.mxu0
      %v4467 = vadd.f32 %v597, %v4466
      %4468 = vmatmul.bf16.gmra.mxu0 %v782
      %v4469 = vpop.f32.mrf.mxu0
      %v4470 = vadd.f32 %v597, %v4469
      %v4471 = vpop.f32.mrf.mxu0
      %v4472 = vadd.f32 %v597, %v4471
      %4473 = vmatmul.bf16.gmra.mxu0 %v785
      %v4474 = vpop.f32.mrf.mxu0
      %v4475 = vadd.f32 %v597, %v4474
      %v4476 = vpop.f32.mrf.mxu0
      %v4477 = vadd.f32 %v597, %v4476
      %4478 = vmatmul.bf16.gmra.mxu0 %v788
      %v4479 = vpop.f32.mrf.mxu0
      %v4480 = vadd.f32 %v597, %v4479
      %v4481 = vpop.f32.mrf.mxu0
      %v4482 = vadd.f32 %v597, %v4481
      %4483 = vmatmul.bf16.gmra.mxu0 %v791
      %v4484 = vpop.f32.mrf.mxu0
      %v4485 = vadd.f32 %v597, %v4484
      %v4486 = vpop.f32.mrf.mxu0
      %v4487 = vadd.f32 %v597, %v4486
      %4488 = vmatmul.bf16.gmra.mxu0 %v794
      %v4489 = vpop.f32.mrf.mxu0
      %v4490 = vadd.f32 %v597, %v4489
      %v4491 = vpop.f32.mrf.mxu0
      %v4492 = vadd.f32 %v597, %v4491
      %4493 = vmatmul.bf16.gmra.mxu0 %v797
      %v4494 = vpop.f32.mrf.mxu0
      %v4495 = vadd.f32 %v597, %v4494
      %v4496 = vpop.f32.mrf.mxu0
      %v4497 = vadd.f32 %v597, %v4496
      %4498 = vmatmul.bf16.gmra.mxu0 %v800
      %v4499 = vpop.f32.mrf.mxu0
      %v4500 = vadd.f32 %v597, %v4499
      %v4501 = vpop.f32.mrf.mxu0
      %v4502 = vadd.f32 %v597, %v4501
      %4503 = vmatmul.bf16.gmra.mxu0 %v803
      %v4504 = vpop.f32.mrf.mxu0
      %v4505 = vadd.f32 %v597, %v4504
      %v4506 = vpop.f32.mrf.mxu0
      %v4507 = vadd.f32 %v597, %v4506
      %4508 = vmatmul.bf16.gmra.mxu0 %v806
      %v4509 = vpop.f32.mrf.mxu0
      %v4510 = vadd.f32 %v597, %v4509
      %v4511 = vpop.f32.mrf.mxu0
      %v4512 = vadd.f32 %v597, %v4511
      %4513 = vmatmul.bf16.gmra.mxu0 %v809
      %v4514 = vpop.f32.mrf.mxu0
      %v4515 = vadd.f32 %v597, %v4514
      %v4516 = vpop.f32.mrf.mxu0
      %v4517 = vadd.f32 %v597, %v4516
      %4518 = vmatmul.bf16.gmra.mxu0 %v812
      %v4519 = vpop.f32.mrf.mxu0
      %v4520 = vadd.f32 %v597, %v4519
      %v4521 = vpop.f32.mrf.mxu0
      %v4522 = vadd.f32 %v597, %v4521
      %4523 = vmatmul.bf16.gmra.mxu0 %v815
      %v4524 = vpop.f32.mrf.mxu0
      %v4525 = vadd.f32 %v597, %v4524
      %v4526 = vpop.f32.mrf.mxu0
      %v4527 = vadd.f32 %v597, %v4526
      %4528 = vmatmul.bf16.gmra.mxu0 %v818
      %v4529 = vpop.f32.mrf.mxu0
      %v4530 = vadd.f32 %v597, %v4529
      %v4531 = vpop.f32.mrf.mxu0
      %v4532 = vadd.f32 %v597, %v4531
      %4533 = vdwg.mxu0
      %4534 = vmatpush.bf16.msra.mxu0 %v1921
      %4535 = vmatpush.bf16.msra.mxu0 %v1909
      %4536 = vmatpush.bf16.msra.mxu0 %v1897
      %4537 = vmatpush.bf16.msra.mxu0 %v1885
      %4538 = vmatpush.bf16.msra.mxu0 %v1873
      %4539 = vmatpush.bf16.msra.mxu0 %v1861
      %4540 = vmatpush.bf16.msra.mxu0 %v1849
      %4541 = vmatpush.bf16.msra.mxu0 %v1837
      %4542 = vmatmul.bf16.gmra.mxu0 %v774
      %v4543 = vpop.f32.mrf.mxu0
      %v4544 = vadd.f32 %v4455, %v4543
      %v4545 = vpop.f32.mrf.mxu0
      %v4546 = vadd.f32 %v4457, %v4545
      %4547 = vmatmul.bf16.gmra.mxu0 %v777
      %v4548 = vpop.f32.mrf.mxu0
      %v4549 = vadd.f32 %v4460, %v4548
      %v4550 = vpop.f32.mrf.mxu0
      %v4551 = vadd.f32 %v4462, %v4550
      %4552 = vmatmul.bf16.gmra.mxu0 %v780
      %v4553 = vpop.f32.mrf.mxu0
      %v4554 = vadd.f32 %v4465, %v4553
      %v4555 = vpop.f32.mrf.mxu0
      %v4556 = vadd.f32 %v4467, %v4555
      %4557 = vmatmul.bf16.gmra.mxu0 %v783
      %v4558 = vpop.f32.mrf.mxu0
      %v4559 = vadd.f32 %v4470, %v4558
      %v4560 = vpop.f32.mrf.mxu0
      %v4561 = vadd.f32 %v4472, %v4560
      %4562 = vmatmul.bf16.gmra.mxu0 %v786
      %v4563 = vpop.f32.mrf.mxu0
      %v4564 = vadd.f32 %v4475, %v4563
      %v4565 = vpop.f32.mrf.mxu0
      %v4566 = vadd.f32 %v4477, %v4565
      %4567 = vmatmul.bf16.gmra.mxu0 %v789
      %v4568 = vpop.f32.mrf.mxu0
      %v4569 = vadd.f32 %v4480, %v4568
      %v4570 = vpop.f32.mrf.mxu0
      %v4571 = vadd.f32 %v4482, %v4570
      %4572 = vmatmul.bf16.gmra.mxu0 %v792
      %v4573 = vpop.f32.mrf.mxu0
      %v4574 = vadd.f32 %v4485, %v4573
      %v4575 = vpop.f32.mrf.mxu0
      %v4576 = vadd.f32 %v4487, %v4575
      %4577 = vmatmul.bf16.gmra.mxu0 %v795
      %v4578 = vpop.f32.mrf.mxu0
      %v4579 = vadd.f32 %v4490, %v4578
      %v4580 = vpop.f32.mrf.mxu0
      %v4581 = vadd.f32 %v4492, %v4580
      %4582 = vmatmul.bf16.gmra.mxu0 %v798
      %v4583 = vpop.f32.mrf.mxu0
      %v4584 = vadd.f32 %v4495, %v4583
      %v4585 = vpop.f32.mrf.mxu0
      %v4586 = vadd.f32 %v4497, %v4585
      %4587 = vmatmul.bf16.gmra.mxu0 %v801
      %v4588 = vpop.f32.mrf.mxu0
      %v4589 = vadd.f32 %v4500, %v4588
      %v4590 = vpop.f32.mrf.mxu0
      %v4591 = vadd.f32 %v4502, %v4590
      %4592 = vmatmul.bf16.gmra.mxu0 %v804
      %v4593 = vpop.f32.mrf.mxu0
      %v4594 = vadd.f32 %v4505, %v4593
      %v4595 = vpop.f32.mrf.mxu0
      %v4596 = vadd.f32 %v4507, %v4595
      %4597 = vmatmul.bf16.gmra.mxu0 %v807
      %v4598 = vpop.f32.mrf.mxu0
      %v4599 = vadd.f32 %v4510, %v4598
      %v4600 = vpop.f32.mrf.mxu0
      %v4601 = vadd.f32 %v4512, %v4600
      %4602 = vmatmul.bf16.gmra.mxu0 %v810
      %v4603 = vpop.f32.mrf.mxu0
      %v4604 = vadd.f32 %v4515, %v4603
      %v4605 = vpop.f32.mrf.mxu0
      %v4606 = vadd.f32 %v4517, %v4605
      %4607 = vmatmul.bf16.gmra.mxu0 %v813
      %v4608 = vpop.f32.mrf.mxu0
      %v4609 = vadd.f32 %v4520, %v4608
      %v4610 = vpop.f32.mrf.mxu0
      %v4611 = vadd.f32 %v4522, %v4610
      %4612 = vmatmul.bf16.gmra.mxu0 %v816
      %v4613 = vpop.f32.mrf.mxu0
      %v4614 = vadd.f32 %v4525, %v4613
      %v4615 = vpop.f32.mrf.mxu0
      %v4616 = vadd.f32 %v4527, %v4615
      %4617 = vmatmul.bf16.gmra.mxu0 %v819
      %v4618 = vpop.f32.mrf.mxu0
      %v4619 = vadd.f32 %v4530, %v4618
      %v4620 = vpop.f32.mrf.mxu0
      %v4621 = vadd.f32 %v4532, %v4620
      %4622 = vdwg.mxu0
      %4623 = vmatpush.bf16.msra.mxu0 %v2017
      %4624 = vmatpush.bf16.msra.mxu0 %v2005
      %4625 = vmatpush.bf16.msra.mxu0 %v1993
      %4626 = vmatpush.bf16.msra.mxu0 %v1981
      %4627 = vmatpush.bf16.msra.mxu0 %v1969
      %4628 = vmatpush.bf16.msra.mxu0 %v1957
      %4629 = vmatpush.bf16.msra.mxu0 %v1945
      %4630 = vmatpush.bf16.msra.mxu0 %v1933
      %4631 = vmatmul.bf16.gmra.mxu0 %v775
      %v4632 = vpop.f32.mrf.mxu0
      %v4633 = vadd.f32 %v4544, %v4632
      %v4634 = vpop.f32.mrf.mxu0
      %v4635 = vadd.f32 %v4546, %v4634
      %4636 = vmatmul.bf16.gmra.mxu0 %v778
      %v4637 = vpop.f32.mrf.mxu0
      %v4638 = vadd.f32 %v4549, %v4637
      %v4639 = vpop.f32.mrf.mxu0
      %v4640 = vadd.f32 %v4551, %v4639
      %4641 = vmatmul.bf16.gmra.mxu0 %v781
      %v4642 = vpop.f32.mrf.mxu0
      %v4643 = vadd.f32 %v4554, %v4642
      %v4644 = vpop.f32.mrf.mxu0
      %v4645 = vadd.f32 %v4556, %v4644
      %4646 = vmatmul.bf16.gmra.mxu0 %v784
      %v4647 = vpop.f32.mrf.mxu0
      %v4648 = vadd.f32 %v4559, %v4647
      %v4649 = vpop.f32.mrf.mxu0
      %v4650 = vadd.f32 %v4561, %v4649
      %4651 = vmatmul.bf16.gmra.mxu0 %v787
      %v4652 = vpop.f32.mrf.mxu0
      %v4653 = vadd.f32 %v4564, %v4652
      %v4654 = vpop.f32.mrf.mxu0
      %v4655 = vadd.f32 %v4566, %v4654
      %4656 = vmatmul.bf16.gmra.mxu0 %v790
      %v4657 = vpop.f32.mrf.mxu0
      %v4658 = vadd.f32 %v4569, %v4657
      %v4659 = vpop.f32.mrf.mxu0
      %v4660 = vadd.f32 %v4571, %v4659
      %4661 = vmatmul.bf16.gmra.mxu0 %v793
      %v4662 = vpop.f32.mrf.mxu0
      %v4663 = vadd.f32 %v4574, %v4662
      %v4664 = vpop.f32.mrf.mxu0
      %v4665 = vadd.f32 %v4576, %v4664
      %4666 = vmatmul.bf16.gmra.mxu0 %v796
      %v4667 = vpop.f32.mrf.mxu0
      %v4668 = vadd.f32 %v4579, %v4667
      %v4669 = vpop.f32.mrf.mxu0
      %v4670 = vadd.f32 %v4581, %v4669
      %4671 = vmatmul.bf16.gmra.mxu0 %v799
      %v4672 = vpop.f32.mrf.mxu0
      %v4673 = vadd.f32 %v4584, %v4672
      %v4674 = vpop.f32.mrf.mxu0
      %v4675 = vadd.f32 %v4586, %v4674
      %4676 = vmatmul.bf16.gmra.mxu0 %v802
      %v4677 = vpop.f32.mrf.mxu0
      %v4678 = vadd.f32 %v4589, %v4677
      %v4679 = vpop.f32.mrf.mxu0
      %v4680 = vadd.f32 %v4591, %v4679
      %4681 = vmatmul.bf16.gmra.mxu0 %v805
      %v4682 = vpop.f32.mrf.mxu0
      %v4683 = vadd.f32 %v4594, %v4682
      %v4684 = vpop.f32.mrf.mxu0
      %v4685 = vadd.f32 %v4596, %v4684
      %4686 = vmatmul.bf16.gmra.mxu0 %v808
      %v4687 = vpop.f32.mrf.mxu0
      %v4688 = vadd.f32 %v4599, %v4687
      %v4689 = vpop.f32.mrf.mxu0
      %v4690 = vadd.f32 %v4601, %v4689
      %4691 = vmatmul.bf16.gmra.mxu0 %v811
      %v4692 = vpop.f32.mrf.mxu0
      %v4693 = vadd.f32 %v4604, %v4692
      %v4694 = vpop.f32.mrf.mxu0
      %v4695 = vadd.f32 %v4606, %v4694
      %4696 = vmatmul.bf16.gmra.mxu0 %v814
      %v4697 = vpop.f32.mrf.mxu0
      %v4698 = vadd.f32 %v4609, %v4697
      %v4699 = vpop.f32.mrf.mxu0
      %v4700 = vadd.f32 %v4611, %v4699
      %4701 = vmatmul.bf16.gmra.mxu0 %v817
      %v4702 = vpop.f32.mrf.mxu0
      %v4703 = vadd.f32 %v4614, %v4702
      %v4704 = vpop.f32.mrf.mxu0
      %v4705 = vadd.f32 %v4616, %v4704
      %4706 = vmatmul.bf16.gmra.mxu0 %v820
      %v4707 = vpop.f32.mrf.mxu0
      %v4708 = vadd.f32 %v4619, %v4707
      %v4709 = vpop.f32.mrf.mxu0
      %v4710 = vadd.f32 %v4621, %v4709
      %4711 = vdwg.mxu0
      %4712 = vmatpush.bf16.msra.mxu0 %v1826
      %4713 = vmatpush.bf16.msra.mxu0 %v1814
      %4714 = vmatpush.bf16.msra.mxu0 %v1802
      %4715 = vmatpush.bf16.msra.mxu0 %v1790
      %4716 = vmatpush.bf16.msra.mxu0 %v1778
      %4717 = vmatpush.bf16.msra.mxu0 %v1766
      %4718 = vmatpush.bf16.msra.mxu0 %v1754
      %4719 = vmatpush.bf16.msra.mxu0 %v1742
      %4720 = vmatmul.bf16.gmra.mxu0 %v773
      %v4721 = vpop.f32.mrf.mxu0
      %v4722 = vadd.f32 %v598, %v4721
      %v4723 = vpop.f32.mrf.mxu0
      %v4724 = vadd.f32 %v598, %v4723
      %4725 = vmatmul.bf16.gmra.mxu0 %v776
      %v4726 = vpop.f32.mrf.mxu0
      %v4727 = vadd.f32 %v598, %v4726
      %v4728 = vpop.f32.mrf.mxu0
      %v4729 = vadd.f32 %v598, %v4728
      %4730 = vmatmul.bf16.gmra.mxu0 %v779
      %v4731 = vpop.f32.mrf.mxu0
      %v4732 = vadd.f32 %v598, %v4731
      %v4733 = vpop.f32.mrf.mxu0
      %v4734 = vadd.f32 %v598, %v4733
      %4735 = vmatmul.bf16.gmra.mxu0 %v782
      %v4736 = vpop.f32.mrf.mxu0
      %v4737 = vadd.f32 %v598, %v4736
      %v4738 = vpop.f32.mrf.mxu0
      %v4739 = vadd.f32 %v598, %v4738
      %4740 = vmatmul.bf16.gmra.mxu0 %v785
      %v4741 = vpop.f32.mrf.mxu0
      %v4742 = vadd.f32 %v598, %v4741
      %v4743 = vpop.f32.mrf.mxu0
      %v4744 = vadd.f32 %v598, %v4743
      %4745 = vmatmul.bf16.gmra.mxu0 %v788
      %v4746 = vpop.f32.mrf.mxu0
      %v4747 = vadd.f32 %v598, %v4746
      %v4748 = vpop.f32.mrf.mxu0
      %v4749 = vadd.f32 %v598, %v4748
      %4750 = vmatmul.bf16.gmra.mxu0 %v791
      %v4751 = vpop.f32.mrf.mxu0
      %v4752 = vadd.f32 %v598, %v4751
      %v4753 = vpop.f32.mrf.mxu0
      %v4754 = vadd.f32 %v598, %v4753
      %4755 = vmatmul.bf16.gmra.mxu0 %v794
      %v4756 = vpop.f32.mrf.mxu0
      %v4757 = vadd.f32 %v598, %v4756
      %v4758 = vpop.f32.mrf.mxu0
      %v4759 = vadd.f32 %v598, %v4758
      %4760 = vmatmul.bf16.gmra.mxu0 %v797
      %v4761 = vpop.f32.mrf.mxu0
      %v4762 = vadd.f32 %v598, %v4761
      %v4763 = vpop.f32.mrf.mxu0
      %v4764 = vadd.f32 %v598, %v4763
      %4765 = vmatmul.bf16.gmra.mxu0 %v800
      %v4766 = vpop.f32.mrf.mxu0
      %v4767 = vadd.f32 %v598, %v4766
      %v4768 = vpop.f32.mrf.mxu0
      %v4769 = vadd.f32 %v598, %v4768
      %4770 = vmatmul.bf16.gmra.mxu0 %v803
      %v4771 = vpop.f32.mrf.mxu0
      %v4772 = vadd.f32 %v598, %v4771
      %v4773 = vpop.f32.mrf.mxu0
      %v4774 = vadd.f32 %v598, %v4773
      %4775 = vmatmul.bf16.gmra.mxu0 %v806
      %v4776 = vpop.f32.mrf.mxu0
      %v4777 = vadd.f32 %v598, %v4776
      %v4778 = vpop.f32.mrf.mxu0
      %v4779 = vadd.f32 %v598, %v4778
      %4780 = vmatmul.bf16.gmra.mxu0 %v809
      %v4781 = vpop.f32.mrf.mxu0
      %v4782 = vadd.f32 %v598, %v4781
      %v4783 = vpop.f32.mrf.mxu0
      %v4784 = vadd.f32 %v598, %v4783
      %4785 = vmatmul.bf16.gmra.mxu0 %v812
      %v4786 = vpop.f32.mrf.mxu0
      %v4787 = vadd.f32 %v598, %v4786
      %v4788 = vpop.f32.mrf.mxu0
      %v4789 = vadd.f32 %v598, %v4788
      %4790 = vmatmul.bf16.gmra.mxu0 %v815
      %v4791 = vpop.f32.mrf.mxu0
      %v4792 = vadd.f32 %v598, %v4791
      %v4793 = vpop.f32.mrf.mxu0
      %v4794 = vadd.f32 %v598, %v4793
      %4795 = vmatmul.bf16.gmra.mxu0 %v818
      %v4796 = vpop.f32.mrf.mxu0
      %v4797 = vadd.f32 %v598, %v4796
      %v4798 = vpop.f32.mrf.mxu0
      %v4799 = vadd.f32 %v598, %v4798
      %4800 = vdwg.mxu0
      %4801 = vmatpush.bf16.msra.mxu0 %v1922
      %4802 = vmatpush.bf16.msra.mxu0 %v1910
      %4803 = vmatpush.bf16.msra.mxu0 %v1898
      %4804 = vmatpush.bf16.msra.mxu0 %v1886
      %4805 = vmatpush.bf16.msra.mxu0 %v1874
      %4806 = vmatpush.bf16.msra.mxu0 %v1862
      %4807 = vmatpush.bf16.msra.mxu0 %v1850
      %4808 = vmatpush.bf16.msra.mxu0 %v1838
      %4809 = vmatmul.bf16.gmra.mxu0 %v774
      %v4810 = vpop.f32.mrf.mxu0
      %v4811 = vadd.f32 %v4722, %v4810
      %v4812 = vpop.f32.mrf.mxu0
      %v4813 = vadd.f32 %v4724, %v4812
      %4814 = vmatmul.bf16.gmra.mxu0 %v777
      %v4815 = vpop.f32.mrf.mxu0
      %v4816 = vadd.f32 %v4727, %v4815
      %v4817 = vpop.f32.mrf.mxu0
      %v4818 = vadd.f32 %v4729, %v4817
      %4819 = vmatmul.bf16.gmra.mxu0 %v780
      %v4820 = vpop.f32.mrf.mxu0
      %v4821 = vadd.f32 %v4732, %v4820
      %v4822 = vpop.f32.mrf.mxu0
      %v4823 = vadd.f32 %v4734, %v4822
      %4824 = vmatmul.bf16.gmra.mxu0 %v783
      %v4825 = vpop.f32.mrf.mxu0
      %v4826 = vadd.f32 %v4737, %v4825
      %v4827 = vpop.f32.mrf.mxu0
      %v4828 = vadd.f32 %v4739, %v4827
      %4829 = vmatmul.bf16.gmra.mxu0 %v786
      %v4830 = vpop.f32.mrf.mxu0
      %v4831 = vadd.f32 %v4742, %v4830
      %v4832 = vpop.f32.mrf.mxu0
      %v4833 = vadd.f32 %v4744, %v4832
      %4834 = vmatmul.bf16.gmra.mxu0 %v789
      %v4835 = vpop.f32.mrf.mxu0
      %v4836 = vadd.f32 %v4747, %v4835
      %v4837 = vpop.f32.mrf.mxu0
      %v4838 = vadd.f32 %v4749, %v4837
      %4839 = vmatmul.bf16.gmra.mxu0 %v792
      %v4840 = vpop.f32.mrf.mxu0
      %v4841 = vadd.f32 %v4752, %v4840
      %v4842 = vpop.f32.mrf.mxu0
      %v4843 = vadd.f32 %v4754, %v4842
      %4844 = vmatmul.bf16.gmra.mxu0 %v795
      %v4845 = vpop.f32.mrf.mxu0
      %v4846 = vadd.f32 %v4757, %v4845
      %v4847 = vpop.f32.mrf.mxu0
      %v4848 = vadd.f32 %v4759, %v4847
      %4849 = vmatmul.bf16.gmra.mxu0 %v798
      %v4850 = vpop.f32.mrf.mxu0
      %v4851 = vadd.f32 %v4762, %v4850
      %v4852 = vpop.f32.mrf.mxu0
      %v4853 = vadd.f32 %v4764, %v4852
      %4854 = vmatmul.bf16.gmra.mxu0 %v801
      %v4855 = vpop.f32.mrf.mxu0
      %v4856 = vadd.f32 %v4767, %v4855
      %v4857 = vpop.f32.mrf.mxu0
      %v4858 = vadd.f32 %v4769, %v4857
      %4859 = vmatmul.bf16.gmra.mxu0 %v804
      %v4860 = vpop.f32.mrf.mxu0
      %v4861 = vadd.f32 %v4772, %v4860
      %v4862 = vpop.f32.mrf.mxu0
      %v4863 = vadd.f32 %v4774, %v4862
      %4864 = vmatmul.bf16.gmra.mxu0 %v807
      %v4865 = vpop.f32.mrf.mxu0
      %v4866 = vadd.f32 %v4777, %v4865
      %v4867 = vpop.f32.mrf.mxu0
      %v4868 = vadd.f32 %v4779, %v4867
      %4869 = vmatmul.bf16.gmra.mxu0 %v810
      %v4870 = vpop.f32.mrf.mxu0
      %v4871 = vadd.f32 %v4782, %v4870
      %v4872 = vpop.f32.mrf.mxu0
      %v4873 = vadd.f32 %v4784, %v4872
      %4874 = vmatmul.bf16.gmra.mxu0 %v813
      %v4875 = vpop.f32.mrf.mxu0
      %v4876 = vadd.f32 %v4787, %v4875
      %v4877 = vpop.f32.mrf.mxu0
      %v4878 = vadd.f32 %v4789, %v4877
      %4879 = vmatmul.bf16.gmra.mxu0 %v816
      %v4880 = vpop.f32.mrf.mxu0
      %v4881 = vadd.f32 %v4792, %v4880
      %v4882 = vpop.f32.mrf.mxu0
      %v4883 = vadd.f32 %v4794, %v4882
      %4884 = vmatmul.bf16.gmra.mxu0 %v819
      %v4885 = vpop.f32.mrf.mxu0
      %v4886 = vadd.f32 %v4797, %v4885
      %v4887 = vpop.f32.mrf.mxu0
      %v4888 = vadd.f32 %v4799, %v4887
      %4889 = vdwg.mxu0
      %4890 = vmatpush.bf16.msra.mxu0 %v2018
      %4891 = vmatpush.bf16.msra.mxu0 %v2006
      %4892 = vmatpush.bf16.msra.mxu0 %v1994
      %4893 = vmatpush.bf16.msra.mxu0 %v1982
      %4894 = vmatpush.bf16.msra.mxu0 %v1970
      %4895 = vmatpush.bf16.msra.mxu0 %v1958
      %4896 = vmatpush.bf16.msra.mxu0 %v1946
      %4897 = vmatpush.bf16.msra.mxu0 %v1934
      %4898 = vmatmul.bf16.gmra.mxu0 %v775
      %v4899 = vpop.f32.mrf.mxu0
      %v4900 = vadd.f32 %v4811, %v4899
      %v4901 = vpop.f32.mrf.mxu0
      %v4902 = vadd.f32 %v4813, %v4901
      %4903 = vmatmul.bf16.gmra.mxu0 %v778
      %v4904 = vpop.f32.mrf.mxu0
      %v4905 = vadd.f32 %v4816, %v4904
      %v4906 = vpop.f32.mrf.mxu0
      %v4907 = vadd.f32 %v4818, %v4906
      %4908 = vmatmul.bf16.gmra.mxu0 %v781
      %v4909 = vpop.f32.mrf.mxu0
      %v4910 = vadd.f32 %v4821, %v4909
      %v4911 = vpop.f32.mrf.mxu0
      %v4912 = vadd.f32 %v4823, %v4911
      %4913 = vmatmul.bf16.gmra.mxu0 %v784
      %v4914 = vpop.f32.mrf.mxu0
      %v4915 = vadd.f32 %v4826, %v4914
      %v4916 = vpop.f32.mrf.mxu0
      %v4917 = vadd.f32 %v4828, %v4916
      %4918 = vmatmul.bf16.gmra.mxu0 %v787
      %v4919 = vpop.f32.mrf.mxu0
      %v4920 = vadd.f32 %v4831, %v4919
      %v4921 = vpop.f32.mrf.mxu0
      %v4922 = vadd.f32 %v4833, %v4921
      %4923 = vmatmul.bf16.gmra.mxu0 %v790
      %v4924 = vpop.f32.mrf.mxu0
      %v4925 = vadd.f32 %v4836, %v4924
      %v4926 = vpop.f32.mrf.mxu0
      %v4927 = vadd.f32 %v4838, %v4926
      %4928 = vmatmul.bf16.gmra.mxu0 %v793
      %v4929 = vpop.f32.mrf.mxu0
      %v4930 = vadd.f32 %v4841, %v4929
      %v4931 = vpop.f32.mrf.mxu0
      %v4932 = vadd.f32 %v4843, %v4931
      %4933 = vmatmul.bf16.gmra.mxu0 %v796
      %v4934 = vpop.f32.mrf.mxu0
      %v4935 = vadd.f32 %v4846, %v4934
      %v4936 = vpop.f32.mrf.mxu0
      %v4937 = vadd.f32 %v4848, %v4936
      %4938 = vmatmul.bf16.gmra.mxu0 %v799
      %v4939 = vpop.f32.mrf.mxu0
      %v4940 = vadd.f32 %v4851, %v4939
      %v4941 = vpop.f32.mrf.mxu0
      %v4942 = vadd.f32 %v4853, %v4941
      %4943 = vmatmul.bf16.gmra.mxu0 %v802
      %v4944 = vpop.f32.mrf.mxu0
      %v4945 = vadd.f32 %v4856, %v4944
      %v4946 = vpop.f32.mrf.mxu0
      %v4947 = vadd.f32 %v4858, %v4946
      %4948 = vmatmul.bf16.gmra.mxu0 %v805
      %v4949 = vpop.f32.mrf.mxu0
      %v4950 = vadd.f32 %v4861, %v4949
      %v4951 = vpop.f32.mrf.mxu0
      %v4952 = vadd.f32 %v4863, %v4951
      %4953 = vmatmul.bf16.gmra.mxu0 %v808
      %v4954 = vpop.f32.mrf.mxu0
      %v4955 = vadd.f32 %v4866, %v4954
      %v4956 = vpop.f32.mrf.mxu0
      %v4957 = vadd.f32 %v4868, %v4956
      %4958 = vmatmul.bf16.gmra.mxu0 %v811
      %v4959 = vpop.f32.mrf.mxu0
      %v4960 = vadd.f32 %v4871, %v4959
      %v4961 = vpop.f32.mrf.mxu0
      %v4962 = vadd.f32 %v4873, %v4961
      %4963 = vmatmul.bf16.gmra.mxu0 %v814
      %v4964 = vpop.f32.mrf.mxu0
      %v4965 = vadd.f32 %v4876, %v4964
      %v4966 = vpop.f32.mrf.mxu0
      %v4967 = vadd.f32 %v4878, %v4966
      %4968 = vmatmul.bf16.gmra.mxu0 %v817
      %v4969 = vpop.f32.mrf.mxu0
      %v4970 = vadd.f32 %v4881, %v4969
      %v4971 = vpop.f32.mrf.mxu0
      %v4972 = vadd.f32 %v4883, %v4971
      %4973 = vmatmul.bf16.gmra.mxu0 %v820
      %v4974 = vpop.f32.mrf.mxu0
      %v4975 = vadd.f32 %v4886, %v4974
      %v4976 = vpop.f32.mrf.mxu0
      %v4977 = vadd.f32 %v4888, %v4976
      %4978 = vdwg.mxu0
      %4979 = vmatpush.bf16.msra.mxu0 %v1827
      %4980 = vmatpush.bf16.msra.mxu0 %v1815
      %4981 = vmatpush.bf16.msra.mxu0 %v1803
      %4982 = vmatpush.bf16.msra.mxu0 %v1791
      %4983 = vmatpush.bf16.msra.mxu0 %v1779
      %4984 = vmatpush.bf16.msra.mxu0 %v1767
      %4985 = vmatpush.bf16.msra.mxu0 %v1755
      %4986 = vmatpush.bf16.msra.mxu0 %v1743
      %4987 = vmatmul.bf16.gmra.mxu0 %v773
      %v4988 = vpop.f32.mrf.mxu0
      %v4989 = vadd.f32 %v599, %v4988
      %v4990 = vpop.f32.mrf.mxu0
      %v4991 = vadd.f32 %v599, %v4990
      %4992 = vmatmul.bf16.gmra.mxu0 %v776
      %v4993 = vpop.f32.mrf.mxu0
      %v4994 = vadd.f32 %v599, %v4993
      %v4995 = vpop.f32.mrf.mxu0
      %v4996 = vadd.f32 %v599, %v4995
      %4997 = vmatmul.bf16.gmra.mxu0 %v779
      %v4998 = vpop.f32.mrf.mxu0
      %v4999 = vadd.f32 %v599, %v4998
      %v5000 = vpop.f32.mrf.mxu0
      %v5001 = vadd.f32 %v599, %v5000
      %5002 = vmatmul.bf16.gmra.mxu0 %v782
      %v5003 = vpop.f32.mrf.mxu0
      %v5004 = vadd.f32 %v599, %v5003
      %v5005 = vpop.f32.mrf.mxu0
      %v5006 = vadd.f32 %v599, %v5005
      %5007 = vmatmul.bf16.gmra.mxu0 %v785
      %v5008 = vpop.f32.mrf.mxu0
      %v5009 = vadd.f32 %v599, %v5008
      %v5010 = vpop.f32.mrf.mxu0
      %v5011 = vadd.f32 %v599, %v5010
      %5012 = vmatmul.bf16.gmra.mxu0 %v788
      %v5013 = vpop.f32.mrf.mxu0
      %v5014 = vadd.f32 %v599, %v5013
      %v5015 = vpop.f32.mrf.mxu0
      %v5016 = vadd.f32 %v599, %v5015
      %5017 = vmatmul.bf16.gmra.mxu0 %v791
      %v5018 = vpop.f32.mrf.mxu0
      %v5019 = vadd.f32 %v599, %v5018
      %v5020 = vpop.f32.mrf.mxu0
      %v5021 = vadd.f32 %v599, %v5020
      %5022 = vmatmul.bf16.gmra.mxu0 %v794
      %v5023 = vpop.f32.mrf.mxu0
      %v5024 = vadd.f32 %v599, %v5023
      %v5025 = vpop.f32.mrf.mxu0
      %v5026 = vadd.f32 %v599, %v5025
      %5027 = vmatmul.bf16.gmra.mxu0 %v797
      %v5028 = vpop.f32.mrf.mxu0
      %v5029 = vadd.f32 %v599, %v5028
      %v5030 = vpop.f32.mrf.mxu0
      %v5031 = vadd.f32 %v599, %v5030
      %5032 = vmatmul.bf16.gmra.mxu0 %v800
      %v5033 = vpop.f32.mrf.mxu0
      %v5034 = vadd.f32 %v599, %v5033
      %v5035 = vpop.f32.mrf.mxu0
      %v5036 = vadd.f32 %v599, %v5035
      %5037 = vmatmul.bf16.gmra.mxu0 %v803
      %v5038 = vpop.f32.mrf.mxu0
      %v5039 = vadd.f32 %v599, %v5038
      %v5040 = vpop.f32.mrf.mxu0
      %v5041 = vadd.f32 %v599, %v5040
      %5042 = vmatmul.bf16.gmra.mxu0 %v806
      %v5043 = vpop.f32.mrf.mxu0
      %v5044 = vadd.f32 %v599, %v5043
      %v5045 = vpop.f32.mrf.mxu0
      %v5046 = vadd.f32 %v599, %v5045
      %5047 = vmatmul.bf16.gmra.mxu0 %v809
      %v5048 = vpop.f32.mrf.mxu0
      %v5049 = vadd.f32 %v599, %v5048
      %v5050 = vpop.f32.mrf.mxu0
      %v5051 = vadd.f32 %v599, %v5050
      %5052 = vmatmul.bf16.gmra.mxu0 %v812
      %v5053 = vpop.f32.mrf.mxu0
      %v5054 = vadd.f32 %v599, %v5053
      %v5055 = vpop.f32.mrf.mxu0
      %v5056 = vadd.f32 %v599, %v5055
      %5057 = vmatmul.bf16.gmra.mxu0 %v815
      %v5058 = vpop.f32.mrf.mxu0
      %v5059 = vadd.f32 %v599, %v5058
      %v5060 = vpop.f32.mrf.mxu0
      %v5061 = vadd.f32 %v599, %v5060
      %5062 = vmatmul.bf16.gmra.mxu0 %v818
      %v5063 = vpop.f32.mrf.mxu0
      %v5064 = vadd.f32 %v599, %v5063
      %v5065 = vpop.f32.mrf.mxu0
      %v5066 = vadd.f32 %v599, %v5065
      %5067 = vdwg.mxu0
      %5068 = vmatpush.bf16.msra.mxu0 %v1923
      %5069 = vmatpush.bf16.msra.mxu0 %v1911
      %5070 = vmatpush.bf16.msra.mxu0 %v1899
      %5071 = vmatpush.bf16.msra.mxu0 %v1887
      %5072 = vmatpush.bf16.msra.mxu0 %v1875
      %5073 = vmatpush.bf16.msra.mxu0 %v1863
      %5074 = vmatpush.bf16.msra.mxu0 %v1851
      %5075 = vmatpush.bf16.msra.mxu0 %v1839
      %5076 = vmatmul.bf16.gmra.mxu0 %v774
      %v5077 = vpop.f32.mrf.mxu0
      %v5078 = vadd.f32 %v4989, %v5077
      %v5079 = vpop.f32.mrf.mxu0
      %v5080 = vadd.f32 %v4991, %v5079
      %5081 = vmatmul.bf16.gmra.mxu0 %v777
      %v5082 = vpop.f32.mrf.mxu0
      %v5083 = vadd.f32 %v4994, %v5082
      %v5084 = vpop.f32.mrf.mxu0
      %v5085 = vadd.f32 %v4996, %v5084
      %5086 = vmatmul.bf16.gmra.mxu0 %v780
      %v5087 = vpop.f32.mrf.mxu0
      %v5088 = vadd.f32 %v4999, %v5087
      %v5089 = vpop.f32.mrf.mxu0
      %v5090 = vadd.f32 %v5001, %v5089
      %5091 = vmatmul.bf16.gmra.mxu0 %v783
      %v5092 = vpop.f32.mrf.mxu0
      %v5093 = vadd.f32 %v5004, %v5092
      %v5094 = vpop.f32.mrf.mxu0
      %v5095 = vadd.f32 %v5006, %v5094
      %5096 = vmatmul.bf16.gmra.mxu0 %v786
      %v5097 = vpop.f32.mrf.mxu0
      %v5098 = vadd.f32 %v5009, %v5097
      %v5099 = vpop.f32.mrf.mxu0
      %v5100 = vadd.f32 %v5011, %v5099
      %5101 = vmatmul.bf16.gmra.mxu0 %v789
      %v5102 = vpop.f32.mrf.mxu0
      %v5103 = vadd.f32 %v5014, %v5102
      %v5104 = vpop.f32.mrf.mxu0
      %v5105 = vadd.f32 %v5016, %v5104
      %5106 = vmatmul.bf16.gmra.mxu0 %v792
      %v5107 = vpop.f32.mrf.mxu0
      %v5108 = vadd.f32 %v5019, %v5107
      %v5109 = vpop.f32.mrf.mxu0
      %v5110 = vadd.f32 %v5021, %v5109
      %5111 = vmatmul.bf16.gmra.mxu0 %v795
      %v5112 = vpop.f32.mrf.mxu0
      %v5113 = vadd.f32 %v5024, %v5112
      %v5114 = vpop.f32.mrf.mxu0
      %v5115 = vadd.f32 %v5026, %v5114
      %5116 = vmatmul.bf16.gmra.mxu0 %v798
      %v5117 = vpop.f32.mrf.mxu0
      %v5118 = vadd.f32 %v5029, %v5117
      %v5119 = vpop.f32.mrf.mxu0
      %v5120 = vadd.f32 %v5031, %v5119
      %5121 = vmatmul.bf16.gmra.mxu0 %v801
      %v5122 = vpop.f32.mrf.mxu0
      %v5123 = vadd.f32 %v5034, %v5122
      %v5124 = vpop.f32.mrf.mxu0
      %v5125 = vadd.f32 %v5036, %v5124
      %5126 = vmatmul.bf16.gmra.mxu0 %v804
      %v5127 = vpop.f32.mrf.mxu0
      %v5128 = vadd.f32 %v5039, %v5127
      %v5129 = vpop.f32.mrf.mxu0
      %v5130 = vadd.f32 %v5041, %v5129
      %5131 = vmatmul.bf16.gmra.mxu0 %v807
      %v5132 = vpop.f32.mrf.mxu0
      %v5133 = vadd.f32 %v5044, %v5132
      %v5134 = vpop.f32.mrf.mxu0
      %v5135 = vadd.f32 %v5046, %v5134
      %5136 = vmatmul.bf16.gmra.mxu0 %v810
      %v5137 = vpop.f32.mrf.mxu0
      %v5138 = vadd.f32 %v5049, %v5137
      %v5139 = vpop.f32.mrf.mxu0
      %v5140 = vadd.f32 %v5051, %v5139
      %5141 = vmatmul.bf16.gmra.mxu0 %v813
      %v5142 = vpop.f32.mrf.mxu0
      %v5143 = vadd.f32 %v5054, %v5142
      %v5144 = vpop.f32.mrf.mxu0
      %v5145 = vadd.f32 %v5056, %v5144
      %5146 = vmatmul.bf16.gmra.mxu0 %v816
      %v5147 = vpop.f32.mrf.mxu0
      %v5148 = vadd.f32 %v5059, %v5147
      %v5149 = vpop.f32.mrf.mxu0
      %v5150 = vadd.f32 %v5061, %v5149
      %5151 = vmatmul.bf16.gmra.mxu0 %v819
      %v5152 = vpop.f32.mrf.mxu0
      %v5153 = vadd.f32 %v5064, %v5152
      %v5154 = vpop.f32.mrf.mxu0
      %v5155 = vadd.f32 %v5066, %v5154
      %5156 = vdwg.mxu0
      %5157 = vmatpush.bf16.msra.mxu0 %v2019
      %5158 = vmatpush.bf16.msra.mxu0 %v2007
      %5159 = vmatpush.bf16.msra.mxu0 %v1995
      %5160 = vmatpush.bf16.msra.mxu0 %v1983
      %5161 = vmatpush.bf16.msra.mxu0 %v1971
      %5162 = vmatpush.bf16.msra.mxu0 %v1959
      %5163 = vmatpush.bf16.msra.mxu0 %v1947
      %5164 = vmatpush.bf16.msra.mxu0 %v1935
      %5165 = vmatmul.bf16.gmra.mxu0 %v775
      %v5166 = vpop.f32.mrf.mxu0
      %v5167 = vadd.f32 %v5078, %v5166
      %v5168 = vpop.f32.mrf.mxu0
      %v5169 = vadd.f32 %v5080, %v5168
      %5170 = vmatmul.bf16.gmra.mxu0 %v778
      %v5171 = vpop.f32.mrf.mxu0
      %v5172 = vadd.f32 %v5083, %v5171
      %v5173 = vpop.f32.mrf.mxu0
      %v5174 = vadd.f32 %v5085, %v5173
      %5175 = vmatmul.bf16.gmra.mxu0 %v781
      %v5176 = vpop.f32.mrf.mxu0
      %v5177 = vadd.f32 %v5088, %v5176
      %v5178 = vpop.f32.mrf.mxu0
      %v5179 = vadd.f32 %v5090, %v5178
      %5180 = vmatmul.bf16.gmra.mxu0 %v784
      %v5181 = vpop.f32.mrf.mxu0
      %v5182 = vadd.f32 %v5093, %v5181
      %v5183 = vpop.f32.mrf.mxu0
      %v5184 = vadd.f32 %v5095, %v5183
      %5185 = vmatmul.bf16.gmra.mxu0 %v787
      %v5186 = vpop.f32.mrf.mxu0
      %v5187 = vadd.f32 %v5098, %v5186
      %v5188 = vpop.f32.mrf.mxu0
      %v5189 = vadd.f32 %v5100, %v5188
      %5190 = vmatmul.bf16.gmra.mxu0 %v790
      %v5191 = vpop.f32.mrf.mxu0
      %v5192 = vadd.f32 %v5103, %v5191
      %v5193 = vpop.f32.mrf.mxu0
      %v5194 = vadd.f32 %v5105, %v5193
      %5195 = vmatmul.bf16.gmra.mxu0 %v793
      %v5196 = vpop.f32.mrf.mxu0
      %v5197 = vadd.f32 %v5108, %v5196
      %v5198 = vpop.f32.mrf.mxu0
      %v5199 = vadd.f32 %v5110, %v5198
      %5200 = vmatmul.bf16.gmra.mxu0 %v796
      %v5201 = vpop.f32.mrf.mxu0
      %v5202 = vadd.f32 %v5113, %v5201
      %v5203 = vpop.f32.mrf.mxu0
      %v5204 = vadd.f32 %v5115, %v5203
      %5205 = vmatmul.bf16.gmra.mxu0 %v799
      %v5206 = vpop.f32.mrf.mxu0
      %v5207 = vadd.f32 %v5118, %v5206
      %v5208 = vpop.f32.mrf.mxu0
      %v5209 = vadd.f32 %v5120, %v5208
      %5210 = vmatmul.bf16.gmra.mxu0 %v802
      %v5211 = vpop.f32.mrf.mxu0
      %v5212 = vadd.f32 %v5123, %v5211
      %v5213 = vpop.f32.mrf.mxu0
      %v5214 = vadd.f32 %v5125, %v5213
      %5215 = vmatmul.bf16.gmra.mxu0 %v805
      %v5216 = vpop.f32.mrf.mxu0
      %v5217 = vadd.f32 %v5128, %v5216
      %v5218 = vpop.f32.mrf.mxu0
      %v5219 = vadd.f32 %v5130, %v5218
      %5220 = vmatmul.bf16.gmra.mxu0 %v808
      %v5221 = vpop.f32.mrf.mxu0
      %v5222 = vadd.f32 %v5133, %v5221
      %v5223 = vpop.f32.mrf.mxu0
      %v5224 = vadd.f32 %v5135, %v5223
      %5225 = vmatmul.bf16.gmra.mxu0 %v811
      %v5226 = vpop.f32.mrf.mxu0
      %v5227 = vadd.f32 %v5138, %v5226
      %v5228 = vpop.f32.mrf.mxu0
      %v5229 = vadd.f32 %v5140, %v5228
      %5230 = vmatmul.bf16.gmra.mxu0 %v814
      %v5231 = vpop.f32.mrf.mxu0
      %v5232 = vadd.f32 %v5143, %v5231
      %v5233 = vpop.f32.mrf.mxu0
      %v5234 = vadd.f32 %v5145, %v5233
      %5235 = vmatmul.bf16.gmra.mxu0 %v817
      %v5236 = vpop.f32.mrf.mxu0
      %v5237 = vadd.f32 %v5148, %v5236
      %v5238 = vpop.f32.mrf.mxu0
      %v5239 = vadd.f32 %v5150, %v5238
      %5240 = vmatmul.bf16.gmra.mxu0 %v820
      %v5241 = vpop.f32.mrf.mxu0
      %v5242 = vadd.f32 %v5153, %v5241
      %v5243 = vpop.f32.mrf.mxu0
      %v5244 = vadd.f32 %v5155, %v5243
      %5245 = vdwg.mxu0
      %5246 = vmatpush.bf16.msra.mxu0 %v1828
      %5247 = vmatpush.bf16.msra.mxu0 %v1816
      %5248 = vmatpush.bf16.msra.mxu0 %v1804
      %5249 = vmatpush.bf16.msra.mxu0 %v1792
      %5250 = vmatpush.bf16.msra.mxu0 %v1780
      %5251 = vmatpush.bf16.msra.mxu0 %v1768
      %5252 = vmatpush.bf16.msra.mxu0 %v1756
      %5253 = vmatpush.bf16.msra.mxu0 %v1744
      %5254 = vmatmul.bf16.gmra.mxu0 %v773
      %v5255 = vpop.f32.mrf.mxu0
      %v5256 = vadd.f32 %v600, %v5255
      %v5257 = vpop.f32.mrf.mxu0
      %v5258 = vadd.f32 %v600, %v5257
      %5259 = vmatmul.bf16.gmra.mxu0 %v776
      %v5260 = vpop.f32.mrf.mxu0
      %v5261 = vadd.f32 %v600, %v5260
      %v5262 = vpop.f32.mrf.mxu0
      %v5263 = vadd.f32 %v600, %v5262
      %5264 = vmatmul.bf16.gmra.mxu0 %v779
      %v5265 = vpop.f32.mrf.mxu0
      %v5266 = vadd.f32 %v600, %v5265
      %v5267 = vpop.f32.mrf.mxu0
      %v5268 = vadd.f32 %v600, %v5267
      %5269 = vmatmul.bf16.gmra.mxu0 %v782
      %v5270 = vpop.f32.mrf.mxu0
      %v5271 = vadd.f32 %v600, %v5270
      %v5272 = vpop.f32.mrf.mxu0
      %v5273 = vadd.f32 %v600, %v5272
      %5274 = vmatmul.bf16.gmra.mxu0 %v785
      %v5275 = vpop.f32.mrf.mxu0
      %v5276 = vadd.f32 %v600, %v5275
      %v5277 = vpop.f32.mrf.mxu0
      %v5278 = vadd.f32 %v600, %v5277
      %5279 = vmatmul.bf16.gmra.mxu0 %v788
      %v5280 = vpop.f32.mrf.mxu0
      %v5281 = vadd.f32 %v600, %v5280
      %v5282 = vpop.f32.mrf.mxu0
      %v5283 = vadd.f32 %v600, %v5282
      %5284 = vmatmul.bf16.gmra.mxu0 %v791
      %v5285 = vpop.f32.mrf.mxu0
      %v5286 = vadd.f32 %v600, %v5285
      %v5287 = vpop.f32.mrf.mxu0
      %v5288 = vadd.f32 %v600, %v5287
      %5289 = vmatmul.bf16.gmra.mxu0 %v794
      %v5290 = vpop.f32.mrf.mxu0
      %v5291 = vadd.f32 %v600, %v5290
      %v5292 = vpop.f32.mrf.mxu0
      %v5293 = vadd.f32 %v600, %v5292
      %5294 = vmatmul.bf16.gmra.mxu0 %v797
      %v5295 = vpop.f32.mrf.mxu0
      %v5296 = vadd.f32 %v600, %v5295
      %v5297 = vpop.f32.mrf.mxu0
      %v5298 = vadd.f32 %v600, %v5297
      %5299 = vmatmul.bf16.gmra.mxu0 %v800
      %v5300 = vpop.f32.mrf.mxu0
      %v5301 = vadd.f32 %v600, %v5300
      %v5302 = vpop.f32.mrf.mxu0
      %v5303 = vadd.f32 %v600, %v5302
      %5304 = vmatmul.bf16.gmra.mxu0 %v803
      %v5305 = vpop.f32.mrf.mxu0
      %v5306 = vadd.f32 %v600, %v5305
      %v5307 = vpop.f32.mrf.mxu0
      %v5308 = vadd.f32 %v600, %v5307
      %5309 = vmatmul.bf16.gmra.mxu0 %v806
      %v5310 = vpop.f32.mrf.mxu0
      %v5311 = vadd.f32 %v600, %v5310
      %v5312 = vpop.f32.mrf.mxu0
      %v5313 = vadd.f32 %v600, %v5312
      %5314 = vmatmul.bf16.gmra.mxu0 %v809
      %v5315 = vpop.f32.mrf.mxu0
      %v5316 = vadd.f32 %v600, %v5315
      %v5317 = vpop.f32.mrf.mxu0
      %v5318 = vadd.f32 %v600, %v5317
      %5319 = vmatmul.bf16.gmra.mxu0 %v812
      %v5320 = vpop.f32.mrf.mxu0
      %v5321 = vadd.f32 %v600, %v5320
      %v5322 = vpop.f32.mrf.mxu0
      %v5323 = vadd.f32 %v600, %v5322
      %5324 = vmatmul.bf16.gmra.mxu0 %v815
      %v5325 = vpop.f32.mrf.mxu0
      %v5326 = vadd.f32 %v600, %v5325
      %v5327 = vpop.f32.mrf.mxu0
      %v5328 = vadd.f32 %v600, %v5327
      %5329 = vmatmul.bf16.gmra.mxu0 %v818
      %v5330 = vpop.f32.mrf.mxu0
      %v5331 = vadd.f32 %v600, %v5330
      %v5332 = vpop.f32.mrf.mxu0
      %v5333 = vadd.f32 %v600, %v5332
      %5334 = vdwg.mxu0
      %5335 = vmatpush.bf16.msra.mxu0 %v1924
      %5336 = vmatpush.bf16.msra.mxu0 %v1912
      %5337 = vmatpush.bf16.msra.mxu0 %v1900
      %5338 = vmatpush.bf16.msra.mxu0 %v1888
      %5339 = vmatpush.bf16.msra.mxu0 %v1876
      %5340 = vmatpush.bf16.msra.mxu0 %v1864
      %5341 = vmatpush.bf16.msra.mxu0 %v1852
      %5342 = vmatpush.bf16.msra.mxu0 %v1840
      %5343 = vmatmul.bf16.gmra.mxu0 %v774
      %v5344 = vpop.f32.mrf.mxu0
      %v5345 = vadd.f32 %v5256, %v5344
      %v5346 = vpop.f32.mrf.mxu0
      %v5347 = vadd.f32 %v5258, %v5346
      %5348 = vmatmul.bf16.gmra.mxu0 %v777
      %v5349 = vpop.f32.mrf.mxu0
      %v5350 = vadd.f32 %v5261, %v5349
      %v5351 = vpop.f32.mrf.mxu0
      %v5352 = vadd.f32 %v5263, %v5351
      %5353 = vmatmul.bf16.gmra.mxu0 %v780
      %v5354 = vpop.f32.mrf.mxu0
      %v5355 = vadd.f32 %v5266, %v5354
      %v5356 = vpop.f32.mrf.mxu0
      %v5357 = vadd.f32 %v5268, %v5356
      %5358 = vmatmul.bf16.gmra.mxu0 %v783
      %v5359 = vpop.f32.mrf.mxu0
      %v5360 = vadd.f32 %v5271, %v5359
      %v5361 = vpop.f32.mrf.mxu0
      %v5362 = vadd.f32 %v5273, %v5361
      %5363 = vmatmul.bf16.gmra.mxu0 %v786
      %v5364 = vpop.f32.mrf.mxu0
      %v5365 = vadd.f32 %v5276, %v5364
      %v5366 = vpop.f32.mrf.mxu0
      %v5367 = vadd.f32 %v5278, %v5366
      %5368 = vmatmul.bf16.gmra.mxu0 %v789
      %v5369 = vpop.f32.mrf.mxu0
      %v5370 = vadd.f32 %v5281, %v5369
      %v5371 = vpop.f32.mrf.mxu0
      %v5372 = vadd.f32 %v5283, %v5371
      %5373 = vmatmul.bf16.gmra.mxu0 %v792
      %v5374 = vpop.f32.mrf.mxu0
      %v5375 = vadd.f32 %v5286, %v5374
      %v5376 = vpop.f32.mrf.mxu0
      %v5377 = vadd.f32 %v5288, %v5376
      %5378 = vmatmul.bf16.gmra.mxu0 %v795
      %v5379 = vpop.f32.mrf.mxu0
      %v5380 = vadd.f32 %v5291, %v5379
      %v5381 = vpop.f32.mrf.mxu0
      %v5382 = vadd.f32 %v5293, %v5381
      %5383 = vmatmul.bf16.gmra.mxu0 %v798
      %v5384 = vpop.f32.mrf.mxu0
      %v5385 = vadd.f32 %v5296, %v5384
      %v5386 = vpop.f32.mrf.mxu0
      %v5387 = vadd.f32 %v5298, %v5386
      %5388 = vmatmul.bf16.gmra.mxu0 %v801
      %v5389 = vpop.f32.mrf.mxu0
      %v5390 = vadd.f32 %v5301, %v5389
      %v5391 = vpop.f32.mrf.mxu0
      %v5392 = vadd.f32 %v5303, %v5391
      %5393 = vmatmul.bf16.gmra.mxu0 %v804
      %v5394 = vpop.f32.mrf.mxu0
      %v5395 = vadd.f32 %v5306, %v5394
      %v5396 = vpop.f32.mrf.mxu0
      %v5397 = vadd.f32 %v5308, %v5396
      %5398 = vmatmul.bf16.gmra.mxu0 %v807
      %v5399 = vpop.f32.mrf.mxu0
      %v5400 = vadd.f32 %v5311, %v5399
      %v5401 = vpop.f32.mrf.mxu0
      %v5402 = vadd.f32 %v5313, %v5401
      %5403 = vmatmul.bf16.gmra.mxu0 %v810
      %v5404 = vpop.f32.mrf.mxu0
      %v5405 = vadd.f32 %v5316, %v5404
      %v5406 = vpop.f32.mrf.mxu0
      %v5407 = vadd.f32 %v5318, %v5406
      %5408 = vmatmul.bf16.gmra.mxu0 %v813
      %v5409 = vpop.f32.mrf.mxu0
      %v5410 = vadd.f32 %v5321, %v5409
      %v5411 = vpop.f32.mrf.mxu0
      %v5412 = vadd.f32 %v5323, %v5411
      %5413 = vmatmul.bf16.gmra.mxu0 %v816
      %v5414 = vpop.f32.mrf.mxu0
      %v5415 = vadd.f32 %v5326, %v5414
      %v5416 = vpop.f32.mrf.mxu0
      %v5417 = vadd.f32 %v5328, %v5416
      %5418 = vmatmul.bf16.gmra.mxu0 %v819
      %v5419 = vpop.f32.mrf.mxu0
      %v5420 = vadd.f32 %v5331, %v5419
      %v5421 = vpop.f32.mrf.mxu0
      %v5422 = vadd.f32 %v5333, %v5421
      %5423 = vdwg.mxu0
      %5424 = vmatpush.bf16.msra.mxu0 %v2020
      %5425 = vmatpush.bf16.msra.mxu0 %v2008
      %5426 = vmatpush.bf16.msra.mxu0 %v1996
      %5427 = vmatpush.bf16.msra.mxu0 %v1984
      %5428 = vmatpush.bf16.msra.mxu0 %v1972
      %5429 = vmatpush.bf16.msra.mxu0 %v1960
      %5430 = vmatpush.bf16.msra.mxu0 %v1948
      %5431 = vmatpush.bf16.msra.mxu0 %v1936
      %5432 = vmatmul.bf16.gmra.mxu0 %v775
      %v5433 = vpop.f32.mrf.mxu0
      %v5434 = vadd.f32 %v5345, %v5433
      %v5435 = vpop.f32.mrf.mxu0
      %v5436 = vadd.f32 %v5347, %v5435
      %5437 = vmatmul.bf16.gmra.mxu0 %v778
      %v5438 = vpop.f32.mrf.mxu0
      %v5439 = vadd.f32 %v5350, %v5438
      %v5440 = vpop.f32.mrf.mxu0
      %v5441 = vadd.f32 %v5352, %v5440
      %5442 = vmatmul.bf16.gmra.mxu0 %v781
      %v5443 = vpop.f32.mrf.mxu0
      %v5444 = vadd.f32 %v5355, %v5443
      %v5445 = vpop.f32.mrf.mxu0
      %v5446 = vadd.f32 %v5357, %v5445
      %5447 = vmatmul.bf16.gmra.mxu0 %v784
      %v5448 = vpop.f32.mrf.mxu0
      %v5449 = vadd.f32 %v5360, %v5448
      %v5450 = vpop.f32.mrf.mxu0
      %v5451 = vadd.f32 %v5362, %v5450
      %5452 = vmatmul.bf16.gmra.mxu0 %v787
      %v5453 = vpop.f32.mrf.mxu0
      %v5454 = vadd.f32 %v5365, %v5453
      %v5455 = vpop.f32.mrf.mxu0
      %v5456 = vadd.f32 %v5367, %v5455
      %5457 = vmatmul.bf16.gmra.mxu0 %v790
      %v5458 = vpop.f32.mrf.mxu0
      %v5459 = vadd.f32 %v5370, %v5458
      %v5460 = vpop.f32.mrf.mxu0
      %v5461 = vadd.f32 %v5372, %v5460
      %5462 = vmatmul.bf16.gmra.mxu0 %v793
      %v5463 = vpop.f32.mrf.mxu0
      %v5464 = vadd.f32 %v5375, %v5463
      %v5465 = vpop.f32.mrf.mxu0
      %v5466 = vadd.f32 %v5377, %v5465
      %5467 = vmatmul.bf16.gmra.mxu0 %v796
      %v5468 = vpop.f32.mrf.mxu0
      %v5469 = vadd.f32 %v5380, %v5468
      %v5470 = vpop.f32.mrf.mxu0
      %v5471 = vadd.f32 %v5382, %v5470
      %5472 = vmatmul.bf16.gmra.mxu0 %v799
      %v5473 = vpop.f32.mrf.mxu0
      %v5474 = vadd.f32 %v5385, %v5473
      %v5475 = vpop.f32.mrf.mxu0
      %v5476 = vadd.f32 %v5387, %v5475
      %5477 = vmatmul.bf16.gmra.mxu0 %v802
      %v5478 = vpop.f32.mrf.mxu0
      %v5479 = vadd.f32 %v5390, %v5478
      %v5480 = vpop.f32.mrf.mxu0
      %v5481 = vadd.f32 %v5392, %v5480
      %5482 = vmatmul.bf16.gmra.mxu0 %v805
      %v5483 = vpop.f32.mrf.mxu0
      %v5484 = vadd.f32 %v5395, %v5483
      %v5485 = vpop.f32.mrf.mxu0
      %v5486 = vadd.f32 %v5397, %v5485
      %5487 = vmatmul.bf16.gmra.mxu0 %v808
      %v5488 = vpop.f32.mrf.mxu0
      %v5489 = vadd.f32 %v5400, %v5488
      %v5490 = vpop.f32.mrf.mxu0
      %v5491 = vadd.f32 %v5402, %v5490
      %5492 = vmatmul.bf16.gmra.mxu0 %v811
      %v5493 = vpop.f32.mrf.mxu0
      %v5494 = vadd.f32 %v5405, %v5493
      %v5495 = vpop.f32.mrf.mxu0
      %v5496 = vadd.f32 %v5407, %v5495
      %5497 = vmatmul.bf16.gmra.mxu0 %v814
      %v5498 = vpop.f32.mrf.mxu0
      %v5499 = vadd.f32 %v5410, %v5498
      %v5500 = vpop.f32.mrf.mxu0
      %v5501 = vadd.f32 %v5412, %v5500
      %5502 = vmatmul.bf16.gmra.mxu0 %v817
      %v5503 = vpop.f32.mrf.mxu0
      %v5504 = vadd.f32 %v5415, %v5503
      %v5505 = vpop.f32.mrf.mxu0
      %v5506 = vadd.f32 %v5417, %v5505
      %5507 = vmatmul.bf16.gmra.mxu0 %v820
      %v5508 = vpop.f32.mrf.mxu0
      %v5509 = vadd.f32 %v5420, %v5508
      %v5510 = vpop.f32.mrf.mxu0
      %v5511 = vadd.f32 %v5422, %v5510
      %5512 = vdwg.mxu0
      %v5513 = vmax.f32 %v2497, 0.0
      %v5514 = vmax.f32 %v2764, 0.0
      %v5515 = vmax.f32 %v3031, 0.0
      %v5516 = vmax.f32 %v3298, 0.0
      %v5517 = vmax.f32 %v3565, 0.0
      %v5518 = vmax.f32 %v3832, 0.0
      %v5519 = vmax.f32 %v4099, 0.0
      %v5520 = vmax.f32 %v4366, 0.0
      %v5521 = vmax.f32 %v4633, 0.0
      %v5522 = vmax.f32 %v4900, 0.0
      %v5523 = vmax.f32 %v5167, 0.0
      %v5524 = vmax.f32 %v5434, 0.0
      %v5525 = vmax.f32 %v2499, 0.0
      %v5526 = vmax.f32 %v2766, 0.0
      %v5527 = vmax.f32 %v3033, 0.0
      %v5528 = vmax.f32 %v3300, 0.0
      %v5529 = vmax.f32 %v3567, 0.0
      %v5530 = vmax.f32 %v3834, 0.0
      %v5531 = vmax.f32 %v4101, 0.0
      %v5532 = vmax.f32 %v4368, 0.0
      %v5533 = vmax.f32 %v4635, 0.0
      %v5534 = vmax.f32 %v4902, 0.0
      %v5535 = vmax.f32 %v5169, 0.0
      %v5536 = vmax.f32 %v5436, 0.0
      %v5537 = vmax.f32 %v2502, 0.0
      %v5538 = vmax.f32 %v2769, 0.0
      %v5539 = vmax.f32 %v3036, 0.0
      %v5540 = vmax.f32 %v3303, 0.0
      %v5541 = vmax.f32 %v3570, 0.0
      %v5542 = vmax.f32 %v3837, 0.0
      %v5543 = vmax.f32 %v4104, 0.0
      %v5544 = vmax.f32 %v4371, 0.0
      %v5545 = vmax.f32 %v4638, 0.0
      %v5546 = vmax.f32 %v4905, 0.0
      %v5547 = vmax.f32 %v5172, 0.0
      %v5548 = vmax.f32 %v5439, 0.0
      %v5549 = vmax.f32 %v2504, 0.0
      %v5550 = vmax.f32 %v2771, 0.0
      %v5551 = vmax.f32 %v3038, 0.0
      %v5552 = vmax.f32 %v3305, 0.0
      %v5553 = vmax.f32 %v3572, 0.0
      %v5554 = vmax.f32 %v3839, 0.0
      %v5555 = vmax.f32 %v4106, 0.0
      %v5556 = vmax.f32 %v4373, 0.0
      %v5557 = vmax.f32 %v4640, 0.0
      %v5558 = vmax.f32 %v4907, 0.0
      %v5559 = vmax.f32 %v5174, 0.0
      %v5560 = vmax.f32 %v5441, 0.0
      %v5561 = vmax.f32 %v2507, 0.0
      %v5562 = vmax.f32 %v2774, 0.0
      %v5563 = vmax.f32 %v3041, 0.0
      %v5564 = vmax.f32 %v3308, 0.0
      %v5565 = vmax.f32 %v3575, 0.0
      %v5566 = vmax.f32 %v3842, 0.0
      %v5567 = vmax.f32 %v4109, 0.0
      %v5568 = vmax.f32 %v4376, 0.0
      %v5569 = vmax.f32 %v4643, 0.0
      %v5570 = vmax.f32 %v4910, 0.0
      %v5571 = vmax.f32 %v5177, 0.0
      %v5572 = vmax.f32 %v5444, 0.0
      %v5573 = vmax.f32 %v2509, 0.0
      %v5574 = vmax.f32 %v2776, 0.0
      %v5575 = vmax.f32 %v3043, 0.0
      %v5576 = vmax.f32 %v3310, 0.0
      %v5577 = vmax.f32 %v3577, 0.0
      %v5578 = vmax.f32 %v3844, 0.0
      %v5579 = vmax.f32 %v4111, 0.0
      %v5580 = vmax.f32 %v4378, 0.0
      %v5581 = vmax.f32 %v4645, 0.0
      %v5582 = vmax.f32 %v4912, 0.0
      %v5583 = vmax.f32 %v5179, 0.0
      %v5584 = vmax.f32 %v5446, 0.0
      %v5585 = vmax.f32 %v2512, 0.0
      %v5586 = vmax.f32 %v2779, 0.0
      %v5587 = vmax.f32 %v3046, 0.0
      %v5588 = vmax.f32 %v3313, 0.0
      %v5589 = vmax.f32 %v3580, 0.0
      %v5590 = vmax.f32 %v3847, 0.0
      %v5591 = vmax.f32 %v4114, 0.0
      %v5592 = vmax.f32 %v4381, 0.0
      %v5593 = vmax.f32 %v4648, 0.0
      %v5594 = vmax.f32 %v4915, 0.0
      %v5595 = vmax.f32 %v5182, 0.0
      %v5596 = vmax.f32 %v5449, 0.0
      %v5597 = vmax.f32 %v2514, 0.0
      %v5598 = vmax.f32 %v2781, 0.0
      %v5599 = vmax.f32 %v3048, 0.0
      %v5600 = vmax.f32 %v3315, 0.0
      %v5601 = vmax.f32 %v3582, 0.0
      %v5602 = vmax.f32 %v3849, 0.0
      %v5603 = vmax.f32 %v4116, 0.0
      %v5604 = vmax.f32 %v4383, 0.0
      %v5605 = vmax.f32 %v4650, 0.0
      %v5606 = vmax.f32 %v4917, 0.0
      %v5607 = vmax.f32 %v5184, 0.0
      %v5608 = vmax.f32 %v5451, 0.0
      %v5609 = vmax.f32 %v2517, 0.0
      %v5610 = vmax.f32 %v2784, 0.0
      %v5611 = vmax.f32 %v3051, 0.0
      %v5612 = vmax.f32 %v3318, 0.0
      %v5613 = vmax.f32 %v3585, 0.0
      %v5614 = vmax.f32 %v3852, 0.0
      %v5615 = vmax.f32 %v4119, 0.0
      %v5616 = vmax.f32 %v4386, 0.0
      %v5617 = vmax.f32 %v4653, 0.0
      %v5618 = vmax.f32 %v4920, 0.0
      %v5619 = vmax.f32 %v5187, 0.0
      %v5620 = vmax.f32 %v5454, 0.0
      %v5621 = vmax.f32 %v2519, 0.0
      %v5622 = vmax.f32 %v2786, 0.0
      %v5623 = vmax.f32 %v3053, 0.0
      %v5624 = vmax.f32 %v3320, 0.0
      %v5625 = vmax.f32 %v3587, 0.0
      %v5626 = vmax.f32 %v3854, 0.0
      %v5627 = vmax.f32 %v4121, 0.0
      %v5628 = vmax.f32 %v4388, 0.0
      %v5629 = vmax.f32 %v4655, 0.0
      %v5630 = vmax.f32 %v4922, 0.0
      %v5631 = vmax.f32 %v5189, 0.0
      %v5632 = vmax.f32 %v5456, 0.0
      %v5633 = vmax.f32 %v2522, 0.0
      %v5634 = vmax.f32 %v2789, 0.0
      %v5635 = vmax.f32 %v3056, 0.0
      %v5636 = vmax.f32 %v3323, 0.0
      %v5637 = vmax.f32 %v3590, 0.0
      %v5638 = vmax.f32 %v3857, 0.0
      %v5639 = vmax.f32 %v4124, 0.0
      %v5640 = vmax.f32 %v4391, 0.0
      %v5641 = vmax.f32 %v4658, 0.0
      %v5642 = vmax.f32 %v4925, 0.0
      %v5643 = vmax.f32 %v5192, 0.0
      %v5644 = vmax.f32 %v5459, 0.0
      %v5645 = vmax.f32 %v2524, 0.0
      %v5646 = vmax.f32 %v2791, 0.0
      %v5647 = vmax.f32 %v3058, 0.0
      %v5648 = vmax.f32 %v3325, 0.0
      %v5649 = vmax.f32 %v3592, 0.0
      %v5650 = vmax.f32 %v3859, 0.0
      %v5651 = vmax.f32 %v4126, 0.0
      %v5652 = vmax.f32 %v4393, 0.0
      %v5653 = vmax.f32 %v4660, 0.0
      %v5654 = vmax.f32 %v4927, 0.0
      %v5655 = vmax.f32 %v5194, 0.0
      %v5656 = vmax.f32 %v5461, 0.0
      %v5657 = vmax.f32 %v2527, 0.0
      %v5658 = vmax.f32 %v2794, 0.0
      %v5659 = vmax.f32 %v3061, 0.0
      %v5660 = vmax.f32 %v3328, 0.0
      %v5661 = vmax.f32 %v3595, 0.0
      %v5662 = vmax.f32 %v3862, 0.0
      %v5663 = vmax.f32 %v4129, 0.0
      %v5664 = vmax.f32 %v4396, 0.0
      %v5665 = vmax.f32 %v4663, 0.0
      %v5666 = vmax.f32 %v4930, 0.0
      %v5667 = vmax.f32 %v5197, 0.0
      %v5668 = vmax.f32 %v5464, 0.0
      %v5669 = vmax.f32 %v2529, 0.0
      %v5670 = vmax.f32 %v2796, 0.0
      %v5671 = vmax.f32 %v3063, 0.0
      %v5672 = vmax.f32 %v3330, 0.0
      %v5673 = vmax.f32 %v3597, 0.0
      %v5674 = vmax.f32 %v3864, 0.0
      %v5675 = vmax.f32 %v4131, 0.0
      %v5676 = vmax.f32 %v4398, 0.0
      %v5677 = vmax.f32 %v4665, 0.0
      %v5678 = vmax.f32 %v4932, 0.0
      %v5679 = vmax.f32 %v5199, 0.0
      %v5680 = vmax.f32 %v5466, 0.0
      %v5681 = vmax.f32 %v2532, 0.0
      %v5682 = vmax.f32 %v2799, 0.0
      %v5683 = vmax.f32 %v3066, 0.0
      %v5684 = vmax.f32 %v3333, 0.0
      %v5685 = vmax.f32 %v3600, 0.0
      %v5686 = vmax.f32 %v3867, 0.0
      %v5687 = vmax.f32 %v4134, 0.0
      %v5688 = vmax.f32 %v4401, 0.0
      %v5689 = vmax.f32 %v4668, 0.0
      %v5690 = vmax.f32 %v4935, 0.0
      %v5691 = vmax.f32 %v5202, 0.0
      %v5692 = vmax.f32 %v5469, 0.0
      %v5693 = vmax.f32 %v2534, 0.0
      %v5694 = vmax.f32 %v2801, 0.0
      %v5695 = vmax.f32 %v3068, 0.0
      %v5696 = vmax.f32 %v3335, 0.0
      %v5697 = vmax.f32 %v3602, 0.0
      %v5698 = vmax.f32 %v3869, 0.0
      %v5699 = vmax.f32 %v4136, 0.0
      %v5700 = vmax.f32 %v4403, 0.0
      %v5701 = vmax.f32 %v4670, 0.0
      %v5702 = vmax.f32 %v4937, 0.0
      %v5703 = vmax.f32 %v5204, 0.0
      %v5704 = vmax.f32 %v5471, 0.0
      %v5705 = vmax.f32 %v2537, 0.0
      %v5706 = vmax.f32 %v2804, 0.0
      %v5707 = vmax.f32 %v3071, 0.0
      %v5708 = vmax.f32 %v3338, 0.0
      %v5709 = vmax.f32 %v3605, 0.0
      %v5710 = vmax.f32 %v3872, 0.0
      %v5711 = vmax.f32 %v4139, 0.0
      %v5712 = vmax.f32 %v4406, 0.0
      %v5713 = vmax.f32 %v4673, 0.0
      %v5714 = vmax.f32 %v4940, 0.0
      %v5715 = vmax.f32 %v5207, 0.0
      %v5716 = vmax.f32 %v5474, 0.0
      %v5717 = vmax.f32 %v2539, 0.0
      %v5718 = vmax.f32 %v2806, 0.0
      %v5719 = vmax.f32 %v3073, 0.0
      %v5720 = vmax.f32 %v3340, 0.0
      %v5721 = vmax.f32 %v3607, 0.0
      %v5722 = vmax.f32 %v3874, 0.0
      %v5723 = vmax.f32 %v4141, 0.0
      %v5724 = vmax.f32 %v4408, 0.0
      %v5725 = vmax.f32 %v4675, 0.0
      %v5726 = vmax.f32 %v4942, 0.0
      %v5727 = vmax.f32 %v5209, 0.0
      %v5728 = vmax.f32 %v5476, 0.0
      %v5729 = vmax.f32 %v2542, 0.0
      %v5730 = vmax.f32 %v2809, 0.0
      %v5731 = vmax.f32 %v3076, 0.0
      %v5732 = vmax.f32 %v3343, 0.0
      %v5733 = vmax.f32 %v3610, 0.0
      %v5734 = vmax.f32 %v3877, 0.0
      %v5735 = vmax.f32 %v4144, 0.0
      %v5736 = vmax.f32 %v4411, 0.0
      %v5737 = vmax.f32 %v4678, 0.0
      %v5738 = vmax.f32 %v4945, 0.0
      %v5739 = vmax.f32 %v5212, 0.0
      %v5740 = vmax.f32 %v5479, 0.0
      %v5741 = vmax.f32 %v2544, 0.0
      %v5742 = vmax.f32 %v2811, 0.0
      %v5743 = vmax.f32 %v3078, 0.0
      %v5744 = vmax.f32 %v3345, 0.0
      %v5745 = vmax.f32 %v3612, 0.0
      %v5746 = vmax.f32 %v3879, 0.0
      %v5747 = vmax.f32 %v4146, 0.0
      %v5748 = vmax.f32 %v4413, 0.0
      %v5749 = vmax.f32 %v4680, 0.0
      %v5750 = vmax.f32 %v4947, 0.0
      %v5751 = vmax.f32 %v5214, 0.0
      %v5752 = vmax.f32 %v5481, 0.0
      %v5753 = vmax.f32 %v2547, 0.0
      %v5754 = vmax.f32 %v2814, 0.0
      %v5755 = vmax.f32 %v3081, 0.0
      %v5756 = vmax.f32 %v3348, 0.0
      %v5757 = vmax.f32 %v3615, 0.0
      %v5758 = vmax.f32 %v3882, 0.0
      %v5759 = vmax.f32 %v4149, 0.0
      %v5760 = vmax.f32 %v4416, 0.0
      %v5761 = vmax.f32 %v4683, 0.0
      %v5762 = vmax.f32 %v4950, 0.0
      %v5763 = vmax.f32 %v5217, 0.0
      %v5764 = vmax.f32 %v5484, 0.0
      %v5765 = vmax.f32 %v2549, 0.0
      %v5766 = vmax.f32 %v2816, 0.0
      %v5767 = vmax.f32 %v3083, 0.0
      %v5768 = vmax.f32 %v3350, 0.0
      %v5769 = vmax.f32 %v3617, 0.0
      %v5770 = vmax.f32 %v3884, 0.0
      %v5771 = vmax.f32 %v4151, 0.0
      %v5772 = vmax.f32 %v4418, 0.0
      %v5773 = vmax.f32 %v4685, 0.0
      %v5774 = vmax.f32 %v4952, 0.0
      %v5775 = vmax.f32 %v5219, 0.0
      %v5776 = vmax.f32 %v5486, 0.0
      %v5777 = vmax.f32 %v2552, 0.0
      %v5778 = vmax.f32 %v2819, 0.0
      %v5779 = vmax.f32 %v3086, 0.0
      %v5780 = vmax.f32 %v3353, 0.0
      %v5781 = vmax.f32 %v3620, 0.0
      %v5782 = vmax.f32 %v3887, 0.0
      %v5783 = vmax.f32 %v4154, 0.0
      %v5784 = vmax.f32 %v4421, 0.0
      %v5785 = vmax.f32 %v4688, 0.0
      %v5786 = vmax.f32 %v4955, 0.0
      %v5787 = vmax.f32 %v5222, 0.0
      %v5788 = vmax.f32 %v5489, 0.0
      %v5789 = vmax.f32 %v2554, 0.0
      %v5790 = vmax.f32 %v2821, 0.0
      %v5791 = vmax.f32 %v3088, 0.0
      %v5792 = vmax.f32 %v3355, 0.0
      %v5793 = vmax.f32 %v3622, 0.0
      %v5794 = vmax.f32 %v3889, 0.0
      %v5795 = vmax.f32 %v4156, 0.0
      %v5796 = vmax.f32 %v4423, 0.0
      %v5797 = vmax.f32 %v4690, 0.0
      %v5798 = vmax.f32 %v4957, 0.0
      %v5799 = vmax.f32 %v5224, 0.0
      %v5800 = vmax.f32 %v5491, 0.0
      %v5801 = vmax.f32 %v2557, 0.0
      %v5802 = vmax.f32 %v2824, 0.0
      %v5803 = vmax.f32 %v3091, 0.0
      %v5804 = vmax.f32 %v3358, 0.0
      %v5805 = vmax.f32 %v3625, 0.0
      %v5806 = vmax.f32 %v3892, 0.0
      %v5807 = vmax.f32 %v4159, 0.0
      %v5808 = vmax.f32 %v4426, 0.0
      %v5809 = vmax.f32 %v4693, 0.0
      %v5810 = vmax.f32 %v4960, 0.0
      %v5811 = vmax.f32 %v5227, 0.0
      %v5812 = vmax.f32 %v5494, 0.0
      %v5813 = vmax.f32 %v2559, 0.0
      %v5814 = vmax.f32 %v2826, 0.0
      %v5815 = vmax.f32 %v3093, 0.0
      %v5816 = vmax.f32 %v3360, 0.0
      %v5817 = vmax.f32 %v3627, 0.0
      %v5818 = vmax.f32 %v3894, 0.0
      %v5819 = vmax.f32 %v4161, 0.0
      %v5820 = vmax.f32 %v4428, 0.0
      %v5821 = vmax.f32 %v4695, 0.0
      %v5822 = vmax.f32 %v4962, 0.0
      %v5823 = vmax.f32 %v5229, 0.0
      %v5824 = vmax.f32 %v5496, 0.0
      %v5825 = vmax.f32 %v2562, 0.0
      %v5826 = vmax.f32 %v2829, 0.0
      %v5827 = vmax.f32 %v3096, 0.0
      %v5828 = vmax.f32 %v3363, 0.0
      %v5829 = vmax.f32 %v3630, 0.0
      %v5830 = vmax.f32 %v3897, 0.0
      %v5831 = vmax.f32 %v4164, 0.0
      %v5832 = vmax.f32 %v4431, 0.0
      %v5833 = vmax.f32 %v4698, 0.0
      %v5834 = vmax.f32 %v4965, 0.0
      %v5835 = vmax.f32 %v5232, 0.0
      %v5836 = vmax.f32 %v5499, 0.0
      %v5837 = vmax.f32 %v2564, 0.0
      %v5838 = vmax.f32 %v2831, 0.0
      %v5839 = vmax.f32 %v3098, 0.0
      %v5840 = vmax.f32 %v3365, 0.0
      %v5841 = vmax.f32 %v3632, 0.0
      %v5842 = vmax.f32 %v3899, 0.0
      %v5843 = vmax.f32 %v4166, 0.0
      %v5844 = vmax.f32 %v4433, 0.0
      %v5845 = vmax.f32 %v4700, 0.0
      %v5846 = vmax.f32 %v4967, 0.0
      %v5847 = vmax.f32 %v5234, 0.0
      %v5848 = vmax.f32 %v5501, 0.0
      %v5849 = vmax.f32 %v2567, 0.0
      %v5850 = vmax.f32 %v2834, 0.0
      %v5851 = vmax.f32 %v3101, 0.0
      %v5852 = vmax.f32 %v3368, 0.0
      %v5853 = vmax.f32 %v3635, 0.0
      %v5854 = vmax.f32 %v3902, 0.0
      %v5855 = vmax.f32 %v4169, 0.0
      %v5856 = vmax.f32 %v4436, 0.0
      %v5857 = vmax.f32 %v4703, 0.0
      %v5858 = vmax.f32 %v4970, 0.0
      %v5859 = vmax.f32 %v5237, 0.0
      %v5860 = vmax.f32 %v5504, 0.0
      %v5861 = vmax.f32 %v2569, 0.0
      %v5862 = vmax.f32 %v2836, 0.0
      %v5863 = vmax.f32 %v3103, 0.0
      %v5864 = vmax.f32 %v3370, 0.0
      %v5865 = vmax.f32 %v3637, 0.0
      %v5866 = vmax.f32 %v3904, 0.0
      %v5867 = vmax.f32 %v4171, 0.0
      %v5868 = vmax.f32 %v4438, 0.0
      %v5869 = vmax.f32 %v4705, 0.0
      %v5870 = vmax.f32 %v4972, 0.0
      %v5871 = vmax.f32 %v5239, 0.0
      %v5872 = vmax.f32 %v5506, 0.0
      %v5873 = vmax.f32 %v2572, 0.0
      %v5874 = vmax.f32 %v2839, 0.0
      %v5875 = vmax.f32 %v3106, 0.0
      %v5876 = vmax.f32 %v3373, 0.0
      %v5877 = vmax.f32 %v3640, 0.0
      %v5878 = vmax.f32 %v3907, 0.0
      %v5879 = vmax.f32 %v4174, 0.0
      %v5880 = vmax.f32 %v4441, 0.0
      %v5881 = vmax.f32 %v4708, 0.0
      %v5882 = vmax.f32 %v4975, 0.0
      %v5883 = vmax.f32 %v5242, 0.0
      %v5884 = vmax.f32 %v5509, 0.0
      %v5885 = vmax.f32 %v2574, 0.0
      %v5886 = vmax.f32 %v2841, 0.0
      %v5887 = vmax.f32 %v3108, 0.0
      %v5888 = vmax.f32 %v3375, 0.0
      %v5889 = vmax.f32 %v3642, 0.0
      %v5890 = vmax.f32 %v3909, 0.0
      %v5891 = vmax.f32 %v4176, 0.0
      %v5892 = vmax.f32 %v4443, 0.0
      %v5893 = vmax.f32 %v4710, 0.0
      %v5894 = vmax.f32 %v4977, 0.0
      %v5895 = vmax.f32 %v5244, 0.0
      %v5896 = vmax.f32 %v5511, 0.0
      %v5897 = vpack.c.bf16 %v5525, %v5513
      %v5898 = vpack.c.bf16 %v5526, %v5514
      %v5899 = vpack.c.bf16 %v5527, %v5515
      %v5900 = vpack.c.bf16 %v5528, %v5516
      %v5901 = vpack.c.bf16 %v5529, %v5517
      %v5902 = vpack.c.bf16 %v5530, %v5518
      %v5903 = vpack.c.bf16 %v5531, %v5519
      %v5904 = vpack.c.bf16 %v5532, %v5520
      %v5905 = vpack.c.bf16 %v5533, %v5521
      %v5906 = vpack.c.bf16 %v5534, %v5522
      %v5907 = vpack.c.bf16 %v5535, %v5523
      %v5908 = vpack.c.bf16 %v5536, %v5524
      %v5909 = vpack.c.bf16 %v5549, %v5537
      %v5910 = vpack.c.bf16 %v5550, %v5538
      %v5911 = vpack.c.bf16 %v5551, %v5539
      %v5912 = vpack.c.bf16 %v5552, %v5540
      %v5913 = vpack.c.bf16 %v5553, %v5541
      %v5914 = vpack.c.bf16 %v5554, %v5542
      %v5915 = vpack.c.bf16 %v5555, %v5543
      %v5916 = vpack.c.bf16 %v5556, %v5544
      %v5917 = vpack.c.bf16 %v5557, %v5545
      %v5918 = vpack.c.bf16 %v5558, %v5546
      %v5919 = vpack.c.bf16 %v5559, %v5547
      %v5920 = vpack.c.bf16 %v5560, %v5548
      %v5921 = vpack.c.bf16 %v5573, %v5561
      %v5922 = vpack.c.bf16 %v5574, %v5562
      %v5923 = vpack.c.bf16 %v5575, %v5563
      %v5924 = vpack.c.bf16 %v5576, %v5564
      %v5925 = vpack.c.bf16 %v5577, %v5565
      %v5926 = vpack.c.bf16 %v5578, %v5566
      %v5927 = vpack.c.bf16 %v5579, %v5567
      %v5928 = vpack.c.bf16 %v5580, %v5568
      %v5929 = vpack.c.bf16 %v5581, %v5569
      %v5930 = vpack.c.bf16 %v5582, %v5570
      %v5931 = vpack.c.bf16 %v5583, %v5571
      %v5932 = vpack.c.bf16 %v5584, %v5572
      %v5933 = vpack.c.bf16 %v5597, %v5585
      %v5934 = vpack.c.bf16 %v5598, %v5586
      %v5935 = vpack.c.bf16 %v5599, %v5587
      %v5936 = vpack.c.bf16 %v5600, %v5588
      %v5937 = vpack.c.bf16 %v5601, %v5589
      %v5938 = vpack.c.bf16 %v5602, %v5590
      %v5939 = vpack.c.bf16 %v5603, %v5591
      %v5940 = vpack.c.bf16 %v5604, %v5592
      %v5941 = vpack.c.bf16 %v5605, %v5593
      %v5942 = vpack.c.bf16 %v5606, %v5594
      %v5943 = vpack.c.bf16 %v5607, %v5595
      %v5944 = vpack.c.bf16 %v5608, %v5596
      %v5945 = vpack.c.bf16 %v5621, %v5609
      %v5946 = vpack.c.bf16 %v5622, %v5610
      %v5947 = vpack.c.bf16 %v5623, %v5611
      %v5948 = vpack.c.bf16 %v5624, %v5612
      %v5949 = vpack.c.bf16 %v5625, %v5613
      %v5950 = vpack.c.bf16 %v5626, %v5614
      %v5951 = vpack.c.bf16 %v5627, %v5615
      %v5952 = vpack.c.bf16 %v5628, %v5616
      %v5953 = vpack.c.bf16 %v5629, %v5617
      %v5954 = vpack.c.bf16 %v5630, %v5618
      %v5955 = vpack.c.bf16 %v5631, %v5619
      %v5956 = vpack.c.bf16 %v5632, %v5620
      %v5957 = vpack.c.bf16 %v5645, %v5633
      %v5958 = vpack.c.bf16 %v5646, %v5634
      %v5959 = vpack.c.bf16 %v5647, %v5635
      %v5960 = vpack.c.bf16 %v5648, %v5636
      %v5961 = vpack.c.bf16 %v5649, %v5637
      %v5962 = vpack.c.bf16 %v5650, %v5638
      %v5963 = vpack.c.bf16 %v5651, %v5639
      %v5964 = vpack.c.bf16 %v5652, %v5640
      %v5965 = vpack.c.bf16 %v5653, %v5641
      %v5966 = vpack.c.bf16 %v5654, %v5642
      %v5967 = vpack.c.bf16 %v5655, %v5643
      %v5968 = vpack.c.bf16 %v5656, %v5644
      %v5969 = vpack.c.bf16 %v5669, %v5657
      %v5970 = vpack.c.bf16 %v5670, %v5658
      %v5971 = vpack.c.bf16 %v5671, %v5659
      %v5972 = vpack.c.bf16 %v5672, %v5660
      %v5973 = vpack.c.bf16 %v5673, %v5661
      %v5974 = vpack.c.bf16 %v5674, %v5662
      %v5975 = vpack.c.bf16 %v5675, %v5663
      %v5976 = vpack.c.bf16 %v5676, %v5664
      %v5977 = vpack.c.bf16 %v5677, %v5665
      %v5978 = vpack.c.bf16 %v5678, %v5666
      %v5979 = vpack.c.bf16 %v5679, %v5667
      %v5980 = vpack.c.bf16 %v5680, %v5668
      %v5981 = vpack.c.bf16 %v5693, %v5681
      %v5982 = vpack.c.bf16 %v5694, %v5682
      %v5983 = vpack.c.bf16 %v5695, %v5683
      %v5984 = vpack.c.bf16 %v5696, %v5684
      %v5985 = vpack.c.bf16 %v5697, %v5685
      %v5986 = vpack.c.bf16 %v5698, %v5686
      %v5987 = vpack.c.bf16 %v5699, %v5687
      %v5988 = vpack.c.bf16 %v5700, %v5688
      %v5989 = vpack.c.bf16 %v5701, %v5689
      %v5990 = vpack.c.bf16 %v5702, %v5690
      %v5991 = vpack.c.bf16 %v5703, %v5691
      %v5992 = vpack.c.bf16 %v5704, %v5692
      %v5993 = vpack.c.bf16 %v5717, %v5705
      %v5994 = vpack.c.bf16 %v5718, %v5706
      %v5995 = vpack.c.bf16 %v5719, %v5707
      %v5996 = vpack.c.bf16 %v5720, %v5708
      %v5997 = vpack.c.bf16 %v5721, %v5709
      %v5998 = vpack.c.bf16 %v5722, %v5710
      %v5999 = vpack.c.bf16 %v5723, %v5711
      %v6000 = vpack.c.bf16 %v5724, %v5712
      %v6001 = vpack.c.bf16 %v5725, %v5713
      %v6002 = vpack.c.bf16 %v5726, %v5714
      %v6003 = vpack.c.bf16 %v5727, %v5715
      %v6004 = vpack.c.bf16 %v5728, %v5716
      %v6005 = vpack.c.bf16 %v5741, %v5729
      %v6006 = vpack.c.bf16 %v5742, %v5730
      %v6007 = vpack.c.bf16 %v5743, %v5731
      %v6008 = vpack.c.bf16 %v5744, %v5732
      %v6009 = vpack.c.bf16 %v5745, %v5733
      %v6010 = vpack.c.bf16 %v5746, %v5734
      %v6011 = vpack.c.bf16 %v5747, %v5735
      %v6012 = vpack.c.bf16 %v5748, %v5736
      %v6013 = vpack.c.bf16 %v5749, %v5737
      %v6014 = vpack.c.bf16 %v5750, %v5738
      %v6015 = vpack.c.bf16 %v5751, %v5739
      %v6016 = vpack.c.bf16 %v5752, %v5740
      %v6017 = vpack.c.bf16 %v5765, %v5753
      %v6018 = vpack.c.bf16 %v5766, %v5754
      %v6019 = vpack.c.bf16 %v5767, %v5755
      %v6020 = vpack.c.bf16 %v5768, %v5756
      %v6021 = vpack.c.bf16 %v5769, %v5757
      %v6022 = vpack.c.bf16 %v5770, %v5758
      %v6023 = vpack.c.bf16 %v5771, %v5759
      %v6024 = vpack.c.bf16 %v5772, %v5760
      %v6025 = vpack.c.bf16 %v5773, %v5761
      %v6026 = vpack.c.bf16 %v5774, %v5762
      %v6027 = vpack.c.bf16 %v5775, %v5763
      %v6028 = vpack.c.bf16 %v5776, %v5764
      %v6029 = vpack.c.bf16 %v5789, %v5777
      %v6030 = vpack.c.bf16 %v5790, %v5778
      %v6031 = vpack.c.bf16 %v5791, %v5779
      %v6032 = vpack.c.bf16 %v5792, %v5780
      %v6033 = vpack.c.bf16 %v5793, %v5781
      %v6034 = vpack.c.bf16 %v5794, %v5782
      %v6035 = vpack.c.bf16 %v5795, %v5783
      %v6036 = vpack.c.bf16 %v5796, %v5784
      %v6037 = vpack.c.bf16 %v5797, %v5785
      %v6038 = vpack.c.bf16 %v5798, %v5786
      %v6039 = vpack.c.bf16 %v5799, %v5787
      %v6040 = vpack.c.bf16 %v5800, %v5788
      %v6041 = vpack.c.bf16 %v5813, %v5801
      %v6042 = vpack.c.bf16 %v5814, %v5802
      %v6043 = vpack.c.bf16 %v5815, %v5803
      %v6044 = vpack.c.bf16 %v5816, %v5804
      %v6045 = vpack.c.bf16 %v5817, %v5805
      %v6046 = vpack.c.bf16 %v5818, %v5806
      %v6047 = vpack.c.bf16 %v5819, %v5807
      %v6048 = vpack.c.bf16 %v5820, %v5808
      %v6049 = vpack.c.bf16 %v5821, %v5809
      %v6050 = vpack.c.bf16 %v5822, %v5810
      %v6051 = vpack.c.bf16 %v5823, %v5811
      %v6052 = vpack.c.bf16 %v5824, %v5812
      %v6053 = vpack.c.bf16 %v5837, %v5825
      %v6054 = vpack.c.bf16 %v5838, %v5826
      %v6055 = vpack.c.bf16 %v5839, %v5827
      %v6056 = vpack.c.bf16 %v5840, %v5828
      %v6057 = vpack.c.bf16 %v5841, %v5829
      %v6058 = vpack.c.bf16 %v5842, %v5830
      %v6059 = vpack.c.bf16 %v5843, %v5831
      %v6060 = vpack.c.bf16 %v5844, %v5832
      %v6061 = vpack.c.bf16 %v5845, %v5833
      %v6062 = vpack.c.bf16 %v5846, %v5834
      %v6063 = vpack.c.bf16 %v5847, %v5835
      %v6064 = vpack.c.bf16 %v5848, %v5836
      %v6065 = vpack.c.bf16 %v5861, %v5849
      %v6066 = vpack.c.bf16 %v5862, %v5850
      %v6067 = vpack.c.bf16 %v5863, %v5851
      %v6068 = vpack.c.bf16 %v5864, %v5852
      %v6069 = vpack.c.bf16 %v5865, %v5853
      %v6070 = vpack.c.bf16 %v5866, %v5854
      %v6071 = vpack.c.bf16 %v5867, %v5855
      %v6072 = vpack.c.bf16 %v5868, %v5856
      %v6073 = vpack.c.bf16 %v5869, %v5857
      %v6074 = vpack.c.bf16 %v5870, %v5858
      %v6075 = vpack.c.bf16 %v5871, %v5859
      %v6076 = vpack.c.bf16 %v5872, %v5860
      %v6077 = vpack.c.bf16 %v5885, %v5873
      %v6078 = vpack.c.bf16 %v5886, %v5874
      %v6079 = vpack.c.bf16 %v5887, %v5875
      %v6080 = vpack.c.bf16 %v5888, %v5876
      %v6081 = vpack.c.bf16 %v5889, %v5877
      %v6082 = vpack.c.bf16 %v5890, %v5878
      %v6083 = vpack.c.bf16 %v5891, %v5879
      %v6084 = vpack.c.bf16 %v5892, %v5880
      %v6085 = vpack.c.bf16 %v5893, %v5881
      %v6086 = vpack.c.bf16 %v5894, %v5882
      %v6087 = vpack.c.bf16 %v5895, %v5883
      %v6088 = vpack.c.bf16 %v5896, %v5884
      %v6089 = vld [vmem:[%s3] sm:$0xff]
      %v6090 = vld [vmem:[%s3 + $0x8] sm:$0xf]
      %v6091 = vld [vmem:[%s3 + $0xc] sm:$0xff]
      %v6092 = vld [vmem:[%s3 + $0x14] sm:$0xf]
      %v6093 = vld [vmem:[%s3 + $0x18] sm:$0xff]
      %v6094 = vld [vmem:[%s3 + $0x20] sm:$0xf]
      %v6095 = vld [vmem:[%s3 + $0x24] sm:$0xff]
      %v6096 = vld [vmem:[%s3 + $0x2c] sm:$0xf]
      %v6097 = vld [vmem:[%s3 + $0x30] sm:$0xff]
      %v6098 = vld [vmem:[%s3 + $0x38] sm:$0xf]
      %v6099 = vld [vmem:[%s3 + $0x3c] sm:$0xff]
      %v6100 = vld [vmem:[%s3 + $0x44] sm:$0xf]
      %v6101 = vld [vmem:[%s3 + $0x48] sm:$0xff]
      %v6102 = vld [vmem:[%s3 + $0x50] sm:$0xf]
      %v6103 = vld [vmem:[%s3 + $0x54] sm:$0xff]
      %v6104 = vld [vmem:[%s3 + $0x5c] sm:$0xf]
      %v6105 = vld [vmem:[%s3 + $0x60] sm:$0xff]
      %v6106 = vld [vmem:[%s3 + $0x68] sm:$0xf]
      %v6107 = vld [vmem:[%s3 + $0x6c] sm:$0xff]
      %v6108 = vld [vmem:[%s3 + $0x74] sm:$0xf]
      %v6109 = vld [vmem:[%s3 + $0x78] sm:$0xff]
      %v6110 = vld [vmem:[%s3 + $0x80] sm:$0xf]
      %v6111 = vld [vmem:[%s3 + $0x84] sm:$0xff]
      %v6112 = vld [vmem:[%s3 + $0x8c] sm:$0xf]
      %v6113 = vld [vmem:[%s3 + $0x90] sm:$0xff]
      %v6114 = vld [vmem:[%s3 + $0x98] sm:$0xf]
      %v6115 = vld [vmem:[%s3 + $0x9c] sm:$0xff]
      %v6116 = vld [vmem:[%s3 + $0xa4] sm:$0xf]
      %v6117 = vld [vmem:[%s3 + $0xa8] sm:$0xff]
      %v6118 = vld [vmem:[%s3 + $0xb0] sm:$0xf]
      %v6119 = vld [vmem:[%s3 + $0xb4] sm:$0xff]
      %v6120 = vld [vmem:[%s3 + $0xbc] sm:$0xf]
      %v6121 = vld [vmem:[%s3 + $0xc0] sm:$0xff]
      %v6122 = vld [vmem:[%s3 + $0xc8] sm:$0xf]
      %v6123 = vld [vmem:[%s3 + $0xcc] sm:$0xff]
      %v6124 = vld [vmem:[%s3 + $0xd4] sm:$0xf]
      %v6125 = vld [vmem:[%s3 + $0xd8] sm:$0xff]
      %v6126 = vld [vmem:[%s3 + $0xe0] sm:$0xf]
      %v6127 = vld [vmem:[%s3 + $0xe4] sm:$0xff]
      %v6128 = vld [vmem:[%s3 + $0xec] sm:$0xf]
      %v6129 = vld [vmem:[%s3 + $0xf0] sm:$0xff]
      %v6130 = vld [vmem:[%s3 + $0xf8] sm:$0xf]
      %v6131 = vld [vmem:[%s3 + $0xfc] sm:$0xff]
      %v6132 = vld [vmem:[%s3 + $0x104] sm:$0xf]
      %v6133 = vld [vmem:[%s3 + $0x108] sm:$0xff]
      %v6134 = vld [vmem:[%s3 + $0x110] sm:$0xf]
      %v6135 = vld [vmem:[%s3 + $0x114] sm:$0xff]
      %v6136 = vld [vmem:[%s3 + $0x11c] sm:$0xf]
      %v6137 = vld [vmem:[%s3 + $0x120] sm:$0xff]
      %v6138 = vld [vmem:[%s3 + $0x128] sm:$0xf]
      %v6139 = vld [vmem:[%s3 + $0x12c] sm:$0xff]
      %v6140 = vld [vmem:[%s3 + $0x134] sm:$0xf]
      %v6141 = vld [vmem:[%s3 + $0x138] sm:$0xff]
      %v6142 = vld [vmem:[%s3 + $0x140] sm:$0xf]
      %v6143 = vld [vmem:[%s3 + $0x144] sm:$0xff]
      %v6144 = vld [vmem:[%s3 + $0x14c] sm:$0xf]
      %v6145 = vld [vmem:[%s3 + $0x150] sm:$0xff]
      %v6146 = vld [vmem:[%s3 + $0x158] sm:$0xf]
      %v6147 = vld [vmem:[%s3 + $0x15c] sm:$0xff]
      %v6148 = vld [vmem:[%s3 + $0x164] sm:$0xf]
      %v6149 = vld [vmem:[%s3 + $0x168] sm:$0xff]
      %v6150 = vld [vmem:[%s3 + $0x170] sm:$0xf]
      %v6151 = vld [vmem:[%s3 + $0x174] sm:$0xff]
      %v6152 = vld [vmem:[%s3 + $0x17c] sm:$0xf]
      %v6153 = vld [vmem:[%s3 + $0x180] sm:$0xff]
      %v6154 = vld [vmem:[%s3 + $0x188] sm:$0xf]
      %v6155 = vld [vmem:[%s3 + $0x18c] sm:$0xff]
      %v6156 = vld [vmem:[%s3 + $0x194] sm:$0xf]
      %v6157 = vld [vmem:[%s3 + $0x198] sm:$0xff]
      %v6158 = vld [vmem:[%s3 + $0x1a0] sm:$0xf]
      %v6159 = vld [vmem:[%s3 + $0x1a4] sm:$0xff]
      %v6160 = vld [vmem:[%s3 + $0x1ac] sm:$0xf]
      %v6161 = vld [vmem:[%s3 + $0x1b0] sm:$0xff]
      %v6162 = vld [vmem:[%s3 + $0x1b8] sm:$0xf]
      %v6163 = vld [vmem:[%s3 + $0x1bc] sm:$0xff]
      %v6164 = vld [vmem:[%s3 + $0x1c4] sm:$0xf]
      %v6165 = vld [vmem:[%s3 + $0x1c8] sm:$0xff]
      %v6166 = vld [vmem:[%s3 + $0x1d0] sm:$0xf]
      %v6167 = vld [vmem:[%s3 + $0x1d4] sm:$0xff]
      %v6168 = vld [vmem:[%s3 + $0x1dc] sm:$0xf]
      %v6169 = vld [vmem:[%s3 + $0x1e0] sm:$0xff]
      %v6170 = vld [vmem:[%s3 + $0x1e8] sm:$0xf]
      %v6171 = vld [vmem:[%s3 + $0x1ec] sm:$0xff]
      %v6172 = vld [vmem:[%s3 + $0x1f4] sm:$0xf]
      %v6173 = vld [vmem:[%s3 + $0x1f8] sm:$0xff]
      %v6174 = vld [vmem:[%s3 + $0x200] sm:$0xf]
      %v6175 = vld [vmem:[%s3 + $0x204] sm:$0xff]
      %v6176 = vld [vmem:[%s3 + $0x20c] sm:$0xf]
      %v6177 = vld [vmem:[%s3 + $0x210] sm:$0xff]
      %v6178 = vld [vmem:[%s3 + $0x218] sm:$0xf]
      %v6179 = vld [vmem:[%s3 + $0x21c] sm:$0xff]
      %v6180 = vld [vmem:[%s3 + $0x224] sm:$0xf]
      %v6181 = vld [vmem:[%s3 + $0x228] sm:$0xff]
      %v6182 = vld [vmem:[%s3 + $0x230] sm:$0xf]
      %v6183 = vld [vmem:[%s3 + $0x234] sm:$0xff]
      %v6184 = vld [vmem:[%s3 + $0x23c] sm:$0xf]
      %v6185 = vld [vmem:[%s3 + $0x240] sm:$0xff]
      %v6186 = vld [vmem:[%s3 + $0x248] sm:$0xf]
      %v6187 = vld [vmem:[%s3 + $0x24c] sm:$0xff]
      %v6188 = vld [vmem:[%s3 + $0x254] sm:$0xf]
      %v6189 = vld [vmem:[%s3 + $0x258] sm:$0xff]
      %v6190 = vld [vmem:[%s3 + $0x260] sm:$0xf]
      %v6191 = vld [vmem:[%s3 + $0x264] sm:$0xff]
      %v6192 = vld [vmem:[%s3 + $0x26c] sm:$0xf]
      %v6193 = vld [vmem:[%s3 + $0x270] sm:$0xff]
      %v6194 = vld [vmem:[%s3 + $0x278] sm:$0xf]
      %v6195 = vld [vmem:[%s3 + $0x27c] sm:$0xff]
      %v6196 = vld [vmem:[%s3 + $0x284] sm:$0xf]
      %v6197 = vld [vmem:[%s3 + $0x288] sm:$0xff]
      %v6198 = vld [vmem:[%s3 + $0x290] sm:$0xf]
      %v6199 = vld [vmem:[%s3 + $0x294] sm:$0xff]
      %v6200 = vld [vmem:[%s3 + $0x29c] sm:$0xf]
      %v6201 = vld [vmem:[%s3 + $0x2a0] sm:$0xff]
      %v6202 = vld [vmem:[%s3 + $0x2a8] sm:$0xf]
      %v6203 = vld [vmem:[%s3 + $0x2ac] sm:$0xff]
      %v6204 = vld [vmem:[%s3 + $0x2b4] sm:$0xf]
      %v6205 = vld [vmem:[%s3 + $0x2b8] sm:$0xff]
      %v6206 = vld [vmem:[%s3 + $0x2c0] sm:$0xf]
      %v6207 = vld [vmem:[%s3 + $0x2c4] sm:$0xff]
      %v6208 = vld [vmem:[%s3 + $0x2cc] sm:$0xf]
      %v6209 = vld [vmem:[%s3 + $0x2d0] sm:$0xff]
      %v6210 = vld [vmem:[%s3 + $0x2d8] sm:$0xf]
      %v6211 = vld [vmem:[%s3 + $0x2dc] sm:$0xff]
      %v6212 = vld [vmem:[%s3 + $0x2e4] sm:$0xf]
      %v6213 = vld [vmem:[%s3 + $0x2e8] sm:$0xff]
      %v6214 = vld [vmem:[%s3 + $0x2f0] sm:$0xf]
      %v6215 = vld [vmem:[%s3 + $0x2f4] sm:$0xff]
      %v6216 = vld [vmem:[%s3 + $0x2fc] sm:$0xf]
      %v6217 = vld [vmem:[%s3 + $0x300] sm:$0xff]
      %v6218 = vld [vmem:[%s3 + $0x308] sm:$0xf]
      %v6219 = vld [vmem:[%s3 + $0x30c] sm:$0xff]
      %v6220 = vld [vmem:[%s3 + $0x314] sm:$0xf]
      %v6221 = vld [vmem:[%s3 + $0x318] sm:$0xff]
      %v6222 = vld [vmem:[%s3 + $0x320] sm:$0xf]
      %v6223 = vld [vmem:[%s3 + $0x324] sm:$0xff]
      %v6224 = vld [vmem:[%s3 + $0x32c] sm:$0xf]
      %v6225 = vld [vmem:[%s3 + $0x330] sm:$0xff]
      %v6226 = vld [vmem:[%s3 + $0x338] sm:$0xf]
      %v6227 = vld [vmem:[%s3 + $0x33c] sm:$0xff]
      %v6228 = vld [vmem:[%s3 + $0x344] sm:$0xf]
      %v6229 = vld [vmem:[%s3 + $0x348] sm:$0xff]
      %v6230 = vld [vmem:[%s3 + $0x350] sm:$0xf]
      %v6231 = vld [vmem:[%s3 + $0x354] sm:$0xff]
      %v6232 = vld [vmem:[%s3 + $0x35c] sm:$0xf]
      %v6233 = vld [vmem:[%s3 + $0x360] sm:$0xff]
      %v6234 = vld [vmem:[%s3 + $0x368] sm:$0xf]
      %v6235 = vld [vmem:[%s3 + $0x36c] sm:$0xff]
      %v6236 = vld [vmem:[%s3 + $0x374] sm:$0xf]
      %v6237 = vld [vmem:[%s3 + $0x378] sm:$0xff]
      %v6238 = vld [vmem:[%s3 + $0x380] sm:$0xf]
      %v6239 = vld [vmem:[%s3 + $0x384] sm:$0xff]
      %v6240 = vld [vmem:[%s3 + $0x38c] sm:$0xf]
      %v6241 = vld [vmem:[%s3 + $0x390] sm:$0xff]
      %v6242 = vld [vmem:[%s3 + $0x398] sm:$0xf]
      %v6243 = vld [vmem:[%s3 + $0x39c] sm:$0xff]
      %v6244 = vld [vmem:[%s3 + $0x3a4] sm:$0xf]
      %v6245 = vld [vmem:[%s3 + $0x3a8] sm:$0xff]
      %v6246 = vld [vmem:[%s3 + $0x3b0] sm:$0xf]
      %v6247 = vld [vmem:[%s3 + $0x3b4] sm:$0xff]
      %v6248 = vld [vmem:[%s3 + $0x3bc] sm:$0xf]
      %v6249 = vld [vmem:[%s3 + $0x3c0] sm:$0xff]
      %v6250 = vld [vmem:[%s3 + $0x3c8] sm:$0xf]
      %v6251 = vld [vmem:[%s3 + $0x3cc] sm:$0xff]
      %v6252 = vld [vmem:[%s3 + $0x3d4] sm:$0xf]
      %v6253 = vld [vmem:[%s3 + $0x3d8] sm:$0xff]
      %v6254 = vld [vmem:[%s3 + $0x3e0] sm:$0xf]
      %v6255 = vld [vmem:[%s3 + $0x3e4] sm:$0xff]
      %v6256 = vld [vmem:[%s3 + $0x3ec] sm:$0xf]
      %v6257 = vld [vmem:[%s3 + $0x3f0] sm:$0xff]
      %v6258 = vld [vmem:[%s3 + $0x3f8] sm:$0xf]
      %v6259 = vld [vmem:[%s3 + $0x3fc] sm:$0xff]
      %v6260 = vld [vmem:[%s3 + $0x404] sm:$0xf]
      %v6261 = vld [vmem:[%s3 + $0x408] sm:$0xff]
      %v6262 = vld [vmem:[%s3 + $0x410] sm:$0xf]
      %v6263 = vld [vmem:[%s3 + $0x414] sm:$0xff]
      %v6264 = vld [vmem:[%s3 + $0x41c] sm:$0xf]
      %v6265 = vld [vmem:[%s3 + $0x420] sm:$0xff]
      %v6266 = vld [vmem:[%s3 + $0x428] sm:$0xf]
      %v6267 = vld [vmem:[%s3 + $0x42c] sm:$0xff]
      %v6268 = vld [vmem:[%s3 + $0x434] sm:$0xf]
      %v6269 = vld [vmem:[%s3 + $0x438] sm:$0xff]
      %v6270 = vld [vmem:[%s3 + $0x440] sm:$0xf]
      %v6271 = vld [vmem:[%s3 + $0x444] sm:$0xff]
      %v6272 = vld [vmem:[%s3 + $0x44c] sm:$0xf]
      %v6273 = vld [vmem:[%s3 + $0x450] sm:$0xff]
      %v6274 = vld [vmem:[%s3 + $0x458] sm:$0xf]
      %v6275 = vld [vmem:[%s3 + $0x45c] sm:$0xff]
      %v6276 = vld [vmem:[%s3 + $0x464] sm:$0xf]
      %v6277 = vld [vmem:[%s3 + $0x468] sm:$0xff]
      %v6278 = vld [vmem:[%s3 + $0x470] sm:$0xf]
      %v6279 = vld [vmem:[%s3 + $0x474] sm:$0xff]
      %v6280 = vld [vmem:[%s3 + $0x47c] sm:$0xf]
      %v6281 = vld [vmem:[%s3 + $0x480] sm:$0xff]
      %v6282 = vld [vmem:[%s3 + $0x488] sm:$0xf]
      %v6283 = vld [vmem:[%s3 + $0x48c] sm:$0xff]
      %v6284 = vld [vmem:[%s3 + $0x494] sm:$0xf]
      %v6285 = vld [vmem:[%s3 + $0x498] sm:$0xff]
      %v6286 = vld [vmem:[%s3 + $0x4a0] sm:$0xf]
      %v6287 = vld [vmem:[%s3 + $0x4a4] sm:$0xff]
      %v6288 = vld [vmem:[%s3 + $0x4ac] sm:$0xf]
      %v6289 = vld [vmem:[%s3 + $0x4b0] sm:$0xff]
      %v6290 = vld [vmem:[%s3 + $0x4b8] sm:$0xf]
      %v6291 = vld [vmem:[%s3 + $0x4bc] sm:$0xff]
      %v6292 = vld [vmem:[%s3 + $0x4c4] sm:$0xf]
      %v6293 = vld [vmem:[%s3 + $0x4c8] sm:$0xff]
      %v6294 = vld [vmem:[%s3 + $0x4d0] sm:$0xf]
      %v6295 = vld [vmem:[%s3 + $0x4d4] sm:$0xff]
      %v6296 = vld [vmem:[%s3 + $0x4dc] sm:$0xf]
      %v6297 = vld [vmem:[%s3 + $0x4e0] sm:$0xff]
      %v6298 = vld [vmem:[%s3 + $0x4e8] sm:$0xf]
      %v6299 = vld [vmem:[%s3 + $0x4ec] sm:$0xff]
      %v6300 = vld [vmem:[%s3 + $0x4f4] sm:$0xf]
      %v6301 = vld [vmem:[%s3 + $0x4f8] sm:$0xff]
      %v6302 = vld [vmem:[%s3 + $0x500] sm:$0xf]
      %v6303 = vld [vmem:[%s3 + $0x504] sm:$0xff]
      %v6304 = vld [vmem:[%s3 + $0x50c] sm:$0xf]
      %v6305 = vld [vmem:[%s3 + $0x510] sm:$0xff]
      %v6306 = vld [vmem:[%s3 + $0x518] sm:$0xf]
      %v6307 = vld [vmem:[%s3 + $0x51c] sm:$0xff]
      %v6308 = vld [vmem:[%s3 + $0x524] sm:$0xf]
      %v6309 = vld [vmem:[%s3 + $0x528] sm:$0xff]
      %v6310 = vld [vmem:[%s3 + $0x530] sm:$0xf]
      %v6311 = vld [vmem:[%s3 + $0x534] sm:$0xff]
      %v6312 = vld [vmem:[%s3 + $0x53c] sm:$0xf]
      %v6313 = vld [vmem:[%s3 + $0x540] sm:$0xff]
      %v6314 = vld [vmem:[%s3 + $0x548] sm:$0xf]
      %v6315 = vld [vmem:[%s3 + $0x54c] sm:$0xff]
      %v6316 = vld [vmem:[%s3 + $0x554] sm:$0xf]
      %v6317 = vld [vmem:[%s3 + $0x558] sm:$0xff]
      %v6318 = vld [vmem:[%s3 + $0x560] sm:$0xf]
      %v6319 = vld [vmem:[%s3 + $0x564] sm:$0xff]
      %v6320 = vld [vmem:[%s3 + $0x56c] sm:$0xf]
      %v6321 = vld [vmem:[%s3 + $0x570] sm:$0xff]
      %v6322 = vld [vmem:[%s3 + $0x578] sm:$0xf]
      %v6323 = vld [vmem:[%s3 + $0x57c] sm:$0xff]
      %v6324 = vld [vmem:[%s3 + $0x584] sm:$0xf]
      %v6325 = vld [vmem:[%s3 + $0x588] sm:$0xff]
      %v6326 = vld [vmem:[%s3 + $0x590] sm:$0xf]
      %v6327 = vld [vmem:[%s3 + $0x594] sm:$0xff]
      %v6328 = vld [vmem:[%s3 + $0x59c] sm:$0xf]
      %v6329 = vld [vmem:[%s3 + $0x5a0] sm:$0xff]
      %v6330 = vld [vmem:[%s3 + $0x5a8] sm:$0xf]
      %v6331 = vld [vmem:[%s3 + $0x5ac] sm:$0xff]
      %v6332 = vld [vmem:[%s3 + $0x5b4] sm:$0xf]
      %v6333 = vld [vmem:[%s3 + $0x5b8] sm:$0xff]
      %v6334 = vld [vmem:[%s3 + $0x5c0] sm:$0xf]
      %v6335 = vld [vmem:[%s3 + $0x5c4] sm:$0xff]
      %v6336 = vld [vmem:[%s3 + $0x5cc] sm:$0xf]
      %v6337 = vld [vmem:[%s3 + $0x5d0] sm:$0xff]
      %v6338 = vld [vmem:[%s3 + $0x5d8] sm:$0xf]
      %v6339 = vld [vmem:[%s3 + $0x5dc] sm:$0xff]
      %v6340 = vld [vmem:[%s3 + $0x5e4] sm:$0xf]
      %v6341 = vld [vmem:[%s3 + $0x5e8] sm:$0xff]
      %v6342 = vld [vmem:[%s3 + $0x5f0] sm:$0xf]
      %v6343 = vld [vmem:[%s3 + $0x5f4] sm:$0xff]
      %v6344 = vld [vmem:[%s3 + $0x5fc] sm:$0xf]
      %v6345 = vld [vmem:[%s3 + $0x600] sm:$0xff]
      %v6346 = vld [vmem:[%s3 + $0x608] sm:$0xf]
      %v6347 = vld [vmem:[%s3 + $0x60c] sm:$0xff]
      %v6348 = vld [vmem:[%s3 + $0x614] sm:$0xf]
      %v6349 = vld [vmem:[%s3 + $0x618] sm:$0xff]
      %v6350 = vld [vmem:[%s3 + $0x620] sm:$0xf]
      %v6351 = vld [vmem:[%s3 + $0x624] sm:$0xff]
      %v6352 = vld [vmem:[%s3 + $0x62c] sm:$0xf]
      %v6353 = vld [vmem:[%s3 + $0x630] sm:$0xff]
      %v6354 = vld [vmem:[%s3 + $0x638] sm:$0xf]
      %v6355 = vld [vmem:[%s3 + $0x63c] sm:$0xff]
      %v6356 = vld [vmem:[%s3 + $0x644] sm:$0xf]
      %v6357 = vld [vmem:[%s3 + $0x648] sm:$0xff]
      %v6358 = vld [vmem:[%s3 + $0x650] sm:$0xf]
      %v6359 = vld [vmem:[%s3 + $0x654] sm:$0xff]
      %v6360 = vld [vmem:[%s3 + $0x65c] sm:$0xf]
      %v6361 = vld [vmem:[%s3 + $0x660] sm:$0xff]
      %v6362 = vld [vmem:[%s3 + $0x668] sm:$0xf]
      %v6363 = vld [vmem:[%s3 + $0x66c] sm:$0xff]
      %v6364 = vld [vmem:[%s3 + $0x674] sm:$0xf]
      %v6365 = vld [vmem:[%s3 + $0x678] sm:$0xff]
      %v6366 = vld [vmem:[%s3 + $0x680] sm:$0xf]
      %v6367 = vld [vmem:[%s3 + $0x684] sm:$0xff]
      %v6368 = vld [vmem:[%s3 + $0x68c] sm:$0xf]
      %v6369 = vld [vmem:[%s3 + $0x690] sm:$0xff]
      %v6370 = vld [vmem:[%s3 + $0x698] sm:$0xf]
      %v6371 = vld [vmem:[%s3 + $0x69c] sm:$0xff]
      %v6372 = vld [vmem:[%s3 + $0x6a4] sm:$0xf]
      %v6373 = vld [vmem:[%s3 + $0x6a8] sm:$0xff]
      %v6374 = vld [vmem:[%s3 + $0x6b0] sm:$0xf]
      %v6375 = vld [vmem:[%s3 + $0x6b4] sm:$0xff]
      %v6376 = vld [vmem:[%s3 + $0x6bc] sm:$0xf]
      %v6377 = vld [vmem:[%s3 + $0x6c0] sm:$0xff]
      %v6378 = vld [vmem:[%s3 + $0x6c8] sm:$0xf]
      %v6379 = vld [vmem:[%s3 + $0x6cc] sm:$0xff]
      %v6380 = vld [vmem:[%s3 + $0x6d4] sm:$0xf]
      %v6381 = vld [vmem:[%s3 + $0x6d8] sm:$0xff]
      %v6382 = vld [vmem:[%s3 + $0x6e0] sm:$0xf]
      %v6383 = vld [vmem:[%s3 + $0x6e4] sm:$0xff]
      %v6384 = vld [vmem:[%s3 + $0x6ec] sm:$0xf]
      %v6385 = vld [vmem:[%s3 + $0x6f0] sm:$0xff]
      %v6386 = vld [vmem:[%s3 + $0x6f8] sm:$0xf]
      %v6387 = vld [vmem:[%s3 + $0x6fc] sm:$0xff]
      %v6388 = vld [vmem:[%s3 + $0x704] sm:$0xf]
      %v6389 = vld [vmem:[%s3 + $0x708] sm:$0xff]
      %v6390 = vld [vmem:[%s3 + $0x710] sm:$0xf]
      %v6391 = vld [vmem:[%s3 + $0x714] sm:$0xff]
      %v6392 = vld [vmem:[%s3 + $0x71c] sm:$0xf]
      %v6393 = vld [vmem:[%s3 + $0x720] sm:$0xff]
      %v6394 = vld [vmem:[%s3 + $0x728] sm:$0xf]
      %v6395 = vld [vmem:[%s3 + $0x72c] sm:$0xff]
      %v6396 = vld [vmem:[%s3 + $0x734] sm:$0xf]
      %v6397 = vld [vmem:[%s3 + $0x738] sm:$0xff]
      %v6398 = vld [vmem:[%s3 + $0x740] sm:$0xf]
      %v6399 = vld [vmem:[%s3 + $0x744] sm:$0xff]
      %v6400 = vld [vmem:[%s3 + $0x74c] sm:$0xf]
      %v6401 = vld [vmem:[%s3 + $0x750] sm:$0xff]
      %v6402 = vld [vmem:[%s3 + $0x758] sm:$0xf]
      %v6403 = vld [vmem:[%s3 + $0x75c] sm:$0xff]
      %v6404 = vld [vmem:[%s3 + $0x764] sm:$0xf]
      %v6405 = vld [vmem:[%s3 + $0x768] sm:$0xff]
      %v6406 = vld [vmem:[%s3 + $0x770] sm:$0xf]
      %v6407 = vld [vmem:[%s3 + $0x774] sm:$0xff]
      %v6408 = vld [vmem:[%s3 + $0x77c] sm:$0xf]
      %v6409 = vld [vmem:[%s3 + $0x780] sm:$0xff]
      %v6410 = vld [vmem:[%s3 + $0x788] sm:$0xf]
      %v6411 = vld [vmem:[%s3 + $0x78c] sm:$0xff]
      %v6412 = vld [vmem:[%s3 + $0x794] sm:$0xf]
      %v6413 = vld [vmem:[%s3 + $0x798] sm:$0xff]
      %v6414 = vld [vmem:[%s3 + $0x7a0] sm:$0xf]
      %v6415 = vld [vmem:[%s3 + $0x7a4] sm:$0xff]
      %v6416 = vld [vmem:[%s3 + $0x7ac] sm:$0xf]
      %v6417 = vld [vmem:[%s3 + $0x7b0] sm:$0xff]
      %v6418 = vld [vmem:[%s3 + $0x7b8] sm:$0xf]
      %v6419 = vld [vmem:[%s3 + $0x7bc] sm:$0xff]
      %v6420 = vld [vmem:[%s3 + $0x7c4] sm:$0xf]
      %v6421 = vld [vmem:[%s3 + $0x7c8] sm:$0xff]
      %v6422 = vld [vmem:[%s3 + $0x7d0] sm:$0xf]
      %v6423 = vld [vmem:[%s3 + $0x7d4] sm:$0xff]
      %v6424 = vld [vmem:[%s3 + $0x7dc] sm:$0xf]
      %v6425 = vld [vmem:[%s3 + $0x7e0] sm:$0xff]
      %v6426 = vld [vmem:[%s3 + $0x7e8] sm:$0xf]
      %v6427 = vld [vmem:[%s3 + $0x7ec] sm:$0xff]
      %v6428 = vld [vmem:[%s3 + $0x7f4] sm:$0xf]
      %v6429 = vld [vmem:[%s3 + $0x7f8] sm:$0xff]
      %v6430 = vld [vmem:[%s3 + $0x800] sm:$0xf]
      %v6431 = vld [vmem:[%s3 + $0x804] sm:$0xff]
      %v6432 = vld [vmem:[%s3 + $0x80c] sm:$0xf]
      %v6433 = vld [vmem:[%s3 + $0x810] sm:$0xff]
      %v6434 = vld [vmem:[%s3 + $0x818] sm:$0xf]
      %v6435 = vld [vmem:[%s3 + $0x81c] sm:$0xff]
      %v6436 = vld [vmem:[%s3 + $0x824] sm:$0xf]
      %v6437 = vld [vmem:[%s3 + $0x828] sm:$0xff]
      %v6438 = vld [vmem:[%s3 + $0x830] sm:$0xf]
      %v6439 = vld [vmem:[%s3 + $0x834] sm:$0xff]
      %v6440 = vld [vmem:[%s3 + $0x83c] sm:$0xf]
      %v6441 = vld [vmem:[%s3 + $0x840] sm:$0xff]
      %v6442 = vld [vmem:[%s3 + $0x848] sm:$0xf]
      %v6443 = vld [vmem:[%s3 + $0x84c] sm:$0xff]
      %v6444 = vld [vmem:[%s3 + $0x854] sm:$0xf]
      %v6445 = vld [vmem:[%s3 + $0x858] sm:$0xff]
      %v6446 = vld [vmem:[%s3 + $0x860] sm:$0xf]
      %v6447 = vld [vmem:[%s3 + $0x864] sm:$0xff]
      %v6448 = vld [vmem:[%s3 + $0x86c] sm:$0xf]
      %v6449 = vld [vmem:[%s3 + $0x870] sm:$0xff]
      %v6450 = vld [vmem:[%s3 + $0x878] sm:$0xf]
      %v6451 = vld [vmem:[%s3 + $0x87c] sm:$0xff]
      %v6452 = vld [vmem:[%s3 + $0x884] sm:$0xf]
      %v6453 = vld [vmem:[%s3 + $0x888] sm:$0xff]
      %v6454 = vld [vmem:[%s3 + $0x890] sm:$0xf]
      %v6455 = vld [vmem:[%s3 + $0x894] sm:$0xff]
      %v6456 = vld [vmem:[%s3 + $0x89c] sm:$0xf]
      %v6457 = vld [vmem:[%s3 + $0x8a0] sm:$0xff]
      %v6458 = vld [vmem:[%s3 + $0x8a8] sm:$0xf]
      %v6459 = vld [vmem:[%s3 + $0x8ac] sm:$0xff]
      %v6460 = vld [vmem:[%s3 + $0x8b4] sm:$0xf]
      %v6461 = vld [vmem:[%s3 + $0x8b8] sm:$0xff]
      %v6462 = vld [vmem:[%s3 + $0x8c0] sm:$0xf]
      %v6463 = vld [vmem:[%s3 + $0x8c4] sm:$0xff]
      %v6464 = vld [vmem:[%s3 + $0x8cc] sm:$0xf]
      %v6465 = vld [vmem:[%s3 + $0x8d0] sm:$0xff]
      %v6466 = vld [vmem:[%s3 + $0x8d8] sm:$0xf]
      %v6467 = vld [vmem:[%s3 + $0x8dc] sm:$0xff]
      %v6468 = vld [vmem:[%s3 + $0x8e4] sm:$0xf]
      %v6469 = vld [vmem:[%s3 + $0x8e8] sm:$0xff]
      %v6470 = vld [vmem:[%s3 + $0x8f0] sm:$0xf]
      %v6471 = vld [vmem:[%s3 + $0x8f4] sm:$0xff]
      %v6472 = vld [vmem:[%s3 + $0x8fc] sm:$0xf]
      %v6473 = vld [vmem:[%s4] sm:$0x7]
      %v6475 = vperm.slane %v6473, 0
      %v6476 = vperm.slane %v6473, 1
      %v6477 = vperm.slane %v6473, 2
      %v6865 = vunpack.c.l.b16 %v6089
      %v6866 = vunpack.c.h.b16 %v6089
      %v6867 = vunpack.c.l.b16 %v6090
      %v6868 = vunpack.c.l.b16 %v6091
      %v6869 = vunpack.c.h.b16 %v6091
      %v6870 = vunpack.c.l.b16 %v6092
      %v6871 = vunpack.c.l.b16 %v6093
      %v6872 = vunpack.c.h.b16 %v6093
      %v6873 = vunpack.c.l.b16 %v6094
      %v6874 = vunpack.c.l.b16 %v6095
      %v6875 = vunpack.c.h.b16 %v6095
      %v6876 = vunpack.c.l.b16 %v6096
      %v6877 = vunpack.c.l.b16 %v6097
      %v6878 = vunpack.c.h.b16 %v6097
      %v6879 = vunpack.c.l.b16 %v6098
      %v6880 = vunpack.c.l.b16 %v6099
      %v6881 = vunpack.c.h.b16 %v6099
      %v6882 = vunpack.c.l.b16 %v6100
      %v6883 = vunpack.c.l.b16 %v6101
      %v6884 = vunpack.c.h.b16 %v6101
      %v6885 = vunpack.c.l.b16 %v6102
      %v6886 = vunpack.c.l.b16 %v6103
      %v6887 = vunpack.c.h.b16 %v6103
      %v6888 = vunpack.c.l.b16 %v6104
      %v6889 = vunpack.c.l.b16 %v6105
      %v6890 = vunpack.c.h.b16 %v6105
      %v6891 = vunpack.c.l.b16 %v6106
      %v6892 = vunpack.c.l.b16 %v6107
      %v6893 = vunpack.c.h.b16 %v6107
      %v6894 = vunpack.c.l.b16 %v6108
      %v6895 = vunpack.c.l.b16 %v6109
      %v6896 = vunpack.c.h.b16 %v6109
      %v6897 = vunpack.c.l.b16 %v6110
      %v6898 = vunpack.c.l.b16 %v6111
      %v6899 = vunpack.c.h.b16 %v6111
      %v6900 = vunpack.c.l.b16 %v6112
      %v6901 = vunpack.c.l.b16 %v6113
      %v6902 = vunpack.c.h.b16 %v6113
      %v6903 = vunpack.c.l.b16 %v6114
      %v6904 = vunpack.c.l.b16 %v6115
      %v6905 = vunpack.c.h.b16 %v6115
      %v6906 = vunpack.c.l.b16 %v6116
      %v6907 = vunpack.c.l.b16 %v6117
      %v6908 = vunpack.c.h.b16 %v6117
      %v6909 = vunpack.c.l.b16 %v6118
      %v6910 = vunpack.c.l.b16 %v6119
      %v6911 = vunpack.c.h.b16 %v6119
      %v6912 = vunpack.c.l.b16 %v6120
      %v6913 = vunpack.c.l.b16 %v6121
      %v6914 = vunpack.c.h.b16 %v6121
      %v6915 = vunpack.c.l.b16 %v6122
      %v6916 = vunpack.c.l.b16 %v6123
      %v6917 = vunpack.c.h.b16 %v6123
      %v6918 = vunpack.c.l.b16 %v6124
      %v6919 = vunpack.c.l.b16 %v6125
      %v6920 = vunpack.c.h.b16 %v6125
      %v6921 = vunpack.c.l.b16 %v6126
      %v6922 = vunpack.c.l.b16 %v6127
      %v6923 = vunpack.c.h.b16 %v6127
      %v6924 = vunpack.c.l.b16 %v6128
      %v6925 = vunpack.c.l.b16 %v6129
      %v6926 = vunpack.c.h.b16 %v6129
      %v6927 = vunpack.c.l.b16 %v6130
      %v6928 = vunpack.c.l.b16 %v6131
      %v6929 = vunpack.c.h.b16 %v6131
      %v6930 = vunpack.c.l.b16 %v6132
      %v6931 = vunpack.c.l.b16 %v6133
      %v6932 = vunpack.c.h.b16 %v6133
      %v6933 = vunpack.c.l.b16 %v6134
      %v6934 = vunpack.c.l.b16 %v6135
      %v6935 = vunpack.c.h.b16 %v6135
      %v6936 = vunpack.c.l.b16 %v6136
      %v6937 = vunpack.c.l.b16 %v6137
      %v6938 = vunpack.c.h.b16 %v6137
      %v6939 = vunpack.c.l.b16 %v6138
      %v6940 = vunpack.c.l.b16 %v6139
      %v6941 = vunpack.c.h.b16 %v6139
      %v6942 = vunpack.c.l.b16 %v6140
      %v6943 = vunpack.c.l.b16 %v6141
      %v6944 = vunpack.c.h.b16 %v6141
      %v6945 = vunpack.c.l.b16 %v6142
      %v6946 = vunpack.c.l.b16 %v6143
      %v6947 = vunpack.c.h.b16 %v6143
      %v6948 = vunpack.c.l.b16 %v6144
      %v6949 = vunpack.c.l.b16 %v6145
      %v6950 = vunpack.c.h.b16 %v6145
      %v6951 = vunpack.c.l.b16 %v6146
      %v6952 = vunpack.c.l.b16 %v6147
      %v6953 = vunpack.c.h.b16 %v6147
      %v6954 = vunpack.c.l.b16 %v6148
      %v6955 = vunpack.c.l.b16 %v6149
      %v6956 = vunpack.c.h.b16 %v6149
      %v6957 = vunpack.c.l.b16 %v6150
      %v6958 = vunpack.c.l.b16 %v6151
      %v6959 = vunpack.c.h.b16 %v6151
      %v6960 = vunpack.c.l.b16 %v6152
      %v6961 = vunpack.c.l.b16 %v6153
      %v6962 = vunpack.c.h.b16 %v6153
      %v6963 = vunpack.c.l.b16 %v6154
      %v6964 = vunpack.c.l.b16 %v6155
      %v6965 = vunpack.c.h.b16 %v6155
      %v6966 = vunpack.c.l.b16 %v6156
      %v6967 = vunpack.c.l.b16 %v6157
      %v6968 = vunpack.c.h.b16 %v6157
      %v6969 = vunpack.c.l.b16 %v6158
      %v6970 = vunpack.c.l.b16 %v6159
      %v6971 = vunpack.c.h.b16 %v6159
      %v6972 = vunpack.c.l.b16 %v6160
      %v6973 = vunpack.c.l.b16 %v6161
      %v6974 = vunpack.c.h.b16 %v6161
      %v6975 = vunpack.c.l.b16 %v6162
      %v6976 = vunpack.c.l.b16 %v6163
      %v6977 = vunpack.c.h.b16 %v6163
      %v6978 = vunpack.c.l.b16 %v6164
      %v6979 = vunpack.c.l.b16 %v6165
      %v6980 = vunpack.c.h.b16 %v6165
      %v6981 = vunpack.c.l.b16 %v6166
      %v6982 = vunpack.c.l.b16 %v6167
      %v6983 = vunpack.c.h.b16 %v6167
      %v6984 = vunpack.c.l.b16 %v6168
      %v6985 = vunpack.c.l.b16 %v6169
      %v6986 = vunpack.c.h.b16 %v6169
      %v6987 = vunpack.c.l.b16 %v6170
      %v6988 = vunpack.c.l.b16 %v6171
      %v6989 = vunpack.c.h.b16 %v6171
      %v6990 = vunpack.c.l.b16 %v6172
      %v6991 = vunpack.c.l.b16 %v6173
      %v6992 = vunpack.c.h.b16 %v6173
      %v6993 = vunpack.c.l.b16 %v6174
      %v6994 = vunpack.c.l.b16 %v6175
      %v6995 = vunpack.c.h.b16 %v6175
      %v6996 = vunpack.c.l.b16 %v6176
      %v6997 = vunpack.c.l.b16 %v6177
      %v6998 = vunpack.c.h.b16 %v6177
      %v6999 = vunpack.c.l.b16 %v6178
      %v7000 = vunpack.c.l.b16 %v6179
      %v7001 = vunpack.c.h.b16 %v6179
      %v7002 = vunpack.c.l.b16 %v6180
      %v7003 = vunpack.c.l.b16 %v6181
      %v7004 = vunpack.c.h.b16 %v6181
      %v7005 = vunpack.c.l.b16 %v6182
      %v7006 = vunpack.c.l.b16 %v6183
      %v7007 = vunpack.c.h.b16 %v6183
      %v7008 = vunpack.c.l.b16 %v6184
      %v7009 = vunpack.c.l.b16 %v6185
      %v7010 = vunpack.c.h.b16 %v6185
      %v7011 = vunpack.c.l.b16 %v6186
      %v7012 = vunpack.c.l.b16 %v6187
      %v7013 = vunpack.c.h.b16 %v6187
      %v7014 = vunpack.c.l.b16 %v6188
      %v7015 = vunpack.c.l.b16 %v6189
      %v7016 = vunpack.c.h.b16 %v6189
      %v7017 = vunpack.c.l.b16 %v6190
      %v7018 = vunpack.c.l.b16 %v6191
      %v7019 = vunpack.c.h.b16 %v6191
      %v7020 = vunpack.c.l.b16 %v6192
      %v7021 = vunpack.c.l.b16 %v6193
      %v7022 = vunpack.c.h.b16 %v6193
      %v7023 = vunpack.c.l.b16 %v6194
      %v7024 = vunpack.c.l.b16 %v6195
      %v7025 = vunpack.c.h.b16 %v6195
      %v7026 = vunpack.c.l.b16 %v6196
      %v7027 = vunpack.c.l.b16 %v6197
      %v7028 = vunpack.c.h.b16 %v6197
      %v7029 = vunpack.c.l.b16 %v6198
      %v7030 = vunpack.c.l.b16 %v6199
      %v7031 = vunpack.c.h.b16 %v6199
      %v7032 = vunpack.c.l.b16 %v6200
      %v7033 = vunpack.c.l.b16 %v6201
      %v7034 = vunpack.c.h.b16 %v6201
      %v7035 = vunpack.c.l.b16 %v6202
      %v7036 = vunpack.c.l.b16 %v6203
      %v7037 = vunpack.c.h.b16 %v6203
      %v7038 = vunpack.c.l.b16 %v6204
      %v7039 = vunpack.c.l.b16 %v6205
      %v7040 = vunpack.c.h.b16 %v6205
      %v7041 = vunpack.c.l.b16 %v6206
      %v7042 = vunpack.c.l.b16 %v6207
      %v7043 = vunpack.c.h.b16 %v6207
      %v7044 = vunpack.c.l.b16 %v6208
      %v7045 = vunpack.c.l.b16 %v6209
      %v7046 = vunpack.c.h.b16 %v6209
      %v7047 = vunpack.c.l.b16 %v6210
      %v7048 = vunpack.c.l.b16 %v6211
      %v7049 = vunpack.c.h.b16 %v6211
      %v7050 = vunpack.c.l.b16 %v6212
      %v7051 = vunpack.c.l.b16 %v6213
      %v7052 = vunpack.c.h.b16 %v6213
      %v7053 = vunpack.c.l.b16 %v6214
      %v7054 = vunpack.c.l.b16 %v6215
      %v7055 = vunpack.c.h.b16 %v6215
      %v7056 = vunpack.c.l.b16 %v6216
      %v7057 = vunpack.c.l.b16 %v6217
      %v7058 = vunpack.c.h.b16 %v6217
      %v7059 = vunpack.c.l.b16 %v6218
      %v7060 = vunpack.c.l.b16 %v6219
      %v7061 = vunpack.c.h.b16 %v6219
      %v7062 = vunpack.c.l.b16 %v6220
      %v7063 = vunpack.c.l.b16 %v6221
      %v7064 = vunpack.c.h.b16 %v6221
      %v7065 = vunpack.c.l.b16 %v6222
      %v7066 = vunpack.c.l.b16 %v6223
      %v7067 = vunpack.c.h.b16 %v6223
      %v7068 = vunpack.c.l.b16 %v6224
      %v7069 = vunpack.c.l.b16 %v6225
      %v7070 = vunpack.c.h.b16 %v6225
      %v7071 = vunpack.c.l.b16 %v6226
      %v7072 = vunpack.c.l.b16 %v6227
      %v7073 = vunpack.c.h.b16 %v6227
      %v7074 = vunpack.c.l.b16 %v6228
      %v7075 = vunpack.c.l.b16 %v6229
      %v7076 = vunpack.c.h.b16 %v6229
      %v7077 = vunpack.c.l.b16 %v6230
      %v7078 = vunpack.c.l.b16 %v6231
      %v7079 = vunpack.c.h.b16 %v6231
      %v7080 = vunpack.c.l.b16 %v6232
      %v7081 = vunpack.c.l.b16 %v6233
      %v7082 = vunpack.c.h.b16 %v6233
      %v7083 = vunpack.c.l.b16 %v6234
      %v7084 = vunpack.c.l.b16 %v6235
      %v7085 = vunpack.c.h.b16 %v6235
      %v7086 = vunpack.c.l.b16 %v6236
      %v7087 = vunpack.c.l.b16 %v6237
      %v7088 = vunpack.c.h.b16 %v6237
      %v7089 = vunpack.c.l.b16 %v6238
      %v7090 = vunpack.c.l.b16 %v6239
      %v7091 = vunpack.c.h.b16 %v6239
      %v7092 = vunpack.c.l.b16 %v6240
      %v7093 = vunpack.c.l.b16 %v6241
      %v7094 = vunpack.c.h.b16 %v6241
      %v7095 = vunpack.c.l.b16 %v6242
      %v7096 = vunpack.c.l.b16 %v6243
      %v7097 = vunpack.c.h.b16 %v6243
      %v7098 = vunpack.c.l.b16 %v6244
      %v7099 = vunpack.c.l.b16 %v6245
      %v7100 = vunpack.c.h.b16 %v6245
      %v7101 = vunpack.c.l.b16 %v6246
      %v7102 = vunpack.c.l.b16 %v6247
      %v7103 = vunpack.c.h.b16 %v6247
      %v7104 = vunpack.c.l.b16 %v6248
      %v7105 = vunpack.c.l.b16 %v6249
      %v7106 = vunpack.c.h.b16 %v6249
      %v7107 = vunpack.c.l.b16 %v6250
      %v7108 = vunpack.c.l.b16 %v6251
      %v7109 = vunpack.c.h.b16 %v6251
      %v7110 = vunpack.c.l.b16 %v6252
      %v7111 = vunpack.c.l.b16 %v6253
      %v7112 = vunpack.c.h.b16 %v6253
      %v7113 = vunpack.c.l.b16 %v6254
      %v7114 = vunpack.c.l.b16 %v6255
      %v7115 = vunpack.c.h.b16 %v6255
      %v7116 = vunpack.c.l.b16 %v6256
      %v7117 = vunpack.c.l.b16 %v6257
      %v7118 = vunpack.c.h.b16 %v6257
      %v7119 = vunpack.c.l.b16 %v6258
      %v7120 = vunpack.c.l.b16 %v6259
      %v7121 = vunpack.c.h.b16 %v6259
      %v7122 = vunpack.c.l.b16 %v6260
      %v7123 = vunpack.c.l.b16 %v6261
      %v7124 = vunpack.c.h.b16 %v6261
      %v7125 = vunpack.c.l.b16 %v6262
      %v7126 = vunpack.c.l.b16 %v6263
      %v7127 = vunpack.c.h.b16 %v6263
      %v7128 = vunpack.c.l.b16 %v6264
      %v7129 = vunpack.c.l.b16 %v6265
      %v7130 = vunpack.c.h.b16 %v6265
      %v7131 = vunpack.c.l.b16 %v6266
      %v7132 = vunpack.c.l.b16 %v6267
      %v7133 = vunpack.c.h.b16 %v6267
      %v7134 = vunpack.c.l.b16 %v6268
      %v7135 = vunpack.c.l.b16 %v6269
      %v7136 = vunpack.c.h.b16 %v6269
      %v7137 = vunpack.c.l.b16 %v6270
      %v7138 = vunpack.c.l.b16 %v6271
      %v7139 = vunpack.c.h.b16 %v6271
      %v7140 = vunpack.c.l.b16 %v6272
      %v7141 = vunpack.c.l.b16 %v6273
      %v7142 = vunpack.c.h.b16 %v6273
      %v7143 = vunpack.c.l.b16 %v6274
      %v7144 = vunpack.c.l.b16 %v6275
      %v7145 = vunpack.c.h.b16 %v6275
      %v7146 = vunpack.c.l.b16 %v6276
      %v7147 = vunpack.c.l.b16 %v6277
      %v7148 = vunpack.c.h.b16 %v6277
      %v7149 = vunpack.c.l.b16 %v6278
      %v7150 = vunpack.c.l.b16 %v6279
      %v7151 = vunpack.c.h.b16 %v6279
      %v7152 = vunpack.c.l.b16 %v6280
      %v7153 = vunpack.c.l.b16 %v6281
      %v7154 = vunpack.c.h.b16 %v6281
      %v7155 = vunpack.c.l.b16 %v6282
      %v7156 = vunpack.c.l.b16 %v6283
      %v7157 = vunpack.c.h.b16 %v6283
      %v7158 = vunpack.c.l.b16 %v6284
      %v7159 = vunpack.c.l.b16 %v6285
      %v7160 = vunpack.c.h.b16 %v6285
      %v7161 = vunpack.c.l.b16 %v6286
      %v7162 = vunpack.c.l.b16 %v6287
      %v7163 = vunpack.c.h.b16 %v6287
      %v7164 = vunpack.c.l.b16 %v6288
      %v7165 = vunpack.c.l.b16 %v6289
      %v7166 = vunpack.c.h.b16 %v6289
      %v7167 = vunpack.c.l.b16 %v6290
      %v7168 = vunpack.c.l.b16 %v6291
      %v7169 = vunpack.c.h.b16 %v6291
      %v7170 = vunpack.c.l.b16 %v6292
      %v7171 = vunpack.c.l.b16 %v6293
      %v7172 = vunpack.c.h.b16 %v6293
      %v7173 = vunpack.c.l.b16 %v6294
      %v7174 = vunpack.c.l.b16 %v6295
      %v7175 = vunpack.c.h.b16 %v6295
      %v7176 = vunpack.c.l.b16 %v6296
      %v7177 = vunpack.c.l.b16 %v6297
      %v7178 = vunpack.c.h.b16 %v6297
      %v7179 = vunpack.c.l.b16 %v6298
      %v7180 = vunpack.c.l.b16 %v6299
      %v7181 = vunpack.c.h.b16 %v6299
      %v7182 = vunpack.c.l.b16 %v6300
      %v7183 = vunpack.c.l.b16 %v6301
      %v7184 = vunpack.c.h.b16 %v6301
      %v7185 = vunpack.c.l.b16 %v6302
      %v7186 = vunpack.c.l.b16 %v6303
      %v7187 = vunpack.c.h.b16 %v6303
      %v7188 = vunpack.c.l.b16 %v6304
      %v7189 = vunpack.c.l.b16 %v6305
      %v7190 = vunpack.c.h.b16 %v6305
      %v7191 = vunpack.c.l.b16 %v6306
      %v7192 = vunpack.c.l.b16 %v6307
      %v7193 = vunpack.c.h.b16 %v6307
      %v7194 = vunpack.c.l.b16 %v6308
      %v7195 = vunpack.c.l.b16 %v6309
      %v7196 = vunpack.c.h.b16 %v6309
      %v7197 = vunpack.c.l.b16 %v6310
      %v7198 = vunpack.c.l.b16 %v6311
      %v7199 = vunpack.c.h.b16 %v6311
      %v7200 = vunpack.c.l.b16 %v6312
      %v7201 = vunpack.c.l.b16 %v6313
      %v7202 = vunpack.c.h.b16 %v6313
      %v7203 = vunpack.c.l.b16 %v6314
      %v7204 = vunpack.c.l.b16 %v6315
      %v7205 = vunpack.c.h.b16 %v6315
      %v7206 = vunpack.c.l.b16 %v6316
      %v7207 = vunpack.c.l.b16 %v6317
      %v7208 = vunpack.c.h.b16 %v6317
      %v7209 = vunpack.c.l.b16 %v6318
      %v7210 = vunpack.c.l.b16 %v6319
      %v7211 = vunpack.c.h.b16 %v6319
      %v7212 = vunpack.c.l.b16 %v6320
      %v7213 = vunpack.c.l.b16 %v6321
      %v7214 = vunpack.c.h.b16 %v6321
      %v7215 = vunpack.c.l.b16 %v6322
      %v7216 = vunpack.c.l.b16 %v6323
      %v7217 = vunpack.c.h.b16 %v6323
      %v7218 = vunpack.c.l.b16 %v6324
      %v7219 = vunpack.c.l.b16 %v6325
      %v7220 = vunpack.c.h.b16 %v6325
      %v7221 = vunpack.c.l.b16 %v6326
      %v7222 = vunpack.c.l.b16 %v6327
      %v7223 = vunpack.c.h.b16 %v6327
      %v7224 = vunpack.c.l.b16 %v6328
      %v7225 = vunpack.c.l.b16 %v6329
      %v7226 = vunpack.c.h.b16 %v6329
      %v7227 = vunpack.c.l.b16 %v6330
      %v7228 = vunpack.c.l.b16 %v6331
      %v7229 = vunpack.c.h.b16 %v6331
      %v7230 = vunpack.c.l.b16 %v6332
      %v7231 = vunpack.c.l.b16 %v6333
      %v7232 = vunpack.c.h.b16 %v6333
      %v7233 = vunpack.c.l.b16 %v6334
      %v7234 = vunpack.c.l.b16 %v6335
      %v7235 = vunpack.c.h.b16 %v6335
      %v7236 = vunpack.c.l.b16 %v6336
      %v7237 = vunpack.c.l.b16 %v6337
      %v7238 = vunpack.c.h.b16 %v6337
      %v7239 = vunpack.c.l.b16 %v6338
      %v7240 = vunpack.c.l.b16 %v6339
      %v7241 = vunpack.c.h.b16 %v6339
      %v7242 = vunpack.c.l.b16 %v6340
      %v7243 = vunpack.c.l.b16 %v6341
      %v7244 = vunpack.c.h.b16 %v6341
      %v7245 = vunpack.c.l.b16 %v6342
      %v7246 = vunpack.c.l.b16 %v6343
      %v7247 = vunpack.c.h.b16 %v6343
      %v7248 = vunpack.c.l.b16 %v6344
      %v7249 = vunpack.c.l.b16 %v6345
      %v7250 = vunpack.c.h.b16 %v6345
      %v7251 = vunpack.c.l.b16 %v6346
      %v7252 = vunpack.c.l.b16 %v6347
      %v7253 = vunpack.c.h.b16 %v6347
      %v7254 = vunpack.c.l.b16 %v6348
      %v7255 = vunpack.c.l.b16 %v6349
      %v7256 = vunpack.c.h.b16 %v6349
      %v7257 = vunpack.c.l.b16 %v6350
      %v7258 = vunpack.c.l.b16 %v6351
      %v7259 = vunpack.c.h.b16 %v6351
      %v7260 = vunpack.c.l.b16 %v6352
      %v7261 = vunpack.c.l.b16 %v6353
      %v7262 = vunpack.c.h.b16 %v6353
      %v7263 = vunpack.c.l.b16 %v6354
      %v7264 = vunpack.c.l.b16 %v6355
      %v7265 = vunpack.c.h.b16 %v6355
      %v7266 = vunpack.c.l.b16 %v6356
      %v7267 = vunpack.c.l.b16 %v6357
      %v7268 = vunpack.c.h.b16 %v6357
      %v7269 = vunpack.c.l.b16 %v6358
      %v7270 = vunpack.c.l.b16 %v6359
      %v7271 = vunpack.c.h.b16 %v6359
      %v7272 = vunpack.c.l.b16 %v6360
      %v7273 = vunpack.c.l.b16 %v6361
      %v7274 = vunpack.c.h.b16 %v6361
      %v7275 = vunpack.c.l.b16 %v6362
      %v7276 = vunpack.c.l.b16 %v6363
      %v7277 = vunpack.c.h.b16 %v6363
      %v7278 = vunpack.c.l.b16 %v6364
      %v7279 = vunpack.c.l.b16 %v6365
      %v7280 = vunpack.c.h.b16 %v6365
      %v7281 = vunpack.c.l.b16 %v6366
      %v7282 = vunpack.c.l.b16 %v6367
      %v7283 = vunpack.c.h.b16 %v6367
      %v7284 = vunpack.c.l.b16 %v6368
      %v7285 = vunpack.c.l.b16 %v6369
      %v7286 = vunpack.c.h.b16 %v6369
      %v7287 = vunpack.c.l.b16 %v6370
      %v7288 = vunpack.c.l.b16 %v6371
      %v7289 = vunpack.c.h.b16 %v6371
      %v7290 = vunpack.c.l.b16 %v6372
      %v7291 = vunpack.c.l.b16 %v6373
      %v7292 = vunpack.c.h.b16 %v6373
      %v7293 = vunpack.c.l.b16 %v6374
      %v7294 = vunpack.c.l.b16 %v6375
      %v7295 = vunpack.c.h.b16 %v6375
      %v7296 = vunpack.c.l.b16 %v6376
      %v7297 = vunpack.c.l.b16 %v6377
      %v7298 = vunpack.c.h.b16 %v6377
      %v7299 = vunpack.c.l.b16 %v6378
      %v7300 = vunpack.c.l.b16 %v6379
      %v7301 = vunpack.c.h.b16 %v6379
      %v7302 = vunpack.c.l.b16 %v6380
      %v7303 = vunpack.c.l.b16 %v6381
      %v7304 = vunpack.c.h.b16 %v6381
      %v7305 = vunpack.c.l.b16 %v6382
      %v7306 = vunpack.c.l.b16 %v6383
      %v7307 = vunpack.c.h.b16 %v6383
      %v7308 = vunpack.c.l.b16 %v6384
      %v7309 = vunpack.c.l.b16 %v6385
      %v7310 = vunpack.c.h.b16 %v6385
      %v7311 = vunpack.c.l.b16 %v6386
      %v7312 = vunpack.c.l.b16 %v6387
      %v7313 = vunpack.c.h.b16 %v6387
      %v7314 = vunpack.c.l.b16 %v6388
      %v7315 = vunpack.c.l.b16 %v6389
      %v7316 = vunpack.c.h.b16 %v6389
      %v7317 = vunpack.c.l.b16 %v6390
      %v7318 = vunpack.c.l.b16 %v6391
      %v7319 = vunpack.c.h.b16 %v6391
      %v7320 = vunpack.c.l.b16 %v6392
      %v7321 = vunpack.c.l.b16 %v6393
      %v7322 = vunpack.c.h.b16 %v6393
      %v7323 = vunpack.c.l.b16 %v6394
      %v7324 = vunpack.c.l.b16 %v6395
      %v7325 = vunpack.c.h.b16 %v6395
      %v7326 = vunpack.c.l.b16 %v6396
      %v7327 = vunpack.c.l.b16 %v6397
      %v7328 = vunpack.c.h.b16 %v6397
      %v7329 = vunpack.c.l.b16 %v6398
      %v7330 = vunpack.c.l.b16 %v6399
      %v7331 = vunpack.c.h.b16 %v6399
      %v7332 = vunpack.c.l.b16 %v6400
      %v7333 = vunpack.c.l.b16 %v6401
      %v7334 = vunpack.c.h.b16 %v6401
      %v7335 = vunpack.c.l.b16 %v6402
      %v7336 = vunpack.c.l.b16 %v6403
      %v7337 = vunpack.c.h.b16 %v6403
      %v7338 = vunpack.c.l.b16 %v6404
      %v7339 = vunpack.c.l.b16 %v6405
      %v7340 = vunpack.c.h.b16 %v6405
      %v7341 = vunpack.c.l.b16 %v6406
      %v7342 = vunpack.c.l.b16 %v6407
      %v7343 = vunpack.c.h.b16 %v6407
      %v7344 = vunpack.c.l.b16 %v6408
      %v7345 = vunpack.c.l.b16 %v6409
      %v7346 = vunpack.c.h.b16 %v6409
      %v7347 = vunpack.c.l.b16 %v6410
      %v7348 = vunpack.c.l.b16 %v6411
      %v7349 = vunpack.c.h.b16 %v6411
      %v7350 = vunpack.c.l.b16 %v6412
      %v7351 = vunpack.c.l.b16 %v6413
      %v7352 = vunpack.c.h.b16 %v6413
      %v7353 = vunpack.c.l.b16 %v6414
      %v7354 = vunpack.c.l.b16 %v6415
      %v7355 = vunpack.c.h.b16 %v6415
      %v7356 = vunpack.c.l.b16 %v6416
      %v7357 = vunpack.c.l.b16 %v6417
      %v7358 = vunpack.c.h.b16 %v6417
      %v7359 = vunpack.c.l.b16 %v6418
      %v7360 = vunpack.c.l.b16 %v6419
      %v7361 = vunpack.c.h.b16 %v6419
      %v7362 = vunpack.c.l.b16 %v6420
      %v7363 = vunpack.c.l.b16 %v6421
      %v7364 = vunpack.c.h.b16 %v6421
      %v7365 = vunpack.c.l.b16 %v6422
      %v7366 = vunpack.c.l.b16 %v6423
      %v7367 = vunpack.c.h.b16 %v6423
      %v7368 = vunpack.c.l.b16 %v6424
      %v7369 = vunpack.c.l.b16 %v6425
      %v7370 = vunpack.c.h.b16 %v6425
      %v7371 = vunpack.c.l.b16 %v6426
      %v7372 = vunpack.c.l.b16 %v6427
      %v7373 = vunpack.c.h.b16 %v6427
      %v7374 = vunpack.c.l.b16 %v6428
      %v7375 = vunpack.c.l.b16 %v6429
      %v7376 = vunpack.c.h.b16 %v6429
      %v7377 = vunpack.c.l.b16 %v6430
      %v7378 = vunpack.c.l.b16 %v6431
      %v7379 = vunpack.c.h.b16 %v6431
      %v7380 = vunpack.c.l.b16 %v6432
      %v7381 = vunpack.c.l.b16 %v6433
      %v7382 = vunpack.c.h.b16 %v6433
      %v7383 = vunpack.c.l.b16 %v6434
      %v7384 = vunpack.c.l.b16 %v6435
      %v7385 = vunpack.c.h.b16 %v6435
      %v7386 = vunpack.c.l.b16 %v6436
      %v7387 = vunpack.c.l.b16 %v6437
      %v7388 = vunpack.c.h.b16 %v6437
      %v7389 = vunpack.c.l.b16 %v6438
      %v7390 = vunpack.c.l.b16 %v6439
      %v7391 = vunpack.c.h.b16 %v6439
      %v7392 = vunpack.c.l.b16 %v6440
      %v7393 = vunpack.c.l.b16 %v6441
      %v7394 = vunpack.c.h.b16 %v6441
      %v7395 = vunpack.c.l.b16 %v6442
      %v7396 = vunpack.c.l.b16 %v6443
      %v7397 = vunpack.c.h.b16 %v6443
      %v7398 = vunpack.c.l.b16 %v6444
      %v7399 = vunpack.c.l.b16 %v6445
      %v7400 = vunpack.c.h.b16 %v6445
      %v7401 = vunpack.c.l.b16 %v6446
      %v7402 = vunpack.c.l.b16 %v6447
      %v7403 = vunpack.c.h.b16 %v6447
      %v7404 = vunpack.c.l.b16 %v6448
      %v7405 = vunpack.c.l.b16 %v6449
      %v7406 = vunpack.c.h.b16 %v6449
      %v7407 = vunpack.c.l.b16 %v6450
      %v7408 = vunpack.c.l.b16 %v6451
      %v7409 = vunpack.c.h.b16 %v6451
      %v7410 = vunpack.c.l.b16 %v6452
      %v7411 = vunpack.c.l.b16 %v6453
      %v7412 = vunpack.c.h.b16 %v6453
      %v7413 = vunpack.c.l.b16 %v6454
      %v7414 = vunpack.c.l.b16 %v6455
      %v7415 = vunpack.c.h.b16 %v6455
      %v7416 = vunpack.c.l.b16 %v6456
      %v7417 = vunpack.c.l.b16 %v6457
      %v7418 = vunpack.c.h.b16 %v6457
      %v7419 = vunpack.c.l.b16 %v6458
      %v7420 = vunpack.c.l.b16 %v6459
      %v7421 = vunpack.c.h.b16 %v6459
      %v7422 = vunpack.c.l.b16 %v6460
      %v7423 = vunpack.c.l.b16 %v6461
      %v7424 = vunpack.c.h.b16 %v6461
      %v7425 = vunpack.c.l.b16 %v6462
      %v7426 = vunpack.c.l.b16 %v6463
      %v7427 = vunpack.c.h.b16 %v6463
      %v7428 = vunpack.c.l.b16 %v6464
      %v7429 = vunpack.c.l.b16 %v6465
      %v7430 = vunpack.c.h.b16 %v6465
      %v7431 = vunpack.c.l.b16 %v6466
      %v7432 = vunpack.c.l.b16 %v6467
      %v7433 = vunpack.c.h.b16 %v6467
      %v7434 = vunpack.c.l.b16 %v6468
      %v7435 = vunpack.c.l.b16 %v6469
      %v7436 = vunpack.c.h.b16 %v6469
      %v7437 = vunpack.c.l.b16 %v6470
      %v7438 = vunpack.c.l.b16 %v6471
      %v7439 = vunpack.c.h.b16 %v6471
      %v7440 = vunpack.c.l.b16 %v6472
      %v7441 = vpack.c.b16 %v6868, %v6865
      %v7442 = vpack.c.b16 %v6869, %v6866
      %v7443 = vpack.c.b16 %v6870, %v6867
      %v7444 = vpack.c.b16 %v6874, %v6871
      %v7445 = vpack.c.b16 %v6875, %v6872
      %v7446 = vpack.c.b16 %v6876, %v6873
      %v7447 = vpack.c.b16 %v6880, %v6877
      %v7448 = vpack.c.b16 %v6881, %v6878
      %v7449 = vpack.c.b16 %v6882, %v6879
      %v7450 = vpack.c.b16 %v6886, %v6883
      %v7451 = vpack.c.b16 %v6887, %v6884
      %v7452 = vpack.c.b16 %v6888, %v6885
      %v7453 = vpack.c.b16 %v6892, %v6889
      %v7454 = vpack.c.b16 %v6893, %v6890
      %v7455 = vpack.c.b16 %v6894, %v6891
      %v7456 = vpack.c.b16 %v6898, %v6895
      %v7457 = vpack.c.b16 %v6899, %v6896
      %v7458 = vpack.c.b16 %v6900, %v6897
      %v7459 = vpack.c.b16 %v6904, %v6901
      %v7460 = vpack.c.b16 %v6905, %v6902
      %v7461 = vpack.c.b16 %v6906, %v6903
      %v7462 = vpack.c.b16 %v6910, %v6907
      %v7463 = vpack.c.b16 %v6911, %v6908
      %v7464 = vpack.c.b16 %v6912, %v6909
      %v7465 = vpack.c.b16 %v6916, %v6913
      %v7466 = vpack.c.b16 %v6917, %v6914
      %v7467 = vpack.c.b16 %v6918, %v6915
      %v7468 = vpack.c.b16 %v6922, %v6919
      %v7469 = vpack.c.b16 %v6923, %v6920
      %v7470 = vpack.c.b16 %v6924, %v6921
      %v7471 = vpack.c.b16 %v6928, %v6925
      %v7472 = vpack.c.b16 %v6929, %v6926
      %v7473 = vpack.c.b16 %v6930, %v6927
      %v7474 = vpack.c.b16 %v6934, %v6931
      %v7475 = vpack.c.b16 %v6935, %v6932
      %v7476 = vpack.c.b16 %v6936, %v6933
      %v7477 = vpack.c.b16 %v6940, %v6937
      %v7478 = vpack.c.b16 %v6941, %v6938
      %v7479 = vpack.c.b16 %v6942, %v6939
      %v7480 = vpack.c.b16 %v6946, %v6943
      %v7481 = vpack.c.b16 %v6947, %v6944
      %v7482 = vpack.c.b16 %v6948, %v6945
      %v7483 = vpack.c.b16 %v6952, %v6949
      %v7484 = vpack.c.b16 %v6953, %v6950
      %v7485 = vpack.c.b16 %v6954, %v6951
      %v7486 = vpack.c.b16 %v6958, %v6955
      %v7487 = vpack.c.b16 %v6959, %v6956
      %v7488 = vpack.c.b16 %v6960, %v6957
      %v7489 = vpack.c.b16 %v6964, %v6961
      %v7490 = vpack.c.b16 %v6965, %v6962
      %v7491 = vpack.c.b16 %v6966, %v6963
      %v7492 = vpack.c.b16 %v6970, %v6967
      %v7493 = vpack.c.b16 %v6971, %v6968
      %v7494 = vpack.c.b16 %v6972, %v6969
      %v7495 = vpack.c.b16 %v6976, %v6973
      %v7496 = vpack.c.b16 %v6977, %v6974
      %v7497 = vpack.c.b16 %v6978, %v6975
      %v7498 = vpack.c.b16 %v6982, %v6979
      %v7499 = vpack.c.b16 %v6983, %v6980
      %v7500 = vpack.c.b16 %v6984, %v6981
      %v7501 = vpack.c.b16 %v6988, %v6985
      %v7502 = vpack.c.b16 %v6989, %v6986
      %v7503 = vpack.c.b16 %v6990, %v6987
      %v7504 = vpack.c.b16 %v6994, %v6991
      %v7505 = vpack.c.b16 %v6995, %v6992
      %v7506 = vpack.c.b16 %v6996, %v6993
      %v7507 = vpack.c.b16 %v7000, %v6997
      %v7508 = vpack.c.b16 %v7001, %v6998
      %v7509 = vpack.c.b16 %v7002, %v6999
      %v7510 = vpack.c.b16 %v7006, %v7003
      %v7511 = vpack.c.b16 %v7007, %v7004
      %v7512 = vpack.c.b16 %v7008, %v7005
      %v7513 = vpack.c.b16 %v7012, %v7009
      %v7514 = vpack.c.b16 %v7013, %v7010
      %v7515 = vpack.c.b16 %v7014, %v7011
      %v7516 = vpack.c.b16 %v7018, %v7015
      %v7517 = vpack.c.b16 %v7019, %v7016
      %v7518 = vpack.c.b16 %v7020, %v7017
      %v7519 = vpack.c.b16 %v7024, %v7021
      %v7520 = vpack.c.b16 %v7025, %v7022
      %v7521 = vpack.c.b16 %v7026, %v7023
      %v7522 = vpack.c.b16 %v7030, %v7027
      %v7523 = vpack.c.b16 %v7031, %v7028
      %v7524 = vpack.c.b16 %v7032, %v7029
      %v7525 = vpack.c.b16 %v7036, %v7033
      %v7526 = vpack.c.b16 %v7037, %v7034
      %v7527 = vpack.c.b16 %v7038, %v7035
      %v7528 = vpack.c.b16 %v7042, %v7039
      %v7529 = vpack.c.b16 %v7043, %v7040
      %v7530 = vpack.c.b16 %v7044, %v7041
      %v7531 = vpack.c.b16 %v7048, %v7045
      %v7532 = vpack.c.b16 %v7049, %v7046
      %v7533 = vpack.c.b16 %v7050, %v7047
      %v7534 = vpack.c.b16 %v7054, %v7051
      %v7535 = vpack.c.b16 %v7055, %v7052
      %v7536 = vpack.c.b16 %v7056, %v7053
      %v7537 = vpack.c.b16 %v7060, %v7057
      %v7538 = vpack.c.b16 %v7061, %v7058
      %v7539 = vpack.c.b16 %v7062, %v7059
      %v7540 = vpack.c.b16 %v7066, %v7063
      %v7541 = vpack.c.b16 %v7067, %v7064
      %v7542 = vpack.c.b16 %v7068, %v7065
      %v7543 = vpack.c.b16 %v7072, %v7069
      %v7544 = vpack.c.b16 %v7073, %v7070
      %v7545 = vpack.c.b16 %v7074, %v7071
      %v7546 = vpack.c.b16 %v7078, %v7075
      %v7547 = vpack.c.b16 %v7079, %v7076
      %v7548 = vpack.c.b16 %v7080, %v7077
      %v7549 = vpack.c.b16 %v7084, %v7081
      %v7550 = vpack.c.b16 %v7085, %v7082
      %v7551 = vpack.c.b16 %v7086, %v7083
      %v7552 = vpack.c.b16 %v7090, %v7087
      %v7553 = vpack.c.b16 %v7091, %v7088
      %v7554 = vpack.c.b16 %v7092, %v7089
      %v7555 = vpack.c.b16 %v7096, %v7093
      %v7556 = vpack.c.b16 %v7097, %v7094
      %v7557 = vpack.c.b16 %v7098, %v7095
      %v7558 = vpack.c.b16 %v7102, %v7099
      %v7559 = vpack.c.b16 %v7103, %v7100
      %v7560 = vpack.c.b16 %v7104, %v7101
      %v7561 = vpack.c.b16 %v7108, %v7105
      %v7562 = vpack.c.b16 %v7109, %v7106
      %v7563 = vpack.c.b16 %v7110, %v7107
      %v7564 = vpack.c.b16 %v7114, %v7111
      %v7565 = vpack.c.b16 %v7115, %v7112
      %v7566 = vpack.c.b16 %v7116, %v7113
      %v7567 = vpack.c.b16 %v7120, %v7117
      %v7568 = vpack.c.b16 %v7121, %v7118
      %v7569 = vpack.c.b16 %v7122, %v7119
      %v7570 = vpack.c.b16 %v7126, %v7123
      %v7571 = vpack.c.b16 %v7127, %v7124
      %v7572 = vpack.c.b16 %v7128, %v7125
      %v7573 = vpack.c.b16 %v7132, %v7129
      %v7574 = vpack.c.b16 %v7133, %v7130
      %v7575 = vpack.c.b16 %v7134, %v7131
      %v7576 = vpack.c.b16 %v7138, %v7135
      %v7577 = vpack.c.b16 %v7139, %v7136
      %v7578 = vpack.c.b16 %v7140, %v7137
      %v7579 = vpack.c.b16 %v7144, %v7141
      %v7580 = vpack.c.b16 %v7145, %v7142
      %v7581 = vpack.c.b16 %v7146, %v7143
      %v7582 = vpack.c.b16 %v7150, %v7147
      %v7583 = vpack.c.b16 %v7151, %v7148
      %v7584 = vpack.c.b16 %v7152, %v7149
      %v7585 = vpack.c.b16 %v7156, %v7153
      %v7586 = vpack.c.b16 %v7157, %v7154
      %v7587 = vpack.c.b16 %v7158, %v7155
      %v7588 = vpack.c.b16 %v7162, %v7159
      %v7589 = vpack.c.b16 %v7163, %v7160
      %v7590 = vpack.c.b16 %v7164, %v7161
      %v7591 = vpack.c.b16 %v7168, %v7165
      %v7592 = vpack.c.b16 %v7169, %v7166
      %v7593 = vpack.c.b16 %v7170, %v7167
      %v7594 = vpack.c.b16 %v7174, %v7171
      %v7595 = vpack.c.b16 %v7175, %v7172
      %v7596 = vpack.c.b16 %v7176, %v7173
      %v7597 = vpack.c.b16 %v7180, %v7177
      %v7598 = vpack.c.b16 %v7181, %v7178
      %v7599 = vpack.c.b16 %v7182, %v7179
      %v7600 = vpack.c.b16 %v7186, %v7183
      %v7601 = vpack.c.b16 %v7187, %v7184
      %v7602 = vpack.c.b16 %v7188, %v7185
      %v7603 = vpack.c.b16 %v7192, %v7189
      %v7604 = vpack.c.b16 %v7193, %v7190
      %v7605 = vpack.c.b16 %v7194, %v7191
      %v7606 = vpack.c.b16 %v7198, %v7195
      %v7607 = vpack.c.b16 %v7199, %v7196
      %v7608 = vpack.c.b16 %v7200, %v7197
      %v7609 = vpack.c.b16 %v7204, %v7201
      %v7610 = vpack.c.b16 %v7205, %v7202
      %v7611 = vpack.c.b16 %v7206, %v7203
      %v7612 = vpack.c.b16 %v7210, %v7207
      %v7613 = vpack.c.b16 %v7211, %v7208
      %v7614 = vpack.c.b16 %v7212, %v7209
      %v7615 = vpack.c.b16 %v7216, %v7213
      %v7616 = vpack.c.b16 %v7217, %v7214
      %v7617 = vpack.c.b16 %v7218, %v7215
      %v7618 = vpack.c.b16 %v7222, %v7219
      %v7619 = vpack.c.b16 %v7223, %v7220
      %v7620 = vpack.c.b16 %v7224, %v7221
      %v7621 = vpack.c.b16 %v7228, %v7225
      %v7622 = vpack.c.b16 %v7229, %v7226
      %v7623 = vpack.c.b16 %v7230, %v7227
      %v7624 = vpack.c.b16 %v7234, %v7231
      %v7625 = vpack.c.b16 %v7235, %v7232
      %v7626 = vpack.c.b16 %v7236, %v7233
      %v7627 = vpack.c.b16 %v7240, %v7237
      %v7628 = vpack.c.b16 %v7241, %v7238
      %v7629 = vpack.c.b16 %v7242, %v7239
      %v7630 = vpack.c.b16 %v7246, %v7243
      %v7631 = vpack.c.b16 %v7247, %v7244
      %v7632 = vpack.c.b16 %v7248, %v7245
      %v7633 = vpack.c.b16 %v7252, %v7249
      %v7634 = vpack.c.b16 %v7253, %v7250
      %v7635 = vpack.c.b16 %v7254, %v7251
      %v7636 = vpack.c.b16 %v7258, %v7255
      %v7637 = vpack.c.b16 %v7259, %v7256
      %v7638 = vpack.c.b16 %v7260, %v7257
      %v7639 = vpack.c.b16 %v7264, %v7261
      %v7640 = vpack.c.b16 %v7265, %v7262
      %v7641 = vpack.c.b16 %v7266, %v7263
      %v7642 = vpack.c.b16 %v7270, %v7267
      %v7643 = vpack.c.b16 %v7271, %v7268
      %v7644 = vpack.c.b16 %v7272, %v7269
      %v7645 = vpack.c.b16 %v7276, %v7273
      %v7646 = vpack.c.b16 %v7277, %v7274
      %v7647 = vpack.c.b16 %v7278, %v7275
      %v7648 = vpack.c.b16 %v7282, %v7279
      %v7649 = vpack.c.b16 %v7283, %v7280
      %v7650 = vpack.c.b16 %v7284, %v7281
      %v7651 = vpack.c.b16 %v7288, %v7285
      %v7652 = vpack.c.b16 %v7289, %v7286
      %v7653 = vpack.c.b16 %v7290, %v7287
      %v7654 = vpack.c.b16 %v7294, %v7291
      %v7655 = vpack.c.b16 %v7295, %v7292
      %v7656 = vpack.c.b16 %v7296, %v7293
      %v7657 = vpack.c.b16 %v7300, %v7297
      %v7658 = vpack.c.b16 %v7301, %v7298
      %v7659 = vpack.c.b16 %v7302, %v7299
      %v7660 = vpack.c.b16 %v7306, %v7303
      %v7661 = vpack.c.b16 %v7307, %v7304
      %v7662 = vpack.c.b16 %v7308, %v7305
      %v7663 = vpack.c.b16 %v7312, %v7309
      %v7664 = vpack.c.b16 %v7313, %v7310
      %v7665 = vpack.c.b16 %v7314, %v7311
      %v7666 = vpack.c.b16 %v7318, %v7315
      %v7667 = vpack.c.b16 %v7319, %v7316
      %v7668 = vpack.c.b16 %v7320, %v7317
      %v7669 = vpack.c.b16 %v7324, %v7321
      %v7670 = vpack.c.b16 %v7325, %v7322
      %v7671 = vpack.c.b16 %v7326, %v7323
      %v7672 = vpack.c.b16 %v7330, %v7327
      %v7673 = vpack.c.b16 %v7331, %v7328
      %v7674 = vpack.c.b16 %v7332, %v7329
      %v7675 = vpack.c.b16 %v7336, %v7333
      %v7676 = vpack.c.b16 %v7337, %v7334
      %v7677 = vpack.c.b16 %v7338, %v7335
      %v7678 = vpack.c.b16 %v7342, %v7339
      %v7679 = vpack.c.b16 %v7343, %v7340
      %v7680 = vpack.c.b16 %v7344, %v7341
      %v7681 = vpack.c.b16 %v7348, %v7345
      %v7682 = vpack.c.b16 %v7349, %v7346
      %v7683 = vpack.c.b16 %v7350, %v7347
      %v7684 = vpack.c.b16 %v7354, %v7351
      %v7685 = vpack.c.b16 %v7355, %v7352
      %v7686 = vpack.c.b16 %v7356, %v7353
      %v7687 = vpack.c.b16 %v7360, %v7357
      %v7688 = vpack.c.b16 %v7361, %v7358
      %v7689 = vpack.c.b16 %v7362, %v7359
      %v7690 = vpack.c.b16 %v7366, %v7363
      %v7691 = vpack.c.b16 %v7367, %v7364
      %v7692 = vpack.c.b16 %v7368, %v7365
      %v7693 = vpack.c.b16 %v7372, %v7369
      %v7694 = vpack.c.b16 %v7373, %v7370
      %v7695 = vpack.c.b16 %v7374, %v7371
      %v7696 = vpack.c.b16 %v7378, %v7375
      %v7697 = vpack.c.b16 %v7379, %v7376
      %v7698 = vpack.c.b16 %v7380, %v7377
      %v7699 = vpack.c.b16 %v7384, %v7381
      %v7700 = vpack.c.b16 %v7385, %v7382
      %v7701 = vpack.c.b16 %v7386, %v7383
      %v7702 = vpack.c.b16 %v7390, %v7387
      %v7703 = vpack.c.b16 %v7391, %v7388
      %v7704 = vpack.c.b16 %v7392, %v7389
      %v7705 = vpack.c.b16 %v7396, %v7393
      %v7706 = vpack.c.b16 %v7397, %v7394
      %v7707 = vpack.c.b16 %v7398, %v7395
      %v7708 = vpack.c.b16 %v7402, %v7399
      %v7709 = vpack.c.b16 %v7403, %v7400
      %v7710 = vpack.c.b16 %v7404, %v7401
      %v7711 = vpack.c.b16 %v7408, %v7405
      %v7712 = vpack.c.b16 %v7409, %v7406
      %v7713 = vpack.c.b16 %v7410, %v7407
      %v7714 = vpack.c.b16 %v7414, %v7411
      %v7715 = vpack.c.b16 %v7415, %v7412
      %v7716 = vpack.c.b16 %v7416, %v7413
      %v7717 = vpack.c.b16 %v7420, %v7417
      %v7718 = vpack.c.b16 %v7421, %v7418
      %v7719 = vpack.c.b16 %v7422, %v7419
      %v7720 = vpack.c.b16 %v7426, %v7423
      %v7721 = vpack.c.b16 %v7427, %v7424
      %v7722 = vpack.c.b16 %v7428, %v7425
      %v7723 = vpack.c.b16 %v7432, %v7429
      %v7724 = vpack.c.b16 %v7433, %v7430
      %v7725 = vpack.c.b16 %v7434, %v7431
      %v7726 = vpack.c.b16 %v7438, %v7435
      %v7727 = vpack.c.b16 %v7439, %v7436
      %v7728 = vpack.c.b16 %v7440, %v7437
      %8017 = vmatpush.bf16.msra.mxu0 %v7462
      %8018 = vmatpush.bf16.msra.mxu0 %v7459
      %8019 = vmatpush.bf16.msra.mxu0 %v7456
      %8020 = vmatpush.bf16.msra.mxu0 %v7453
      %8021 = vmatpush.bf16.msra.mxu0 %v7450
      %8022 = vmatpush.bf16.msra.mxu0 %v7447
      %8023 = vmatpush.bf16.msra.mxu0 %v7444
      %8024 = vmatpush.bf16.msra.mxu0 %v7441
      %8025 = vmatmul.bf16.gmra.mxu0 %v5897
      %v8026 = vpop.f32.mrf.mxu0
      %v8027 = vadd.f32 %v6475, %v8026
      %v8028 = vpop.f32.mrf.mxu0
      %v8029 = vadd.f32 %v6475, %v8028
      %8030 = vmatmul.bf16.gmra.mxu0 %v5909
      %v8031 = vpop.f32.mrf.mxu0
      %v8032 = vadd.f32 %v6475, %v8031
      %v8033 = vpop.f32.mrf.mxu0
      %v8034 = vadd.f32 %v6475, %v8033
      %8035 = vmatmul.bf16.gmra.mxu0 %v5921
      %v8036 = vpop.f32.mrf.mxu0
      %v8037 = vadd.f32 %v6475, %v8036
      %v8038 = vpop.f32.mrf.mxu0
      %v8039 = vadd.f32 %v6475, %v8038
      %8040 = vmatmul.bf16.gmra.mxu0 %v5933
      %v8041 = vpop.f32.mrf.mxu0
      %v8042 = vadd.f32 %v6475, %v8041
      %v8043 = vpop.f32.mrf.mxu0
      %v8044 = vadd.f32 %v6475, %v8043
      %8045 = vmatmul.bf16.gmra.mxu0 %v5945
      %v8046 = vpop.f32.mrf.mxu0
      %v8047 = vadd.f32 %v6475, %v8046
      %v8048 = vpop.f32.mrf.mxu0
      %v8049 = vadd.f32 %v6475, %v8048
      %8050 = vmatmul.bf16.gmra.mxu0 %v5957
      %v8051 = vpop.f32.mrf.mxu0
      %v8052 = vadd.f32 %v6475, %v8051
      %v8053 = vpop.f32.mrf.mxu0
      %v8054 = vadd.f32 %v6475, %v8053
      %8055 = vmatmul.bf16.gmra.mxu0 %v5969
      %v8056 = vpop.f32.mrf.mxu0
      %v8057 = vadd.f32 %v6475, %v8056
      %v8058 = vpop.f32.mrf.mxu0
      %v8059 = vadd.f32 %v6475, %v8058
      %8060 = vmatmul.bf16.gmra.mxu0 %v5981
      %v8061 = vpop.f32.mrf.mxu0
      %v8062 = vadd.f32 %v6475, %v8061
      %v8063 = vpop.f32.mrf.mxu0
      %v8064 = vadd.f32 %v6475, %v8063
      %8065 = vmatmul.bf16.gmra.mxu0 %v5993
      %v8066 = vpop.f32.mrf.mxu0
      %v8067 = vadd.f32 %v6475, %v8066
      %v8068 = vpop.f32.mrf.mxu0
      %v8069 = vadd.f32 %v6475, %v8068
      %8070 = vmatmul.bf16.gmra.mxu0 %v6005
      %v8071 = vpop.f32.mrf.mxu0
      %v8072 = vadd.f32 %v6475, %v8071
      %v8073 = vpop.f32.mrf.mxu0
      %v8074 = vadd.f32 %v6475, %v8073
      %8075 = vmatmul.bf16.gmra.mxu0 %v6017
      %v8076 = vpop.f32.mrf.mxu0
      %v8077 = vadd.f32 %v6475, %v8076
      %v8078 = vpop.f32.mrf.mxu0
      %v8079 = vadd.f32 %v6475, %v8078
      %8080 = vmatmul.bf16.gmra.mxu0 %v6029
      %v8081 = vpop.f32.mrf.mxu0
      %v8082 = vadd.f32 %v6475, %v8081
      %v8083 = vpop.f32.mrf.mxu0
      %v8084 = vadd.f32 %v6475, %v8083
      %8085 = vmatmul.bf16.gmra.mxu0 %v6041
      %v8086 = vpop.f32.mrf.mxu0
      %v8087 = vadd.f32 %v6475, %v8086
      %v8088 = vpop.f32.mrf.mxu0
      %v8089 = vadd.f32 %v6475, %v8088
      %8090 = vmatmul.bf16.gmra.mxu0 %v6053
      %v8091 = vpop.f32.mrf.mxu0
      %v8092 = vadd.f32 %v6475, %v8091
      %v8093 = vpop.f32.mrf.mxu0
      %v8094 = vadd.f32 %v6475, %v8093
      %8095 = vmatmul.bf16.gmra.mxu0 %v6065
      %v8096 = vpop.f32.mrf.mxu0
      %v8097 = vadd.f32 %v6475, %v8096
      %v8098 = vpop.f32.mrf.mxu0
      %v8099 = vadd.f32 %v6475, %v8098
      %8100 = vmatmul.bf16.gmra.mxu0 %v6077
      %v8101 = vpop.f32.mrf.mxu0
      %v8102 = vadd.f32 %v6475, %v8101
      %v8103 = vpop.f32.mrf.mxu0
      %v8104 = vadd.f32 %v6475, %v8103
      %8105 = vdwg.mxu0
      %8106 = vmatpush.bf16.msra.mxu0 %v7486
      %8107 = vmatpush.bf16.msra.mxu0 %v7483
      %8108 = vmatpush.bf16.msra.mxu0 %v7480
      %8109 = vmatpush.bf16.msra.mxu0 %v7477
      %8110 = vmatpush.bf16.msra.mxu0 %v7474
      %8111 = vmatpush.bf16.msra.mxu0 %v7471
      %8112 = vmatpush.bf16.msra.mxu0 %v7468
      %8113 = vmatpush.bf16.msra.mxu0 %v7465
      %8114 = vmatmul.bf16.gmra.mxu0 %v5898
      %v8115 = vpop.f32.mrf.mxu0
      %v8116 = vadd.f32 %v8027, %v8115
      %v8117 = vpop.f32.mrf.mxu0
      %v8118 = vadd.f32 %v8029, %v8117
      %8119 = vmatmul.bf16.gmra.mxu0 %v5910
      %v8120 = vpop.f32.mrf.mxu0
      %v8121 = vadd.f32 %v8032, %v8120
      %v8122 = vpop.f32.mrf.mxu0
      %v8123 = vadd.f32 %v8034, %v8122
      %8124 = vmatmul.bf16.gmra.mxu0 %v5922
      %v8125 = vpop.f32.mrf.mxu0
      %v8126 = vadd.f32 %v8037, %v8125
      %v8127 = vpop.f32.mrf.mxu0
      %v8128 = vadd.f32 %v8039, %v8127
      %8129 = vmatmul.bf16.gmra.mxu0 %v5934
      %v8130 = vpop.f32.mrf.mxu0
      %v8131 = vadd.f32 %v8042, %v8130
      %v8132 = vpop.f32.mrf.mxu0
      %v8133 = vadd.f32 %v8044, %v8132
      %8134 = vmatmul.bf16.gmra.mxu0 %v5946
      %v8135 = vpop.f32.mrf.mxu0
      %v8136 = vadd.f32 %v8047, %v8135
      %v8137 = vpop.f32.mrf.mxu0
      %v8138 = vadd.f32 %v8049, %v8137
      %8139 = vmatmul.bf16.gmra.mxu0 %v5958
      %v8140 = vpop.f32.mrf.mxu0
      %v8141 = vadd.f32 %v8052, %v8140
      %v8142 = vpop.f32.mrf.mxu0
      %v8143 = vadd.f32 %v8054, %v8142
      %8144 = vmatmul.bf16.gmra.mxu0 %v5970
      %v8145 = vpop.f32.mrf.mxu0
      %v8146 = vadd.f32 %v8057, %v8145
      %v8147 = vpop.f32.mrf.mxu0
      %v8148 = vadd.f32 %v8059, %v8147
      %8149 = vmatmul.bf16.gmra.mxu0 %v5982
      %v8150 = vpop.f32.mrf.mxu0
      %v8151 = vadd.f32 %v8062, %v8150
      %v8152 = vpop.f32.mrf.mxu0
      %v8153 = vadd.f32 %v8064, %v8152
      %8154 = vmatmul.bf16.gmra.mxu0 %v5994
      %v8155 = vpop.f32.mrf.mxu0
      %v8156 = vadd.f32 %v8067, %v8155
      %v8157 = vpop.f32.mrf.mxu0
      %v8158 = vadd.f32 %v8069, %v8157
      %8159 = vmatmul.bf16.gmra.mxu0 %v6006
      %v8160 = vpop.f32.mrf.mxu0
      %v8161 = vadd.f32 %v8072, %v8160
      %v8162 = vpop.f32.mrf.mxu0
      %v8163 = vadd.f32 %v8074, %v8162
      %8164 = vmatmul.bf16.gmra.mxu0 %v6018
      %v8165 = vpop.f32.mrf.mxu0
      %v8166 = vadd.f32 %v8077, %v8165
      %v8167 = vpop.f32.mrf.mxu0
      %v8168 = vadd.f32 %v8079, %v8167
      %8169 = vmatmul.bf16.gmra.mxu0 %v6030
      %v8170 = vpop.f32.mrf.mxu0
      %v8171 = vadd.f32 %v8082, %v8170
      %v8172 = vpop.f32.mrf.mxu0
      %v8173 = vadd.f32 %v8084, %v8172
      %8174 = vmatmul.bf16.gmra.mxu0 %v6042
      %v8175 = vpop.f32.mrf.mxu0
      %v8176 = vadd.f32 %v8087, %v8175
      %v8177 = vpop.f32.mrf.mxu0
      %v8178 = vadd.f32 %v8089, %v8177
      %8179 = vmatmul.bf16.gmra.mxu0 %v6054
      %v8180 = vpop.f32.mrf.mxu0
      %v8181 = vadd.f32 %v8092, %v8180
      %v8182 = vpop.f32.mrf.mxu0
      %v8183 = vadd.f32 %v8094, %v8182
      %8184 = vmatmul.bf16.gmra.mxu0 %v6066
      %v8185 = vpop.f32.mrf.mxu0
      %v8186 = vadd.f32 %v8097, %v8185
      %v8187 = vpop.f32.mrf.mxu0
      %v8188 = vadd.f32 %v8099, %v8187
      %8189 = vmatmul.bf16.gmra.mxu0 %v6078
      %v8190 = vpop.f32.mrf.mxu0
      %v8191 = vadd.f32 %v8102, %v8190
      %v8192 = vpop.f32.mrf.mxu0
      %v8193 = vadd.f32 %v8104, %v8192
      %8194 = vdwg.mxu0
      %8195 = vmatpush.bf16.msra.mxu0 %v7510
      %8196 = vmatpush.bf16.msra.mxu0 %v7507
      %8197 = vmatpush.bf16.msra.mxu0 %v7504
      %8198 = vmatpush.bf16.msra.mxu0 %v7501
      %8199 = vmatpush.bf16.msra.mxu0 %v7498
      %8200 = vmatpush.bf16.msra.mxu0 %v7495
      %8201 = vmatpush.bf16.msra.mxu0 %v7492
      %8202 = vmatpush.bf16.msra.mxu0 %v7489
      %8203 = vmatmul.bf16.gmra.mxu0 %v5899
      %v8204 = vpop.f32.mrf.mxu0
      %v8205 = vadd.f32 %v8116, %v8204
      %v8206 = vpop.f32.mrf.mxu0
      %v8207 = vadd.f32 %v8118, %v8206
      %8208 = vmatmul.bf16.gmra.mxu0 %v5911
      %v8209 = vpop.f32.mrf.mxu0
      %v8210 = vadd.f32 %v8121, %v8209
      %v8211 = vpop.f32.mrf.mxu0
      %v8212 = vadd.f32 %v8123, %v8211
      %8213 = vmatmul.bf16.gmra.mxu0 %v5923
      %v8214 = vpop.f32.mrf.mxu0
      %v8215 = vadd.f32 %v8126, %v8214
      %v8216 = vpop.f32.mrf.mxu0
      %v8217 = vadd.f32 %v8128, %v8216
      %8218 = vmatmul.bf16.gmra.mxu0 %v5935
      %v8219 = vpop.f32.mrf.mxu0
      %v8220 = vadd.f32 %v8131, %v8219
      %v8221 = vpop.f32.mrf.mxu0
      %v8222 = vadd.f32 %v8133, %v8221
      %8223 = vmatmul.bf16.gmra.mxu0 %v5947
      %v8224 = vpop.f32.mrf.mxu0
      %v8225 = vadd.f32 %v8136, %v8224
      %v8226 = vpop.f32.mrf.mxu0
      %v8227 = vadd.f32 %v8138, %v8226
      %8228 = vmatmul.bf16.gmra.mxu0 %v5959
      %v8229 = vpop.f32.mrf.mxu0
      %v8230 = vadd.f32 %v8141, %v8229
      %v8231 = vpop.f32.mrf.mxu0
      %v8232 = vadd.f32 %v8143, %v8231
      %8233 = vmatmul.bf16.gmra.mxu0 %v5971
      %v8234 = vpop.f32.mrf.mxu0
      %v8235 = vadd.f32 %v8146, %v8234
      %v8236 = vpop.f32.mrf.mxu0
      %v8237 = vadd.f32 %v8148, %v8236
      %8238 = vmatmul.bf16.gmra.mxu0 %v5983
      %v8239 = vpop.f32.mrf.mxu0
      %v8240 = vadd.f32 %v8151, %v8239
      %v8241 = vpop.f32.mrf.mxu0
      %v8242 = vadd.f32 %v8153, %v8241
      %8243 = vmatmul.bf16.gmra.mxu0 %v5995
      %v8244 = vpop.f32.mrf.mxu0
      %v8245 = vadd.f32 %v8156, %v8244
      %v8246 = vpop.f32.mrf.mxu0
      %v8247 = vadd.f32 %v8158, %v8246
      %8248 = vmatmul.bf16.gmra.mxu0 %v6007
      %v8249 = vpop.f32.mrf.mxu0
      %v8250 = vadd.f32 %v8161, %v8249
      %v8251 = vpop.f32.mrf.mxu0
      %v8252 = vadd.f32 %v8163, %v8251
      %8253 = vmatmul.bf16.gmra.mxu0 %v6019
      %v8254 = vpop.f32.mrf.mxu0
      %v8255 = vadd.f32 %v8166, %v8254
      %v8256 = vpop.f32.mrf.mxu0
      %v8257 = vadd.f32 %v8168, %v8256
      %8258 = vmatmul.bf16.gmra.mxu0 %v6031
      %v8259 = vpop.f32.mrf.mxu0
      %v8260 = vadd.f32 %v8171, %v8259
      %v8261 = vpop.f32.mrf.mxu0
      %v8262 = vadd.f32 %v8173, %v8261
      %8263 = vmatmul.bf16.gmra.mxu0 %v6043
      %v8264 = vpop.f32.mrf.mxu0
      %v8265 = vadd.f32 %v8176, %v8264
      %v8266 = vpop.f32.mrf.mxu0
      %v8267 = vadd.f32 %v8178, %v8266
      %8268 = vmatmul.bf16.gmra.mxu0 %v6055
      %v8269 = vpop.f32.mrf.mxu0
      %v8270 = vadd.f32 %v8181, %v8269
      %v8271 = vpop.f32.mrf.mxu0
      %v8272 = vadd.f32 %v8183, %v8271
      %8273 = vmatmul.bf16.gmra.mxu0 %v6067
      %v8274 = vpop.f32.mrf.mxu0
      %v8275 = vadd.f32 %v8186, %v8274
      %v8276 = vpop.f32.mrf.mxu0
      %v8277 = vadd.f32 %v8188, %v8276
      %8278 = vmatmul.bf16.gmra.mxu0 %v6079
      %v8279 = vpop.f32.mrf.mxu0
      %v8280 = vadd.f32 %v8191, %v8279
      %v8281 = vpop.f32.mrf.mxu0
      %v8282 = vadd.f32 %v8193, %v8281
      %8283 = vdwg.mxu0
      %8284 = vmatpush.bf16.msra.mxu0 %v7534
      %8285 = vmatpush.bf16.msra.mxu0 %v7531
      %8286 = vmatpush.bf16.msra.mxu0 %v7528
      %8287 = vmatpush.bf16.msra.mxu0 %v7525
      %8288 = vmatpush.bf16.msra.mxu0 %v7522
      %8289 = vmatpush.bf16.msra.mxu0 %v7519
      %8290 = vmatpush.bf16.msra.mxu0 %v7516
      %8291 = vmatpush.bf16.msra.mxu0 %v7513
      %8292 = vmatmul.bf16.gmra.mxu0 %v5900
      %v8293 = vpop.f32.mrf.mxu0
      %v8294 = vadd.f32 %v8205, %v8293
      %v8295 = vpop.f32.mrf.mxu0
      %v8296 = vadd.f32 %v8207, %v8295
      %8297 = vmatmul.bf16.gmra.mxu0 %v5912
      %v8298 = vpop.f32.mrf.mxu0
      %v8299 = vadd.f32 %v8210, %v8298
      %v8300 = vpop.f32.mrf.mxu0
      %v8301 = vadd.f32 %v8212, %v8300
      %8302 = vmatmul.bf16.gmra.mxu0 %v5924
      %v8303 = vpop.f32.mrf.mxu0
      %v8304 = vadd.f32 %v8215, %v8303
      %v8305 = vpop.f32.mrf.mxu0
      %v8306 = vadd.f32 %v8217, %v8305
      %8307 = vmatmul.bf16.gmra.mxu0 %v5936
      %v8308 = vpop.f32.mrf.mxu0
      %v8309 = vadd.f32 %v8220, %v8308
      %v8310 = vpop.f32.mrf.mxu0
      %v8311 = vadd.f32 %v8222, %v8310
      %8312 = vmatmul.bf16.gmra.mxu0 %v5948
      %v8313 = vpop.f32.mrf.mxu0
      %v8314 = vadd.f32 %v8225, %v8313
      %v8315 = vpop.f32.mrf.mxu0
      %v8316 = vadd.f32 %v8227, %v8315
      %8317 = vmatmul.bf16.gmra.mxu0 %v5960
      %v8318 = vpop.f32.mrf.mxu0
      %v8319 = vadd.f32 %v8230, %v8318
      %v8320 = vpop.f32.mrf.mxu0
      %v8321 = vadd.f32 %v8232, %v8320
      %8322 = vmatmul.bf16.gmra.mxu0 %v5972
      %v8323 = vpop.f32.mrf.mxu0
      %v8324 = vadd.f32 %v8235, %v8323
      %v8325 = vpop.f32.mrf.mxu0
      %v8326 = vadd.f32 %v8237, %v8325
      %8327 = vmatmul.bf16.gmra.mxu0 %v5984
      %v8328 = vpop.f32.mrf.mxu0
      %v8329 = vadd.f32 %v8240, %v8328
      %v8330 = vpop.f32.mrf.mxu0
      %v8331 = vadd.f32 %v8242, %v8330
      %8332 = vmatmul.bf16.gmra.mxu0 %v5996
      %v8333 = vpop.f32.mrf.mxu0
      %v8334 = vadd.f32 %v8245, %v8333
      %v8335 = vpop.f32.mrf.mxu0
      %v8336 = vadd.f32 %v8247, %v8335
      %8337 = vmatmul.bf16.gmra.mxu0 %v6008
      %v8338 = vpop.f32.mrf.mxu0
      %v8339 = vadd.f32 %v8250, %v8338
      %v8340 = vpop.f32.mrf.mxu0
      %v8341 = vadd.f32 %v8252, %v8340
      %8342 = vmatmul.bf16.gmra.mxu0 %v6020
      %v8343 = vpop.f32.mrf.mxu0
      %v8344 = vadd.f32 %v8255, %v8343
      %v8345 = vpop.f32.mrf.mxu0
      %v8346 = vadd.f32 %v8257, %v8345
      %8347 = vmatmul.bf16.gmra.mxu0 %v6032
      %v8348 = vpop.f32.mrf.mxu0
      %v8349 = vadd.f32 %v8260, %v8348
      %v8350 = vpop.f32.mrf.mxu0
      %v8351 = vadd.f32 %v8262, %v8350
      %8352 = vmatmul.bf16.gmra.mxu0 %v6044
      %v8353 = vpop.f32.mrf.mxu0
      %v8354 = vadd.f32 %v8265, %v8353
      %v8355 = vpop.f32.mrf.mxu0
      %v8356 = vadd.f32 %v8267, %v8355
      %8357 = vmatmul.bf16.gmra.mxu0 %v6056
      %v8358 = vpop.f32.mrf.mxu0
      %v8359 = vadd.f32 %v8270, %v8358
      %v8360 = vpop.f32.mrf.mxu0
      %v8361 = vadd.f32 %v8272, %v8360
      %8362 = vmatmul.bf16.gmra.mxu0 %v6068
      %v8363 = vpop.f32.mrf.mxu0
      %v8364 = vadd.f32 %v8275, %v8363
      %v8365 = vpop.f32.mrf.mxu0
      %v8366 = vadd.f32 %v8277, %v8365
      %8367 = vmatmul.bf16.gmra.mxu0 %v6080
      %v8368 = vpop.f32.mrf.mxu0
      %v8369 = vadd.f32 %v8280, %v8368
      %v8370 = vpop.f32.mrf.mxu0
      %v8371 = vadd.f32 %v8282, %v8370
      %8372 = vdwg.mxu0
      %8373 = vmatpush.bf16.msra.mxu0 %v7558
      %8374 = vmatpush.bf16.msra.mxu0 %v7555
      %8375 = vmatpush.bf16.msra.mxu0 %v7552
      %8376 = vmatpush.bf16.msra.mxu0 %v7549
      %8377 = vmatpush.bf16.msra.mxu0 %v7546
      %8378 = vmatpush.bf16.msra.mxu0 %v7543
      %8379 = vmatpush.bf16.msra.mxu0 %v7540
      %8380 = vmatpush.bf16.msra.mxu0 %v7537
      %8381 = vmatmul.bf16.gmra.mxu0 %v5901
      %v8382 = vpop.f32.mrf.mxu0
      %v8383 = vadd.f32 %v8294, %v8382
      %v8384 = vpop.f32.mrf.mxu0
      %v8385 = vadd.f32 %v8296, %v8384
      %8386 = vmatmul.bf16.gmra.mxu0 %v5913
      %v8387 = vpop.f32.mrf.mxu0
      %v8388 = vadd.f32 %v8299, %v8387
      %v8389 = vpop.f32.mrf.mxu0
      %v8390 = vadd.f32 %v8301, %v8389
      %8391 = vmatmul.bf16.gmra.mxu0 %v5925
      %v8392 = vpop.f32.mrf.mxu0
      %v8393 = vadd.f32 %v8304, %v8392
      %v8394 = vpop.f32.mrf.mxu0
      %v8395 = vadd.f32 %v8306, %v8394
      %8396 = vmatmul.bf16.gmra.mxu0 %v5937
      %v8397 = vpop.f32.mrf.mxu0
      %v8398 = vadd.f32 %v8309, %v8397
      %v8399 = vpop.f32.mrf.mxu0
      %v8400 = vadd.f32 %v8311, %v8399
      %8401 = vmatmul.bf16.gmra.mxu0 %v5949
      %v8402 = vpop.f32.mrf.mxu0
      %v8403 = vadd.f32 %v8314, %v8402
      %v8404 = vpop.f32.mrf.mxu0
      %v8405 = vadd.f32 %v8316, %v8404
      %8406 = vmatmul.bf16.gmra.mxu0 %v5961
      %v8407 = vpop.f32.mrf.mxu0
      %v8408 = vadd.f32 %v8319, %v8407
      %v8409 = vpop.f32.mrf.mxu0
      %v8410 = vadd.f32 %v8321, %v8409
      %8411 = vmatmul.bf16.gmra.mxu0 %v5973
      %v8412 = vpop.f32.mrf.mxu0
      %v8413 = vadd.f32 %v8324, %v8412
      %v8414 = vpop.f32.mrf.mxu0
      %v8415 = vadd.f32 %v8326, %v8414
      %8416 = vmatmul.bf16.gmra.mxu0 %v5985
      %v8417 = vpop.f32.mrf.mxu0
      %v8418 = vadd.f32 %v8329, %v8417
      %v8419 = vpop.f32.mrf.mxu0
      %v8420 = vadd.f32 %v8331, %v8419
      %8421 = vmatmul.bf16.gmra.mxu0 %v5997
      %v8422 = vpop.f32.mrf.mxu0
      %v8423 = vadd.f32 %v8334, %v8422
      %v8424 = vpop.f32.mrf.mxu0
      %v8425 = vadd.f32 %v8336, %v8424
      %8426 = vmatmul.bf16.gmra.mxu0 %v6009
      %v8427 = vpop.f32.mrf.mxu0
      %v8428 = vadd.f32 %v8339, %v8427
      %v8429 = vpop.f32.mrf.mxu0
      %v8430 = vadd.f32 %v8341, %v8429
      %8431 = vmatmul.bf16.gmra.mxu0 %v6021
      %v8432 = vpop.f32.mrf.mxu0
      %v8433 = vadd.f32 %v8344, %v8432
      %v8434 = vpop.f32.mrf.mxu0
      %v8435 = vadd.f32 %v8346, %v8434
      %8436 = vmatmul.bf16.gmra.mxu0 %v6033
      %v8437 = vpop.f32.mrf.mxu0
      %v8438 = vadd.f32 %v8349, %v8437
      %v8439 = vpop.f32.mrf.mxu0
      %v8440 = vadd.f32 %v8351, %v8439
      %8441 = vmatmul.bf16.gmra.mxu0 %v6045
      %v8442 = vpop.f32.mrf.mxu0
      %v8443 = vadd.f32 %v8354, %v8442
      %v8444 = vpop.f32.mrf.mxu0
      %v8445 = vadd.f32 %v8356, %v8444
      %8446 = vmatmul.bf16.gmra.mxu0 %v6057
      %v8447 = vpop.f32.mrf.mxu0
      %v8448 = vadd.f32 %v8359, %v8447
      %v8449 = vpop.f32.mrf.mxu0
      %v8450 = vadd.f32 %v8361, %v8449
      %8451 = vmatmul.bf16.gmra.mxu0 %v6069
      %v8452 = vpop.f32.mrf.mxu0
      %v8453 = vadd.f32 %v8364, %v8452
      %v8454 = vpop.f32.mrf.mxu0
      %v8455 = vadd.f32 %v8366, %v8454
      %8456 = vmatmul.bf16.gmra.mxu0 %v6081
      %v8457 = vpop.f32.mrf.mxu0
      %v8458 = vadd.f32 %v8369, %v8457
      %v8459 = vpop.f32.mrf.mxu0
      %v8460 = vadd.f32 %v8371, %v8459
      %8461 = vdwg.mxu0
      %8462 = vmatpush.bf16.msra.mxu0 %v7582
      %8463 = vmatpush.bf16.msra.mxu0 %v7579
      %8464 = vmatpush.bf16.msra.mxu0 %v7576
      %8465 = vmatpush.bf16.msra.mxu0 %v7573
      %8466 = vmatpush.bf16.msra.mxu0 %v7570
      %8467 = vmatpush.bf16.msra.mxu0 %v7567
      %8468 = vmatpush.bf16.msra.mxu0 %v7564
      %8469 = vmatpush.bf16.msra.mxu0 %v7561
      %8470 = vmatmul.bf16.gmra.mxu0 %v5902
      %v8471 = vpop.f32.mrf.mxu0
      %v8472 = vadd.f32 %v8383, %v8471
      %v8473 = vpop.f32.mrf.mxu0
      %v8474 = vadd.f32 %v8385, %v8473
      %8475 = vmatmul.bf16.gmra.mxu0 %v5914
      %v8476 = vpop.f32.mrf.mxu0
      %v8477 = vadd.f32 %v8388, %v8476
      %v8478 = vpop.f32.mrf.mxu0
      %v8479 = vadd.f32 %v8390, %v8478
      %8480 = vmatmul.bf16.gmra.mxu0 %v5926
      %v8481 = vpop.f32.mrf.mxu0
      %v8482 = vadd.f32 %v8393, %v8481
      %v8483 = vpop.f32.mrf.mxu0
      %v8484 = vadd.f32 %v8395, %v8483
      %8485 = vmatmul.bf16.gmra.mxu0 %v5938
      %v8486 = vpop.f32.mrf.mxu0
      %v8487 = vadd.f32 %v8398, %v8486
      %v8488 = vpop.f32.mrf.mxu0
      %v8489 = vadd.f32 %v8400, %v8488
      %8490 = vmatmul.bf16.gmra.mxu0 %v5950
      %v8491 = vpop.f32.mrf.mxu0
      %v8492 = vadd.f32 %v8403, %v8491
      %v8493 = vpop.f32.mrf.mxu0
      %v8494 = vadd.f32 %v8405, %v8493
      %8495 = vmatmul.bf16.gmra.mxu0 %v5962
      %v8496 = vpop.f32.mrf.mxu0
      %v8497 = vadd.f32 %v8408, %v8496
      %v8498 = vpop.f32.mrf.mxu0
      %v8499 = vadd.f32 %v8410, %v8498
      %8500 = vmatmul.bf16.gmra.mxu0 %v5974
      %v8501 = vpop.f32.mrf.mxu0
      %v8502 = vadd.f32 %v8413, %v8501
      %v8503 = vpop.f32.mrf.mxu0
      %v8504 = vadd.f32 %v8415, %v8503
      %8505 = vmatmul.bf16.gmra.mxu0 %v5986
      %v8506 = vpop.f32.mrf.mxu0
      %v8507 = vadd.f32 %v8418, %v8506
      %v8508 = vpop.f32.mrf.mxu0
      %v8509 = vadd.f32 %v8420, %v8508
      %8510 = vmatmul.bf16.gmra.mxu0 %v5998
      %v8511 = vpop.f32.mrf.mxu0
      %v8512 = vadd.f32 %v8423, %v8511
      %v8513 = vpop.f32.mrf.mxu0
      %v8514 = vadd.f32 %v8425, %v8513
      %8515 = vmatmul.bf16.gmra.mxu0 %v6010
      %v8516 = vpop.f32.mrf.mxu0
      %v8517 = vadd.f32 %v8428, %v8516
      %v8518 = vpop.f32.mrf.mxu0
      %v8519 = vadd.f32 %v8430, %v8518
      %8520 = vmatmul.bf16.gmra.mxu0 %v6022
      %v8521 = vpop.f32.mrf.mxu0
      %v8522 = vadd.f32 %v8433, %v8521
      %v8523 = vpop.f32.mrf.mxu0
      %v8524 = vadd.f32 %v8435, %v8523
      %8525 = vmatmul.bf16.gmra.mxu0 %v6034
      %v8526 = vpop.f32.mrf.mxu0
      %v8527 = vadd.f32 %v8438, %v8526
      %v8528 = vpop.f32.mrf.mxu0
      %v8529 = vadd.f32 %v8440, %v8528
      %8530 = vmatmul.bf16.gmra.mxu0 %v6046
      %v8531 = vpop.f32.mrf.mxu0
      %v8532 = vadd.f32 %v8443, %v8531
      %v8533 = vpop.f32.mrf.mxu0
      %v8534 = vadd.f32 %v8445, %v8533
      %8535 = vmatmul.bf16.gmra.mxu0 %v6058
      %v8536 = vpop.f32.mrf.mxu0
      %v8537 = vadd.f32 %v8448, %v8536
      %v8538 = vpop.f32.mrf.mxu0
      %v8539 = vadd.f32 %v8450, %v8538
      %8540 = vmatmul.bf16.gmra.mxu0 %v6070
      %v8541 = vpop.f32.mrf.mxu0
      %v8542 = vadd.f32 %v8453, %v8541
      %v8543 = vpop.f32.mrf.mxu0
      %v8544 = vadd.f32 %v8455, %v8543
      %8545 = vmatmul.bf16.gmra.mxu0 %v6082
      %v8546 = vpop.f32.mrf.mxu0
      %v8547 = vadd.f32 %v8458, %v8546
      %v8548 = vpop.f32.mrf.mxu0
      %v8549 = vadd.f32 %v8460, %v8548
      %8550 = vdwg.mxu0
      %8551 = vmatpush.bf16.msra.mxu0 %v7606
      %8552 = vmatpush.bf16.msra.mxu0 %v7603
      %8553 = vmatpush.bf16.msra.mxu0 %v7600
      %8554 = vmatpush.bf16.msra.mxu0 %v7597
      %8555 = vmatpush.bf16.msra.mxu0 %v7594
      %8556 = vmatpush.bf16.msra.mxu0 %v7591
      %8557 = vmatpush.bf16.msra.mxu0 %v7588
      %8558 = vmatpush.bf16.msra.mxu0 %v7585
      %8559 = vmatmul.bf16.gmra.mxu0 %v5903
      %v8560 = vpop.f32.mrf.mxu0
      %v8561 = vadd.f32 %v8472, %v8560
      %v8562 = vpop.f32.mrf.mxu0
      %v8563 = vadd.f32 %v8474, %v8562
      %8564 = vmatmul.bf16.gmra.mxu0 %v5915
      %v8565 = vpop.f32.mrf.mxu0
      %v8566 = vadd.f32 %v8477, %v8565
      %v8567 = vpop.f32.mrf.mxu0
      %v8568 = vadd.f32 %v8479, %v8567
      %8569 = vmatmul.bf16.gmra.mxu0 %v5927
      %v8570 = vpop.f32.mrf.mxu0
      %v8571 = vadd.f32 %v8482, %v8570
      %v8572 = vpop.f32.mrf.mxu0
      %v8573 = vadd.f32 %v8484, %v8572
      %8574 = vmatmul.bf16.gmra.mxu0 %v5939
      %v8575 = vpop.f32.mrf.mxu0
      %v8576 = vadd.f32 %v8487, %v8575
      %v8577 = vpop.f32.mrf.mxu0
      %v8578 = vadd.f32 %v8489, %v8577
      %8579 = vmatmul.bf16.gmra.mxu0 %v5951
      %v8580 = vpop.f32.mrf.mxu0
      %v8581 = vadd.f32 %v8492, %v8580
      %v8582 = vpop.f32.mrf.mxu0
      %v8583 = vadd.f32 %v8494, %v8582
      %8584 = vmatmul.bf16.gmra.mxu0 %v5963
      %v8585 = vpop.f32.mrf.mxu0
      %v8586 = vadd.f32 %v8497, %v8585
      %v8587 = vpop.f32.mrf.mxu0
      %v8588 = vadd.f32 %v8499, %v8587
      %8589 = vmatmul.bf16.gmra.mxu0 %v5975
      %v8590 = vpop.f32.mrf.mxu0
      %v8591 = vadd.f32 %v8502, %v8590
      %v8592 = vpop.f32.mrf.mxu0
      %v8593 = vadd.f32 %v8504, %v8592
      %8594 = vmatmul.bf16.gmra.mxu0 %v5987
      %v8595 = vpop.f32.mrf.mxu0
      %v8596 = vadd.f32 %v8507, %v8595
      %v8597 = vpop.f32.mrf.mxu0
      %v8598 = vadd.f32 %v8509, %v8597
      %8599 = vmatmul.bf16.gmra.mxu0 %v5999
      %v8600 = vpop.f32.mrf.mxu0
      %v8601 = vadd.f32 %v8512, %v8600
      %v8602 = vpop.f32.mrf.mxu0
      %v8603 = vadd.f32 %v8514, %v8602
      %8604 = vmatmul.bf16.gmra.mxu0 %v6011
      %v8605 = vpop.f32.mrf.mxu0
      %v8606 = vadd.f32 %v8517, %v8605
      %v8607 = vpop.f32.mrf.mxu0
      %v8608 = vadd.f32 %v8519, %v8607
      %8609 = vmatmul.bf16.gmra.mxu0 %v6023
      %v8610 = vpop.f32.mrf.mxu0
      %v8611 = vadd.f32 %v8522, %v8610
      %v8612 = vpop.f32.mrf.mxu0
      %v8613 = vadd.f32 %v8524, %v8612
      %8614 = vmatmul.bf16.gmra.mxu0 %v6035
      %v8615 = vpop.f32.mrf.mxu0
      %v8616 = vadd.f32 %v8527, %v8615
      %v8617 = vpop.f32.mrf.mxu0
      %v8618 = vadd.f32 %v8529, %v8617
      %8619 = vmatmul.bf16.gmra.mxu0 %v6047
      %v8620 = vpop.f32.mrf.mxu0
      %v8621 = vadd.f32 %v8532, %v8620
      %v8622 = vpop.f32.mrf.mxu0
      %v8623 = vadd.f32 %v8534, %v8622
      %8624 = vmatmul.bf16.gmra.mxu0 %v6059
      %v8625 = vpop.f32.mrf.mxu0
      %v8626 = vadd.f32 %v8537, %v8625
      %v8627 = vpop.f32.mrf.mxu0
      %v8628 = vadd.f32 %v8539, %v8627
      %8629 = vmatmul.bf16.gmra.mxu0 %v6071
      %v8630 = vpop.f32.mrf.mxu0
      %v8631 = vadd.f32 %v8542, %v8630
      %v8632 = vpop.f32.mrf.mxu0
      %v8633 = vadd.f32 %v8544, %v8632
      %8634 = vmatmul.bf16.gmra.mxu0 %v6083
      %v8635 = vpop.f32.mrf.mxu0
      %v8636 = vadd.f32 %v8547, %v8635
      %v8637 = vpop.f32.mrf.mxu0
      %v8638 = vadd.f32 %v8549, %v8637
      %8639 = vdwg.mxu0
      %8640 = vmatpush.bf16.msra.mxu0 %v7630
      %8641 = vmatpush.bf16.msra.mxu0 %v7627
      %8642 = vmatpush.bf16.msra.mxu0 %v7624
      %8643 = vmatpush.bf16.msra.mxu0 %v7621
      %8644 = vmatpush.bf16.msra.mxu0 %v7618
      %8645 = vmatpush.bf16.msra.mxu0 %v7615
      %8646 = vmatpush.bf16.msra.mxu0 %v7612
      %8647 = vmatpush.bf16.msra.mxu0 %v7609
      %8648 = vmatmul.bf16.gmra.mxu0 %v5904
      %v8649 = vpop.f32.mrf.mxu0
      %v8650 = vadd.f32 %v8561, %v8649
      %v8651 = vpop.f32.mrf.mxu0
      %v8652 = vadd.f32 %v8563, %v8651
      %8653 = vmatmul.bf16.gmra.mxu0 %v5916
      %v8654 = vpop.f32.mrf.mxu0
      %v8655 = vadd.f32 %v8566, %v8654
      %v8656 = vpop.f32.mrf.mxu0
      %v8657 = vadd.f32 %v8568, %v8656
      %8658 = vmatmul.bf16.gmra.mxu0 %v5928
      %v8659 = vpop.f32.mrf.mxu0
      %v8660 = vadd.f32 %v8571, %v8659
      %v8661 = vpop.f32.mrf.mxu0
      %v8662 = vadd.f32 %v8573, %v8661
      %8663 = vmatmul.bf16.gmra.mxu0 %v5940
      %v8664 = vpop.f32.mrf.mxu0
      %v8665 = vadd.f32 %v8576, %v8664
      %v8666 = vpop.f32.mrf.mxu0
      %v8667 = vadd.f32 %v8578, %v8666
      %8668 = vmatmul.bf16.gmra.mxu0 %v5952
      %v8669 = vpop.f32.mrf.mxu0
      %v8670 = vadd.f32 %v8581, %v8669
      %v8671 = vpop.f32.mrf.mxu0
      %v8672 = vadd.f32 %v8583, %v8671
      %8673 = vmatmul.bf16.gmra.mxu0 %v5964
      %v8674 = vpop.f32.mrf.mxu0
      %v8675 = vadd.f32 %v8586, %v8674
      %v8676 = vpop.f32.mrf.mxu0
      %v8677 = vadd.f32 %v8588, %v8676
      %8678 = vmatmul.bf16.gmra.mxu0 %v5976
      %v8679 = vpop.f32.mrf.mxu0
      %v8680 = vadd.f32 %v8591, %v8679
      %v8681 = vpop.f32.mrf.mxu0
      %v8682 = vadd.f32 %v8593, %v8681
      %8683 = vmatmul.bf16.gmra.mxu0 %v5988
      %v8684 = vpop.f32.mrf.mxu0
      %v8685 = vadd.f32 %v8596, %v8684
      %v8686 = vpop.f32.mrf.mxu0
      %v8687 = vadd.f32 %v8598, %v8686
      %8688 = vmatmul.bf16.gmra.mxu0 %v6000
      %v8689 = vpop.f32.mrf.mxu0
      %v8690 = vadd.f32 %v8601, %v8689
      %v8691 = vpop.f32.mrf.mxu0
      %v8692 = vadd.f32 %v8603, %v8691
      %8693 = vmatmul.bf16.gmra.mxu0 %v6012
      %v8694 = vpop.f32.mrf.mxu0
      %v8695 = vadd.f32 %v8606, %v8694
      %v8696 = vpop.f32.mrf.mxu0
      %v8697 = vadd.f32 %v8608, %v8696
      %8698 = vmatmul.bf16.gmra.mxu0 %v6024
      %v8699 = vpop.f32.mrf.mxu0
      %v8700 = vadd.f32 %v8611, %v8699
      %v8701 = vpop.f32.mrf.mxu0
      %v8702 = vadd.f32 %v8613, %v8701
      %8703 = vmatmul.bf16.gmra.mxu0 %v6036
      %v8704 = vpop.f32.mrf.mxu0
      %v8705 = vadd.f32 %v8616, %v8704
      %v8706 = vpop.f32.mrf.mxu0
      %v8707 = vadd.f32 %v8618, %v8706
      %8708 = vmatmul.bf16.gmra.mxu0 %v6048
      %v8709 = vpop.f32.mrf.mxu0
      %v8710 = vadd.f32 %v8621, %v8709
      %v8711 = vpop.f32.mrf.mxu0
      %v8712 = vadd.f32 %v8623, %v8711
      %8713 = vmatmul.bf16.gmra.mxu0 %v6060
      %v8714 = vpop.f32.mrf.mxu0
      %v8715 = vadd.f32 %v8626, %v8714
      %v8716 = vpop.f32.mrf.mxu0
      %v8717 = vadd.f32 %v8628, %v8716
      %8718 = vmatmul.bf16.gmra.mxu0 %v6072
      %v8719 = vpop.f32.mrf.mxu0
      %v8720 = vadd.f32 %v8631, %v8719
      %v8721 = vpop.f32.mrf.mxu0
      %v8722 = vadd.f32 %v8633, %v8721
      %8723 = vmatmul.bf16.gmra.mxu0 %v6084
      %v8724 = vpop.f32.mrf.mxu0
      %v8725 = vadd.f32 %v8636, %v8724
      %v8726 = vpop.f32.mrf.mxu0
      %v8727 = vadd.f32 %v8638, %v8726
      %8728 = vdwg.mxu0
      %8729 = vmatpush.bf16.msra.mxu0 %v7654
      %8730 = vmatpush.bf16.msra.mxu0 %v7651
      %8731 = vmatpush.bf16.msra.mxu0 %v7648
      %8732 = vmatpush.bf16.msra.mxu0 %v7645
      %8733 = vmatpush.bf16.msra.mxu0 %v7642
      %8734 = vmatpush.bf16.msra.mxu0 %v7639
      %8735 = vmatpush.bf16.msra.mxu0 %v7636
      %8736 = vmatpush.bf16.msra.mxu0 %v7633
      %8737 = vmatmul.bf16.gmra.mxu0 %v5905
      %v8738 = vpop.f32.mrf.mxu0
      %v8739 = vadd.f32 %v8650, %v8738
      %v8740 = vpop.f32.mrf.mxu0
      %v8741 = vadd.f32 %v8652, %v8740
      %8742 = vmatmul.bf16.gmra.mxu0 %v5917
      %v8743 = vpop.f32.mrf.mxu0
      %v8744 = vadd.f32 %v8655, %v8743
      %v8745 = vpop.f32.mrf.mxu0
      %v8746 = vadd.f32 %v8657, %v8745
      %8747 = vmatmul.bf16.gmra.mxu0 %v5929
      %v8748 = vpop.f32.mrf.mxu0
      %v8749 = vadd.f32 %v8660, %v8748
      %v8750 = vpop.f32.mrf.mxu0
      %v8751 = vadd.f32 %v8662, %v8750
      %8752 = vmatmul.bf16.gmra.mxu0 %v5941
      %v8753 = vpop.f32.mrf.mxu0
      %v8754 = vadd.f32 %v8665, %v8753
      %v8755 = vpop.f32.mrf.mxu0
      %v8756 = vadd.f32 %v8667, %v8755
      %8757 = vmatmul.bf16.gmra.mxu0 %v5953
      %v8758 = vpop.f32.mrf.mxu0
      %v8759 = vadd.f32 %v8670, %v8758
      %v8760 = vpop.f32.mrf.mxu0
      %v8761 = vadd.f32 %v8672, %v8760
      %8762 = vmatmul.bf16.gmra.mxu0 %v5965
      %v8763 = vpop.f32.mrf.mxu0
      %v8764 = vadd.f32 %v8675, %v8763
      %v8765 = vpop.f32.mrf.mxu0
      %v8766 = vadd.f32 %v8677, %v8765
      %8767 = vmatmul.bf16.gmra.mxu0 %v5977
      %v8768 = vpop.f32.mrf.mxu0
      %v8769 = vadd.f32 %v8680, %v8768
      %v8770 = vpop.f32.mrf.mxu0
      %v8771 = vadd.f32 %v8682, %v8770
      %8772 = vmatmul.bf16.gmra.mxu0 %v5989
      %v8773 = vpop.f32.mrf.mxu0
      %v8774 = vadd.f32 %v8685, %v8773
      %v8775 = vpop.f32.mrf.mxu0
      %v8776 = vadd.f32 %v8687, %v8775
      %8777 = vmatmul.bf16.gmra.mxu0 %v6001
      %v8778 = vpop.f32.mrf.mxu0
      %v8779 = vadd.f32 %v8690, %v8778
      %v8780 = vpop.f32.mrf.mxu0
      %v8781 = vadd.f32 %v8692, %v8780
      %8782 = vmatmul.bf16.gmra.mxu0 %v6013
      %v8783 = vpop.f32.mrf.mxu0
      %v8784 = vadd.f32 %v8695, %v8783
      %v8785 = vpop.f32.mrf.mxu0
      %v8786 = vadd.f32 %v8697, %v8785
      %8787 = vmatmul.bf16.gmra.mxu0 %v6025
      %v8788 = vpop.f32.mrf.mxu0
      %v8789 = vadd.f32 %v8700, %v8788
      %v8790 = vpop.f32.mrf.mxu0
      %v8791 = vadd.f32 %v8702, %v8790
      %8792 = vmatmul.bf16.gmra.mxu0 %v6037
      %v8793 = vpop.f32.mrf.mxu0
      %v8794 = vadd.f32 %v8705, %v8793
      %v8795 = vpop.f32.mrf.mxu0
      %v8796 = vadd.f32 %v8707, %v8795
      %8797 = vmatmul.bf16.gmra.mxu0 %v6049
      %v8798 = vpop.f32.mrf.mxu0
      %v8799 = vadd.f32 %v8710, %v8798
      %v8800 = vpop.f32.mrf.mxu0
      %v8801 = vadd.f32 %v8712, %v8800
      %8802 = vmatmul.bf16.gmra.mxu0 %v6061
      %v8803 = vpop.f32.mrf.mxu0
      %v8804 = vadd.f32 %v8715, %v8803
      %v8805 = vpop.f32.mrf.mxu0
      %v8806 = vadd.f32 %v8717, %v8805
      %8807 = vmatmul.bf16.gmra.mxu0 %v6073
      %v8808 = vpop.f32.mrf.mxu0
      %v8809 = vadd.f32 %v8720, %v8808
      %v8810 = vpop.f32.mrf.mxu0
      %v8811 = vadd.f32 %v8722, %v8810
      %8812 = vmatmul.bf16.gmra.mxu0 %v6085
      %v8813 = vpop.f32.mrf.mxu0
      %v8814 = vadd.f32 %v8725, %v8813
      %v8815 = vpop.f32.mrf.mxu0
      %v8816 = vadd.f32 %v8727, %v8815
      %8817 = vdwg.mxu0
      %8818 = vmatpush.bf16.msra.mxu0 %v7678
      %8819 = vmatpush.bf16.msra.mxu0 %v7675
      %8820 = vmatpush.bf16.msra.mxu0 %v7672
      %8821 = vmatpush.bf16.msra.mxu0 %v7669
      %8822 = vmatpush.bf16.msra.mxu0 %v7666
      %8823 = vmatpush.bf16.msra.mxu0 %v7663
      %8824 = vmatpush.bf16.msra.mxu0 %v7660
      %8825 = vmatpush.bf16.msra.mxu0 %v7657
      %8826 = vmatmul.bf16.gmra.mxu0 %v5906
      %v8827 = vpop.f32.mrf.mxu0
      %v8828 = vadd.f32 %v8739, %v8827
      %v8829 = vpop.f32.mrf.mxu0
      %v8830 = vadd.f32 %v8741, %v8829
      %8831 = vmatmul.bf16.gmra.mxu0 %v5918
      %v8832 = vpop.f32.mrf.mxu0
      %v8833 = vadd.f32 %v8744, %v8832
      %v8834 = vpop.f32.mrf.mxu0
      %v8835 = vadd.f32 %v8746, %v8834
      %8836 = vmatmul.bf16.gmra.mxu0 %v5930
      %v8837 = vpop.f32.mrf.mxu0
      %v8838 = vadd.f32 %v8749, %v8837
      %v8839 = vpop.f32.mrf.mxu0
      %v8840 = vadd.f32 %v8751, %v8839
      %8841 = vmatmul.bf16.gmra.mxu0 %v5942
      %v8842 = vpop.f32.mrf.mxu0
      %v8843 = vadd.f32 %v8754, %v8842
      %v8844 = vpop.f32.mrf.mxu0
      %v8845 = vadd.f32 %v8756, %v8844
      %8846 = vmatmul.bf16.gmra.mxu0 %v5954
      %v8847 = vpop.f32.mrf.mxu0
      %v8848 = vadd.f32 %v8759, %v8847
      %v8849 = vpop.f32.mrf.mxu0
      %v8850 = vadd.f32 %v8761, %v8849
      %8851 = vmatmul.bf16.gmra.mxu0 %v5966
      %v8852 = vpop.f32.mrf.mxu0
      %v8853 = vadd.f32 %v8764, %v8852
      %v8854 = vpop.f32.mrf.mxu0
      %v8855 = vadd.f32 %v8766, %v8854
      %8856 = vmatmul.bf16.gmra.mxu0 %v5978
      %v8857 = vpop.f32.mrf.mxu0
      %v8858 = vadd.f32 %v8769, %v8857
      %v8859 = vpop.f32.mrf.mxu0
      %v8860 = vadd.f32 %v8771, %v8859
      %8861 = vmatmul.bf16.gmra.mxu0 %v5990
      %v8862 = vpop.f32.mrf.mxu0
      %v8863 = vadd.f32 %v8774, %v8862
      %v8864 = vpop.f32.mrf.mxu0
      %v8865 = vadd.f32 %v8776, %v8864
      %8866 = vmatmul.bf16.gmra.mxu0 %v6002
      %v8867 = vpop.f32.mrf.mxu0
      %v8868 = vadd.f32 %v8779, %v8867
      %v8869 = vpop.f32.mrf.mxu0
      %v8870 = vadd.f32 %v8781, %v8869
      %8871 = vmatmul.bf16.gmra.mxu0 %v6014
      %v8872 = vpop.f32.mrf.mxu0
      %v8873 = vadd.f32 %v8784, %v8872
      %v8874 = vpop.f32.mrf.mxu0
      %v8875 = vadd.f32 %v8786, %v8874
      %8876 = vmatmul.bf16.gmra.mxu0 %v6026
      %v8877 = vpop.f32.mrf.mxu0
      %v8878 = vadd.f32 %v8789, %v8877
      %v8879 = vpop.f32.mrf.mxu0
      %v8880 = vadd.f32 %v8791, %v8879
      %8881 = vmatmul.bf16.gmra.mxu0 %v6038
      %v8882 = vpop.f32.mrf.mxu0
      %v8883 = vadd.f32 %v8794, %v8882
      %v8884 = vpop.f32.mrf.mxu0
      %v8885 = vadd.f32 %v8796, %v8884
      %8886 = vmatmul.bf16.gmra.mxu0 %v6050
      %v8887 = vpop.f32.mrf.mxu0
      %v8888 = vadd.f32 %v8799, %v8887
      %v8889 = vpop.f32.mrf.mxu0
      %v8890 = vadd.f32 %v8801, %v8889
      %8891 = vmatmul.bf16.gmra.mxu0 %v6062
      %v8892 = vpop.f32.mrf.mxu0
      %v8893 = vadd.f32 %v8804, %v8892
      %v8894 = vpop.f32.mrf.mxu0
      %v8895 = vadd.f32 %v8806, %v8894
      %8896 = vmatmul.bf16.gmra.mxu0 %v6074
      %v8897 = vpop.f32.mrf.mxu0
      %v8898 = vadd.f32 %v8809, %v8897
      %v8899 = vpop.f32.mrf.mxu0
      %v8900 = vadd.f32 %v8811, %v8899
      %8901 = vmatmul.bf16.gmra.mxu0 %v6086
      %v8902 = vpop.f32.mrf.mxu0
      %v8903 = vadd.f32 %v8814, %v8902
      %v8904 = vpop.f32.mrf.mxu0
      %v8905 = vadd.f32 %v8816, %v8904
      %8906 = vdwg.mxu0
      %8907 = vmatpush.bf16.msra.mxu0 %v7702
      %8908 = vmatpush.bf16.msra.mxu0 %v7699
      %8909 = vmatpush.bf16.msra.mxu0 %v7696
      %8910 = vmatpush.bf16.msra.mxu0 %v7693
      %8911 = vmatpush.bf16.msra.mxu0 %v7690
      %8912 = vmatpush.bf16.msra.mxu0 %v7687
      %8913 = vmatpush.bf16.msra.mxu0 %v7684
      %8914 = vmatpush.bf16.msra.mxu0 %v7681
      %8915 = vmatmul.bf16.gmra.mxu0 %v5907
      %v8916 = vpop.f32.mrf.mxu0
      %v8917 = vadd.f32 %v8828, %v8916
      %v8918 = vpop.f32.mrf.mxu0
      %v8919 = vadd.f32 %v8830, %v8918
      %8920 = vmatmul.bf16.gmra.mxu0 %v5919
      %v8921 = vpop.f32.mrf.mxu0
      %v8922 = vadd.f32 %v8833, %v8921
      %v8923 = vpop.f32.mrf.mxu0
      %v8924 = vadd.f32 %v8835, %v8923
      %8925 = vmatmul.bf16.gmra.mxu0 %v5931
      %v8926 = vpop.f32.mrf.mxu0
      %v8927 = vadd.f32 %v8838, %v8926
      %v8928 = vpop.f32.mrf.mxu0
      %v8929 = vadd.f32 %v8840, %v8928
      %8930 = vmatmul.bf16.gmra.mxu0 %v5943
      %v8931 = vpop.f32.mrf.mxu0
      %v8932 = vadd.f32 %v8843, %v8931
      %v8933 = vpop.f32.mrf.mxu0
      %v8934 = vadd.f32 %v8845, %v8933
      %8935 = vmatmul.bf16.gmra.mxu0 %v5955
      %v8936 = vpop.f32.mrf.mxu0
      %v8937 = vadd.f32 %v8848, %v8936
      %v8938 = vpop.f32.mrf.mxu0
      %v8939 = vadd.f32 %v8850, %v8938
      %8940 = vmatmul.bf16.gmra.mxu0 %v5967
      %v8941 = vpop.f32.mrf.mxu0
      %v8942 = vadd.f32 %v8853, %v8941
      %v8943 = vpop.f32.mrf.mxu0
      %v8944 = vadd.f32 %v8855, %v8943
      %8945 = vmatmul.bf16.gmra.mxu0 %v5979
      %v8946 = vpop.f32.mrf.mxu0
      %v8947 = vadd.f32 %v8858, %v8946
      %v8948 = vpop.f32.mrf.mxu0
      %v8949 = vadd.f32 %v8860, %v8948
      %8950 = vmatmul.bf16.gmra.mxu0 %v5991
      %v8951 = vpop.f32.mrf.mxu0
      %v8952 = vadd.f32 %v8863, %v8951
      %v8953 = vpop.f32.mrf.mxu0
      %v8954 = vadd.f32 %v8865, %v8953
      %8955 = vmatmul.bf16.gmra.mxu0 %v6003
      %v8956 = vpop.f32.mrf.mxu0
      %v8957 = vadd.f32 %v8868, %v8956
      %v8958 = vpop.f32.mrf.mxu0
      %v8959 = vadd.f32 %v8870, %v8958
      %8960 = vmatmul.bf16.gmra.mxu0 %v6015
      %v8961 = vpop.f32.mrf.mxu0
      %v8962 = vadd.f32 %v8873, %v8961
      %v8963 = vpop.f32.mrf.mxu0
      %v8964 = vadd.f32 %v8875, %v8963
      %8965 = vmatmul.bf16.gmra.mxu0 %v6027
      %v8966 = vpop.f32.mrf.mxu0
      %v8967 = vadd.f32 %v8878, %v8966
      %v8968 = vpop.f32.mrf.mxu0
      %v8969 = vadd.f32 %v8880, %v8968
      %8970 = vmatmul.bf16.gmra.mxu0 %v6039
      %v8971 = vpop.f32.mrf.mxu0
      %v8972 = vadd.f32 %v8883, %v8971
      %v8973 = vpop.f32.mrf.mxu0
      %v8974 = vadd.f32 %v8885, %v8973
      %8975 = vmatmul.bf16.gmra.mxu0 %v6051
      %v8976 = vpop.f32.mrf.mxu0
      %v8977 = vadd.f32 %v8888, %v8976
      %v8978 = vpop.f32.mrf.mxu0
      %v8979 = vadd.f32 %v8890, %v8978
      %8980 = vmatmul.bf16.gmra.mxu0 %v6063
      %v8981 = vpop.f32.mrf.mxu0
      %v8982 = vadd.f32 %v8893, %v8981
      %v8983 = vpop.f32.mrf.mxu0
      %v8984 = vadd.f32 %v8895, %v8983
      %8985 = vmatmul.bf16.gmra.mxu0 %v6075
      %v8986 = vpop.f32.mrf.mxu0
      %v8987 = vadd.f32 %v8898, %v8986
      %v8988 = vpop.f32.mrf.mxu0
      %v8989 = vadd.f32 %v8900, %v8988
      %8990 = vmatmul.bf16.gmra.mxu0 %v6087
      %v8991 = vpop.f32.mrf.mxu0
      %v8992 = vadd.f32 %v8903, %v8991
      %v8993 = vpop.f32.mrf.mxu0
      %v8994 = vadd.f32 %v8905, %v8993
      %8995 = vdwg.mxu0
      %8996 = vmatpush.bf16.msra.mxu0 %v7726
      %8997 = vmatpush.bf16.msra.mxu0 %v7723
      %8998 = vmatpush.bf16.msra.mxu0 %v7720
      %8999 = vmatpush.bf16.msra.mxu0 %v7717
      %9000 = vmatpush.bf16.msra.mxu0 %v7714
      %9001 = vmatpush.bf16.msra.mxu0 %v7711
      %9002 = vmatpush.bf16.msra.mxu0 %v7708
      %9003 = vmatpush.bf16.msra.mxu0 %v7705
      %9004 = vmatmul.bf16.gmra.mxu0 %v5908
      %v9005 = vpop.f32.mrf.mxu0
      %v9006 = vadd.f32 %v8917, %v9005
      %v9007 = vpop.f32.mrf.mxu0
      %v9008 = vadd.f32 %v8919, %v9007
      %9009 = vmatmul.bf16.gmra.mxu0 %v5920
      %v9010 = vpop.f32.mrf.mxu0
      %v9011 = vadd.f32 %v8922, %v9010
      %v9012 = vpop.f32.mrf.mxu0
      %v9013 = vadd.f32 %v8924, %v9012
      %9014 = vmatmul.bf16.gmra.mxu0 %v5932
      %v9015 = vpop.f32.mrf.mxu0
      %v9016 = vadd.f32 %v8927, %v9015
      %v9017 = vpop.f32.mrf.mxu0
      %v9018 = vadd.f32 %v8929, %v9017
      %9019 = vmatmul.bf16.gmra.mxu0 %v5944
      %v9020 = vpop.f32.mrf.mxu0
      %v9021 = vadd.f32 %v8932, %v9020
      %v9022 = vpop.f32.mrf.mxu0
      %v9023 = vadd.f32 %v8934, %v9022
      %9024 = vmatmul.bf16.gmra.mxu0 %v5956
      %v9025 = vpop.f32.mrf.mxu0
      %v9026 = vadd.f32 %v8937, %v9025
      %v9027 = vpop.f32.mrf.mxu0
      %v9028 = vadd.f32 %v8939, %v9027
      %9029 = vmatmul.bf16.gmra.mxu0 %v5968
      %v9030 = vpop.f32.mrf.mxu0
      %v9031 = vadd.f32 %v8942, %v9030
      %v9032 = vpop.f32.mrf.mxu0
      %v9033 = vadd.f32 %v8944, %v9032
      %9034 = vmatmul.bf16.gmra.mxu0 %v5980
      %v9035 = vpop.f32.mrf.mxu0
      %v9036 = vadd.f32 %v8947, %v9035
      %v9037 = vpop.f32.mrf.mxu0
      %v9038 = vadd.f32 %v8949, %v9037
      %9039 = vmatmul.bf16.gmra.mxu0 %v5992
      %v9040 = vpop.f32.mrf.mxu0
      %v9041 = vadd.f32 %v8952, %v9040
      %v9042 = vpop.f32.mrf.mxu0
      %v9043 = vadd.f32 %v8954, %v9042
      %9044 = vmatmul.bf16.gmra.mxu0 %v6004
      %v9045 = vpop.f32.mrf.mxu0
      %v9046 = vadd.f32 %v8957, %v9045
      %v9047 = vpop.f32.mrf.mxu0
      %v9048 = vadd.f32 %v8959, %v9047
      %9049 = vmatmul.bf16.gmra.mxu0 %v6016
      %v9050 = vpop.f32.mrf.mxu0
      %v9051 = vadd.f32 %v8962, %v9050
      %v9052 = vpop.f32.mrf.mxu0
      %v9053 = vadd.f32 %v8964, %v9052
      %9054 = vmatmul.bf16.gmra.mxu0 %v6028
      %v9055 = vpop.f32.mrf.mxu0
      %v9056 = vadd.f32 %v8967, %v9055
      %v9057 = vpop.f32.mrf.mxu0
      %v9058 = vadd.f32 %v8969, %v9057
      %9059 = vmatmul.bf16.gmra.mxu0 %v6040
      %v9060 = vpop.f32.mrf.mxu0
      %v9061 = vadd.f32 %v8972, %v9060
      %v9062 = vpop.f32.mrf.mxu0
      %v9063 = vadd.f32 %v8974, %v9062
      %9064 = vmatmul.bf16.gmra.mxu0 %v6052
      %v9065 = vpop.f32.mrf.mxu0
      %v9066 = vadd.f32 %v8977, %v9065
      %v9067 = vpop.f32.mrf.mxu0
      %v9068 = vadd.f32 %v8979, %v9067
      %9069 = vmatmul.bf16.gmra.mxu0 %v6064
      %v9070 = vpop.f32.mrf.mxu0
      %v9071 = vadd.f32 %v8982, %v9070
      %v9072 = vpop.f32.mrf.mxu0
      %v9073 = vadd.f32 %v8984, %v9072
      %9074 = vmatmul.bf16.gmra.mxu0 %v6076
      %v9075 = vpop.f32.mrf.mxu0
      %v9076 = vadd.f32 %v8987, %v9075
      %v9077 = vpop.f32.mrf.mxu0
      %v9078 = vadd.f32 %v8989, %v9077
      %9079 = vmatmul.bf16.gmra.mxu0 %v6088
      %v9080 = vpop.f32.mrf.mxu0
      %v9081 = vadd.f32 %v8992, %v9080
      %v9082 = vpop.f32.mrf.mxu0
      %v9083 = vadd.f32 %v8994, %v9082
      %9084 = vdwg.mxu0
      %9085 = vmatpush.bf16.msra.mxu0 %v7463
      %9086 = vmatpush.bf16.msra.mxu0 %v7460
      %9087 = vmatpush.bf16.msra.mxu0 %v7457
      %9088 = vmatpush.bf16.msra.mxu0 %v7454
      %9089 = vmatpush.bf16.msra.mxu0 %v7451
      %9090 = vmatpush.bf16.msra.mxu0 %v7448
      %9091 = vmatpush.bf16.msra.mxu0 %v7445
      %9092 = vmatpush.bf16.msra.mxu0 %v7442
      %9093 = vmatmul.bf16.gmra.mxu0 %v5897
      %v9094 = vpop.f32.mrf.mxu0
      %v9095 = vadd.f32 %v6476, %v9094
      %v9096 = vpop.f32.mrf.mxu0
      %v9097 = vadd.f32 %v6476, %v9096
      %9098 = vmatmul.bf16.gmra.mxu0 %v5909
      %v9099 = vpop.f32.mrf.mxu0
      %v9100 = vadd.f32 %v6476, %v9099
      %v9101 = vpop.f32.mrf.mxu0
      %v9102 = vadd.f32 %v6476, %v9101
      %9103 = vmatmul.bf16.gmra.mxu0 %v5921
      %v9104 = vpop.f32.mrf.mxu0
      %v9105 = vadd.f32 %v6476, %v9104
      %v9106 = vpop.f32.mrf.mxu0
      %v9107 = vadd.f32 %v6476, %v9106
      %9108 = vmatmul.bf16.gmra.mxu0 %v5933
      %v9109 = vpop.f32.mrf.mxu0
      %v9110 = vadd.f32 %v6476, %v9109
      %v9111 = vpop.f32.mrf.mxu0
      %v9112 = vadd.f32 %v6476, %v9111
      %9113 = vmatmul.bf16.gmra.mxu0 %v5945
      %v9114 = vpop.f32.mrf.mxu0
      %v9115 = vadd.f32 %v6476, %v9114
      %v9116 = vpop.f32.mrf.mxu0
      %v9117 = vadd.f32 %v6476, %v9116
      %9118 = vmatmul.bf16.gmra.mxu0 %v5957
      %v9119 = vpop.f32.mrf.mxu0
      %v9120 = vadd.f32 %v6476, %v9119
      %v9121 = vpop.f32.mrf.mxu0
      %v9122 = vadd.f32 %v6476, %v9121
      %9123 = vmatmul.bf16.gmra.mxu0 %v5969
      %v9124 = vpop.f32.mrf.mxu0
      %v9125 = vadd.f32 %v6476, %v9124
      %v9126 = vpop.f32.mrf.mxu0
      %v9127 = vadd.f32 %v6476, %v9126
      %9128 = vmatmul.bf16.gmra.mxu0 %v5981
      %v9129 = vpop.f32.mrf.mxu0
      %v9130 = vadd.f32 %v6476, %v9129
      %v9131 = vpop.f32.mrf.mxu0
      %v9132 = vadd.f32 %v6476, %v9131
      %9133 = vmatmul.bf16.gmra.mxu0 %v5993
      %v9134 = vpop.f32.mrf.mxu0
      %v9135 = vadd.f32 %v6476, %v9134
      %v9136 = vpop.f32.mrf.mxu0
      %v9137 = vadd.f32 %v6476, %v9136
      %9138 = vmatmul.bf16.gmra.mxu0 %v6005
      %v9139 = vpop.f32.mrf.mxu0
      %v9140 = vadd.f32 %v6476, %v9139
      %v9141 = vpop.f32.mrf.mxu0
      %v9142 = vadd.f32 %v6476, %v9141
      %9143 = vmatmul.bf16.gmra.mxu0 %v6017
      %v9144 = vpop.f32.mrf.mxu0
      %v9145 = vadd.f32 %v6476, %v9144
      %v9146 = vpop.f32.mrf.mxu0
      %v9147 = vadd.f32 %v6476, %v9146
      %9148 = vmatmul.bf16.gmra.mxu0 %v6029
      %v9149 = vpop.f32.mrf.mxu0
      %v9150 = vadd.f32 %v6476, %v9149
      %v9151 = vpop.f32.mrf.mxu0
      %v9152 = vadd.f32 %v6476, %v9151
      %9153 = vmatmul.bf16.gmra.mxu0 %v6041
      %v9154 = vpop.f32.mrf.mxu0
      %v9155 = vadd.f32 %v6476, %v9154
      %v9156 = vpop.f32.mrf.mxu0
      %v9157 = vadd.f32 %v6476, %v9156
      %9158 = vmatmul.bf16.gmra.mxu0 %v6053
      %v9159 = vpop.f32.mrf.mxu0
      %v9160 = vadd.f32 %v6476, %v9159
      %v9161 = vpop.f32.mrf.mxu0
      %v9162 = vadd.f32 %v6476, %v9161
      %9163 = vmatmul.bf16.gmra.mxu0 %v6065
      %v9164 = vpop.f32.mrf.mxu0
      %v9165 = vadd.f32 %v6476, %v9164
      %v9166 = vpop.f32.mrf.mxu0
      %v9167 = vadd.f32 %v6476, %v9166
      %9168 = vmatmul.bf16.gmra.mxu0 %v6077
      %v9169 = vpop.f32.mrf.mxu0
      %v9170 = vadd.f32 %v6476, %v9169
      %v9171 = vpop.f32.mrf.mxu0
      %v9172 = vadd.f32 %v6476, %v9171
      %9173 = vdwg.mxu0
      %9174 = vmatpush.bf16.msra.mxu0 %v7487
      %9175 = vmatpush.bf16.msra.mxu0 %v7484
      %9176 = vmatpush.bf16.msra.mxu0 %v7481
      %9177 = vmatpush.bf16.msra.mxu0 %v7478
      %9178 = vmatpush.bf16.msra.mxu0 %v7475
      %9179 = vmatpush.bf16.msra.mxu0 %v7472
      %9180 = vmatpush.bf16.msra.mxu0 %v7469
      %9181 = vmatpush.bf16.msra.mxu0 %v7466
      %9182 = vmatmul.bf16.gmra.mxu0 %v5898
      %v9183 = vpop.f32.mrf.mxu0
      %v9184 = vadd.f32 %v9095, %v9183
      %v9185 = vpop.f32.mrf.mxu0
      %v9186 = vadd.f32 %v9097, %v9185
      %9187 = vmatmul.bf16.gmra.mxu0 %v5910
      %v9188 = vpop.f32.mrf.mxu0
      %v9189 = vadd.f32 %v9100, %v9188
      %v9190 = vpop.f32.mrf.mxu0
      %v9191 = vadd.f32 %v9102, %v9190
      %9192 = vmatmul.bf16.gmra.mxu0 %v5922
      %v9193 = vpop.f32.mrf.mxu0
      %v9194 = vadd.f32 %v9105, %v9193
      %v9195 = vpop.f32.mrf.mxu0
      %v9196 = vadd.f32 %v9107, %v9195
      %9197 = vmatmul.bf16.gmra.mxu0 %v5934
      %v9198 = vpop.f32.mrf.mxu0
      %v9199 = vadd.f32 %v9110, %v9198
      %v9200 = vpop.f32.mrf.mxu0
      %v9201 = vadd.f32 %v9112, %v9200
      %9202 = vmatmul.bf16.gmra.mxu0 %v5946
      %v9203 = vpop.f32.mrf.mxu0
      %v9204 = vadd.f32 %v9115, %v9203
      %v9205 = vpop.f32.mrf.mxu0
      %v9206 = vadd.f32 %v9117, %v9205
      %9207 = vmatmul.bf16.gmra.mxu0 %v5958
      %v9208 = vpop.f32.mrf.mxu0
      %v9209 = vadd.f32 %v9120, %v9208
      %v9210 = vpop.f32.mrf.mxu0
      %v9211 = vadd.f32 %v9122, %v9210
      %9212 = vmatmul.bf16.gmra.mxu0 %v5970
      %v9213 = vpop.f32.mrf.mxu0
      %v9214 = vadd.f32 %v9125, %v9213
      %v9215 = vpop.f32.mrf.mxu0
      %v9216 = vadd.f32 %v9127, %v9215
      %9217 = vmatmul.bf16.gmra.mxu0 %v5982
      %v9218 = vpop.f32.mrf.mxu0
      %v9219 = vadd.f32 %v9130, %v9218
      %v9220 = vpop.f32.mrf.mxu0
      %v9221 = vadd.f32 %v9132, %v9220
      %9222 = vmatmul.bf16.gmra.mxu0 %v5994
      %v9223 = vpop.f32.mrf.mxu0
      %v9224 = vadd.f32 %v9135, %v9223
      %v9225 = vpop.f32.mrf.mxu0
      %v9226 = vadd.f32 %v9137, %v9225
      %9227 = vmatmul.bf16.gmra.mxu0 %v6006
      %v9228 = vpop.f32.mrf.mxu0
      %v9229 = vadd.f32 %v9140, %v9228
      %v9230 = vpop.f32.mrf.mxu0
      %v9231 = vadd.f32 %v9142, %v9230
      %9232 = vmatmul.bf16.gmra.mxu0 %v6018
      %v9233 = vpop.f32.mrf.mxu0
      %v9234 = vadd.f32 %v9145, %v9233
      %v9235 = vpop.f32.mrf.mxu0
      %v9236 = vadd.f32 %v9147, %v9235
      %9237 = vmatmul.bf16.gmra.mxu0 %v6030
      %v9238 = vpop.f32.mrf.mxu0
      %v9239 = vadd.f32 %v9150, %v9238
      %v9240 = vpop.f32.mrf.mxu0
      %v9241 = vadd.f32 %v9152, %v9240
      %9242 = vmatmul.bf16.gmra.mxu0 %v6042
      %v9243 = vpop.f32.mrf.mxu0
      %v9244 = vadd.f32 %v9155, %v9243
      %v9245 = vpop.f32.mrf.mxu0
      %v9246 = vadd.f32 %v9157, %v9245
      %9247 = vmatmul.bf16.gmra.mxu0 %v6054
      %v9248 = vpop.f32.mrf.mxu0
      %v9249 = vadd.f32 %v9160, %v9248
      %v9250 = vpop.f32.mrf.mxu0
      %v9251 = vadd.f32 %v9162, %v9250
      %9252 = vmatmul.bf16.gmra.mxu0 %v6066
      %v9253 = vpop.f32.mrf.mxu0
      %v9254 = vadd.f32 %v9165, %v9253
      %v9255 = vpop.f32.mrf.mxu0
      %v9256 = vadd.f32 %v9167, %v9255
      %9257 = vmatmul.bf16.gmra.mxu0 %v6078
      %v9258 = vpop.f32.mrf.mxu0
      %v9259 = vadd.f32 %v9170, %v9258
      %v9260 = vpop.f32.mrf.mxu0
      %v9261 = vadd.f32 %v9172, %v9260
      %9262 = vdwg.mxu0
      %9263 = vmatpush.bf16.msra.mxu0 %v7511
      %9264 = vmatpush.bf16.msra.mxu0 %v7508
      %9265 = vmatpush.bf16.msra.mxu0 %v7505
      %9266 = vmatpush.bf16.msra.mxu0 %v7502
      %9267 = vmatpush.bf16.msra.mxu0 %v7499
      %9268 = vmatpush.bf16.msra.mxu0 %v7496
      %9269 = vmatpush.bf16.msra.mxu0 %v7493
      %9270 = vmatpush.bf16.msra.mxu0 %v7490
      %9271 = vmatmul.bf16.gmra.mxu0 %v5899
      %v9272 = vpop.f32.mrf.mxu0
      %v9273 = vadd.f32 %v9184, %v9272
      %v9274 = vpop.f32.mrf.mxu0
      %v9275 = vadd.f32 %v9186, %v9274
      %9276 = vmatmul.bf16.gmra.mxu0 %v5911
      %v9277 = vpop.f32.mrf.mxu0
      %v9278 = vadd.f32 %v9189, %v9277
      %v9279 = vpop.f32.mrf.mxu0
      %v9280 = vadd.f32 %v9191, %v9279
      %9281 = vmatmul.bf16.gmra.mxu0 %v5923
      %v9282 = vpop.f32.mrf.mxu0
      %v9283 = vadd.f32 %v9194, %v9282
      %v9284 = vpop.f32.mrf.mxu0
      %v9285 = vadd.f32 %v9196, %v9284
      %9286 = vmatmul.bf16.gmra.mxu0 %v5935
      %v9287 = vpop.f32.mrf.mxu0
      %v9288 = vadd.f32 %v9199, %v9287
      %v9289 = vpop.f32.mrf.mxu0
      %v9290 = vadd.f32 %v9201, %v9289
      %9291 = vmatmul.bf16.gmra.mxu0 %v5947
      %v9292 = vpop.f32.mrf.mxu0
      %v9293 = vadd.f32 %v9204, %v9292
      %v9294 = vpop.f32.mrf.mxu0
      %v9295 = vadd.f32 %v9206, %v9294
      %9296 = vmatmul.bf16.gmra.mxu0 %v5959
      %v9297 = vpop.f32.mrf.mxu0
      %v9298 = vadd.f32 %v9209, %v9297
      %v9299 = vpop.f32.mrf.mxu0
      %v9300 = vadd.f32 %v9211, %v9299
      %9301 = vmatmul.bf16.gmra.mxu0 %v5971
      %v9302 = vpop.f32.mrf.mxu0
      %v9303 = vadd.f32 %v9214, %v9302
      %v9304 = vpop.f32.mrf.mxu0
      %v9305 = vadd.f32 %v9216, %v9304
      %9306 = vmatmul.bf16.gmra.mxu0 %v5983
      %v9307 = vpop.f32.mrf.mxu0
      %v9308 = vadd.f32 %v9219, %v9307
      %v9309 = vpop.f32.mrf.mxu0
      %v9310 = vadd.f32 %v9221, %v9309
      %9311 = vmatmul.bf16.gmra.mxu0 %v5995
      %v9312 = vpop.f32.mrf.mxu0
      %v9313 = vadd.f32 %v9224, %v9312
      %v9314 = vpop.f32.mrf.mxu0
      %v9315 = vadd.f32 %v9226, %v9314
      %9316 = vmatmul.bf16.gmra.mxu0 %v6007
      %v9317 = vpop.f32.mrf.mxu0
      %v9318 = vadd.f32 %v9229, %v9317
      %v9319 = vpop.f32.mrf.mxu0
      %v9320 = vadd.f32 %v9231, %v9319
      %9321 = vmatmul.bf16.gmra.mxu0 %v6019
      %v9322 = vpop.f32.mrf.mxu0
      %v9323 = vadd.f32 %v9234, %v9322
      %v9324 = vpop.f32.mrf.mxu0
      %v9325 = vadd.f32 %v9236, %v9324
      %9326 = vmatmul.bf16.gmra.mxu0 %v6031
      %v9327 = vpop.f32.mrf.mxu0
      %v9328 = vadd.f32 %v9239, %v9327
      %v9329 = vpop.f32.mrf.mxu0
      %v9330 = vadd.f32 %v9241, %v9329
      %9331 = vmatmul.bf16.gmra.mxu0 %v6043
      %v9332 = vpop.f32.mrf.mxu0
      %v9333 = vadd.f32 %v9244, %v9332
      %v9334 = vpop.f32.mrf.mxu0
      %v9335 = vadd.f32 %v9246, %v9334
      %9336 = vmatmul.bf16.gmra.mxu0 %v6055
      %v9337 = vpop.f32.mrf.mxu0
      %v9338 = vadd.f32 %v9249, %v9337
      %v9339 = vpop.f32.mrf.mxu0
      %v9340 = vadd.f32 %v9251, %v9339
      %9341 = vmatmul.bf16.gmra.mxu0 %v6067
      %v9342 = vpop.f32.mrf.mxu0
      %v9343 = vadd.f32 %v9254, %v9342
      %v9344 = vpop.f32.mrf.mxu0
      %v9345 = vadd.f32 %v9256, %v9344
      %9346 = vmatmul.bf16.gmra.mxu0 %v6079
      %v9347 = vpop.f32.mrf.mxu0
      %v9348 = vadd.f32 %v9259, %v9347
      %v9349 = vpop.f32.mrf.mxu0
      %v9350 = vadd.f32 %v9261, %v9349
      %9351 = vdwg.mxu0
      %9352 = vmatpush.bf16.msra.mxu0 %v7535
      %9353 = vmatpush.bf16.msra.mxu0 %v7532
      %9354 = vmatpush.bf16.msra.mxu0 %v7529
      %9355 = vmatpush.bf16.msra.mxu0 %v7526
      %9356 = vmatpush.bf16.msra.mxu0 %v7523
      %9357 = vmatpush.bf16.msra.mxu0 %v7520
      %9358 = vmatpush.bf16.msra.mxu0 %v7517
      %9359 = vmatpush.bf16.msra.mxu0 %v7514
      %9360 = vmatmul.bf16.gmra.mxu0 %v5900
      %v9361 = vpop.f32.mrf.mxu0
      %v9362 = vadd.f32 %v9273, %v9361
      %v9363 = vpop.f32.mrf.mxu0
      %v9364 = vadd.f32 %v9275, %v9363
      %9365 = vmatmul.bf16.gmra.mxu0 %v5912
      %v9366 = vpop.f32.mrf.mxu0
      %v9367 = vadd.f32 %v9278, %v9366
      %v9368 = vpop.f32.mrf.mxu0
      %v9369 = vadd.f32 %v9280, %v9368
      %9370 = vmatmul.bf16.gmra.mxu0 %v5924
      %v9371 = vpop.f32.mrf.mxu0
      %v9372 = vadd.f32 %v9283, %v9371
      %v9373 = vpop.f32.mrf.mxu0
      %v9374 = vadd.f32 %v9285, %v9373
      %9375 = vmatmul.bf16.gmra.mxu0 %v5936
      %v9376 = vpop.f32.mrf.mxu0
      %v9377 = vadd.f32 %v9288, %v9376
      %v9378 = vpop.f32.mrf.mxu0
      %v9379 = vadd.f32 %v9290, %v9378
      %9380 = vmatmul.bf16.gmra.mxu0 %v5948
      %v9381 = vpop.f32.mrf.mxu0
      %v9382 = vadd.f32 %v9293, %v9381
      %v9383 = vpop.f32.mrf.mxu0
      %v9384 = vadd.f32 %v9295, %v9383
      %9385 = vmatmul.bf16.gmra.mxu0 %v5960
      %v9386 = vpop.f32.mrf.mxu0
      %v9387 = vadd.f32 %v9298, %v9386
      %v9388 = vpop.f32.mrf.mxu0
      %v9389 = vadd.f32 %v9300, %v9388
      %9390 = vmatmul.bf16.gmra.mxu0 %v5972
      %v9391 = vpop.f32.mrf.mxu0
      %v9392 = vadd.f32 %v9303, %v9391
      %v9393 = vpop.f32.mrf.mxu0
      %v9394 = vadd.f32 %v9305, %v9393
      %9395 = vmatmul.bf16.gmra.mxu0 %v5984
      %v9396 = vpop.f32.mrf.mxu0
      %v9397 = vadd.f32 %v9308, %v9396
      %v9398 = vpop.f32.mrf.mxu0
      %v9399 = vadd.f32 %v9310, %v9398
      %9400 = vmatmul.bf16.gmra.mxu0 %v5996
      %v9401 = vpop.f32.mrf.mxu0
      %v9402 = vadd.f32 %v9313, %v9401
      %v9403 = vpop.f32.mrf.mxu0
      %v9404 = vadd.f32 %v9315, %v9403
      %9405 = vmatmul.bf16.gmra.mxu0 %v6008
      %v9406 = vpop.f32.mrf.mxu0
      %v9407 = vadd.f32 %v9318, %v9406
      %v9408 = vpop.f32.mrf.mxu0
      %v9409 = vadd.f32 %v9320, %v9408
      %9410 = vmatmul.bf16.gmra.mxu0 %v6020
      %v9411 = vpop.f32.mrf.mxu0
      %v9412 = vadd.f32 %v9323, %v9411
      %v9413 = vpop.f32.mrf.mxu0
      %v9414 = vadd.f32 %v9325, %v9413
      %9415 = vmatmul.bf16.gmra.mxu0 %v6032
      %v9416 = vpop.f32.mrf.mxu0
      %v9417 = vadd.f32 %v9328, %v9416
      %v9418 = vpop.f32.mrf.mxu0
      %v9419 = vadd.f32 %v9330, %v9418
      %9420 = vmatmul.bf16.gmra.mxu0 %v6044
      %v9421 = vpop.f32.mrf.mxu0
      %v9422 = vadd.f32 %v9333, %v9421
      %v9423 = vpop.f32.mrf.mxu0
      %v9424 = vadd.f32 %v9335, %v9423
      %9425 = vmatmul.bf16.gmra.mxu0 %v6056
      %v9426 = vpop.f32.mrf.mxu0
      %v9427 = vadd.f32 %v9338, %v9426
      %v9428 = vpop.f32.mrf.mxu0
      %v9429 = vadd.f32 %v9340, %v9428
      %9430 = vmatmul.bf16.gmra.mxu0 %v6068
      %v9431 = vpop.f32.mrf.mxu0
      %v9432 = vadd.f32 %v9343, %v9431
      %v9433 = vpop.f32.mrf.mxu0
      %v9434 = vadd.f32 %v9345, %v9433
      %9435 = vmatmul.bf16.gmra.mxu0 %v6080
      %v9436 = vpop.f32.mrf.mxu0
      %v9437 = vadd.f32 %v9348, %v9436
      %v9438 = vpop.f32.mrf.mxu0
      %v9439 = vadd.f32 %v9350, %v9438
      %9440 = vdwg.mxu0
      %9441 = vmatpush.bf16.msra.mxu0 %v7559
      %9442 = vmatpush.bf16.msra.mxu0 %v7556
      %9443 = vmatpush.bf16.msra.mxu0 %v7553
      %9444 = vmatpush.bf16.msra.mxu0 %v7550
      %9445 = vmatpush.bf16.msra.mxu0 %v7547
      %9446 = vmatpush.bf16.msra.mxu0 %v7544
      %9447 = vmatpush.bf16.msra.mxu0 %v7541
      %9448 = vmatpush.bf16.msra.mxu0 %v7538
      %9449 = vmatmul.bf16.gmra.mxu0 %v5901
      %v9450 = vpop.f32.mrf.mxu0
      %v9451 = vadd.f32 %v9362, %v9450
      %v9452 = vpop.f32.mrf.mxu0
      %v9453 = vadd.f32 %v9364, %v9452
      %9454 = vmatmul.bf16.gmra.mxu0 %v5913
      %v9455 = vpop.f32.mrf.mxu0
      %v9456 = vadd.f32 %v9367, %v9455
      %v9457 = vpop.f32.mrf.mxu0
      %v9458 = vadd.f32 %v9369, %v9457
      %9459 = vmatmul.bf16.gmra.mxu0 %v5925
      %v9460 = vpop.f32.mrf.mxu0
      %v9461 = vadd.f32 %v9372, %v9460
      %v9462 = vpop.f32.mrf.mxu0
      %v9463 = vadd.f32 %v9374, %v9462
      %9464 = vmatmul.bf16.gmra.mxu0 %v5937
      %v9465 = vpop.f32.mrf.mxu0
      %v9466 = vadd.f32 %v9377, %v9465
      %v9467 = vpop.f32.mrf.mxu0
      %v9468 = vadd.f32 %v9379, %v9467
      %9469 = vmatmul.bf16.gmra.mxu0 %v5949
      %v9470 = vpop.f32.mrf.mxu0
      %v9471 = vadd.f32 %v9382, %v9470
      %v9472 = vpop.f32.mrf.mxu0
      %v9473 = vadd.f32 %v9384, %v9472
      %9474 = vmatmul.bf16.gmra.mxu0 %v5961
      %v9475 = vpop.f32.mrf.mxu0
      %v9476 = vadd.f32 %v9387, %v9475
      %v9477 = vpop.f32.mrf.mxu0
      %v9478 = vadd.f32 %v9389, %v9477
      %9479 = vmatmul.bf16.gmra.mxu0 %v5973
      %v9480 = vpop.f32.mrf.mxu0
      %v9481 = vadd.f32 %v9392, %v9480
      %v9482 = vpop.f32.mrf.mxu0
      %v9483 = vadd.f32 %v9394, %v9482
      %9484 = vmatmul.bf16.gmra.mxu0 %v5985
      %v9485 = vpop.f32.mrf.mxu0
      %v9486 = vadd.f32 %v9397, %v9485
      %v9487 = vpop.f32.mrf.mxu0
      %v9488 = vadd.f32 %v9399, %v9487
      %9489 = vmatmul.bf16.gmra.mxu0 %v5997
      %v9490 = vpop.f32.mrf.mxu0
      %v9491 = vadd.f32 %v9402, %v9490
      %v9492 = vpop.f32.mrf.mxu0
      %v9493 = vadd.f32 %v9404, %v9492
      %9494 = vmatmul.bf16.gmra.mxu0 %v6009
      %v9495 = vpop.f32.mrf.mxu0
      %v9496 = vadd.f32 %v9407, %v9495
      %v9497 = vpop.f32.mrf.mxu0
      %v9498 = vadd.f32 %v9409, %v9497
      %9499 = vmatmul.bf16.gmra.mxu0 %v6021
      %v9500 = vpop.f32.mrf.mxu0
      %v9501 = vadd.f32 %v9412, %v9500
      %v9502 = vpop.f32.mrf.mxu0
      %v9503 = vadd.f32 %v9414, %v9502
      %9504 = vmatmul.bf16.gmra.mxu0 %v6033
      %v9505 = vpop.f32.mrf.mxu0
      %v9506 = vadd.f32 %v9417, %v9505
      %v9507 = vpop.f32.mrf.mxu0
      %v9508 = vadd.f32 %v9419, %v9507
      %9509 = vmatmul.bf16.gmra.mxu0 %v6045
      %v9510 = vpop.f32.mrf.mxu0
      %v9511 = vadd.f32 %v9422, %v9510
      %v9512 = vpop.f32.mrf.mxu0
      %v9513 = vadd.f32 %v9424, %v9512
      %9514 = vmatmul.bf16.gmra.mxu0 %v6057
      %v9515 = vpop.f32.mrf.mxu0
      %v9516 = vadd.f32 %v9427, %v9515
      %v9517 = vpop.f32.mrf.mxu0
      %v9518 = vadd.f32 %v9429, %v9517
      %9519 = vmatmul.bf16.gmra.mxu0 %v6069
      %v9520 = vpop.f32.mrf.mxu0
      %v9521 = vadd.f32 %v9432, %v9520
      %v9522 = vpop.f32.mrf.mxu0
      %v9523 = vadd.f32 %v9434, %v9522
      %9524 = vmatmul.bf16.gmra.mxu0 %v6081
      %v9525 = vpop.f32.mrf.mxu0
      %v9526 = vadd.f32 %v9437, %v9525
      %v9527 = vpop.f32.mrf.mxu0
      %v9528 = vadd.f32 %v9439, %v9527
      %9529 = vdwg.mxu0
      %9530 = vmatpush.bf16.msra.mxu0 %v7583
      %9531 = vmatpush.bf16.msra.mxu0 %v7580
      %9532 = vmatpush.bf16.msra.mxu0 %v7577
      %9533 = vmatpush.bf16.msra.mxu0 %v7574
      %9534 = vmatpush.bf16.msra.mxu0 %v7571
      %9535 = vmatpush.bf16.msra.mxu0 %v7568
      %9536 = vmatpush.bf16.msra.mxu0 %v7565
      %9537 = vmatpush.bf16.msra.mxu0 %v7562
      %9538 = vmatmul.bf16.gmra.mxu0 %v5902
      %v9539 = vpop.f32.mrf.mxu0
      %v9540 = vadd.f32 %v9451, %v9539
      %v9541 = vpop.f32.mrf.mxu0
      %v9542 = vadd.f32 %v9453, %v9541
      %9543 = vmatmul.bf16.gmra.mxu0 %v5914
      %v9544 = vpop.f32.mrf.mxu0
      %v9545 = vadd.f32 %v9456, %v9544
      %v9546 = vpop.f32.mrf.mxu0
      %v9547 = vadd.f32 %v9458, %v9546
      %9548 = vmatmul.bf16.gmra.mxu0 %v5926
      %v9549 = vpop.f32.mrf.mxu0
      %v9550 = vadd.f32 %v9461, %v9549
      %v9551 = vpop.f32.mrf.mxu0
      %v9552 = vadd.f32 %v9463, %v9551
      %9553 = vmatmul.bf16.gmra.mxu0 %v5938
      %v9554 = vpop.f32.mrf.mxu0
      %v9555 = vadd.f32 %v9466, %v9554
      %v9556 = vpop.f32.mrf.mxu0
      %v9557 = vadd.f32 %v9468, %v9556
      %9558 = vmatmul.bf16.gmra.mxu0 %v5950
      %v9559 = vpop.f32.mrf.mxu0
      %v9560 = vadd.f32 %v9471, %v9559
      %v9561 = vpop.f32.mrf.mxu0
      %v9562 = vadd.f32 %v9473, %v9561
      %9563 = vmatmul.bf16.gmra.mxu0 %v5962
      %v9564 = vpop.f32.mrf.mxu0
      %v9565 = vadd.f32 %v9476, %v9564
      %v9566 = vpop.f32.mrf.mxu0
      %v9567 = vadd.f32 %v9478, %v9566
      %9568 = vmatmul.bf16.gmra.mxu0 %v5974
      %v9569 = vpop.f32.mrf.mxu0
      %v9570 = vadd.f32 %v9481, %v9569
      %v9571 = vpop.f32.mrf.mxu0
      %v9572 = vadd.f32 %v9483, %v9571
      %9573 = vmatmul.bf16.gmra.mxu0 %v5986
      %v9574 = vpop.f32.mrf.mxu0
      %v9575 = vadd.f32 %v9486, %v9574
      %v9576 = vpop.f32.mrf.mxu0
      %v9577 = vadd.f32 %v9488, %v9576
      %9578 = vmatmul.bf16.gmra.mxu0 %v5998
      %v9579 = vpop.f32.mrf.mxu0
      %v9580 = vadd.f32 %v9491, %v9579
      %v9581 = vpop.f32.mrf.mxu0
      %v9582 = vadd.f32 %v9493, %v9581
      %9583 = vmatmul.bf16.gmra.mxu0 %v6010
      %v9584 = vpop.f32.mrf.mxu0
      %v9585 = vadd.f32 %v9496, %v9584
      %v9586 = vpop.f32.mrf.mxu0
      %v9587 = vadd.f32 %v9498, %v9586
      %9588 = vmatmul.bf16.gmra.mxu0 %v6022
      %v9589 = vpop.f32.mrf.mxu0
      %v9590 = vadd.f32 %v9501, %v9589
      %v9591 = vpop.f32.mrf.mxu0
      %v9592 = vadd.f32 %v9503, %v9591
      %9593 = vmatmul.bf16.gmra.mxu0 %v6034
      %v9594 = vpop.f32.mrf.mxu0
      %v9595 = vadd.f32 %v9506, %v9594
      %v9596 = vpop.f32.mrf.mxu0
      %v9597 = vadd.f32 %v9508, %v9596
      %9598 = vmatmul.bf16.gmra.mxu0 %v6046
      %v9599 = vpop.f32.mrf.mxu0
      %v9600 = vadd.f32 %v9511, %v9599
      %v9601 = vpop.f32.mrf.mxu0
      %v9602 = vadd.f32 %v9513, %v9601
      %9603 = vmatmul.bf16.gmra.mxu0 %v6058
      %v9604 = vpop.f32.mrf.mxu0
      %v9605 = vadd.f32 %v9516, %v9604
      %v9606 = vpop.f32.mrf.mxu0
      %v9607 = vadd.f32 %v9518, %v9606
      %9608 = vmatmul.bf16.gmra.mxu0 %v6070
      %v9609 = vpop.f32.mrf.mxu0
      %v9610 = vadd.f32 %v9521, %v9609
      %v9611 = vpop.f32.mrf.mxu0
      %v9612 = vadd.f32 %v9523, %v9611
      %9613 = vmatmul.bf16.gmra.mxu0 %v6082
      %v9614 = vpop.f32.mrf.mxu0
      %v9615 = vadd.f32 %v9526, %v9614
      %v9616 = vpop.f32.mrf.mxu0
      %v9617 = vadd.f32 %v9528, %v9616
      %9618 = vdwg.mxu0
      %9619 = vmatpush.bf16.msra.mxu0 %v7607
      %9620 = vmatpush.bf16.msra.mxu0 %v7604
      %9621 = vmatpush.bf16.msra.mxu0 %v7601
      %9622 = vmatpush.bf16.msra.mxu0 %v7598
      %9623 = vmatpush.bf16.msra.mxu0 %v7595
      %9624 = vmatpush.bf16.msra.mxu0 %v7592
      %9625 = vmatpush.bf16.msra.mxu0 %v7589
      %9626 = vmatpush.bf16.msra.mxu0 %v7586
      %9627 = vmatmul.bf16.gmra.mxu0 %v5903
      %v9628 = vpop.f32.mrf.mxu0
      %v9629 = vadd.f32 %v9540, %v9628
      %v9630 = vpop.f32.mrf.mxu0
      %v9631 = vadd.f32 %v9542, %v9630
      %9632 = vmatmul.bf16.gmra.mxu0 %v5915
      %v9633 = vpop.f32.mrf.mxu0
      %v9634 = vadd.f32 %v9545, %v9633
      %v9635 = vpop.f32.mrf.mxu0
      %v9636 = vadd.f32 %v9547, %v9635
      %9637 = vmatmul.bf16.gmra.mxu0 %v5927
      %v9638 = vpop.f32.mrf.mxu0
      %v9639 = vadd.f32 %v9550, %v9638
      %v9640 = vpop.f32.mrf.mxu0
      %v9641 = vadd.f32 %v9552, %v9640
      %9642 = vmatmul.bf16.gmra.mxu0 %v5939
      %v9643 = vpop.f32.mrf.mxu0
      %v9644 = vadd.f32 %v9555, %v9643
      %v9645 = vpop.f32.mrf.mxu0
      %v9646 = vadd.f32 %v9557, %v9645
      %9647 = vmatmul.bf16.gmra.mxu0 %v5951
      %v9648 = vpop.f32.mrf.mxu0
      %v9649 = vadd.f32 %v9560, %v9648
      %v9650 = vpop.f32.mrf.mxu0
      %v9651 = vadd.f32 %v9562, %v9650
      %9652 = vmatmul.bf16.gmra.mxu0 %v5963
      %v9653 = vpop.f32.mrf.mxu0
      %v9654 = vadd.f32 %v9565, %v9653
      %v9655 = vpop.f32.mrf.mxu0
      %v9656 = vadd.f32 %v9567, %v9655
      %9657 = vmatmul.bf16.gmra.mxu0 %v5975
      %v9658 = vpop.f32.mrf.mxu0
      %v9659 = vadd.f32 %v9570, %v9658
      %v9660 = vpop.f32.mrf.mxu0
      %v9661 = vadd.f32 %v9572, %v9660
      %9662 = vmatmul.bf16.gmra.mxu0 %v5987
      %v9663 = vpop.f32.mrf.mxu0
      %v9664 = vadd.f32 %v9575, %v9663
      %v9665 = vpop.f32.mrf.mxu0
      %v9666 = vadd.f32 %v9577, %v9665
      %9667 = vmatmul.bf16.gmra.mxu0 %v5999
      %v9668 = vpop.f32.mrf.mxu0
      %v9669 = vadd.f32 %v9580, %v9668
      %v9670 = vpop.f32.mrf.mxu0
      %v9671 = vadd.f32 %v9582, %v9670
      %9672 = vmatmul.bf16.gmra.mxu0 %v6011
      %v9673 = vpop.f32.mrf.mxu0
      %v9674 = vadd.f32 %v9585, %v9673
      %v9675 = vpop.f32.mrf.mxu0
      %v9676 = vadd.f32 %v9587, %v9675
      %9677 = vmatmul.bf16.gmra.mxu0 %v6023
      %v9678 = vpop.f32.mrf.mxu0
      %v9679 = vadd.f32 %v9590, %v9678
      %v9680 = vpop.f32.mrf.mxu0
      %v9681 = vadd.f32 %v9592, %v9680
      %9682 = vmatmul.bf16.gmra.mxu0 %v6035
      %v9683 = vpop.f32.mrf.mxu0
      %v9684 = vadd.f32 %v9595, %v9683
      %v9685 = vpop.f32.mrf.mxu0
      %v9686 = vadd.f32 %v9597, %v9685
      %9687 = vmatmul.bf16.gmra.mxu0 %v6047
      %v9688 = vpop.f32.mrf.mxu0
      %v9689 = vadd.f32 %v9600, %v9688
      %v9690 = vpop.f32.mrf.mxu0
      %v9691 = vadd.f32 %v9602, %v9690
      %9692 = vmatmul.bf16.gmra.mxu0 %v6059
      %v9693 = vpop.f32.mrf.mxu0
      %v9694 = vadd.f32 %v9605, %v9693
      %v9695 = vpop.f32.mrf.mxu0
      %v9696 = vadd.f32 %v9607, %v9695
      %9697 = vmatmul.bf16.gmra.mxu0 %v6071
      %v9698 = vpop.f32.mrf.mxu0
      %v9699 = vadd.f32 %v9610, %v9698
      %v9700 = vpop.f32.mrf.mxu0
      %v9701 = vadd.f32 %v9612, %v9700
      %9702 = vmatmul.bf16.gmra.mxu0 %v6083
      %v9703 = vpop.f32.mrf.mxu0
      %v9704 = vadd.f32 %v9615, %v9703
      %v9705 = vpop.f32.mrf.mxu0
      %v9706 = vadd.f32 %v9617, %v9705
      %9707 = vdwg.mxu0
      %9708 = vmatpush.bf16.msra.mxu0 %v7631
      %9709 = vmatpush.bf16.msra.mxu0 %v7628
      %9710 = vmatpush.bf16.msra.mxu0 %v7625
      %9711 = vmatpush.bf16.msra.mxu0 %v7622
      %9712 = vmatpush.bf16.msra.mxu0 %v7619
      %9713 = vmatpush.bf16.msra.mxu0 %v7616
      %9714 = vmatpush.bf16.msra.mxu0 %v7613
      %9715 = vmatpush.bf16.msra.mxu0 %v7610
      %9716 = vmatmul.bf16.gmra.mxu0 %v5904
      %v9717 = vpop.f32.mrf.mxu0
      %v9718 = vadd.f32 %v9629, %v9717
      %v9719 = vpop.f32.mrf.mxu0
      %v9720 = vadd.f32 %v9631, %v9719
      %9721 = vmatmul.bf16.gmra.mxu0 %v5916
      %v9722 = vpop.f32.mrf.mxu0
      %v9723 = vadd.f32 %v9634, %v9722
      %v9724 = vpop.f32.mrf.mxu0
      %v9725 = vadd.f32 %v9636, %v9724
      %9726 = vmatmul.bf16.gmra.mxu0 %v5928
      %v9727 = vpop.f32.mrf.mxu0
      %v9728 = vadd.f32 %v9639, %v9727
      %v9729 = vpop.f32.mrf.mxu0
      %v9730 = vadd.f32 %v9641, %v9729
      %9731 = vmatmul.bf16.gmra.mxu0 %v5940
      %v9732 = vpop.f32.mrf.mxu0
      %v9733 = vadd.f32 %v9644, %v9732
      %v9734 = vpop.f32.mrf.mxu0
      %v9735 = vadd.f32 %v9646, %v9734
      %9736 = vmatmul.bf16.gmra.mxu0 %v5952
      %v9737 = vpop.f32.mrf.mxu0
      %v9738 = vadd.f32 %v9649, %v9737
      %v9739 = vpop.f32.mrf.mxu0
      %v9740 = vadd.f32 %v9651, %v9739
      %9741 = vmatmul.bf16.gmra.mxu0 %v5964
      %v9742 = vpop.f32.mrf.mxu0
      %v9743 = vadd.f32 %v9654, %v9742
      %v9744 = vpop.f32.mrf.mxu0
      %v9745 = vadd.f32 %v9656, %v9744
      %9746 = vmatmul.bf16.gmra.mxu0 %v5976
      %v9747 = vpop.f32.mrf.mxu0
      %v9748 = vadd.f32 %v9659, %v9747
      %v9749 = vpop.f32.mrf.mxu0
      %v9750 = vadd.f32 %v9661, %v9749
      %9751 = vmatmul.bf16.gmra.mxu0 %v5988
      %v9752 = vpop.f32.mrf.mxu0
      %v9753 = vadd.f32 %v9664, %v9752
      %v9754 = vpop.f32.mrf.mxu0
      %v9755 = vadd.f32 %v9666, %v9754
      %9756 = vmatmul.bf16.gmra.mxu0 %v6000
      %v9757 = vpop.f32.mrf.mxu0
      %v9758 = vadd.f32 %v9669, %v9757
      %v9759 = vpop.f32.mrf.mxu0
      %v9760 = vadd.f32 %v9671, %v9759
      %9761 = vmatmul.bf16.gmra.mxu0 %v6012
      %v9762 = vpop.f32.mrf.mxu0
      %v9763 = vadd.f32 %v9674, %v9762
      %v9764 = vpop.f32.mrf.mxu0
      %v9765 = vadd.f32 %v9676, %v9764
      %9766 = vmatmul.bf16.gmra.mxu0 %v6024
      %v9767 = vpop.f32.mrf.mxu0
      %v9768 = vadd.f32 %v9679, %v9767
      %v9769 = vpop.f32.mrf.mxu0
      %v9770 = vadd.f32 %v9681, %v9769
      %9771 = vmatmul.bf16.gmra.mxu0 %v6036
      %v9772 = vpop.f32.mrf.mxu0
      %v9773 = vadd.f32 %v9684, %v9772
      %v9774 = vpop.f32.mrf.mxu0
      %v9775 = vadd.f32 %v9686, %v9774
      %9776 = vmatmul.bf16.gmra.mxu0 %v6048
      %v9777 = vpop.f32.mrf.mxu0
      %v9778 = vadd.f32 %v9689, %v9777
      %v9779 = vpop.f32.mrf.mxu0
      %v9780 = vadd.f32 %v9691, %v9779
      %9781 = vmatmul.bf16.gmra.mxu0 %v6060
      %v9782 = vpop.f32.mrf.mxu0
      %v9783 = vadd.f32 %v9694, %v9782
      %v9784 = vpop.f32.mrf.mxu0
      %v9785 = vadd.f32 %v9696, %v9784
      %9786 = vmatmul.bf16.gmra.mxu0 %v6072
      %v9787 = vpop.f32.mrf.mxu0
      %v9788 = vadd.f32 %v9699, %v9787
      %v9789 = vpop.f32.mrf.mxu0
      %v9790 = vadd.f32 %v9701, %v9789
      %9791 = vmatmul.bf16.gmra.mxu0 %v6084
      %v9792 = vpop.f32.mrf.mxu0
      %v9793 = vadd.f32 %v9704, %v9792
      %v9794 = vpop.f32.mrf.mxu0
      %v9795 = vadd.f32 %v9706, %v9794
      %9796 = vdwg.mxu0
      %9797 = vmatpush.bf16.msra.mxu0 %v7655
      %9798 = vmatpush.bf16.msra.mxu0 %v7652
      %9799 = vmatpush.bf16.msra.mxu0 %v7649
      %9800 = vmatpush.bf16.msra.mxu0 %v7646
      %9801 = vmatpush.bf16.msra.mxu0 %v7643
      %9802 = vmatpush.bf16.msra.mxu0 %v7640
      %9803 = vmatpush.bf16.msra.mxu0 %v7637
      %9804 = vmatpush.bf16.msra.mxu0 %v7634
      %9805 = vmatmul.bf16.gmra.mxu0 %v5905
      %v9806 = vpop.f32.mrf.mxu0
      %v9807 = vadd.f32 %v9718, %v9806
      %v9808 = vpop.f32.mrf.mxu0
      %v9809 = vadd.f32 %v9720, %v9808
      %9810 = vmatmul.bf16.gmra.mxu0 %v5917
      %v9811 = vpop.f32.mrf.mxu0
      %v9812 = vadd.f32 %v9723, %v9811
      %v9813 = vpop.f32.mrf.mxu0
      %v9814 = vadd.f32 %v9725, %v9813
      %9815 = vmatmul.bf16.gmra.mxu0 %v5929
      %v9816 = vpop.f32.mrf.mxu0
      %v9817 = vadd.f32 %v9728, %v9816
      %v9818 = vpop.f32.mrf.mxu0
      %v9819 = vadd.f32 %v9730, %v9818
      %9820 = vmatmul.bf16.gmra.mxu0 %v5941
      %v9821 = vpop.f32.mrf.mxu0
      %v9822 = vadd.f32 %v9733, %v9821
      %v9823 = vpop.f32.mrf.mxu0
      %v9824 = vadd.f32 %v9735, %v9823
      %9825 = vmatmul.bf16.gmra.mxu0 %v5953
      %v9826 = vpop.f32.mrf.mxu0
      %v9827 = vadd.f32 %v9738, %v9826
      %v9828 = vpop.f32.mrf.mxu0
      %v9829 = vadd.f32 %v9740, %v9828
      %9830 = vmatmul.bf16.gmra.mxu0 %v5965
      %v9831 = vpop.f32.mrf.mxu0
      %v9832 = vadd.f32 %v9743, %v9831
      %v9833 = vpop.f32.mrf.mxu0
      %v9834 = vadd.f32 %v9745, %v9833
      %9835 = vmatmul.bf16.gmra.mxu0 %v5977
      %v9836 = vpop.f32.mrf.mxu0
      %v9837 = vadd.f32 %v9748, %v9836
      %v9838 = vpop.f32.mrf.mxu0
      %v9839 = vadd.f32 %v9750, %v9838
      %9840 = vmatmul.bf16.gmra.mxu0 %v5989
      %v9841 = vpop.f32.mrf.mxu0
      %v9842 = vadd.f32 %v9753, %v9841
      %v9843 = vpop.f32.mrf.mxu0
      %v9844 = vadd.f32 %v9755, %v9843
      %9845 = vmatmul.bf16.gmra.mxu0 %v6001
      %v9846 = vpop.f32.mrf.mxu0
      %v9847 = vadd.f32 %v9758, %v9846
      %v9848 = vpop.f32.mrf.mxu0
      %v9849 = vadd.f32 %v9760, %v9848
      %9850 = vmatmul.bf16.gmra.mxu0 %v6013
      %v9851 = vpop.f32.mrf.mxu0
      %v9852 = vadd.f32 %v9763, %v9851
      %v9853 = vpop.f32.mrf.mxu0
      %v9854 = vadd.f32 %v9765, %v9853
      %9855 = vmatmul.bf16.gmra.mxu0 %v6025
      %v9856 = vpop.f32.mrf.mxu0
      %v9857 = vadd.f32 %v9768, %v9856
      %v9858 = vpop.f32.mrf.mxu0
      %v9859 = vadd.f32 %v9770, %v9858
      %9860 = vmatmul.bf16.gmra.mxu0 %v6037
      %v9861 = vpop.f32.mrf.mxu0
      %v9862 = vadd.f32 %v9773, %v9861
      %v9863 = vpop.f32.mrf.mxu0
      %v9864 = vadd.f32 %v9775, %v9863
      %9865 = vmatmul.bf16.gmra.mxu0 %v6049
      %v9866 = vpop.f32.mrf.mxu0
      %v9867 = vadd.f32 %v9778, %v9866
      %v9868 = vpop.f32.mrf.mxu0
      %v9869 = vadd.f32 %v9780, %v9868
      %9870 = vmatmul.bf16.gmra.mxu0 %v6061
      %v9871 = vpop.f32.mrf.mxu0
      %v9872 = vadd.f32 %v9783, %v9871
      %v9873 = vpop.f32.mrf.mxu0
      %v9874 = vadd.f32 %v9785, %v9873
      %9875 = vmatmul.bf16.gmra.mxu0 %v6073
      %v9876 = vpop.f32.mrf.mxu0
      %v9877 = vadd.f32 %v9788, %v9876
      %v9878 = vpop.f32.mrf.mxu0
      %v9879 = vadd.f32 %v9790, %v9878
      %9880 = vmatmul.bf16.gmra.mxu0 %v6085
      %v9881 = vpop.f32.mrf.mxu0
      %v9882 = vadd.f32 %v9793, %v9881
      %v9883 = vpop.f32.mrf.mxu0
      %v9884 = vadd.f32 %v9795, %v9883
      %9885 = vdwg.mxu0
      %9886 = vmatpush.bf16.msra.mxu0 %v7679
      %9887 = vmatpush.bf16.msra.mxu0 %v7676
      %9888 = vmatpush.bf16.msra.mxu0 %v7673
      %9889 = vmatpush.bf16.msra.mxu0 %v7670
      %9890 = vmatpush.bf16.msra.mxu0 %v7667
      %9891 = vmatpush.bf16.msra.mxu0 %v7664
      %9892 = vmatpush.bf16.msra.mxu0 %v7661
      %9893 = vmatpush.bf16.msra.mxu0 %v7658
      %9894 = vmatmul.bf16.gmra.mxu0 %v5906
      %v9895 = vpop.f32.mrf.mxu0
      %v9896 = vadd.f32 %v9807, %v9895
      %v9897 = vpop.f32.mrf.mxu0
      %v9898 = vadd.f32 %v9809, %v9897
      %9899 = vmatmul.bf16.gmra.mxu0 %v5918
      %v9900 = vpop.f32.mrf.mxu0
      %v9901 = vadd.f32 %v9812, %v9900
      %v9902 = vpop.f32.mrf.mxu0
      %v9903 = vadd.f32 %v9814, %v9902
      %9904 = vmatmul.bf16.gmra.mxu0 %v5930
      %v9905 = vpop.f32.mrf.mxu0
      %v9906 = vadd.f32 %v9817, %v9905
      %v9907 = vpop.f32.mrf.mxu0
      %v9908 = vadd.f32 %v9819, %v9907
      %9909 = vmatmul.bf16.gmra.mxu0 %v5942
      %v9910 = vpop.f32.mrf.mxu0
      %v9911 = vadd.f32 %v9822, %v9910
      %v9912 = vpop.f32.mrf.mxu0
      %v9913 = vadd.f32 %v9824, %v9912
      %9914 = vmatmul.bf16.gmra.mxu0 %v5954
      %v9915 = vpop.f32.mrf.mxu0
      %v9916 = vadd.f32 %v9827, %v9915
      %v9917 = vpop.f32.mrf.mxu0
      %v9918 = vadd.f32 %v9829, %v9917
      %9919 = vmatmul.bf16.gmra.mxu0 %v5966
      %v9920 = vpop.f32.mrf.mxu0
      %v9921 = vadd.f32 %v9832, %v9920
      %v9922 = vpop.f32.mrf.mxu0
      %v9923 = vadd.f32 %v9834, %v9922
      %9924 = vmatmul.bf16.gmra.mxu0 %v5978
      %v9925 = vpop.f32.mrf.mxu0
      %v9926 = vadd.f32 %v9837, %v9925
      %v9927 = vpop.f32.mrf.mxu0
      %v9928 = vadd.f32 %v9839, %v9927
      %9929 = vmatmul.bf16.gmra.mxu0 %v5990
      %v9930 = vpop.f32.mrf.mxu0
      %v9931 = vadd.f32 %v9842, %v9930
      %v9932 = vpop.f32.mrf.mxu0
      %v9933 = vadd.f32 %v9844, %v9932
      %9934 = vmatmul.bf16.gmra.mxu0 %v6002
      %v9935 = vpop.f32.mrf.mxu0
      %v9936 = vadd.f32 %v9847, %v9935
      %v9937 = vpop.f32.mrf.mxu0
      %v9938 = vadd.f32 %v9849, %v9937
      %9939 = vmatmul.bf16.gmra.mxu0 %v6014
      %v9940 = vpop.f32.mrf.mxu0
      %v9941 = vadd.f32 %v9852, %v9940
      %v9942 = vpop.f32.mrf.mxu0
      %v9943 = vadd.f32 %v9854, %v9942
      %9944 = vmatmul.bf16.gmra.mxu0 %v6026
      %v9945 = vpop.f32.mrf.mxu0
      %v9946 = vadd.f32 %v9857, %v9945
      %v9947 = vpop.f32.mrf.mxu0
      %v9948 = vadd.f32 %v9859, %v9947
      %9949 = vmatmul.bf16.gmra.mxu0 %v6038
      %v9950 = vpop.f32.mrf.mxu0
      %v9951 = vadd.f32 %v9862, %v9950
      %v9952 = vpop.f32.mrf.mxu0
      %v9953 = vadd.f32 %v9864, %v9952
      %9954 = vmatmul.bf16.gmra.mxu0 %v6050
      %v9955 = vpop.f32.mrf.mxu0
      %v9956 = vadd.f32 %v9867, %v9955
      %v9957 = vpop.f32.mrf.mxu0
      %v9958 = vadd.f32 %v9869, %v9957
      %9959 = vmatmul.bf16.gmra.mxu0 %v6062
      %v9960 = vpop.f32.mrf.mxu0
      %v9961 = vadd.f32 %v9872, %v9960
      %v9962 = vpop.f32.mrf.mxu0
      %v9963 = vadd.f32 %v9874, %v9962
      %9964 = vmatmul.bf16.gmra.mxu0 %v6074
      %v9965 = vpop.f32.mrf.mxu0
      %v9966 = vadd.f32 %v9877, %v9965
      %v9967 = vpop.f32.mrf.mxu0
      %v9968 = vadd.f32 %v9879, %v9967
      %9969 = vmatmul.bf16.gmra.mxu0 %v6086
      %v9970 = vpop.f32.mrf.mxu0
      %v9971 = vadd.f32 %v9882, %v9970
      %v9972 = vpop.f32.mrf.mxu0
      %v9973 = vadd.f32 %v9884, %v9972
      %9974 = vdwg.mxu0
      %9975 = vmatpush.bf16.msra.mxu0 %v7703
      %9976 = vmatpush.bf16.msra.mxu0 %v7700
      %9977 = vmatpush.bf16.msra.mxu0 %v7697
      %9978 = vmatpush.bf16.msra.mxu0 %v7694
      %9979 = vmatpush.bf16.msra.mxu0 %v7691
      %9980 = vmatpush.bf16.msra.mxu0 %v7688
      %9981 = vmatpush.bf16.msra.mxu0 %v7685
      %9982 = vmatpush.bf16.msra.mxu0 %v7682
      %9983 = vmatmul.bf16.gmra.mxu0 %v5907
      %v9984 = vpop.f32.mrf.mxu0
      %v9985 = vadd.f32 %v9896, %v9984
      %v9986 = vpop.f32.mrf.mxu0
      %v9987 = vadd.f32 %v9898, %v9986
      %9988 = vmatmul.bf16.gmra.mxu0 %v5919
      %v9989 = vpop.f32.mrf.mxu0
      %v9990 = vadd.f32 %v9901, %v9989
      %v9991 = vpop.f32.mrf.mxu0
      %v9992 = vadd.f32 %v9903, %v9991
      %9993 = vmatmul.bf16.gmra.mxu0 %v5931
      %v9994 = vpop.f32.mrf.mxu0
      %v9995 = vadd.f32 %v9906, %v9994
      %v9996 = vpop.f32.mrf.mxu0
      %v9997 = vadd.f32 %v9908, %v9996
      %9998 = vmatmul.bf16.gmra.mxu0 %v5943
      %v9999 = vpop.f32.mrf.mxu0
      %v10000 = vadd.f32 %v9911, %v9999
      %v10001 = vpop.f32.mrf.mxu0
      %v10002 = vadd.f32 %v9913, %v10001
      %10003 = vmatmul.bf16.gmra.mxu0 %v5955
      %v10004 = vpop.f32.mrf.mxu0
      %v10005 = vadd.f32 %v9916, %v10004
      %v10006 = vpop.f32.mrf.mxu0
      %v10007 = vadd.f32 %v9918, %v10006
      %10008 = vmatmul.bf16.gmra.mxu0 %v5967
      %v10009 = vpop.f32.mrf.mxu0
      %v10010 = vadd.f32 %v9921, %v10009
      %v10011 = vpop.f32.mrf.mxu0
      %v10012 = vadd.f32 %v9923, %v10011
      %10013 = vmatmul.bf16.gmra.mxu0 %v5979
      %v10014 = vpop.f32.mrf.mxu0
      %v10015 = vadd.f32 %v9926, %v10014
      %v10016 = vpop.f32.mrf.mxu0
      %v10017 = vadd.f32 %v9928, %v10016
      %10018 = vmatmul.bf16.gmra.mxu0 %v5991
      %v10019 = vpop.f32.mrf.mxu0
      %v10020 = vadd.f32 %v9931, %v10019
      %v10021 = vpop.f32.mrf.mxu0
      %v10022 = vadd.f32 %v9933, %v10021
      %10023 = vmatmul.bf16.gmra.mxu0 %v6003
      %v10024 = vpop.f32.mrf.mxu0
      %v10025 = vadd.f32 %v9936, %v10024
      %v10026 = vpop.f32.mrf.mxu0
      %v10027 = vadd.f32 %v9938, %v10026
      %10028 = vmatmul.bf16.gmra.mxu0 %v6015
      %v10029 = vpop.f32.mrf.mxu0
      %v10030 = vadd.f32 %v9941, %v10029
      %v10031 = vpop.f32.mrf.mxu0
      %v10032 = vadd.f32 %v9943, %v10031
      %10033 = vmatmul.bf16.gmra.mxu0 %v6027
      %v10034 = vpop.f32.mrf.mxu0
      %v10035 = vadd.f32 %v9946, %v10034
      %v10036 = vpop.f32.mrf.mxu0
      %v10037 = vadd.f32 %v9948, %v10036
      %10038 = vmatmul.bf16.gmra.mxu0 %v6039
      %v10039 = vpop.f32.mrf.mxu0
      %v10040 = vadd.f32 %v9951, %v10039
      %v10041 = vpop.f32.mrf.mxu0
      %v10042 = vadd.f32 %v9953, %v10041
      %10043 = vmatmul.bf16.gmra.mxu0 %v6051
      %v10044 = vpop.f32.mrf.mxu0
      %v10045 = vadd.f32 %v9956, %v10044
      %v10046 = vpop.f32.mrf.mxu0
      %v10047 = vadd.f32 %v9958, %v10046
      %10048 = vmatmul.bf16.gmra.mxu0 %v6063
      %v10049 = vpop.f32.mrf.mxu0
      %v10050 = vadd.f32 %v9961, %v10049
      %v10051 = vpop.f32.mrf.mxu0
      %v10052 = vadd.f32 %v9963, %v10051
      %10053 = vmatmul.bf16.gmra.mxu0 %v6075
      %v10054 = vpop.f32.mrf.mxu0
      %v10055 = vadd.f32 %v9966, %v10054
      %v10056 = vpop.f32.mrf.mxu0
      %v10057 = vadd.f32 %v9968, %v10056
      %10058 = vmatmul.bf16.gmra.mxu0 %v6087
      %v10059 = vpop.f32.mrf.mxu0
      %v10060 = vadd.f32 %v9971, %v10059
      %v10061 = vpop.f32.mrf.mxu0
      %v10062 = vadd.f32 %v9973, %v10061
      %10063 = vdwg.mxu0
      %10064 = vmatpush.bf16.msra.mxu0 %v7727
      %10065 = vmatpush.bf16.msra.mxu0 %v7724
      %10066 = vmatpush.bf16.msra.mxu0 %v7721
      %10067 = vmatpush.bf16.msra.mxu0 %v7718
      %10068 = vmatpush.bf16.msra.mxu0 %v7715
      %10069 = vmatpush.bf16.msra.mxu0 %v7712
      %10070 = vmatpush.bf16.msra.mxu0 %v7709
      %10071 = vmatpush.bf16.msra.mxu0 %v7706
      %10072 = vmatmul.bf16.gmra.mxu0 %v5908
      %v10073 = vpop.f32.mrf.mxu0
      %v10074 = vadd.f32 %v9985, %v10073
      %v10075 = vpop.f32.mrf.mxu0
      %v10076 = vadd.f32 %v9987, %v10075
      %10077 = vmatmul.bf16.gmra.mxu0 %v5920
      %v10078 = vpop.f32.mrf.mxu0
      %v10079 = vadd.f32 %v9990, %v10078
      %v10080 = vpop.f32.mrf.mxu0
      %v10081 = vadd.f32 %v9992, %v10080
      %10082 = vmatmul.bf16.gmra.mxu0 %v5932
      %v10083 = vpop.f32.mrf.mxu0
      %v10084 = vadd.f32 %v9995, %v10083
      %v10085 = vpop.f32.mrf.mxu0
      %v10086 = vadd.f32 %v9997, %v10085
      %10087 = vmatmul.bf16.gmra.mxu0 %v5944
      %v10088 = vpop.f32.mrf.mxu0
      %v10089 = vadd.f32 %v10000, %v10088
      %v10090 = vpop.f32.mrf.mxu0
      %v10091 = vadd.f32 %v10002, %v10090
      %10092 = vmatmul.bf16.gmra.mxu0 %v5956
      %v10093 = vpop.f32.mrf.mxu0
      %v10094 = vadd.f32 %v10005, %v10093
      %v10095 = vpop.f32.mrf.mxu0
      %v10096 = vadd.f32 %v10007, %v10095
      %10097 = vmatmul.bf16.gmra.mxu0 %v5968
      %v10098 = vpop.f32.mrf.mxu0
      %v10099 = vadd.f32 %v10010, %v10098
      %v10100 = vpop.f32.mrf.mxu0
      %v10101 = vadd.f32 %v10012, %v10100
      %10102 = vmatmul.bf16.gmra.mxu0 %v5980
      %v10103 = vpop.f32.mrf.mxu0
      %v10104 = vadd.f32 %v10015, %v10103
      %v10105 = vpop.f32.mrf.mxu0
      %v10106 = vadd.f32 %v10017, %v10105
      %10107 = vmatmul.bf16.gmra.mxu0 %v5992
      %v10108 = vpop.f32.mrf.mxu0
      %v10109 = vadd.f32 %v10020, %v10108
      %v10110 = vpop.f32.mrf.mxu0
      %v10111 = vadd.f32 %v10022, %v10110
      %10112 = vmatmul.bf16.gmra.mxu0 %v6004
      %v10113 = vpop.f32.mrf.mxu0
      %v10114 = vadd.f32 %v10025, %v10113
      %v10115 = vpop.f32.mrf.mxu0
      %v10116 = vadd.f32 %v10027, %v10115
      %10117 = vmatmul.bf16.gmra.mxu0 %v6016
      %v10118 = vpop.f32.mrf.mxu0
      %v10119 = vadd.f32 %v10030, %v10118
      %v10120 = vpop.f32.mrf.mxu0
      %v10121 = vadd.f32 %v10032, %v10120
      %10122 = vmatmul.bf16.gmra.mxu0 %v6028
      %v10123 = vpop.f32.mrf.mxu0
      %v10124 = vadd.f32 %v10035, %v10123
      %v10125 = vpop.f32.mrf.mxu0
      %v10126 = vadd.f32 %v10037, %v10125
      %10127 = vmatmul.bf16.gmra.mxu0 %v6040
      %v10128 = vpop.f32.mrf.mxu0
      %v10129 = vadd.f32 %v10040, %v10128
      %v10130 = vpop.f32.mrf.mxu0
      %v10131 = vadd.f32 %v10042, %v10130
      %10132 = vmatmul.bf16.gmra.mxu0 %v6052
      %v10133 = vpop.f32.mrf.mxu0
      %v10134 = vadd.f32 %v10045, %v10133
      %v10135 = vpop.f32.mrf.mxu0
      %v10136 = vadd.f32 %v10047, %v10135
      %10137 = vmatmul.bf16.gmra.mxu0 %v6064
      %v10138 = vpop.f32.mrf.mxu0
      %v10139 = vadd.f32 %v10050, %v10138
      %v10140 = vpop.f32.mrf.mxu0
      %v10141 = vadd.f32 %v10052, %v10140
      %10142 = vmatmul.bf16.gmra.mxu0 %v6076
      %v10143 = vpop.f32.mrf.mxu0
      %v10144 = vadd.f32 %v10055, %v10143
      %v10145 = vpop.f32.mrf.mxu0
      %v10146 = vadd.f32 %v10057, %v10145
      %10147 = vmatmul.bf16.gmra.mxu0 %v6088
      %v10148 = vpop.f32.mrf.mxu0
      %v10149 = vadd.f32 %v10060, %v10148
      %v10150 = vpop.f32.mrf.mxu0
      %v10151 = vadd.f32 %v10062, %v10150
      %10152 = vdwg.mxu0
      %10153 = vmatpush.bf16.msra.mxu0 %v7464
      %10154 = vmatpush.bf16.msra.mxu0 %v7461
      %10155 = vmatpush.bf16.msra.mxu0 %v7458
      %10156 = vmatpush.bf16.msra.mxu0 %v7455
      %10157 = vmatpush.bf16.msra.mxu0 %v7452
      %10158 = vmatpush.bf16.msra.mxu0 %v7449
      %10159 = vmatpush.bf16.msra.mxu0 %v7446
      %10160 = vmatpush.bf16.msra.mxu0 %v7443
      %10161 = vmatmul.bf16.gmra.mxu0 %v5897
      %v10162 = vpop.f32.mrf.mxu0
      %v10163 = vadd.f32 %v6477, %v10162
      %v10164 = vpop.f32.mrf.mxu0
      %v10165 = vadd.f32 %v6477, %v10164
      %10166 = vmatmul.bf16.gmra.mxu0 %v5909
      %v10167 = vpop.f32.mrf.mxu0
      %v10168 = vadd.f32 %v6477, %v10167
      %v10169 = vpop.f32.mrf.mxu0
      %v10170 = vadd.f32 %v6477, %v10169
      %10171 = vmatmul.bf16.gmra.mxu0 %v5921
      %v10172 = vpop.f32.mrf.mxu0
      %v10173 = vadd.f32 %v6477, %v10172
      %v10174 = vpop.f32.mrf.mxu0
      %v10175 = vadd.f32 %v6477, %v10174
      %10176 = vmatmul.bf16.gmra.mxu0 %v5933
      %v10177 = vpop.f32.mrf.mxu0
      %v10178 = vadd.f32 %v6477, %v10177
      %v10179 = vpop.f32.mrf.mxu0
      %v10180 = vadd.f32 %v6477, %v10179
      %10181 = vmatmul.bf16.gmra.mxu0 %v5945
      %v10182 = vpop.f32.mrf.mxu0
      %v10183 = vadd.f32 %v6477, %v10182
      %v10184 = vpop.f32.mrf.mxu0
      %v10185 = vadd.f32 %v6477, %v10184
      %10186 = vmatmul.bf16.gmra.mxu0 %v5957
      %v10187 = vpop.f32.mrf.mxu0
      %v10188 = vadd.f32 %v6477, %v10187
      %v10189 = vpop.f32.mrf.mxu0
      %v10190 = vadd.f32 %v6477, %v10189
      %10191 = vmatmul.bf16.gmra.mxu0 %v5969
      %v10192 = vpop.f32.mrf.mxu0
      %v10193 = vadd.f32 %v6477, %v10192
      %v10194 = vpop.f32.mrf.mxu0
      %v10195 = vadd.f32 %v6477, %v10194
      %10196 = vmatmul.bf16.gmra.mxu0 %v5981
      %v10197 = vpop.f32.mrf.mxu0
      %v10198 = vadd.f32 %v6477, %v10197
      %v10199 = vpop.f32.mrf.mxu0
      %v10200 = vadd.f32 %v6477, %v10199
      %10201 = vmatmul.bf16.gmra.mxu0 %v5993
      %v10202 = vpop.f32.mrf.mxu0
      %v10203 = vadd.f32 %v6477, %v10202
      %v10204 = vpop.f32.mrf.mxu0
      %v10205 = vadd.f32 %v6477, %v10204
      %10206 = vmatmul.bf16.gmra.mxu0 %v6005
      %v10207 = vpop.f32.mrf.mxu0
      %v10208 = vadd.f32 %v6477, %v10207
      %v10209 = vpop.f32.mrf.mxu0
      %v10210 = vadd.f32 %v6477, %v10209
      %10211 = vmatmul.bf16.gmra.mxu0 %v6017
      %v10212 = vpop.f32.mrf.mxu0
      %v10213 = vadd.f32 %v6477, %v10212
      %v10214 = vpop.f32.mrf.mxu0
      %v10215 = vadd.f32 %v6477, %v10214
      %10216 = vmatmul.bf16.gmra.mxu0 %v6029
      %v10217 = vpop.f32.mrf.mxu0
      %v10218 = vadd.f32 %v6477, %v10217
      %v10219 = vpop.f32.mrf.mxu0
      %v10220 = vadd.f32 %v6477, %v10219
      %10221 = vmatmul.bf16.gmra.mxu0 %v6041
      %v10222 = vpop.f32.mrf.mxu0
      %v10223 = vadd.f32 %v6477, %v10222
      %v10224 = vpop.f32.mrf.mxu0
      %v10225 = vadd.f32 %v6477, %v10224
      %10226 = vmatmul.bf16.gmra.mxu0 %v6053
      %v10227 = vpop.f32.mrf.mxu0
      %v10228 = vadd.f32 %v6477, %v10227
      %v10229 = vpop.f32.mrf.mxu0
      %v10230 = vadd.f32 %v6477, %v10229
      %10231 = vmatmul.bf16.gmra.mxu0 %v6065
      %v10232 = vpop.f32.mrf.mxu0
      %v10233 = vadd.f32 %v6477, %v10232
      %v10234 = vpop.f32.mrf.mxu0
      %v10235 = vadd.f32 %v6477, %v10234
      %10236 = vmatmul.bf16.gmra.mxu0 %v6077
      %v10237 = vpop.f32.mrf.mxu0
      %v10238 = vadd.f32 %v6477, %v10237
      %v10239 = vpop.f32.mrf.mxu0
      %v10240 = vadd.f32 %v6477, %v10239
      %10241 = vdwg.mxu0
      %10242 = vmatpush.bf16.msra.mxu0 %v7488
      %10243 = vmatpush.bf16.msra.mxu0 %v7485
      %10244 = vmatpush.bf16.msra.mxu0 %v7482
      %10245 = vmatpush.bf16.msra.mxu0 %v7479
      %10246 = vmatpush.bf16.msra.mxu0 %v7476
      %10247 = vmatpush.bf16.msra.mxu0 %v7473
      %10248 = vmatpush.bf16.msra.mxu0 %v7470
      %10249 = vmatpush.bf16.msra.mxu0 %v7467
      %10250 = vmatmul.bf16.gmra.mxu0 %v5898
      %v10251 = vpop.f32.mrf.mxu0
      %v10252 = vadd.f32 %v10163, %v10251
      %v10253 = vpop.f32.mrf.mxu0
      %v10254 = vadd.f32 %v10165, %v10253
      %10255 = vmatmul.bf16.gmra.mxu0 %v5910
      %v10256 = vpop.f32.mrf.mxu0
      %v10257 = vadd.f32 %v10168, %v10256
      %v10258 = vpop.f32.mrf.mxu0
      %v10259 = vadd.f32 %v10170, %v10258
      %10260 = vmatmul.bf16.gmra.mxu0 %v5922
      %v10261 = vpop.f32.mrf.mxu0
      %v10262 = vadd.f32 %v10173, %v10261
      %v10263 = vpop.f32.mrf.mxu0
      %v10264 = vadd.f32 %v10175, %v10263
      %10265 = vmatmul.bf16.gmra.mxu0 %v5934
      %v10266 = vpop.f32.mrf.mxu0
      %v10267 = vadd.f32 %v10178, %v10266
      %v10268 = vpop.f32.mrf.mxu0
      %v10269 = vadd.f32 %v10180, %v10268
      %10270 = vmatmul.bf16.gmra.mxu0 %v5946
      %v10271 = vpop.f32.mrf.mxu0
      %v10272 = vadd.f32 %v10183, %v10271
      %v10273 = vpop.f32.mrf.mxu0
      %v10274 = vadd.f32 %v10185, %v10273
      %10275 = vmatmul.bf16.gmra.mxu0 %v5958
      %v10276 = vpop.f32.mrf.mxu0
      %v10277 = vadd.f32 %v10188, %v10276
      %v10278 = vpop.f32.mrf.mxu0
      %v10279 = vadd.f32 %v10190, %v10278
      %10280 = vmatmul.bf16.gmra.mxu0 %v5970
      %v10281 = vpop.f32.mrf.mxu0
      %v10282 = vadd.f32 %v10193, %v10281
      %v10283 = vpop.f32.mrf.mxu0
      %v10284 = vadd.f32 %v10195, %v10283
      %10285 = vmatmul.bf16.gmra.mxu0 %v5982
      %v10286 = vpop.f32.mrf.mxu0
      %v10287 = vadd.f32 %v10198, %v10286
      %v10288 = vpop.f32.mrf.mxu0
      %v10289 = vadd.f32 %v10200, %v10288
      %10290 = vmatmul.bf16.gmra.mxu0 %v5994
      %v10291 = vpop.f32.mrf.mxu0
      %v10292 = vadd.f32 %v10203, %v10291
      %v10293 = vpop.f32.mrf.mxu0
      %v10294 = vadd.f32 %v10205, %v10293
      %10295 = vmatmul.bf16.gmra.mxu0 %v6006
      %v10296 = vpop.f32.mrf.mxu0
      %v10297 = vadd.f32 %v10208, %v10296
      %v10298 = vpop.f32.mrf.mxu0
      %v10299 = vadd.f32 %v10210, %v10298
      %10300 = vmatmul.bf16.gmra.mxu0 %v6018
      %v10301 = vpop.f32.mrf.mxu0
      %v10302 = vadd.f32 %v10213, %v10301
      %v10303 = vpop.f32.mrf.mxu0
      %v10304 = vadd.f32 %v10215, %v10303
      %10305 = vmatmul.bf16.gmra.mxu0 %v6030
      %v10306 = vpop.f32.mrf.mxu0
      %v10307 = vadd.f32 %v10218, %v10306
      %v10308 = vpop.f32.mrf.mxu0
      %v10309 = vadd.f32 %v10220, %v10308
      %10310 = vmatmul.bf16.gmra.mxu0 %v6042
      %v10311 = vpop.f32.mrf.mxu0
      %v10312 = vadd.f32 %v10223, %v10311
      %v10313 = vpop.f32.mrf.mxu0
      %v10314 = vadd.f32 %v10225, %v10313
      %10315 = vmatmul.bf16.gmra.mxu0 %v6054
      %v10316 = vpop.f32.mrf.mxu0
      %v10317 = vadd.f32 %v10228, %v10316
      %v10318 = vpop.f32.mrf.mxu0
      %v10319 = vadd.f32 %v10230, %v10318
      %10320 = vmatmul.bf16.gmra.mxu0 %v6066
      %v10321 = vpop.f32.mrf.mxu0
      %v10322 = vadd.f32 %v10233, %v10321
      %v10323 = vpop.f32.mrf.mxu0
      %v10324 = vadd.f32 %v10235, %v10323
      %10325 = vmatmul.bf16.gmra.mxu0 %v6078
      %v10326 = vpop.f32.mrf.mxu0
      %v10327 = vadd.f32 %v10238, %v10326
      %v10328 = vpop.f32.mrf.mxu0
      %v10329 = vadd.f32 %v10240, %v10328
      %10330 = vdwg.mxu0
      %10331 = vmatpush.bf16.msra.mxu0 %v7512
      %10332 = vmatpush.bf16.msra.mxu0 %v7509
      %10333 = vmatpush.bf16.msra.mxu0 %v7506
      %10334 = vmatpush.bf16.msra.mxu0 %v7503
      %10335 = vmatpush.bf16.msra.mxu0 %v7500
      %10336 = vmatpush.bf16.msra.mxu0 %v7497
      %10337 = vmatpush.bf16.msra.mxu0 %v7494
      %10338 = vmatpush.bf16.msra.mxu0 %v7491
      %10339 = vmatmul.bf16.gmra.mxu0 %v5899
      %v10340 = vpop.f32.mrf.mxu0
      %v10341 = vadd.f32 %v10252, %v10340
      %v10342 = vpop.f32.mrf.mxu0
      %v10343 = vadd.f32 %v10254, %v10342
      %10344 = vmatmul.bf16.gmra.mxu0 %v5911
      %v10345 = vpop.f32.mrf.mxu0
      %v10346 = vadd.f32 %v10257, %v10345
      %v10347 = vpop.f32.mrf.mxu0
      %v10348 = vadd.f32 %v10259, %v10347
      %10349 = vmatmul.bf16.gmra.mxu0 %v5923
      %v10350 = vpop.f32.mrf.mxu0
      %v10351 = vadd.f32 %v10262, %v10350
      %v10352 = vpop.f32.mrf.mxu0
      %v10353 = vadd.f32 %v10264, %v10352
      %10354 = vmatmul.bf16.gmra.mxu0 %v5935
      %v10355 = vpop.f32.mrf.mxu0
      %v10356 = vadd.f32 %v10267, %v10355
      %v10357 = vpop.f32.mrf.mxu0
      %v10358 = vadd.f32 %v10269, %v10357
      %10359 = vmatmul.bf16.gmra.mxu0 %v5947
      %v10360 = vpop.f32.mrf.mxu0
      %v10361 = vadd.f32 %v10272, %v10360
      %v10362 = vpop.f32.mrf.mxu0
      %v10363 = vadd.f32 %v10274, %v10362
      %10364 = vmatmul.bf16.gmra.mxu0 %v5959
      %v10365 = vpop.f32.mrf.mxu0
      %v10366 = vadd.f32 %v10277, %v10365
      %v10367 = vpop.f32.mrf.mxu0
      %v10368 = vadd.f32 %v10279, %v10367
      %10369 = vmatmul.bf16.gmra.mxu0 %v5971
      %v10370 = vpop.f32.mrf.mxu0
      %v10371 = vadd.f32 %v10282, %v10370
      %v10372 = vpop.f32.mrf.mxu0
      %v10373 = vadd.f32 %v10284, %v10372
      %10374 = vmatmul.bf16.gmra.mxu0 %v5983
      %v10375 = vpop.f32.mrf.mxu0
      %v10376 = vadd.f32 %v10287, %v10375
      %v10377 = vpop.f32.mrf.mxu0
      %v10378 = vadd.f32 %v10289, %v10377
      %10379 = vmatmul.bf16.gmra.mxu0 %v5995
      %v10380 = vpop.f32.mrf.mxu0
      %v10381 = vadd.f32 %v10292, %v10380
      %v10382 = vpop.f32.mrf.mxu0
      %v10383 = vadd.f32 %v10294, %v10382
      %10384 = vmatmul.bf16.gmra.mxu0 %v6007
      %v10385 = vpop.f32.mrf.mxu0
      %v10386 = vadd.f32 %v10297, %v10385
      %v10387 = vpop.f32.mrf.mxu0
      %v10388 = vadd.f32 %v10299, %v10387
      %10389 = vmatmul.bf16.gmra.mxu0 %v6019
      %v10390 = vpop.f32.mrf.mxu0
      %v10391 = vadd.f32 %v10302, %v10390
      %v10392 = vpop.f32.mrf.mxu0
      %v10393 = vadd.f32 %v10304, %v10392
      %10394 = vmatmul.bf16.gmra.mxu0 %v6031
      %v10395 = vpop.f32.mrf.mxu0
      %v10396 = vadd.f32 %v10307, %v10395
      %v10397 = vpop.f32.mrf.mxu0
      %v10398 = vadd.f32 %v10309, %v10397
      %10399 = vmatmul.bf16.gmra.mxu0 %v6043
      %v10400 = vpop.f32.mrf.mxu0
      %v10401 = vadd.f32 %v10312, %v10400
      %v10402 = vpop.f32.mrf.mxu0
      %v10403 = vadd.f32 %v10314, %v10402
      %10404 = vmatmul.bf16.gmra.mxu0 %v6055
      %v10405 = vpop.f32.mrf.mxu0
      %v10406 = vadd.f32 %v10317, %v10405
      %v10407 = vpop.f32.mrf.mxu0
      %v10408 = vadd.f32 %v10319, %v10407
      %10409 = vmatmul.bf16.gmra.mxu0 %v6067
      %v10410 = vpop.f32.mrf.mxu0
      %v10411 = vadd.f32 %v10322, %v10410
      %v10412 = vpop.f32.mrf.mxu0
      %v10413 = vadd.f32 %v10324, %v10412
      %10414 = vmatmul.bf16.gmra.mxu0 %v6079
      %v10415 = vpop.f32.mrf.mxu0
      %v10416 = vadd.f32 %v10327, %v10415
      %v10417 = vpop.f32.mrf.mxu0
      %v10418 = vadd.f32 %v10329, %v10417
      %10419 = vdwg.mxu0
      %10420 = vmatpush.bf16.msra.mxu0 %v7536
      %10421 = vmatpush.bf16.msra.mxu0 %v7533
      %10422 = vmatpush.bf16.msra.mxu0 %v7530
      %10423 = vmatpush.bf16.msra.mxu0 %v7527
      %10424 = vmatpush.bf16.msra.mxu0 %v7524
      %10425 = vmatpush.bf16.msra.mxu0 %v7521
      %10426 = vmatpush.bf16.msra.mxu0 %v7518
      %10427 = vmatpush.bf16.msra.mxu0 %v7515
      %10428 = vmatmul.bf16.gmra.mxu0 %v5900
      %v10429 = vpop.f32.mrf.mxu0
      %v10430 = vadd.f32 %v10341, %v10429
      %v10431 = vpop.f32.mrf.mxu0
      %v10432 = vadd.f32 %v10343, %v10431
      %10433 = vmatmul.bf16.gmra.mxu0 %v5912
      %v10434 = vpop.f32.mrf.mxu0
      %v10435 = vadd.f32 %v10346, %v10434
      %v10436 = vpop.f32.mrf.mxu0
      %v10437 = vadd.f32 %v10348, %v10436
      %10438 = vmatmul.bf16.gmra.mxu0 %v5924
      %v10439 = vpop.f32.mrf.mxu0
      %v10440 = vadd.f32 %v10351, %v10439
      %v10441 = vpop.f32.mrf.mxu0
      %v10442 = vadd.f32 %v10353, %v10441
      %10443 = vmatmul.bf16.gmra.mxu0 %v5936
      %v10444 = vpop.f32.mrf.mxu0
      %v10445 = vadd.f32 %v10356, %v10444
      %v10446 = vpop.f32.mrf.mxu0
      %v10447 = vadd.f32 %v10358, %v10446
      %10448 = vmatmul.bf16.gmra.mxu0 %v5948
      %v10449 = vpop.f32.mrf.mxu0
      %v10450 = vadd.f32 %v10361, %v10449
      %v10451 = vpop.f32.mrf.mxu0
      %v10452 = vadd.f32 %v10363, %v10451
      %10453 = vmatmul.bf16.gmra.mxu0 %v5960
      %v10454 = vpop.f32.mrf.mxu0
      %v10455 = vadd.f32 %v10366, %v10454
      %v10456 = vpop.f32.mrf.mxu0
      %v10457 = vadd.f32 %v10368, %v10456
      %10458 = vmatmul.bf16.gmra.mxu0 %v5972
      %v10459 = vpop.f32.mrf.mxu0
      %v10460 = vadd.f32 %v10371, %v10459
      %v10461 = vpop.f32.mrf.mxu0
      %v10462 = vadd.f32 %v10373, %v10461
      %10463 = vmatmul.bf16.gmra.mxu0 %v5984
      %v10464 = vpop.f32.mrf.mxu0
      %v10465 = vadd.f32 %v10376, %v10464
      %v10466 = vpop.f32.mrf.mxu0
      %v10467 = vadd.f32 %v10378, %v10466
      %10468 = vmatmul.bf16.gmra.mxu0 %v5996
      %v10469 = vpop.f32.mrf.mxu0
      %v10470 = vadd.f32 %v10381, %v10469
      %v10471 = vpop.f32.mrf.mxu0
      %v10472 = vadd.f32 %v10383, %v10471
      %10473 = vmatmul.bf16.gmra.mxu0 %v6008
      %v10474 = vpop.f32.mrf.mxu0
      %v10475 = vadd.f32 %v10386, %v10474
      %v10476 = vpop.f32.mrf.mxu0
      %v10477 = vadd.f32 %v10388, %v10476
      %10478 = vmatmul.bf16.gmra.mxu0 %v6020
      %v10479 = vpop.f32.mrf.mxu0
      %v10480 = vadd.f32 %v10391, %v10479
      %v10481 = vpop.f32.mrf.mxu0
      %v10482 = vadd.f32 %v10393, %v10481
      %10483 = vmatmul.bf16.gmra.mxu0 %v6032
      %v10484 = vpop.f32.mrf.mxu0
      %v10485 = vadd.f32 %v10396, %v10484
      %v10486 = vpop.f32.mrf.mxu0
      %v10487 = vadd.f32 %v10398, %v10486
      %10488 = vmatmul.bf16.gmra.mxu0 %v6044
      %v10489 = vpop.f32.mrf.mxu0
      %v10490 = vadd.f32 %v10401, %v10489
      %v10491 = vpop.f32.mrf.mxu0
      %v10492 = vadd.f32 %v10403, %v10491
      %10493 = vmatmul.bf16.gmra.mxu0 %v6056
      %v10494 = vpop.f32.mrf.mxu0
      %v10495 = vadd.f32 %v10406, %v10494
      %v10496 = vpop.f32.mrf.mxu0
      %v10497 = vadd.f32 %v10408, %v10496
      %10498 = vmatmul.bf16.gmra.mxu0 %v6068
      %v10499 = vpop.f32.mrf.mxu0
      %v10500 = vadd.f32 %v10411, %v10499
      %v10501 = vpop.f32.mrf.mxu0
      %v10502 = vadd.f32 %v10413, %v10501
      %10503 = vmatmul.bf16.gmra.mxu0 %v6080
      %v10504 = vpop.f32.mrf.mxu0
      %v10505 = vadd.f32 %v10416, %v10504
      %v10506 = vpop.f32.mrf.mxu0
      %v10507 = vadd.f32 %v10418, %v10506
      %10508 = vdwg.mxu0
      %10509 = vmatpush.bf16.msra.mxu0 %v7560
      %10510 = vmatpush.bf16.msra.mxu0 %v7557
      %10511 = vmatpush.bf16.msra.mxu0 %v7554
      %10512 = vmatpush.bf16.msra.mxu0 %v7551
      %10513 = vmatpush.bf16.msra.mxu0 %v7548
      %10514 = vmatpush.bf16.msra.mxu0 %v7545
      %10515 = vmatpush.bf16.msra.mxu0 %v7542
      %10516 = vmatpush.bf16.msra.mxu0 %v7539
      %10517 = vmatmul.bf16.gmra.mxu0 %v5901
      %v10518 = vpop.f32.mrf.mxu0
      %v10519 = vadd.f32 %v10430, %v10518
      %v10520 = vpop.f32.mrf.mxu0
      %v10521 = vadd.f32 %v10432, %v10520
      %10522 = vmatmul.bf16.gmra.mxu0 %v5913
      %v10523 = vpop.f32.mrf.mxu0
      %v10524 = vadd.f32 %v10435, %v10523
      %v10525 = vpop.f32.mrf.mxu0
      %v10526 = vadd.f32 %v10437, %v10525
      %10527 = vmatmul.bf16.gmra.mxu0 %v5925
      %v10528 = vpop.f32.mrf.mxu0
      %v10529 = vadd.f32 %v10440, %v10528
      %v10530 = vpop.f32.mrf.mxu0
      %v10531 = vadd.f32 %v10442, %v10530
      %10532 = vmatmul.bf16.gmra.mxu0 %v5937
      %v10533 = vpop.f32.mrf.mxu0
      %v10534 = vadd.f32 %v10445, %v10533
      %v10535 = vpop.f32.mrf.mxu0
      %v10536 = vadd.f32 %v10447, %v10535
      %10537 = vmatmul.bf16.gmra.mxu0 %v5949
      %v10538 = vpop.f32.mrf.mxu0
      %v10539 = vadd.f32 %v10450, %v10538
      %v10540 = vpop.f32.mrf.mxu0
      %v10541 = vadd.f32 %v10452, %v10540
      %10542 = vmatmul.bf16.gmra.mxu0 %v5961
      %v10543 = vpop.f32.mrf.mxu0
      %v10544 = vadd.f32 %v10455, %v10543
      %v10545 = vpop.f32.mrf.mxu0
      %v10546 = vadd.f32 %v10457, %v10545
      %10547 = vmatmul.bf16.gmra.mxu0 %v5973
      %v10548 = vpop.f32.mrf.mxu0
      %v10549 = vadd.f32 %v10460, %v10548
      %v10550 = vpop.f32.mrf.mxu0
      %v10551 = vadd.f32 %v10462, %v10550
      %10552 = vmatmul.bf16.gmra.mxu0 %v5985
      %v10553 = vpop.f32.mrf.mxu0
      %v10554 = vadd.f32 %v10465, %v10553
      %v10555 = vpop.f32.mrf.mxu0
      %v10556 = vadd.f32 %v10467, %v10555
      %10557 = vmatmul.bf16.gmra.mxu0 %v5997
      %v10558 = vpop.f32.mrf.mxu0
      %v10559 = vadd.f32 %v10470, %v10558
      %v10560 = vpop.f32.mrf.mxu0
      %v10561 = vadd.f32 %v10472, %v10560
      %10562 = vmatmul.bf16.gmra.mxu0 %v6009
      %v10563 = vpop.f32.mrf.mxu0
      %v10564 = vadd.f32 %v10475, %v10563
      %v10565 = vpop.f32.mrf.mxu0
      %v10566 = vadd.f32 %v10477, %v10565
      %10567 = vmatmul.bf16.gmra.mxu0 %v6021
      %v10568 = vpop.f32.mrf.mxu0
      %v10569 = vadd.f32 %v10480, %v10568
      %v10570 = vpop.f32.mrf.mxu0
      %v10571 = vadd.f32 %v10482, %v10570
      %10572 = vmatmul.bf16.gmra.mxu0 %v6033
      %v10573 = vpop.f32.mrf.mxu0
      %v10574 = vadd.f32 %v10485, %v10573
      %v10575 = vpop.f32.mrf.mxu0
      %v10576 = vadd.f32 %v10487, %v10575
      %10577 = vmatmul.bf16.gmra.mxu0 %v6045
      %v10578 = vpop.f32.mrf.mxu0
      %v10579 = vadd.f32 %v10490, %v10578
      %v10580 = vpop.f32.mrf.mxu0
      %v10581 = vadd.f32 %v10492, %v10580
      %10582 = vmatmul.bf16.gmra.mxu0 %v6057
      %v10583 = vpop.f32.mrf.mxu0
      %v10584 = vadd.f32 %v10495, %v10583
      %v10585 = vpop.f32.mrf.mxu0
      %v10586 = vadd.f32 %v10497, %v10585
      %10587 = vmatmul.bf16.gmra.mxu0 %v6069
      %v10588 = vpop.f32.mrf.mxu0
      %v10589 = vadd.f32 %v10500, %v10588
      %v10590 = vpop.f32.mrf.mxu0
      %v10591 = vadd.f32 %v10502, %v10590
      %10592 = vmatmul.bf16.gmra.mxu0 %v6081
      %v10593 = vpop.f32.mrf.mxu0
      %v10594 = vadd.f32 %v10505, %v10593
      %v10595 = vpop.f32.mrf.mxu0
      %v10596 = vadd.f32 %v10507, %v10595
      %10597 = vdwg.mxu0
      %10598 = vmatpush.bf16.msra.mxu0 %v7584
      %10599 = vmatpush.bf16.msra.mxu0 %v7581
      %10600 = vmatpush.bf16.msra.mxu0 %v7578
      %10601 = vmatpush.bf16.msra.mxu0 %v7575
      %10602 = vmatpush.bf16.msra.mxu0 %v7572
      %10603 = vmatpush.bf16.msra.mxu0 %v7569
      %10604 = vmatpush.bf16.msra.mxu0 %v7566
      %10605 = vmatpush.bf16.msra.mxu0 %v7563
      %10606 = vmatmul.bf16.gmra.mxu0 %v5902
      %v10607 = vpop.f32.mrf.mxu0
      %v10608 = vadd.f32 %v10519, %v10607
      %v10609 = vpop.f32.mrf.mxu0
      %v10610 = vadd.f32 %v10521, %v10609
      %10611 = vmatmul.bf16.gmra.mxu0 %v5914
      %v10612 = vpop.f32.mrf.mxu0
      %v10613 = vadd.f32 %v10524, %v10612
      %v10614 = vpop.f32.mrf.mxu0
      %v10615 = vadd.f32 %v10526, %v10614
      %10616 = vmatmul.bf16.gmra.mxu0 %v5926
      %v10617 = vpop.f32.mrf.mxu0
      %v10618 = vadd.f32 %v10529, %v10617
      %v10619 = vpop.f32.mrf.mxu0
      %v10620 = vadd.f32 %v10531, %v10619
      %10621 = vmatmul.bf16.gmra.mxu0 %v5938
      %v10622 = vpop.f32.mrf.mxu0
      %v10623 = vadd.f32 %v10534, %v10622
      %v10624 = vpop.f32.mrf.mxu0
      %v10625 = vadd.f32 %v10536, %v10624
      %10626 = vmatmul.bf16.gmra.mxu0 %v5950
      %v10627 = vpop.f32.mrf.mxu0
      %v10628 = vadd.f32 %v10539, %v10627
      %v10629 = vpop.f32.mrf.mxu0
      %v10630 = vadd.f32 %v10541, %v10629
      %10631 = vmatmul.bf16.gmra.mxu0 %v5962
      %v10632 = vpop.f32.mrf.mxu0
      %v10633 = vadd.f32 %v10544, %v10632
      %v10634 = vpop.f32.mrf.mxu0
      %v10635 = vadd.f32 %v10546, %v10634
      %10636 = vmatmul.bf16.gmra.mxu0 %v5974
      %v10637 = vpop.f32.mrf.mxu0
      %v10638 = vadd.f32 %v10549, %v10637
      %v10639 = vpop.f32.mrf.mxu0
      %v10640 = vadd.f32 %v10551, %v10639
      %10641 = vmatmul.bf16.gmra.mxu0 %v5986
      %v10642 = vpop.f32.mrf.mxu0
      %v10643 = vadd.f32 %v10554, %v10642
      %v10644 = vpop.f32.mrf.mxu0
      %v10645 = vadd.f32 %v10556, %v10644
      %10646 = vmatmul.bf16.gmra.mxu0 %v5998
      %v10647 = vpop.f32.mrf.mxu0
      %v10648 = vadd.f32 %v10559, %v10647
      %v10649 = vpop.f32.mrf.mxu0
      %v10650 = vadd.f32 %v10561, %v10649
      %10651 = vmatmul.bf16.gmra.mxu0 %v6010
      %v10652 = vpop.f32.mrf.mxu0
      %v10653 = vadd.f32 %v10564, %v10652
      %v10654 = vpop.f32.mrf.mxu0
      %v10655 = vadd.f32 %v10566, %v10654
      %10656 = vmatmul.bf16.gmra.mxu0 %v6022
      %v10657 = vpop.f32.mrf.mxu0
      %v10658 = vadd.f32 %v10569, %v10657
      %v10659 = vpop.f32.mrf.mxu0
      %v10660 = vadd.f32 %v10571, %v10659
      %10661 = vmatmul.bf16.gmra.mxu0 %v6034
      %v10662 = vpop.f32.mrf.mxu0
      %v10663 = vadd.f32 %v10574, %v10662
      %v10664 = vpop.f32.mrf.mxu0
      %v10665 = vadd.f32 %v10576, %v10664
      %10666 = vmatmul.bf16.gmra.mxu0 %v6046
      %v10667 = vpop.f32.mrf.mxu0
      %v10668 = vadd.f32 %v10579, %v10667
      %v10669 = vpop.f32.mrf.mxu0
      %v10670 = vadd.f32 %v10581, %v10669
      %10671 = vmatmul.bf16.gmra.mxu0 %v6058
      %v10672 = vpop.f32.mrf.mxu0
      %v10673 = vadd.f32 %v10584, %v10672
      %v10674 = vpop.f32.mrf.mxu0
      %v10675 = vadd.f32 %v10586, %v10674
      %10676 = vmatmul.bf16.gmra.mxu0 %v6070
      %v10677 = vpop.f32.mrf.mxu0
      %v10678 = vadd.f32 %v10589, %v10677
      %v10679 = vpop.f32.mrf.mxu0
      %v10680 = vadd.f32 %v10591, %v10679
      %10681 = vmatmul.bf16.gmra.mxu0 %v6082
      %v10682 = vpop.f32.mrf.mxu0
      %v10683 = vadd.f32 %v10594, %v10682
      %v10684 = vpop.f32.mrf.mxu0
      %v10685 = vadd.f32 %v10596, %v10684
      %10686 = vdwg.mxu0
      %10687 = vmatpush.bf16.msra.mxu0 %v7608
      %10688 = vmatpush.bf16.msra.mxu0 %v7605
      %10689 = vmatpush.bf16.msra.mxu0 %v7602
      %10690 = vmatpush.bf16.msra.mxu0 %v7599
      %10691 = vmatpush.bf16.msra.mxu0 %v7596
      %10692 = vmatpush.bf16.msra.mxu0 %v7593
      %10693 = vmatpush.bf16.msra.mxu0 %v7590
      %10694 = vmatpush.bf16.msra.mxu0 %v7587
      %10695 = vmatmul.bf16.gmra.mxu0 %v5903
      %v10696 = vpop.f32.mrf.mxu0
      %v10697 = vadd.f32 %v10608, %v10696
      %v10698 = vpop.f32.mrf.mxu0
      %v10699 = vadd.f32 %v10610, %v10698
      %10700 = vmatmul.bf16.gmra.mxu0 %v5915
      %v10701 = vpop.f32.mrf.mxu0
      %v10702 = vadd.f32 %v10613, %v10701
      %v10703 = vpop.f32.mrf.mxu0
      %v10704 = vadd.f32 %v10615, %v10703
      %10705 = vmatmul.bf16.gmra.mxu0 %v5927
      %v10706 = vpop.f32.mrf.mxu0
      %v10707 = vadd.f32 %v10618, %v10706
      %v10708 = vpop.f32.mrf.mxu0
      %v10709 = vadd.f32 %v10620, %v10708
      %10710 = vmatmul.bf16.gmra.mxu0 %v5939
      %v10711 = vpop.f32.mrf.mxu0
      %v10712 = vadd.f32 %v10623, %v10711
      %v10713 = vpop.f32.mrf.mxu0
      %v10714 = vadd.f32 %v10625, %v10713
      %10715 = vmatmul.bf16.gmra.mxu0 %v5951
      %v10716 = vpop.f32.mrf.mxu0
      %v10717 = vadd.f32 %v10628, %v10716
      %v10718 = vpop.f32.mrf.mxu0
      %v10719 = vadd.f32 %v10630, %v10718
      %10720 = vmatmul.bf16.gmra.mxu0 %v5963
      %v10721 = vpop.f32.mrf.mxu0
      %v10722 = vadd.f32 %v10633, %v10721
      %v10723 = vpop.f32.mrf.mxu0
      %v10724 = vadd.f32 %v10635, %v10723
      %10725 = vmatmul.bf16.gmra.mxu0 %v5975
      %v10726 = vpop.f32.mrf.mxu0
      %v10727 = vadd.f32 %v10638, %v10726
      %v10728 = vpop.f32.mrf.mxu0
      %v10729 = vadd.f32 %v10640, %v10728
      %10730 = vmatmul.bf16.gmra.mxu0 %v5987
      %v10731 = vpop.f32.mrf.mxu0
      %v10732 = vadd.f32 %v10643, %v10731
      %v10733 = vpop.f32.mrf.mxu0
      %v10734 = vadd.f32 %v10645, %v10733
      %10735 = vmatmul.bf16.gmra.mxu0 %v5999
      %v10736 = vpop.f32.mrf.mxu0
      %v10737 = vadd.f32 %v10648, %v10736
      %v10738 = vpop.f32.mrf.mxu0
      %v10739 = vadd.f32 %v10650, %v10738
      %10740 = vmatmul.bf16.gmra.mxu0 %v6011
      %v10741 = vpop.f32.mrf.mxu0
      %v10742 = vadd.f32 %v10653, %v10741
      %v10743 = vpop.f32.mrf.mxu0
      %v10744 = vadd.f32 %v10655, %v10743
      %10745 = vmatmul.bf16.gmra.mxu0 %v6023
      %v10746 = vpop.f32.mrf.mxu0
      %v10747 = vadd.f32 %v10658, %v10746
      %v10748 = vpop.f32.mrf.mxu0
      %v10749 = vadd.f32 %v10660, %v10748
      %10750 = vmatmul.bf16.gmra.mxu0 %v6035
      %v10751 = vpop.f32.mrf.mxu0
      %v10752 = vadd.f32 %v10663, %v10751
      %v10753 = vpop.f32.mrf.mxu0
      %v10754 = vadd.f32 %v10665, %v10753
      %10755 = vmatmul.bf16.gmra.mxu0 %v6047
      %v10756 = vpop.f32.mrf.mxu0
      %v10757 = vadd.f32 %v10668, %v10756
      %v10758 = vpop.f32.mrf.mxu0
      %v10759 = vadd.f32 %v10670, %v10758
      %10760 = vmatmul.bf16.gmra.mxu0 %v6059
      %v10761 = vpop.f32.mrf.mxu0
      %v10762 = vadd.f32 %v10673, %v10761
      %v10763 = vpop.f32.mrf.mxu0
      %v10764 = vadd.f32 %v10675, %v10763
      %10765 = vmatmul.bf16.gmra.mxu0 %v6071
      %v10766 = vpop.f32.mrf.mxu0
      %v10767 = vadd.f32 %v10678, %v10766
      %v10768 = vpop.f32.mrf.mxu0
      %v10769 = vadd.f32 %v10680, %v10768
      %10770 = vmatmul.bf16.gmra.mxu0 %v6083
      %v10771 = vpop.f32.mrf.mxu0
      %v10772 = vadd.f32 %v10683, %v10771
      %v10773 = vpop.f32.mrf.mxu0
      %v10774 = vadd.f32 %v10685, %v10773
      %10775 = vdwg.mxu0
      %10776 = vmatpush.bf16.msra.mxu0 %v7632
      %10777 = vmatpush.bf16.msra.mxu0 %v7629
      %10778 = vmatpush.bf16.msra.mxu0 %v7626
      %10779 = vmatpush.bf16.msra.mxu0 %v7623
      %10780 = vmatpush.bf16.msra.mxu0 %v7620
      %10781 = vmatpush.bf16.msra.mxu0 %v7617
      %10782 = vmatpush.bf16.msra.mxu0 %v7614
      %10783 = vmatpush.bf16.msra.mxu0 %v7611
      %10784 = vmatmul.bf16.gmra.mxu0 %v5904
      %v10785 = vpop.f32.mrf.mxu0
      %v10786 = vadd.f32 %v10697, %v10785
      %v10787 = vpop.f32.mrf.mxu0
      %v10788 = vadd.f32 %v10699, %v10787
      %10789 = vmatmul.bf16.gmra.mxu0 %v5916
      %v10790 = vpop.f32.mrf.mxu0
      %v10791 = vadd.f32 %v10702, %v10790
      %v10792 = vpop.f32.mrf.mxu0
      %v10793 = vadd.f32 %v10704, %v10792
      %10794 = vmatmul.bf16.gmra.mxu0 %v5928
      %v10795 = vpop.f32.mrf.mxu0
      %v10796 = vadd.f32 %v10707, %v10795
      %v10797 = vpop.f32.mrf.mxu0
      %v10798 = vadd.f32 %v10709, %v10797
      %10799 = vmatmul.bf16.gmra.mxu0 %v5940
      %v10800 = vpop.f32.mrf.mxu0
      %v10801 = vadd.f32 %v10712, %v10800
      %v10802 = vpop.f32.mrf.mxu0
      %v10803 = vadd.f32 %v10714, %v10802
      %10804 = vmatmul.bf16.gmra.mxu0 %v5952
      %v10805 = vpop.f32.mrf.mxu0
      %v10806 = vadd.f32 %v10717, %v10805
      %v10807 = vpop.f32.mrf.mxu0
      %v10808 = vadd.f32 %v10719, %v10807
      %10809 = vmatmul.bf16.gmra.mxu0 %v5964
      %v10810 = vpop.f32.mrf.mxu0
      %v10811 = vadd.f32 %v10722, %v10810
      %v10812 = vpop.f32.mrf.mxu0
      %v10813 = vadd.f32 %v10724, %v10812
      %10814 = vmatmul.bf16.gmra.mxu0 %v5976
      %v10815 = vpop.f32.mrf.mxu0
      %v10816 = vadd.f32 %v10727, %v10815
      %v10817 = vpop.f32.mrf.mxu0
      %v10818 = vadd.f32 %v10729, %v10817
      %10819 = vmatmul.bf16.gmra.mxu0 %v5988
      %v10820 = vpop.f32.mrf.mxu0
      %v10821 = vadd.f32 %v10732, %v10820
      %v10822 = vpop.f32.mrf.mxu0
      %v10823 = vadd.f32 %v10734, %v10822
      %10824 = vmatmul.bf16.gmra.mxu0 %v6000
      %v10825 = vpop.f32.mrf.mxu0
      %v10826 = vadd.f32 %v10737, %v10825
      %v10827 = vpop.f32.mrf.mxu0
      %v10828 = vadd.f32 %v10739, %v10827
      %10829 = vmatmul.bf16.gmra.mxu0 %v6012
      %v10830 = vpop.f32.mrf.mxu0
      %v10831 = vadd.f32 %v10742, %v10830
      %v10832 = vpop.f32.mrf.mxu0
      %v10833 = vadd.f32 %v10744, %v10832
      %10834 = vmatmul.bf16.gmra.mxu0 %v6024
      %v10835 = vpop.f32.mrf.mxu0
      %v10836 = vadd.f32 %v10747, %v10835
      %v10837 = vpop.f32.mrf.mxu0
      %v10838 = vadd.f32 %v10749, %v10837
      %10839 = vmatmul.bf16.gmra.mxu0 %v6036
      %v10840 = vpop.f32.mrf.mxu0
      %v10841 = vadd.f32 %v10752, %v10840
      %v10842 = vpop.f32.mrf.mxu0
      %v10843 = vadd.f32 %v10754, %v10842
      %10844 = vmatmul.bf16.gmra.mxu0 %v6048
      %v10845 = vpop.f32.mrf.mxu0
      %v10846 = vadd.f32 %v10757, %v10845
      %v10847 = vpop.f32.mrf.mxu0
      %v10848 = vadd.f32 %v10759, %v10847
      %10849 = vmatmul.bf16.gmra.mxu0 %v6060
      %v10850 = vpop.f32.mrf.mxu0
      %v10851 = vadd.f32 %v10762, %v10850
      %v10852 = vpop.f32.mrf.mxu0
      %v10853 = vadd.f32 %v10764, %v10852
      %10854 = vmatmul.bf16.gmra.mxu0 %v6072
      %v10855 = vpop.f32.mrf.mxu0
      %v10856 = vadd.f32 %v10767, %v10855
      %v10857 = vpop.f32.mrf.mxu0
      %v10858 = vadd.f32 %v10769, %v10857
      %10859 = vmatmul.bf16.gmra.mxu0 %v6084
      %v10860 = vpop.f32.mrf.mxu0
      %v10861 = vadd.f32 %v10772, %v10860
      %v10862 = vpop.f32.mrf.mxu0
      %v10863 = vadd.f32 %v10774, %v10862
      %10864 = vdwg.mxu0
      %10865 = vmatpush.bf16.msra.mxu0 %v7656
      %10866 = vmatpush.bf16.msra.mxu0 %v7653
      %10867 = vmatpush.bf16.msra.mxu0 %v7650
      %10868 = vmatpush.bf16.msra.mxu0 %v7647
      %10869 = vmatpush.bf16.msra.mxu0 %v7644
      %10870 = vmatpush.bf16.msra.mxu0 %v7641
      %10871 = vmatpush.bf16.msra.mxu0 %v7638
      %10872 = vmatpush.bf16.msra.mxu0 %v7635
      %10873 = vmatmul.bf16.gmra.mxu0 %v5905
      %v10874 = vpop.f32.mrf.mxu0
      %v10875 = vadd.f32 %v10786, %v10874
      %v10876 = vpop.f32.mrf.mxu0
      %v10877 = vadd.f32 %v10788, %v10876
      %10878 = vmatmul.bf16.gmra.mxu0 %v5917
      %v10879 = vpop.f32.mrf.mxu0
      %v10880 = vadd.f32 %v10791, %v10879
      %v10881 = vpop.f32.mrf.mxu0
      %v10882 = vadd.f32 %v10793, %v10881
      %10883 = vmatmul.bf16.gmra.mxu0 %v5929
      %v10884 = vpop.f32.mrf.mxu0
      %v10885 = vadd.f32 %v10796, %v10884
      %v10886 = vpop.f32.mrf.mxu0
      %v10887 = vadd.f32 %v10798, %v10886
      %10888 = vmatmul.bf16.gmra.mxu0 %v5941
      %v10889 = vpop.f32.mrf.mxu0
      %v10890 = vadd.f32 %v10801, %v10889
      %v10891 = vpop.f32.mrf.mxu0
      %v10892 = vadd.f32 %v10803, %v10891
      %10893 = vmatmul.bf16.gmra.mxu0 %v5953
      %v10894 = vpop.f32.mrf.mxu0
      %v10895 = vadd.f32 %v10806, %v10894
      %v10896 = vpop.f32.mrf.mxu0
      %v10897 = vadd.f32 %v10808, %v10896
      %10898 = vmatmul.bf16.gmra.mxu0 %v5965
      %v10899 = vpop.f32.mrf.mxu0
      %v10900 = vadd.f32 %v10811, %v10899
      %v10901 = vpop.f32.mrf.mxu0
      %v10902 = vadd.f32 %v10813, %v10901
      %10903 = vmatmul.bf16.gmra.mxu0 %v5977
      %v10904 = vpop.f32.mrf.mxu0
      %v10905 = vadd.f32 %v10816, %v10904
      %v10906 = vpop.f32.mrf.mxu0
      %v10907 = vadd.f32 %v10818, %v10906
      %10908 = vmatmul.bf16.gmra.mxu0 %v5989
      %v10909 = vpop.f32.mrf.mxu0
      %v10910 = vadd.f32 %v10821, %v10909
      %v10911 = vpop.f32.mrf.mxu0
      %v10912 = vadd.f32 %v10823, %v10911
      %10913 = vmatmul.bf16.gmra.mxu0 %v6001
      %v10914 = vpop.f32.mrf.mxu0
      %v10915 = vadd.f32 %v10826, %v10914
      %v10916 = vpop.f32.mrf.mxu0
      %v10917 = vadd.f32 %v10828, %v10916
      %10918 = vmatmul.bf16.gmra.mxu0 %v6013
      %v10919 = vpop.f32.mrf.mxu0
      %v10920 = vadd.f32 %v10831, %v10919
      %v10921 = vpop.f32.mrf.mxu0
      %v10922 = vadd.f32 %v10833, %v10921
      %10923 = vmatmul.bf16.gmra.mxu0 %v6025
      %v10924 = vpop.f32.mrf.mxu0
      %v10925 = vadd.f32 %v10836, %v10924
      %v10926 = vpop.f32.mrf.mxu0
      %v10927 = vadd.f32 %v10838, %v10926
      %10928 = vmatmul.bf16.gmra.mxu0 %v6037
      %v10929 = vpop.f32.mrf.mxu0
      %v10930 = vadd.f32 %v10841, %v10929
      %v10931 = vpop.f32.mrf.mxu0
      %v10932 = vadd.f32 %v10843, %v10931
      %10933 = vmatmul.bf16.gmra.mxu0 %v6049
      %v10934 = vpop.f32.mrf.mxu0
      %v10935 = vadd.f32 %v10846, %v10934
      %v10936 = vpop.f32.mrf.mxu0
      %v10937 = vadd.f32 %v10848, %v10936
      %10938 = vmatmul.bf16.gmra.mxu0 %v6061
      %v10939 = vpop.f32.mrf.mxu0
      %v10940 = vadd.f32 %v10851, %v10939
      %v10941 = vpop.f32.mrf.mxu0
      %v10942 = vadd.f32 %v10853, %v10941
      %10943 = vmatmul.bf16.gmra.mxu0 %v6073
      %v10944 = vpop.f32.mrf.mxu0
      %v10945 = vadd.f32 %v10856, %v10944
      %v10946 = vpop.f32.mrf.mxu0
      %v10947 = vadd.f32 %v10858, %v10946
      %10948 = vmatmul.bf16.gmra.mxu0 %v6085
      %v10949 = vpop.f32.mrf.mxu0
      %v10950 = vadd.f32 %v10861, %v10949
      %v10951 = vpop.f32.mrf.mxu0
      %v10952 = vadd.f32 %v10863, %v10951
      %10953 = vdwg.mxu0
      %10954 = vmatpush.bf16.msra.mxu0 %v7680
      %10955 = vmatpush.bf16.msra.mxu0 %v7677
      %10956 = vmatpush.bf16.msra.mxu0 %v7674
      %10957 = vmatpush.bf16.msra.mxu0 %v7671
      %10958 = vmatpush.bf16.msra.mxu0 %v7668
      %10959 = vmatpush.bf16.msra.mxu0 %v7665
      %10960 = vmatpush.bf16.msra.mxu0 %v7662
      %10961 = vmatpush.bf16.msra.mxu0 %v7659
      %10962 = vmatmul.bf16.gmra.mxu0 %v5906
      %v10963 = vpop.f32.mrf.mxu0
      %v10964 = vadd.f32 %v10875, %v10963
      %v10965 = vpop.f32.mrf.mxu0
      %v10966 = vadd.f32 %v10877, %v10965
      %10967 = vmatmul.bf16.gmra.mxu0 %v5918
      %v10968 = vpop.f32.mrf.mxu0
      %v10969 = vadd.f32 %v10880, %v10968
      %v10970 = vpop.f32.mrf.mxu0
      %v10971 = vadd.f32 %v10882, %v10970
      %10972 = vmatmul.bf16.gmra.mxu0 %v5930
      %v10973 = vpop.f32.mrf.mxu0
      %v10974 = vadd.f32 %v10885, %v10973
      %v10975 = vpop.f32.mrf.mxu0
      %v10976 = vadd.f32 %v10887, %v10975
      %10977 = vmatmul.bf16.gmra.mxu0 %v5942
      %v10978 = vpop.f32.mrf.mxu0
      %v10979 = vadd.f32 %v10890, %v10978
      %v10980 = vpop.f32.mrf.mxu0
      %v10981 = vadd.f32 %v10892, %v10980
      %10982 = vmatmul.bf16.gmra.mxu0 %v5954
      %v10983 = vpop.f32.mrf.mxu0
      %v10984 = vadd.f32 %v10895, %v10983
      %v10985 = vpop.f32.mrf.mxu0
      %v10986 = vadd.f32 %v10897, %v10985
      %10987 = vmatmul.bf16.gmra.mxu0 %v5966
      %v10988 = vpop.f32.mrf.mxu0
      %v10989 = vadd.f32 %v10900, %v10988
      %v10990 = vpop.f32.mrf.mxu0
      %v10991 = vadd.f32 %v10902, %v10990
      %10992 = vmatmul.bf16.gmra.mxu0 %v5978
      %v10993 = vpop.f32.mrf.mxu0
      %v10994 = vadd.f32 %v10905, %v10993
      %v10995 = vpop.f32.mrf.mxu0
      %v10996 = vadd.f32 %v10907, %v10995
      %10997 = vmatmul.bf16.gmra.mxu0 %v5990
      %v10998 = vpop.f32.mrf.mxu0
      %v10999 = vadd.f32 %v10910, %v10998
      %v11000 = vpop.f32.mrf.mxu0
      %v11001 = vadd.f32 %v10912, %v11000
      %11002 = vmatmul.bf16.gmra.mxu0 %v6002
      %v11003 = vpop.f32.mrf.mxu0
      %v11004 = vadd.f32 %v10915, %v11003
      %v11005 = vpop.f32.mrf.mxu0
      %v11006 = vadd.f32 %v10917, %v11005
      %11007 = vmatmul.bf16.gmra.mxu0 %v6014
      %v11008 = vpop.f32.mrf.mxu0
      %v11009 = vadd.f32 %v10920, %v11008
      %v11010 = vpop.f32.mrf.mxu0
      %v11011 = vadd.f32 %v10922, %v11010
      %11012 = vmatmul.bf16.gmra.mxu0 %v6026
      %v11013 = vpop.f32.mrf.mxu0
      %v11014 = vadd.f32 %v10925, %v11013
      %v11015 = vpop.f32.mrf.mxu0
      %v11016 = vadd.f32 %v10927, %v11015
      %11017 = vmatmul.bf16.gmra.mxu0 %v6038
      %v11018 = vpop.f32.mrf.mxu0
      %v11019 = vadd.f32 %v10930, %v11018
      %v11020 = vpop.f32.mrf.mxu0
      %v11021 = vadd.f32 %v10932, %v11020
      %11022 = vmatmul.bf16.gmra.mxu0 %v6050
      %v11023 = vpop.f32.mrf.mxu0
      %v11024 = vadd.f32 %v10935, %v11023
      %v11025 = vpop.f32.mrf.mxu0
      %v11026 = vadd.f32 %v10937, %v11025
      %11027 = vmatmul.bf16.gmra.mxu0 %v6062
      %v11028 = vpop.f32.mrf.mxu0
      %v11029 = vadd.f32 %v10940, %v11028
      %v11030 = vpop.f32.mrf.mxu0
      %v11031 = vadd.f32 %v10942, %v11030
      %11032 = vmatmul.bf16.gmra.mxu0 %v6074
      %v11033 = vpop.f32.mrf.mxu0
      %v11034 = vadd.f32 %v10945, %v11033
      %v11035 = vpop.f32.mrf.mxu0
      %v11036 = vadd.f32 %v10947, %v11035
      %11037 = vmatmul.bf16.gmra.mxu0 %v6086
      %v11038 = vpop.f32.mrf.mxu0
      %v11039 = vadd.f32 %v10950, %v11038
      %v11040 = vpop.f32.mrf.mxu0
      %v11041 = vadd.f32 %v10952, %v11040
      %11042 = vdwg.mxu0
      %11043 = vmatpush.bf16.msra.mxu0 %v7704
      %11044 = vmatpush.bf16.msra.mxu0 %v7701
      %11045 = vmatpush.bf16.msra.mxu0 %v7698
      %11046 = vmatpush.bf16.msra.mxu0 %v7695
      %11047 = vmatpush.bf16.msra.mxu0 %v7692
      %11048 = vmatpush.bf16.msra.mxu0 %v7689
      %11049 = vmatpush.bf16.msra.mxu0 %v7686
      %11050 = vmatpush.bf16.msra.mxu0 %v7683
      %11051 = vmatmul.bf16.gmra.mxu0 %v5907
      %v11052 = vpop.f32.mrf.mxu0
      %v11053 = vadd.f32 %v10964, %v11052
      %v11054 = vpop.f32.mrf.mxu0
      %v11055 = vadd.f32 %v10966, %v11054
      %11056 = vmatmul.bf16.gmra.mxu0 %v5919
      %v11057 = vpop.f32.mrf.mxu0
      %v11058 = vadd.f32 %v10969, %v11057
      %v11059 = vpop.f32.mrf.mxu0
      %v11060 = vadd.f32 %v10971, %v11059
      %11061 = vmatmul.bf16.gmra.mxu0 %v5931
      %v11062 = vpop.f32.mrf.mxu0
      %v11063 = vadd.f32 %v10974, %v11062
      %v11064 = vpop.f32.mrf.mxu0
      %v11065 = vadd.f32 %v10976, %v11064
      %11066 = vmatmul.bf16.gmra.mxu0 %v5943
      %v11067 = vpop.f32.mrf.mxu0
      %v11068 = vadd.f32 %v10979, %v11067
      %v11069 = vpop.f32.mrf.mxu0
      %v11070 = vadd.f32 %v10981, %v11069
      %11071 = vmatmul.bf16.gmra.mxu0 %v5955
      %v11072 = vpop.f32.mrf.mxu0
      %v11073 = vadd.f32 %v10984, %v11072
      %v11074 = vpop.f32.mrf.mxu0
      %v11075 = vadd.f32 %v10986, %v11074
      %11076 = vmatmul.bf16.gmra.mxu0 %v5967
      %v11077 = vpop.f32.mrf.mxu0
      %v11078 = vadd.f32 %v10989, %v11077
      %v11079 = vpop.f32.mrf.mxu0
      %v11080 = vadd.f32 %v10991, %v11079
      %11081 = vmatmul.bf16.gmra.mxu0 %v5979
      %v11082 = vpop.f32.mrf.mxu0
      %v11083 = vadd.f32 %v10994, %v11082
      %v11084 = vpop.f32.mrf.mxu0
      %v11085 = vadd.f32 %v10996, %v11084
      %11086 = vmatmul.bf16.gmra.mxu0 %v5991
      %v11087 = vpop.f32.mrf.mxu0
      %v11088 = vadd.f32 %v10999, %v11087
      %v11089 = vpop.f32.mrf.mxu0
      %v11090 = vadd.f32 %v11001, %v11089
      %11091 = vmatmul.bf16.gmra.mxu0 %v6003
      %v11092 = vpop.f32.mrf.mxu0
      %v11093 = vadd.f32 %v11004, %v11092
      %v11094 = vpop.f32.mrf.mxu0
      %v11095 = vadd.f32 %v11006, %v11094
      %11096 = vmatmul.bf16.gmra.mxu0 %v6015
      %v11097 = vpop.f32.mrf.mxu0
      %v11098 = vadd.f32 %v11009, %v11097
      %v11099 = vpop.f32.mrf.mxu0
      %v11100 = vadd.f32 %v11011, %v11099
      %11101 = vmatmul.bf16.gmra.mxu0 %v6027
      %v11102 = vpop.f32.mrf.mxu0
      %v11103 = vadd.f32 %v11014, %v11102
      %v11104 = vpop.f32.mrf.mxu0
      %v11105 = vadd.f32 %v11016, %v11104
      %11106 = vmatmul.bf16.gmra.mxu0 %v6039
      %v11107 = vpop.f32.mrf.mxu0
      %v11108 = vadd.f32 %v11019, %v11107
      %v11109 = vpop.f32.mrf.mxu0
      %v11110 = vadd.f32 %v11021, %v11109
      %11111 = vmatmul.bf16.gmra.mxu0 %v6051
      %v11112 = vpop.f32.mrf.mxu0
      %v11113 = vadd.f32 %v11024, %v11112
      %v11114 = vpop.f32.mrf.mxu0
      %v11115 = vadd.f32 %v11026, %v11114
      %11116 = vmatmul.bf16.gmra.mxu0 %v6063
      %v11117 = vpop.f32.mrf.mxu0
      %v11118 = vadd.f32 %v11029, %v11117
      %v11119 = vpop.f32.mrf.mxu0
      %v11120 = vadd.f32 %v11031, %v11119
      %11121 = vmatmul.bf16.gmra.mxu0 %v6075
      %v11122 = vpop.f32.mrf.mxu0
      %v11123 = vadd.f32 %v11034, %v11122
      %v11124 = vpop.f32.mrf.mxu0
      %v11125 = vadd.f32 %v11036, %v11124
      %11126 = vmatmul.bf16.gmra.mxu0 %v6087
      %v11127 = vpop.f32.mrf.mxu0
      %v11128 = vadd.f32 %v11039, %v11127
      %v11129 = vpop.f32.mrf.mxu0
      %v11130 = vadd.f32 %v11041, %v11129
      %11131 = vdwg.mxu0
      %11132 = vmatpush.bf16.msra.mxu0 %v7728
      %11133 = vmatpush.bf16.msra.mxu0 %v7725
      %11134 = vmatpush.bf16.msra.mxu0 %v7722
      %11135 = vmatpush.bf16.msra.mxu0 %v7719
      %11136 = vmatpush.bf16.msra.mxu0 %v7716
      %11137 = vmatpush.bf16.msra.mxu0 %v7713
      %11138 = vmatpush.bf16.msra.mxu0 %v7710
      %11139 = vmatpush.bf16.msra.mxu0 %v7707
      %11140 = vmatmul.bf16.gmra.mxu0 %v5908
      %v11141 = vpop.f32.mrf.mxu0
      %v11142 = vadd.f32 %v11053, %v11141
      %v11143 = vpop.f32.mrf.mxu0
      %v11144 = vadd.f32 %v11055, %v11143
      %11145 = vmatmul.bf16.gmra.mxu0 %v5920
      %v11146 = vpop.f32.mrf.mxu0
      %v11147 = vadd.f32 %v11058, %v11146
      %v11148 = vpop.f32.mrf.mxu0
      %v11149 = vadd.f32 %v11060, %v11148
      %11150 = vmatmul.bf16.gmra.mxu0 %v5932
      %v11151 = vpop.f32.mrf.mxu0
      %v11152 = vadd.f32 %v11063, %v11151
      %v11153 = vpop.f32.mrf.mxu0
      %v11154 = vadd.f32 %v11065, %v11153
      %11155 = vmatmul.bf16.gmra.mxu0 %v5944
      %v11156 = vpop.f32.mrf.mxu0
      %v11157 = vadd.f32 %v11068, %v11156
      %v11158 = vpop.f32.mrf.mxu0
      %v11159 = vadd.f32 %v11070, %v11158
      %11160 = vmatmul.bf16.gmra.mxu0 %v5956
      %v11161 = vpop.f32.mrf.mxu0
      %v11162 = vadd.f32 %v11073, %v11161
      %v11163 = vpop.f32.mrf.mxu0
      %v11164 = vadd.f32 %v11075, %v11163
      %11165 = vmatmul.bf16.gmra.mxu0 %v5968
      %v11166 = vpop.f32.mrf.mxu0
      %v11167 = vadd.f32 %v11078, %v11166
      %v11168 = vpop.f32.mrf.mxu0
      %v11169 = vadd.f32 %v11080, %v11168
      %11170 = vmatmul.bf16.gmra.mxu0 %v5980
      %v11171 = vpop.f32.mrf.mxu0
      %v11172 = vadd.f32 %v11083, %v11171
      %v11173 = vpop.f32.mrf.mxu0
      %v11174 = vadd.f32 %v11085, %v11173
      %11175 = vmatmul.bf16.gmra.mxu0 %v5992
      %v11176 = vpop.f32.mrf.mxu0
      %v11177 = vadd.f32 %v11088, %v11176
      %v11178 = vpop.f32.mrf.mxu0
      %v11179 = vadd.f32 %v11090, %v11178
      %11180 = vmatmul.bf16.gmra.mxu0 %v6004
      %v11181 = vpop.f32.mrf.mxu0
      %v11182 = vadd.f32 %v11093, %v11181
      %v11183 = vpop.f32.mrf.mxu0
      %v11184 = vadd.f32 %v11095, %v11183
      %11185 = vmatmul.bf16.gmra.mxu0 %v6016
      %v11186 = vpop.f32.mrf.mxu0
      %v11187 = vadd.f32 %v11098, %v11186
      %v11188 = vpop.f32.mrf.mxu0
      %v11189 = vadd.f32 %v11100, %v11188
      %11190 = vmatmul.bf16.gmra.mxu0 %v6028
      %v11191 = vpop.f32.mrf.mxu0
      %v11192 = vadd.f32 %v11103, %v11191
      %v11193 = vpop.f32.mrf.mxu0
      %v11194 = vadd.f32 %v11105, %v11193
      %11195 = vmatmul.bf16.gmra.mxu0 %v6040
      %v11196 = vpop.f32.mrf.mxu0
      %v11197 = vadd.f32 %v11108, %v11196
      %v11198 = vpop.f32.mrf.mxu0
      %v11199 = vadd.f32 %v11110, %v11198
      %11200 = vmatmul.bf16.gmra.mxu0 %v6052
      %v11201 = vpop.f32.mrf.mxu0
      %v11202 = vadd.f32 %v11113, %v11201
      %v11203 = vpop.f32.mrf.mxu0
      %v11204 = vadd.f32 %v11115, %v11203
      %11205 = vmatmul.bf16.gmra.mxu0 %v6064
      %v11206 = vpop.f32.mrf.mxu0
      %v11207 = vadd.f32 %v11118, %v11206
      %v11208 = vpop.f32.mrf.mxu0
      %v11209 = vadd.f32 %v11120, %v11208
      %11210 = vmatmul.bf16.gmra.mxu0 %v6076
      %v11211 = vpop.f32.mrf.mxu0
      %v11212 = vadd.f32 %v11123, %v11211
      %v11213 = vpop.f32.mrf.mxu0
      %v11214 = vadd.f32 %v11125, %v11213
      %11215 = vmatmul.bf16.gmra.mxu0 %v6088
      %v11216 = vpop.f32.mrf.mxu0
      %v11217 = vadd.f32 %v11128, %v11216
      %v11218 = vpop.f32.mrf.mxu0
      %v11219 = vadd.f32 %v11130, %v11218
      %11220 = vdwg.mxu0
      %11221 = vst [vmem:[%s231] sm:$0xff] %v9006
      %11222 = vst [vmem:[%s231 + $0x8] sm:$0xff] %v10074
      %11223 = vst [vmem:[%s231 + $0x10] sm:$0xff] %v11142
      %11224 = vst [vmem:[%s231 + $0x18] sm:$0xff] %v9008
      %11225 = vst [vmem:[%s231 + $0x20] sm:$0xff] %v10076
      %11226 = vst [vmem:[%s231 + $0x28] sm:$0xff] %v11144
      %11227 = vst [vmem:[%s231 + $0x30] sm:$0xff] %v9011
      %11228 = vst [vmem:[%s231 + $0x38] sm:$0xff] %v10079
      %11229 = vst [vmem:[%s231 + $0x40] sm:$0xff] %v11147
      %11230 = vst [vmem:[%s231 + $0x48] sm:$0xff] %v9013
      %11231 = vst [vmem:[%s231 + $0x50] sm:$0xff] %v10081
      %11232 = vst [vmem:[%s231 + $0x58] sm:$0xff] %v11149
      %11233 = vst [vmem:[%s231 + $0x60] sm:$0xff] %v9016
      %11234 = vst [vmem:[%s231 + $0x68] sm:$0xff] %v10084
      %11235 = vst [vmem:[%s231 + $0x70] sm:$0xff] %v11152
      %11236 = vst [vmem:[%s231 + $0x78] sm:$0xff] %v9018
      %11237 = vst [vmem:[%s231 + $0x80] sm:$0xff] %v10086
      %11238 = vst [vmem:[%s231 + $0x88] sm:$0xff] %v11154
      %11239 = vst [vmem:[%s231 + $0x90] sm:$0xff] %v9021
      %11240 = vst [vmem:[%s231 + $0x98] sm:$0xff] %v10089
      %11241 = vst [vmem:[%s231 + $0xa0] sm:$0xff] %v11157
      %11242 = vst [vmem:[%s231 + $0xa8] sm:$0xff] %v9023
      %11243 = vst [vmem:[%s231 + $0xb0] sm:$0xff] %v10091
      %11244 = vst [vmem:[%s231 + $0xb8] sm:$0xff] %v11159
      %11245 = vst [vmem:[%s231 + $0xc0] sm:$0xff] %v9026
      %11246 = vst [vmem:[%s231 + $0xc8] sm:$0xff] %v10094
      %11247 = vst [vmem:[%s231 + $0xd0] sm:$0xff] %v11162
      %11248 = vst [vmem:[%s231 + $0xd8] sm:$0xff] %v9028
      %11249 = vst [vmem:[%s231 + $0xe0] sm:$0xff] %v10096
      %11250 = vst [vmem:[%s231 + $0xe8] sm:$0xff] %v11164
      %11251 = vst [vmem:[%s231 + $0xf0] sm:$0xff] %v9031
      %11252 = vst [vmem:[%s231 + $0xf8] sm:$0xff] %v10099
      %11253 = vst [vmem:[%s231 + $0x100] sm:$0xff] %v11167
      %11254 = vst [vmem:[%s231 + $0x108] sm:$0xff] %v9033
      %11255 = vst [vmem:[%s231 + $0x110] sm:$0xff] %v10101
      %11256 = vst [vmem:[%s231 + $0x118] sm:$0xff] %v11169
      %11257 = vst [vmem:[%s231 + $0x120] sm:$0xff] %v9036
      %11258 = vst [vmem:[%s231 + $0x128] sm:$0xff] %v10104
      %11259 = vst [vmem:[%s231 + $0x130] sm:$0xff] %v11172
      %11260 = vst [vmem:[%s231 + $0x138] sm:$0xff] %v9038
      %11261 = vst [vmem:[%s231 + $0x140] sm:$0xff] %v10106
      %11262 = vst [vmem:[%s231 + $0x148] sm:$0xff] %v11174
      %11263 = vst [vmem:[%s231 + $0x150] sm:$0xff] %v9041
      %11264 = vst [vmem:[%s231 + $0x158] sm:$0xff] %v10109
      %11265 = vst [vmem:[%s231 + $0x160] sm:$0xff] %v11177
      %11266 = vst [vmem:[%s231 + $0x168] sm:$0xff] %v9043
      %11267 = vst [vmem:[%s231 + $0x170] sm:$0xff] %v10111
      %11268 = vst [vmem:[%s231 + $0x178] sm:$0xff] %v11179
      %11269 = vst [vmem:[%s231 + $0x180] sm:$0xff] %v9046
      %11270 = vst [vmem:[%s231 + $0x188] sm:$0xff] %v10114
      %11271 = vst [vmem:[%s231 + $0x190] sm:$0xff] %v11182
      %11272 = vst [vmem:[%s231 + $0x198] sm:$0xff] %v9048
      %11273 = vst [vmem:[%s231 + $0x1a0] sm:$0xff] %v10116
      %11274 = vst [vmem:[%s231 + $0x1a8] sm:$0xff] %v11184
      %11275 = vst [vmem:[%s231 + $0x1b0] sm:$0xff] %v9051
      %11276 = vst [vmem:[%s231 + $0x1b8] sm:$0xff] %v10119
      %11277 = vst [vmem:[%s231 + $0x1c0] sm:$0xff] %v11187
      %11278 = vst [vmem:[%s231 + $0x1c8] sm:$0xff] %v9053
      %11279 = vst [vmem:[%s231 + $0x1d0] sm:$0xff] %v10121
      %11280 = vst [vmem:[%s231 + $0x1d8] sm:$0xff] %v11189
      %11281 = vst [vmem:[%s231 + $0x1e0] sm:$0xff] %v9056
      %11282 = vst [vmem:[%s231 + $0x1e8] sm:$0xff] %v10124
      %11283 = vst [vmem:[%s231 + $0x1f0] sm:$0xff] %v11192
      %11284 = vst [vmem:[%s231 + $0x1f8] sm:$0xff] %v9058
      %11285 = vst [vmem:[%s231 + $0x200] sm:$0xff] %v10126
      %11286 = vst [vmem:[%s231 + $0x208] sm:$0xff] %v11194
      %11287 = vst [vmem:[%s231 + $0x210] sm:$0xff] %v9061
      %11288 = vst [vmem:[%s231 + $0x218] sm:$0xff] %v10129
      %11289 = vst [vmem:[%s231 + $0x220] sm:$0xff] %v11197
      %11290 = vst [vmem:[%s231 + $0x228] sm:$0xff] %v9063
      %11291 = vst [vmem:[%s231 + $0x230] sm:$0xff] %v10131
      %11292 = vst [vmem:[%s231 + $0x238] sm:$0xff] %v11199
      %11293 = vst [vmem:[%s231 + $0x240] sm:$0xff] %v9066
      %11294 = vst [vmem:[%s231 + $0x248] sm:$0xff] %v10134
      %11295 = vst [vmem:[%s231 + $0x250] sm:$0xff] %v11202
      %11296 = vst [vmem:[%s231 + $0x258] sm:$0xff] %v9068
      %11297 = vst [vmem:[%s231 + $0x260] sm:$0xff] %v10136
      %11298 = vst [vmem:[%s231 + $0x268] sm:$0xff] %v11204
      %11299 = vst [vmem:[%s231 + $0x270] sm:$0xff] %v9071
      %11300 = vst [vmem:[%s231 + $0x278] sm:$0xff] %v10139
      %11301 = vst [vmem:[%s231 + $0x280] sm:$0xff] %v11207
      %11302 = vst [vmem:[%s231 + $0x288] sm:$0xff] %v9073
      %11303 = vst [vmem:[%s231 + $0x290] sm:$0xff] %v10141
      %11304 = vst [vmem:[%s231 + $0x298] sm:$0xff] %v11209
      %11305 = vst [vmem:[%s231 + $0x2a0] sm:$0xff] %v9076
      %11306 = vst [vmem:[%s231 + $0x2a8] sm:$0xff] %v10144
      %11307 = vst [vmem:[%s231 + $0x2b0] sm:$0xff] %v11212
      %11308 = vst [vmem:[%s231 + $0x2b8] sm:$0xff] %v9078
      %11309 = vst [vmem:[%s231 + $0x2c0] sm:$0xff] %v10146
      %11310 = vst [vmem:[%s231 + $0x2c8] sm:$0xff] %v11214
      %11311 = vst [vmem:[%s231 + $0x2d0] sm:$0xff] %v9081
      %11312 = vst [vmem:[%s231 + $0x2d8] sm:$0xff] %v10149
      %11313 = vst [vmem:[%s231 + $0x2e0] sm:$0xff] %v11217
      %11314 = vst [vmem:[%s231 + $0x2e8] sm:$0xff] %v9083
      %11315 = vst [vmem:[%s231 + $0x2f0] sm:$0xff] %v10151
      %11316 = vst [vmem:[%s231 + $0x2f8] sm:$0xff] %v11219
      %s11317 = smul.u32 32, %s16
      %p11318 = scmp.lt.s32.totalorder %s11317, 63
      %s11319 = scalar_select %p11318, %s11317, 63
      %s11320 = smul.addr %s11319, 3
      %s11321 = smul.addr %s11320, 8
      %s11322 = scalar_lea.vmem %s5, %s11321
      // Predicated region
      $region41: #{feed_forward.1} parent=39 // pred_check
        %p11323 = pneg %p144
      $region42: #{feed_forward.1} parent=39 // pred_check_branch
        %11325 = sbr.rel (%p11323) target = $region44
      $region43: #{feed_forward.1} parent=39 // pred_region
        %s11326 = smul.u32 32, %s16
      $region44: #{feed_forward.1} parent=39 // pred_fallthru
        _
    $region40: #{feed_forward.1} parent=5 // pred_fallthru
      _
    %p11327 = scmp.le.s32.totalorder 2, %s11
    // Predicated region
    $region45: #{feed_forward.1} parent=5 // pred_check
      %p11328 = pneg %p11327
    $region46: #{feed_forward.1} parent=5 // pred_check_branch
      %11330 = sbr.rel (%p11328) target = $region48
    $region47: #{feed_forward.1} parent=5 // pred_region
      %s11331 = ssub.s32 %s11, 2
      // Predicated region
      $region49: #{feed_forward.1} parent=47 // pred_check
        %p11332 = pneg %p150
      $region50: #{feed_forward.1} parent=47 // pred_check_branch
        %11334 = sbr.rel (%p11332) target = $region52
      $region51: #{feed_forward.1} parent=47 // pred_region
        %s11335 = smul.u32 32, %s17
        %p11336 = scmp.lt.s32.totalorder %s11335, 63
        %s11337 = scalar_select %p11336, %s11335, 63
        %s11338 = smul.addr %s11337, 3
        %s11339 = smul.addr %s11338, 8
        %s11340 = scalar_lea.vmem %s5, %s11339
      $region52: #{feed_forward.1} parent=47 // pred_fallthru
        _
    $region48: #{feed_forward.1} parent=5 // pred_fallthru
      _
  $region6: #{feed_forward.1} parent=0 // loop_footer
    %s15 = sadd.s32 1, %s11
  $region7: #{feed_forward.1} parent=0 // loop_footer_branch
    %10 = sbr.rel target = $region3
  $region8: #{feed_forward.1} parent=0 // loop_exit
    _

</llo_original>
